<compile_context>
chip_gen: v5e
topology: v5e:2x2
jax: 0.10.0
libtpu: 0.0.40
codegen_flags: <defaults>
</compile_context>

<pallas_src>
import functools
import math

import jax
import jax.numpy as jnp
from jax.experimental import pallas as pl
from jax.experimental.pallas import tpu as pltpu

ARC = {
    # Reduced SegNet config (same structure as the original VGG-like table).
    "C": [8, 8, "M", 16, 16, "M"],
}
BN_EPS = 1e-5

_COMPILER_PARAMS = pltpu.CompilerParams(
    dimension_semantics=("parallel",),        # batch axis -> both v7x TensorCores
    vmem_limit_bytes=32 * 1024 * 1024,
)


# ---------------------------------------------------------------------------
# Pallas kernels
# ---------------------------------------------------------------------------
def conv3x3_bn_kernel(x_ref, w_ref, s_ref, b_ref, o_ref, acc_ref, *, H, relu):
    """Fused 3x3 conv (pad=1, stride=1) + folded-BN scale/bias + optional ReLU.

    x_ref : (1, H, W*Cin)       bf16 row-packed input
    w_ref : (3, W*Cin, W*Cout)  bf16 banded (Toeplitz) weights, one per kernel row dy
    s_ref : (1, W*Cout)         f32 per-channel scale, tiled over W
    b_ref : (1, W*Cout)         f32 per-channel bias,  tiled over W
    o_ref : (1, H, W*Cout)      row-packed output
    acc_ref: (H, W*Cout) f32    VMEM scratch accumulator
    """
    # dy = 1 (center row): contributes to every output row.
    acc_ref[...] = jnp.dot(x_ref[0], w_ref[1], preferred_element_type=jnp.float32)
    # dy = 0 (row above): output row h uses input row h-1 -> output rows 1..H-1.
    acc_ref[1:H, :] = acc_ref[1:H, :] + jnp.dot(
        x_ref[0, 0:H - 1, :], w_ref[0], preferred_element_type=jnp.float32)
    # dy = 2 (row below): output row h uses input row h+1 -> output rows 0..H-2.
    acc_ref[0:H - 1, :] = acc_ref[0:H - 1, :] + jnp.dot(
        x_ref[0, 1:H, :], w_ref[2], preferred_element_type=jnp.float32)

    y = acc_ref[...] * s_ref[...] + b_ref[...]
    if relu:
        y = jnp.maximum(y, 0.0)
    o_ref[0] = y.astype(o_ref.dtype)


def maxpool2x2_kernel(x_ref, o_ref):
    """MaxPool2d(2, stride=2).  x_ref: (1, Ho, 2, Wo, 2, C) -> o_ref: (1, Ho, Wo, C)."""
    a = x_ref[0, :, 0, :, 0, :].astype(jnp.float32)
    b = x_ref[0, :, 0, :, 1, :].astype(jnp.float32)
    c = x_ref[0, :, 1, :, 0, :].astype(jnp.float32)
    d = x_ref[0, :, 1, :, 1, :].astype(jnp.float32)
    o_ref[0] = jnp.maximum(jnp.maximum(a, b), jnp.maximum(c, d)).astype(o_ref.dtype)


def upsample2x_kernel(x_ref, o_ref, *, H, W):
    """x2 bilinear upsample, align_corners=False (PyTorch default).

    x_ref: (1, H, W, C);  o_ref: (1, H, 2, W, 2, C) -- the parity dims interleave for
    free at the wrapper via a row-major reshape to (N, 2H, 2W*C).
    """
    x = x_ref[0].astype(jnp.float32)                        # (H, W, C)
    # Vertical 2-tap filters (clamped at the borders) via leading-dim concats only.
    xu = jnp.concatenate([x[0:1], x[0:H - 1]], axis=0)      # x[h-1]
    xd = jnp.concatenate([x[1:H], x[H - 1:H]], axis=0)      # x[h+1]
    rows = (0.25 * xu + 0.75 * x,                           # output rows 2h
            0.75 * x + 0.25 * xd)                           # output rows 2h+1
    dt = o_ref.dtype
    for q, t in enumerate(rows):
        # even output columns 2w : 0.25*t[w-1] + 0.75*t[w]   (clamped at w=0)
        o_ref[0, :, q, 0:1, 0, :] = t[:, 0:1].astype(dt)
        o_ref[0, :, q, 1:W, 0, :] = (0.25 * t[:, 0:W - 1] + 0.75 * t[:, 1:W]).astype(dt)
        # odd output columns 2w+1 : 0.75*t[w] + 0.25*t[w+1]  (clamped at w=W-1)
        o_ref[0, :, q, 0:W - 1, 1, :] = (0.75 * t[:, 0:W - 1] + 0.25 * t[:, 1:W]).astype(dt)
        o_ref[0, :, q, W - 1:W, 1, :] = t[:, W - 1:W].astype(dt)


# ---------------------------------------------------------------------------
# Wrappers (pallas_call plumbing + free layout glue)
# ---------------------------------------------------------------------------
def _banded_weights(w, W):
    """(3,3,Cin,Cout) conv kernel -> (3, W*Cin, W*Cout) banded bf16 matrices.

    bw_dy[w'*Cin+ci, w*Cout+co] = K[dy, w'-w+1, ci, co] for |w'-w|<=1, else 0
    (the zero entries implement the W-direction zero padding).  Constant-folded
    under jit since the conv weights are closure constants.
    """
    Cin, Cout = w.shape[2], w.shape[3]
    wp = jnp.arange(W)[:, None]           # input column  w'
    wo = jnp.arange(W)[None, :]           # output column w
    mats = []
    for dy in range(3):
        t = jnp.zeros((W, Cin, W, Cout), jnp.float32)
        for dx in range(3):
            band = (wp == wo + dx - 1).astype(jnp.float32)
            t = t + band[:, None, :, None] * w[dy, dx][None, :, None, :]
        mats.append(t.reshape(W * Cin, W * Cout))
    return jnp.stack(mats, axis=0).astype(jnp.bfloat16)


def conv3x3_bn_relu(x2, w, scale, bias, H, W, relu, out_dtype):
    """x2: (N, H, W*Cin) bf16 packed; w: (3,3,Cin,Cout) f32; scale/bias: (Cout,) f32."""
    N = x2.shape[0]
    Cin, Cout = w.shape[2], w.shape[3]
    assert x2.shape == (N, H, W * Cin)
    bw = _banded_weights(w, W)                                     # (3, W*Cin, W*Cout)
    s2 = jnp.tile(scale.astype(jnp.float32), W).reshape(1, W * Cout)
    b2 = jnp.tile(bias.astype(jnp.float32), W).reshape(1, W * Cout)
    kern = functools.partial(conv3x3_bn_kernel, H=H, relu=relu)
    return pl.pallas_call(
        kern,
        out_shape=jax.ShapeDtypeStruct((N, H, W * Cout), out_dtype),
        grid_spec=pltpu.PrefetchScalarGridSpec(
            num_scalar_prefetch=0,
            grid=(N,),
            in_specs=[
                pl.BlockSpec((1, H, W * Cin), lambda n: (n, 0, 0)),
                pl.BlockSpec((3, W * Cin, W * Cout), lambda n: (0, 0, 0)),
                pl.BlockSpec((1, W * Cout), lambda n: (0, 0)),
                pl.BlockSpec((1, W * Cout), lambda n: (0, 0)),
            ],
            out_specs=pl.BlockSpec((1, H, W * Cout), lambda n: (n, 0, 0)),
            scratch_shapes=[pltpu.VMEM((H, W * Cout), jnp.float32)],
        ),
        compiler_params=_COMPILER_PARAMS,
    )(x2, bw, s2, b2)


def maxpool2x2(x2, H, W, C):
    """x2: (N, H, W*C) packed -> (N, H//2, (W//2)*C) packed."""
    N = x2.shape[0]
    Ho, Wo = H // 2, W // 2
    xr = x2.reshape(N, Ho, 2, Wo, 2, C)                            # free reshape
    out = pl.pallas_call(
        maxpool2x2_kernel,
        out_shape=jax.ShapeDtypeStruct((N, Ho, Wo, C), x2.dtype),
        grid_spec=pltpu.PrefetchScalarGridSpec(
            num_scalar_prefetch=0,
            grid=(N,),
            in_specs=[pl.BlockSpec((1, Ho, 2, Wo, 2, C),
                                   lambda n: (n, 0, 0, 0, 0, 0))],
            out_specs=pl.BlockSpec((1, Ho, Wo, C), lambda n: (n, 0, 0, 0)),
        ),
        compiler_params=_COMPILER_PARAMS,
    )(xr)
    return out.reshape(N, Ho, Wo * C)                              # free reshape


def upsample2x_bilinear(x2, H, W, C):
    """x2: (N, H, W*C) packed -> (N, 2H, 2W*C) packed (bilinear x2, align_corners=False)."""
    N = x2.shape[0]
    xr = x2.reshape(N, H, W, C)                                    # free reshape
    kern = functools.partial(upsample2x_kernel, H=H, W=W)
    out = pl.pallas_call(
        kern,
        out_shape=jax.ShapeDtypeStruct((N, H, 2, W, 2, C), x2.dtype),
        grid_spec=pltpu.PrefetchScalarGridSpec(
            num_scalar_prefetch=0,
            grid=(N,),
            in_specs=[pl.BlockSpec((1, H, W, C), lambda n: (n, 0, 0, 0))],
            out_specs=pl.BlockSpec((1, H, 2, W, 2, C),
                                   lambda n: (n, 0, 0, 0, 0, 0)),
        ),
        compiler_params=_COMPILER_PARAMS,
    )(xr)
    return out.reshape(N, 2 * H, 2 * W * C)                        # free reshape


# ---------------------------------------------------------------------------
# SegNet construction (mirrors _make_encoder / _make_bottleneck / _make_decoder)
# ---------------------------------------------------------------------------
def build_segnet_params(arc="C", key=jax.random.PRNGKey(0)):
    architecture = ARC[arc]
    keys = iter(jax.random.split(key, 256))

    def conv_layer(cin, cout, relu=True, final=False):
        w = jax.random.normal(next(keys), (3, 3, cin, cout),
                              jnp.float32) / math.sqrt(9 * cin)
        if final:
            # Conv2d(in_ch, 1, 3, padding=1) with bias, no BN, no ReLU.
            scale = jnp.ones((cout,), jnp.float32)
            bias = 0.01 * jax.random.normal(next(keys), (cout,), jnp.float32)
        else:
            # Inference-mode BatchNorm2d folded into per-channel scale/bias.
            # TODO(synk): train-mode (batch-statistics) BatchNorm is not implemented.
            gamma = 1.0 + 0.1 * jax.random.normal(next(keys), (cout,), jnp.float32)
            beta = 0.1 * jax.random.normal(next(keys), (cout,), jnp.float32)
            mean = 0.1 * jax.random.normal(next(keys), (cout,), jnp.float32)
            var = 1.0 + 0.5 * jax.random.uniform(next(keys), (cout,), jnp.float32)
            scale = gamma / jnp.sqrt(var + BN_EPS)
            bias = beta - mean * scale
        return ("conv", w, scale, bias, relu)

    layers = []
    # encoder
    in_ch = 3
    for l in architecture:
        if l == "M":
            layers.append(("pool",))
        else:
            layers.append(conv_layer(in_ch, l))
            in_ch = l
    # bottleneck (in_ch = architecture[-2])
    in_ch = architecture[-2]
    for sf in [2, 1, 0.5]:
        out_ch = int(in_ch * sf)
        layers.append(conv_layer(in_ch, out_ch))
        in_ch = out_ch
    # decoder (reversed architecture)
    rev = architecture[::-1]
    assert in_ch == rev[1], (
        "bottleneck output channels must match the decoder's expected input "
        f"channels for this ARC table ({in_ch} vs {rev[1]})")
    in_ch = rev[1]
    for l in rev:
        if l == "M":
            layers.append(("up",))
        else:
            layers.append(conv_layer(in_ch, l))
            in_ch = l
    layers.append(conv_layer(in_ch, 1, relu=False, final=True))
    return layers


def segnet_forward(x_nchw, layers):
    n, c, h, w = x_nchw.shape
    n_pool = sum(1 for l in layers if l[0] == "pool")
    assert h % (2 ** n_pool) == 0 and w % (2 ** n_pool) == 0, (
        "spatial dims must be divisible by 2**n_pools so the decoder restores them")
    # NCHW -> row-packed bf16 NHWC (N, H, W*C); W*C is the lane dimension everywhere.
    x = jnp.transpose(x_nchw, (0, 2, 3, 1)).astype(jnp.bfloat16).reshape(n, h, w * c)
    H, W, C = h, w, c
    for layer in layers:
        kind = layer[0]
        if kind == "conv":
            _, kw, scale, bias, relu = layer
            assert kw.shape[2] == C
            out_dtype = jnp.bfloat16 if relu else jnp.float32   # final conv stays f32
            x = conv3x3_bn_relu(x, kw, scale, bias, H, W, relu, out_dtype)
            C = kw.shape[3]
        elif kind == "pool":
            x = maxpool2x2(x, H, W, C)
            H, W = H // 2, W // 2
        else:  # "up"
            x = upsample2x_bilinear(x, H, W, C)
            H, W = 2 * H, 2 * W
    out = x.astype(jnp.float32).reshape(n, H, W, C)
    return jnp.transpose(out, (0, 3, 1, 2))                      # NHWC -> NCHW


# ---------------------------------------------------------------------------
if __name__ == "__main__":
    key = jax.random.PRNGKey(0)
    kx, kp = jax.random.split(key)
    x = jax.random.normal(kx, (2, 3, 16, 16), jnp.float32)       # NCHW, like PyTorch
    layers = build_segnet_params("C", kp)

    fwd = jax.jit(lambda inp: segnet_forward(inp, layers))
    out = jax.block_until_ready(fwd(x))

    assert out.shape == (2, 1, 16, 16), out.shape
    assert bool(jnp.all(jnp.isfinite(out)))
    print("KERNEL_OK")
</pallas_src>

<mosaic_0001>
module attributes {stable_mosaic.version = 11 : i64} {
  func.func @conv3x3_bn_kernel(%arg0: i32, %arg1: memref<1x16x48xbf16, #tpu.memory_space<vmem>>, %arg2: memref<3x48x128xbf16, #tpu.memory_space<vmem>>, %arg3: memref<1x128xf32, #tpu.memory_space<vmem>>, %arg4: memref<1x128xf32, #tpu.memory_space<vmem>>, %arg5: memref<1x16x128xbf16, #tpu.memory_space<vmem>>, %arg6: memref<16x128xf32, #tpu.memory_space<vmem>>) attributes {dimension_semantics = [#tpu.dimension_semantics<parallel>], iteration_bounds = array<i64: 2>, scalar_prefetch = 0 : i64, scratch_operands = 1 : i64, tpu.core_type = #tpu.core_type<tc>, window_params = [{transform_indices = @transform_0, window_bounds = array<i64: 1, 16, 48>}, {pipeline_mode = #tpu.pipeline_mode<synchronous>, transform_indices = @transform_1, window_bounds = array<i64: 3, 48, 128>}, {pipeline_mode = #tpu.pipeline_mode<synchronous>, transform_indices = @transform_2, window_bounds = array<i64: 1, 128>}, {pipeline_mode = #tpu.pipeline_mode<synchronous>, transform_indices = @transform_3, window_bounds = array<i64: 1, 128>}, {transform_indices = @transform_4, window_bounds = array<i64: 1, 16, 128>}]} {
    %c0 = arith.constant 0 : index
    %c0_0 = arith.constant 0 : index
    %c0_1 = arith.constant 0 : index
    %0 = vector.load %arg1[%c0, %c0_0, %c0_1] : memref<1x16x48xbf16, #tpu.memory_space<vmem>>, vector<1x16x48xbf16>
    %1 = vector.shape_cast %0 : vector<1x16x48xbf16> to vector<16x48xbf16>
    %c1 = arith.constant 1 : index
    %c0_2 = arith.constant 0 : index
    %c0_3 = arith.constant 0 : index
    %2 = vector.load %arg2[%c1, %c0_2, %c0_3] : memref<3x48x128xbf16, #tpu.memory_space<vmem>>, vector<1x48x128xbf16>
    %3 = vector.shape_cast %2 : vector<1x48x128xbf16> to vector<48x128xbf16>
    %cst = arith.constant dense<0.000000e+00> : vector<16x128xf32>
    %4 = tpu.matmul %1, %3, %cst {dimension_numbers = #tpu.dot_dimension_numbers<[1], [0], [0], [1], [0, 0, 1, 1], [], []>} : vector<16x48xbf16>, vector<48x128xbf16>, vector<16x128xf32> -> vector<16x128xf32>
    %c0_4 = arith.constant 0 : index
    %c0_5 = arith.constant 0 : index
    %5 = vector.load %arg6[%c0_4, %c0_5] : memref<16x128xf32, #tpu.memory_space<vmem>>, vector<16x128xf32>
    tpu.vector_store %arg6[%c0_4, %c0_5], %4 {strides = array<i32>} : memref<16x128xf32, #tpu.memory_space<vmem>>, vector<16x128xf32>,
    %c1_6 = arith.constant 1 : index
    %c0_7 = arith.constant 0 : index
    %6 = vector.load %arg6[%c1_6, %c0_7] : memref<16x128xf32, #tpu.memory_space<vmem>>, vector<15x128xf32>
    %c0_8 = arith.constant 0 : index
    %c0_9 = arith.constant 0 : index
    %c0_10 = arith.constant 0 : index
    %7 = vector.load %arg1[%c0_8, %c0_9, %c0_10] : memref<1x16x48xbf16, #tpu.memory_space<vmem>>, vector<1x15x48xbf16>
    %8 = vector.shape_cast %7 : vector<1x15x48xbf16> to vector<15x48xbf16>
    %c0_11 = arith.constant 0 : index
    %c0_12 = arith.constant 0 : index
    %c0_13 = arith.constant 0 : index
    %9 = vector.load %arg2[%c0_11, %c0_12, %c0_13] : memref<3x48x128xbf16, #tpu.memory_space<vmem>>, vector<1x48x128xbf16>
    %10 = vector.shape_cast %9 : vector<1x48x128xbf16> to vector<48x128xbf16>
    %cst_14 = arith.constant dense<0.000000e+00> : vector<15x128xf32>
    %11 = tpu.matmul %8, %10, %cst_14 {dimension_numbers = #tpu.dot_dimension_numbers<[1], [0], [0], [1], [0, 0, 1, 1], [], []>} : vector<15x48xbf16>, vector<48x128xbf16>, vector<15x128xf32> -> vector<15x128xf32>
    %12 = arith.addf %6, %11 : vector<15x128xf32>
    %c1_15 = arith.constant 1 : index
    %c0_16 = arith.constant 0 : index
    %13 = vector.load %arg6[%c1_15, %c0_16] : memref<16x128xf32, #tpu.memory_space<vmem>>, vector<15x128xf32>
    tpu.vector_store %arg6[%c1_15, %c0_16], %12 {strides = array<i32>} : memref<16x128xf32, #tpu.memory_space<vmem>>, vector<15x128xf32>,
    %c0_17 = arith.constant 0 : index
    %c0_18 = arith.constant 0 : index
    %14 = vector.load %arg6[%c0_17, %c0_18] : memref<16x128xf32, #tpu.memory_space<vmem>>, vector<15x128xf32>
    %c0_19 = arith.constant 0 : index
    %c1_20 = arith.constant 1 : index
    %c0_21 = arith.constant 0 : index
    %15 = vector.load %arg1[%c0_19, %c1_20, %c0_21] : memref<1x16x48xbf16, #tpu.memory_space<vmem>>, vector<1x15x48xbf16>
    %16 = vector.shape_cast %15 : vector<1x15x48xbf16> to vector<15x48xbf16>
    %c2 = arith.constant 2 : index
    %c0_22 = arith.constant 0 : index
    %c0_23 = arith.constant 0 : index
    %17 = vector.load %arg2[%c2, %c0_22, %c0_23] : memref<3x48x128xbf16, #tpu.memory_space<vmem>>, vector<1x48x128xbf16>
    %18 = vector.shape_cast %17 : vector<1x48x128xbf16> to vector<48x128xbf16>
    %cst_24 = arith.constant dense<0.000000e+00> : vector<15x128xf32>
    %19 = tpu.matmul %16, %18, %cst_24 {dimension_numbers = #tpu.dot_dimension_numbers<[1], [0], [0], [1], [0, 0, 1, 1], [], []>} : vector<15x48xbf16>, vector<48x128xbf16>, vector<15x128xf32> -> vector<15x128xf32>
    %20 = arith.addf %14, %19 : vector<15x128xf32>
    %c0_25 = arith.constant 0 : index
    %c0_26 = arith.constant 0 : index
    %21 = vector.load %arg6[%c0_25, %c0_26] : memref<16x128xf32, #tpu.memory_space<vmem>>, vector<15x128xf32>
    tpu.vector_store %arg6[%c0_25, %c0_26], %20 {strides = array<i32>} : memref<16x128xf32, #tpu.memory_space<vmem>>, vector<15x128xf32>,
    %c0_27 = arith.constant 0 : index
    %c0_28 = arith.constant 0 : index
    %22 = vector.load %arg6[%c0_27, %c0_28] : memref<16x128xf32, #tpu.memory_space<vmem>>, vector<16x128xf32>
    %c0_29 = arith.constant 0 : index
    %c0_30 = arith.constant 0 : index
    %23 = vector.load %arg3[%c0_29, %c0_30] : memref<1x128xf32, #tpu.memory_space<vmem>>, vector<1x128xf32>
    %24 = vector.broadcast %23 : vector<1x128xf32> to vector<16x128xf32>
    %25 = arith.mulf %22, %24 : vector<16x128xf32>
    %c0_31 = arith.constant 0 : index
    %c0_32 = arith.constant 0 : index
    %26 = vector.load %arg4[%c0_31, %c0_32] : memref<1x128xf32, #tpu.memory_space<vmem>>, vector<1x128xf32>
    %27 = vector.broadcast %26 : vector<1x128xf32> to vector<16x128xf32>
    %28 = arith.addf %25, %27 : vector<16x128xf32>
    %cst_33 = arith.constant 0.000000e+00 : f32
    %29 = vector.broadcast %cst_33 : f32 to vector<16x128xf32>
    %30 = arith.maximumf %28, %29 : vector<16x128xf32>
    %31 = arith.truncf %30 : vector<16x128xf32> to vector<16x128xbf16>
    %c0_34 = arith.constant 0 : index
    %c0_35 = arith.constant 0 : index
    %c0_36 = arith.constant 0 : index
    %32 = vector.load %arg5[%c0_34, %c0_35, %c0_36] : memref<1x16x128xbf16, #tpu.memory_space<vmem>>, vector<1x16x128xbf16>
    %33 = vector.shape_cast %32 : vector<1x16x128xbf16> to vector<16x128xbf16>
    %34 = vector.shape_cast %31 : vector<16x128xbf16> to vector<1x16x128xbf16>
    tpu.vector_store %arg5[%c0_34, %c0_35, %c0_36], %34 {strides = array<i32>} : memref<1x16x128xbf16, #tpu.memory_space<vmem>>, vector<1x16x128xbf16>,
    return
  }
  func.func @transform_0(%arg0: i32) -> (i32, i32, i32) {
    %c0_i32 = arith.constant 0 : i32
    %c0_i32_0 = arith.constant 0 : i32
    %c0_i32_1 = arith.constant 0 : i32
    return %arg0, %c0_i32, %c0_i32_0 : i32, i32, i32
  }
  func.func @transform_1(%arg0: i32) -> (i32, i32, i32) {
    %c0_i32 = arith.constant 0 : i32
    %c0_i32_0 = arith.constant 0 : i32
    %c0_i32_1 = arith.constant 0 : i32
    %c0_i32_2 = arith.constant 0 : i32
    return %c0_i32, %c0_i32_0, %c0_i32_1 : i32, i32, i32
  }
  func.func @transform_2(%arg0: i32) -> (i32, i32) {
    %c0_i32 = arith.constant 0 : i32
    %c0_i32_0 = arith.constant 0 : i32
    %c0_i32_1 = arith.constant 0 : i32
    return %c0_i32, %c0_i32_0 : i32, i32
  }
  func.func @transform_3(%arg0: i32) -> (i32, i32) {
    %c0_i32 = arith.constant 0 : i32
    %c0_i32_0 = arith.constant 0 : i32
    %c0_i32_1 = arith.constant 0 : i32
    return %c0_i32, %c0_i32_0 : i32, i32
  }
  func.func @transform_4(%arg0: i32) -> (i32, i32, i32) {
    %c0_i32 = arith.constant 0 : i32
    %c0_i32_0 = arith.constant 0 : i32
    %c0_i32_1 = arith.constant 0 : i32
    return %arg0, %c0_i32, %c0_i32_0 : i32, i32, i32
  }
}

module attributes {stable_mosaic.version = 11 : i64} {
  func.func @conv3x3_bn_kernel(%arg0: i32, %arg1: memref<1x16x128xbf16, #tpu.memory_space<vmem>>, %arg2: memref<3x128x128xbf16, #tpu.memory_space<vmem>>, %arg3: memref<1x128xf32, #tpu.memory_space<vmem>>, %arg4: memref<1x128xf32, #tpu.memory_space<vmem>>, %arg5: memref<1x16x128xbf16, #tpu.memory_space<vmem>>, %arg6: memref<16x128xf32, #tpu.memory_space<vmem>>) attributes {dimension_semantics = [#tpu.dimension_semantics<parallel>], iteration_bounds = array<i64: 2>, scalar_prefetch = 0 : i64, scratch_operands = 1 : i64, tpu.core_type = #tpu.core_type<tc>, window_params = [{transform_indices = @transform_0, window_bounds = array<i64: 1, 16, 128>}, {pipeline_mode = #tpu.pipeline_mode<synchronous>, transform_indices = @transform_1, window_bounds = array<i64: 3, 128, 128>}, {pipeline_mode = #tpu.pipeline_mode<synchronous>, transform_indices = @transform_2, window_bounds = array<i64: 1, 128>}, {pipeline_mode = #tpu.pipeline_mode<synchronous>, transform_indices = @transform_3, window_bounds = array<i64: 1, 128>}, {transform_indices = @transform_4, window_bounds = array<i64: 1, 16, 128>}]} {
    %c0 = arith.constant 0 : index
    %c0_0 = arith.constant 0 : index
    %c0_1 = arith.constant 0 : index
    %0 = vector.load %arg1[%c0, %c0_0, %c0_1] : memref<1x16x128xbf16, #tpu.memory_space<vmem>>, vector<1x16x128xbf16>
    %1 = vector.shape_cast %0 : vector<1x16x128xbf16> to vector<16x128xbf16>
    %c1 = arith.constant 1 : index
    %c0_2 = arith.constant 0 : index
    %c0_3 = arith.constant 0 : index
    %2 = vector.load %arg2[%c1, %c0_2, %c0_3] : memref<3x128x128xbf16, #tpu.memory_space<vmem>>, vector<1x128x128xbf16>
    %3 = vector.shape_cast %2 : vector<1x128x128xbf16> to vector<128x128xbf16>
    %cst = arith.constant dense<0.000000e+00> : vector<16x128xf32>
    %4 = tpu.matmul %1, %3, %cst {dimension_numbers = #tpu.dot_dimension_numbers<[1], [0], [0], [1], [0, 0, 1, 1], [], []>} : vector<16x128xbf16>, vector<128x128xbf16>, vector<16x128xf32> -> vector<16x128xf32>
    %c0_4 = arith.constant 0 : index
    %c0_5 = arith.constant 0 : index
    %5 = vector.load %arg6[%c0_4, %c0_5] : memref<16x128xf32, #tpu.memory_space<vmem>>, vector<16x128xf32>
    tpu.vector_store %arg6[%c0_4, %c0_5], %4 {strides = array<i32>} : memref<16x128xf32, #tpu.memory_space<vmem>>, vector<16x128xf32>,
    %c1_6 = arith.constant 1 : index
    %c0_7 = arith.constant 0 : index
    %6 = vector.load %arg6[%c1_6, %c0_7] : memref<16x128xf32, #tpu.memory_space<vmem>>, vector<15x128xf32>
    %c0_8 = arith.constant 0 : index
    %c0_9 = arith.constant 0 : index
    %c0_10 = arith.constant 0 : index
    %7 = vector.load %arg1[%c0_8, %c0_9, %c0_10] : memref<1x16x128xbf16, #tpu.memory_space<vmem>>, vector<1x15x128xbf16>
    %8 = vector.shape_cast %7 : vector<1x15x128xbf16> to vector<15x128xbf16>
    %c0_11 = arith.constant 0 : index
    %c0_12 = arith.constant 0 : index
    %c0_13 = arith.constant 0 : index
    %9 = vector.load %arg2[%c0_11, %c0_12, %c0_13] : memref<3x128x128xbf16, #tpu.memory_space<vmem>>, vector<1x128x128xbf16>
    %10 = vector.shape_cast %9 : vector<1x128x128xbf16> to vector<128x128xbf16>
    %cst_14 = arith.constant dense<0.000000e+00> : vector<15x128xf32>
    %11 = tpu.matmul %8, %10, %cst_14 {dimension_numbers = #tpu.dot_dimension_numbers<[1], [0], [0], [1], [0, 0, 1, 1], [], []>} : vector<15x128xbf16>, vector<128x128xbf16>, vector<15x128xf32> -> vector<15x128xf32>
    %12 = arith.addf %6, %11 : vector<15x128xf32>
    %c1_15 = arith.constant 1 : index
    %c0_16 = arith.constant 0 : index
    %13 = vector.load %arg6[%c1_15, %c0_16] : memref<16x128xf32, #tpu.memory_space<vmem>>, vector<15x128xf32>
    tpu.vector_store %arg6[%c1_15, %c0_16], %12 {strides = array<i32>} : memref<16x128xf32, #tpu.memory_space<vmem>>, vector<15x128xf32>,
    %c0_17 = arith.constant 0 : index
    %c0_18 = arith.constant 0 : index
    %14 = vector.load %arg6[%c0_17, %c0_18] : memref<16x128xf32, #tpu.memory_space<vmem>>, vector<15x128xf32>
    %c0_19 = arith.constant 0 : index
    %c1_20 = arith.constant 1 : index
    %c0_21 = arith.constant 0 : index
    %15 = vector.load %arg1[%c0_19, %c1_20, %c0_21] : memref<1x16x128xbf16, #tpu.memory_space<vmem>>, vector<1x15x128xbf16>
    %16 = vector.shape_cast %15 : vector<1x15x128xbf16> to vector<15x128xbf16>
    %c2 = arith.constant 2 : index
    %c0_22 = arith.constant 0 : index
    %c0_23 = arith.constant 0 : index
    %17 = vector.load %arg2[%c2, %c0_22, %c0_23] : memref<3x128x128xbf16, #tpu.memory_space<vmem>>, vector<1x128x128xbf16>
    %18 = vector.shape_cast %17 : vector<1x128x128xbf16> to vector<128x128xbf16>
    %cst_24 = arith.constant dense<0.000000e+00> : vector<15x128xf32>
    %19 = tpu.matmul %16, %18, %cst_24 {dimension_numbers = #tpu.dot_dimension_numbers<[1], [0], [0], [1], [0, 0, 1, 1], [], []>} : vector<15x128xbf16>, vector<128x128xbf16>, vector<15x128xf32> -> vector<15x128xf32>
    %20 = arith.addf %14, %19 : vector<15x128xf32>
    %c0_25 = arith.constant 0 : index
    %c0_26 = arith.constant 0 : index
    %21 = vector.load %arg6[%c0_25, %c0_26] : memref<16x128xf32, #tpu.memory_space<vmem>>, vector<15x128xf32>
    tpu.vector_store %arg6[%c0_25, %c0_26], %20 {strides = array<i32>} : memref<16x128xf32, #tpu.memory_space<vmem>>, vector<15x128xf32>,
    %c0_27 = arith.constant 0 : index
    %c0_28 = arith.constant 0 : index
    %22 = vector.load %arg6[%c0_27, %c0_28] : memref<16x128xf32, #tpu.memory_space<vmem>>, vector<16x128xf32>
    %c0_29 = arith.constant 0 : index
    %c0_30 = arith.constant 0 : index
    %23 = vector.load %arg3[%c0_29, %c0_30] : memref<1x128xf32, #tpu.memory_space<vmem>>, vector<1x128xf32>
    %24 = vector.broadcast %23 : vector<1x128xf32> to vector<16x128xf32>
    %25 = arith.mulf %22, %24 : vector<16x128xf32>
    %c0_31 = arith.constant 0 : index
    %c0_32 = arith.constant 0 : index
    %26 = vector.load %arg4[%c0_31, %c0_32] : memref<1x128xf32, #tpu.memory_space<vmem>>, vector<1x128xf32>
    %27 = vector.broadcast %26 : vector<1x128xf32> to vector<16x128xf32>
    %28 = arith.addf %25, %27 : vector<16x128xf32>
    %cst_33 = arith.constant 0.000000e+00 : f32
    %29 = vector.broadcast %cst_33 : f32 to vector<16x128xf32>
    %30 = arith.maximumf %28, %29 : vector<16x128xf32>
    %31 = arith.truncf %30 : vector<16x128xf32> to vector<16x128xbf16>
    %c0_34 = arith.constant 0 : index
    %c0_35 = arith.constant 0 : index
    %c0_36 = arith.constant 0 : index
    %32 = vector.load %arg5[%c0_34, %c0_35, %c0_36] : memref<1x16x128xbf16, #tpu.memory_space<vmem>>, vector<1x16x128xbf16>
    %33 = vector.shape_cast %32 : vector<1x16x128xbf16> to vector<16x128xbf16>
    %34 = vector.shape_cast %31 : vector<16x128xbf16> to vector<1x16x128xbf16>
    tpu.vector_store %arg5[%c0_34, %c0_35, %c0_36], %34 {strides = array<i32>} : memref<1x16x128xbf16, #tpu.memory_space<vmem>>, vector<1x16x128xbf16>,
    return
  }
  func.func @transform_0(%arg0: i32) -> (i32, i32, i32) {
    %c0_i32 = arith.constant 0 : i32
    %c0_i32_0 = arith.constant 0 : i32
    %c0_i32_1 = arith.constant 0 : i32
    return %arg0, %c0_i32, %c0_i32_0 : i32, i32, i32
  }
  func.func @transform_1(%arg0: i32) -> (i32, i32, i32) {
    %c0_i32 = arith.constant 0 : i32
    %c0_i32_0 = arith.constant 0 : i32
    %c0_i32_1 = arith.constant 0 : i32
    %c0_i32_2 = arith.constant 0 : i32
    return %c0_i32, %c0_i32_0, %c0_i32_1 : i32, i32, i32
  }
  func.func @transform_2(%arg0: i32) -> (i32, i32) {
    %c0_i32 = arith.constant 0 : i32
    %c0_i32_0 = arith.constant 0 : i32
    %c0_i32_1 = arith.constant 0 : i32
    return %c0_i32, %c0_i32_0 : i32, i32
  }
  func.func @transform_3(%arg0: i32) -> (i32, i32) {
    %c0_i32 = arith.constant 0 : i32
    %c0_i32_0 = arith.constant 0 : i32
    %c0_i32_1 = arith.constant 0 : i32
    return %c0_i32, %c0_i32_0 : i32, i32
  }
  func.func @transform_4(%arg0: i32) -> (i32, i32, i32) {
    %c0_i32 = arith.constant 0 : i32
    %c0_i32_0 = arith.constant 0 : i32
    %c0_i32_1 = arith.constant 0 : i32
    return %arg0, %c0_i32, %c0_i32_0 : i32, i32, i32
  }
}

module attributes {stable_mosaic.version = 11 : i64} {
  func.func @maxpool2x2_kernel(%arg0: i32, %arg1: memref<1x8x2x8x2x8xbf16, #tpu.memory_space<vmem>>, %arg2: memref<1x8x8x8xbf16, #tpu.memory_space<vmem>>) attributes {dimension_semantics = [#tpu.dimension_semantics<parallel>], iteration_bounds = array<i64: 2>, scalar_prefetch = 0 : i64, scratch_operands = 0 : i64, tpu.core_type = #tpu.core_type<tc>, window_params = [{transform_indices = @transform_0, window_bounds = array<i64: 1, 8, 2, 8, 2, 8>}, {transform_indices = @transform_1, window_bounds = array<i64: 1, 8, 8, 8>}]} {
    %c0 = arith.constant 0 : index
    %c0_0 = arith.constant 0 : index
    %c0_1 = arith.constant 0 : index
    %c0_2 = arith.constant 0 : index
    %c0_3 = arith.constant 0 : index
    %c0_4 = arith.constant 0 : index
    %0 = vector.load %arg1[%c0, %c0_0, %c0_1, %c0_2, %c0_3, %c0_4] : memref<1x8x2x8x2x8xbf16, #tpu.memory_space<vmem>>, vector<1x8x1x8x1x8xbf16>
    %1 = vector.shape_cast %0 : vector<1x8x1x8x1x8xbf16> to vector<8x8x8xbf16>
    %2 = arith.extf %1 : vector<8x8x8xbf16> to vector<8x8x8xf32>
    %c0_5 = arith.constant 0 : index
    %c0_6 = arith.constant 0 : index
    %c0_7 = arith.constant 0 : index
    %c0_8 = arith.constant 0 : index
    %c1 = arith.constant 1 : index
    %c0_9 = arith.constant 0 : index
    %3 = vector.load %arg1[%c0_5, %c0_6, %c0_7, %c0_8, %c1, %c0_9] : memref<1x8x2x8x2x8xbf16, #tpu.memory_space<vmem>>, vector<1x8x1x8x1x8xbf16>
    %4 = vector.shape_cast %3 : vector<1x8x1x8x1x8xbf16> to vector<8x8x8xbf16>
    %5 = arith.extf %4 : vector<8x8x8xbf16> to vector<8x8x8xf32>
    %c0_10 = arith.constant 0 : index
    %c0_11 = arith.constant 0 : index
    %c1_12 = arith.constant 1 : index
    %c0_13 = arith.constant 0 : index
    %c0_14 = arith.constant 0 : index
    %c0_15 = arith.constant 0 : index
    %6 = vector.load %arg1[%c0_10, %c0_11, %c1_12, %c0_13, %c0_14, %c0_15] : memref<1x8x2x8x2x8xbf16, #tpu.memory_space<vmem>>, vector<1x8x1x8x1x8xbf16>
    %7 = vector.shape_cast %6 : vector<1x8x1x8x1x8xbf16> to vector<8x8x8xbf16>
    %8 = arith.extf %7 : vector<8x8x8xbf16> to vector<8x8x8xf32>
    %c0_16 = arith.constant 0 : index
    %c0_17 = arith.constant 0 : index
    %c1_18 = arith.constant 1 : index
    %c0_19 = arith.constant 0 : index
    %c1_20 = arith.constant 1 : index
    %c0_21 = arith.constant 0 : index
    %9 = vector.load %arg1[%c0_16, %c0_17, %c1_18, %c0_19, %c1_20, %c0_21] : memref<1x8x2x8x2x8xbf16, #tpu.memory_space<vmem>>, vector<1x8x1x8x1x8xbf16>
    %10 = vector.shape_cast %9 : vector<1x8x1x8x1x8xbf16> to vector<8x8x8xbf16>
    %11 = arith.extf %10 : vector<8x8x8xbf16> to vector<8x8x8xf32>
    %12 = arith.maximumf %2, %5 : vector<8x8x8xf32>
    %13 = arith.maximumf %8, %11 : vector<8x8x8xf32>
    %14 = arith.maximumf %12, %13 : vector<8x8x8xf32>
    %15 = arith.truncf %14 : vector<8x8x8xf32> to vector<8x8x8xbf16>
    %c0_22 = arith.constant 0 : index
    %c0_23 = arith.constant 0 : index
    %c0_24 = arith.constant 0 : index
    %c0_25 = arith.constant 0 : index
    %16 = vector.load %arg2[%c0_22, %c0_23, %c0_24, %c0_25] : memref<1x8x8x8xbf16, #tpu.memory_space<vmem>>, vector<1x8x8x8xbf16>
    %17 = vector.shape_cast %16 : vector<1x8x8x8xbf16> to vector<8x8x8xbf16>
    %18 = vector.shape_cast %15 : vector<8x8x8xbf16> to vector<1x8x8x8xbf16>
    tpu.vector_store %arg2[%c0_22, %c0_23, %c0_24, %c0_25], %18 {strides = array<i32>} : memref<1x8x8x8xbf16, #tpu.memory_space<vmem>>, vector<1x8x8x8xbf16>,
    return
  }
  func.func @transform_0(%arg0: i32) -> (i32, i32, i32, i32, i32, i32) {
    %c0_i32 = arith.constant 0 : i32
    %c0_i32_0 = arith.constant 0 : i32
    %c0_i32_1 = arith.constant 0 : i32
    %c0_i32_2 = arith.constant 0 : i32
    %c0_i32_3 = arith.constant 0 : i32
    %c0_i32_4 = arith.constant 0 : i32
    return %arg0, %c0_i32, %c0_i32_0, %c0_i32_1, %c0_i32_2, %c0_i32_3 : i32, i32, i32, i32, i32, i32
  }
  func.func @transform_1(%arg0: i32) -> (i32, i32, i32, i32) {
    %c0_i32 = arith.constant 0 : i32
    %c0_i32_0 = arith.constant 0 : i32
    %c0_i32_1 = arith.constant 0 : i32
    %c0_i32_2 = arith.constant 0 : i32
    return %arg0, %c0_i32, %c0_i32_0, %c0_i32_1 : i32, i32, i32, i32
  }
}

module attributes {stable_mosaic.version = 11 : i64} {
  func.func @conv3x3_bn_kernel(%arg0: i32, %arg1: memref<1x8x64xbf16, #tpu.memory_space<vmem>>, %arg2: memref<3x64x128xbf16, #tpu.memory_space<vmem>>, %arg3: memref<1x128xf32, #tpu.memory_space<vmem>>, %arg4: memref<1x128xf32, #tpu.memory_space<vmem>>, %arg5: memref<1x8x128xbf16, #tpu.memory_space<vmem>>, %arg6: memref<8x128xf32, #tpu.memory_space<vmem>>) attributes {dimension_semantics = [#tpu.dimension_semantics<parallel>], iteration_bounds = array<i64: 2>, scalar_prefetch = 0 : i64, scratch_operands = 1 : i64, tpu.core_type = #tpu.core_type<tc>, window_params = [{transform_indices = @transform_0, window_bounds = array<i64: 1, 8, 64>}, {pipeline_mode = #tpu.pipeline_mode<synchronous>, transform_indices = @transform_1, window_bounds = array<i64: 3, 64, 128>}, {pipeline_mode = #tpu.pipeline_mode<synchronous>, transform_indices = @transform_2, window_bounds = array<i64: 1, 128>}, {pipeline_mode = #tpu.pipeline_mode<synchronous>, transform_indices = @transform_3, window_bounds = array<i64: 1, 128>}, {transform_indices = @transform_4, window_bounds = array<i64: 1, 8, 128>}]} {
    %c0 = arith.constant 0 : index
    %c0_0 = arith.constant 0 : index
    %c0_1 = arith.constant 0 : index
    %0 = vector.load %arg1[%c0, %c0_0, %c0_1] : memref<1x8x64xbf16, #tpu.memory_space<vmem>>, vector<1x8x64xbf16>
    %1 = vector.shape_cast %0 : vector<1x8x64xbf16> to vector<8x64xbf16>
    %c1 = arith.constant 1 : index
    %c0_2 = arith.constant 0 : index
    %c0_3 = arith.constant 0 : index
    %2 = vector.load %arg2[%c1, %c0_2, %c0_3] : memref<3x64x128xbf16, #tpu.memory_space<vmem>>, vector<1x64x128xbf16>
    %3 = vector.shape_cast %2 : vector<1x64x128xbf16> to vector<64x128xbf16>
    %cst = arith.constant dense<0.000000e+00> : vector<8x128xf32>
    %4 = tpu.matmul %1, %3, %cst {dimension_numbers = #tpu.dot_dimension_numbers<[1], [0], [0], [1], [0, 0, 1, 1], [], []>} : vector<8x64xbf16>, vector<64x128xbf16>, vector<8x128xf32> -> vector<8x128xf32>
    %c0_4 = arith.constant 0 : index
    %c0_5 = arith.constant 0 : index
    %5 = vector.load %arg6[%c0_4, %c0_5] : memref<8x128xf32, #tpu.memory_space<vmem>>, vector<8x128xf32>
    tpu.vector_store %arg6[%c0_4, %c0_5], %4 {strides = array<i32>} : memref<8x128xf32, #tpu.memory_space<vmem>>, vector<8x128xf32>,
    %c1_6 = arith.constant 1 : index
    %c0_7 = arith.constant 0 : index
    %6 = vector.load %arg6[%c1_6, %c0_7] : memref<8x128xf32, #tpu.memory_space<vmem>>, vector<7x128xf32>
    %c0_8 = arith.constant 0 : index
    %c0_9 = arith.constant 0 : index
    %c0_10 = arith.constant 0 : index
    %7 = vector.load %arg1[%c0_8, %c0_9, %c0_10] : memref<1x8x64xbf16, #tpu.memory_space<vmem>>, vector<1x7x64xbf16>
    %8 = vector.shape_cast %7 : vector<1x7x64xbf16> to vector<7x64xbf16>
    %c0_11 = arith.constant 0 : index
    %c0_12 = arith.constant 0 : index
    %c0_13 = arith.constant 0 : index
    %9 = vector.load %arg2[%c0_11, %c0_12, %c0_13] : memref<3x64x128xbf16, #tpu.memory_space<vmem>>, vector<1x64x128xbf16>
    %10 = vector.shape_cast %9 : vector<1x64x128xbf16> to vector<64x128xbf16>
    %cst_14 = arith.constant dense<0.000000e+00> : vector<7x128xf32>
    %11 = tpu.matmul %8, %10, %cst_14 {dimension_numbers = #tpu.dot_dimension_numbers<[1], [0], [0], [1], [0, 0, 1, 1], [], []>} : vector<7x64xbf16>, vector<64x128xbf16>, vector<7x128xf32> -> vector<7x128xf32>
    %12 = arith.addf %6, %11 : vector<7x128xf32>
    %c1_15 = arith.constant 1 : index
    %c0_16 = arith.constant 0 : index
    %13 = vector.load %arg6[%c1_15, %c0_16] : memref<8x128xf32, #tpu.memory_space<vmem>>, vector<7x128xf32>
    tpu.vector_store %arg6[%c1_15, %c0_16], %12 {strides = array<i32>} : memref<8x128xf32, #tpu.memory_space<vmem>>, vector<7x128xf32>,
    %c0_17 = arith.constant 0 : index
    %c0_18 = arith.constant 0 : index
    %14 = vector.load %arg6[%c0_17, %c0_18] : memref<8x128xf32, #tpu.memory_space<vmem>>, vector<7x128xf32>
    %c0_19 = arith.constant 0 : index
    %c1_20 = arith.constant 1 : index
    %c0_21 = arith.constant 0 : index
    %15 = vector.load %arg1[%c0_19, %c1_20, %c0_21] : memref<1x8x64xbf16, #tpu.memory_space<vmem>>, vector<1x7x64xbf16>
    %16 = vector.shape_cast %15 : vector<1x7x64xbf16> to vector<7x64xbf16>
    %c2 = arith.constant 2 : index
    %c0_22 = arith.constant 0 : index
    %c0_23 = arith.constant 0 : index
    %17 = vector.load %arg2[%c2, %c0_22, %c0_23] : memref<3x64x128xbf16, #tpu.memory_space<vmem>>, vector<1x64x128xbf16>
    %18 = vector.shape_cast %17 : vector<1x64x128xbf16> to vector<64x128xbf16>
    %cst_24 = arith.constant dense<0.000000e+00> : vector<7x128xf32>
    %19 = tpu.matmul %16, %18, %cst_24 {dimension_numbers = #tpu.dot_dimension_numbers<[1], [0], [0], [1], [0, 0, 1, 1], [], []>} : vector<7x64xbf16>, vector<64x128xbf16>, vector<7x128xf32> -> vector<7x128xf32>
    %20 = arith.addf %14, %19 : vector<7x128xf32>
    %c0_25 = arith.constant 0 : index
    %c0_26 = arith.constant 0 : index
    %21 = vector.load %arg6[%c0_25, %c0_26] : memref<8x128xf32, #tpu.memory_space<vmem>>, vector<7x128xf32>
    tpu.vector_store %arg6[%c0_25, %c0_26], %20 {strides = array<i32>} : memref<8x128xf32, #tpu.memory_space<vmem>>, vector<7x128xf32>,
    %c0_27 = arith.constant 0 : index
    %c0_28 = arith.constant 0 : index
    %22 = vector.load %arg6[%c0_27, %c0_28] : memref<8x128xf32, #tpu.memory_space<vmem>>, vector<8x128xf32>
    %c0_29 = arith.constant 0 : index
    %c0_30 = arith.constant 0 : index
    %23 = vector.load %arg3[%c0_29, %c0_30] : memref<1x128xf32, #tpu.memory_space<vmem>>, vector<1x128xf32>
    %24 = vector.broadcast %23 : vector<1x128xf32> to vector<8x128xf32>
    %25 = arith.mulf %22, %24 : vector<8x128xf32>
    %c0_31 = arith.constant 0 : index
    %c0_32 = arith.constant 0 : index
    %26 = vector.load %arg4[%c0_31, %c0_32] : memref<1x128xf32, #tpu.memory_space<vmem>>, vector<1x128xf32>
    %27 = vector.broadcast %26 : vector<1x128xf32> to vector<8x128xf32>
    %28 = arith.addf %25, %27 : vector<8x128xf32>
    %cst_33 = arith.constant 0.000000e+00 : f32
    %29 = vector.broadcast %cst_33 : f32 to vector<8x128xf32>
    %30 = arith.maximumf %28, %29 : vector<8x128xf32>
    %31 = arith.truncf %30 : vector<8x128xf32> to vector<8x128xbf16>
    %c0_34 = arith.constant 0 : index
    %c0_35 = arith.constant 0 : index
    %c0_36 = arith.constant 0 : index
    %32 = vector.load %arg5[%c0_34, %c0_35, %c0_36] : memref<1x8x128xbf16, #tpu.memory_space<vmem>>, vector<1x8x128xbf16>
    %33 = vector.shape_cast %32 : vector<1x8x128xbf16> to vector<8x128xbf16>
    %34 = vector.shape_cast %31 : vector<8x128xbf16> to vector<1x8x128xbf16>
    tpu.vector_store %arg5[%c0_34, %c0_35, %c0_36], %34 {strides = array<i32>} : memref<1x8x128xbf16, #tpu.memory_space<vmem>>, vector<1x8x128xbf16>,
    return
  }
  func.func @transform_0(%arg0: i32) -> (i32, i32, i32) {
    %c0_i32 = arith.constant 0 : i32
    %c0_i32_0 = arith.constant 0 : i32
    %c0_i32_1 = arith.constant 0 : i32
    return %arg0, %c0_i32, %c0_i32_0 : i32, i32, i32
  }
  func.func @transform_1(%arg0: i32) -> (i32, i32, i32) {
    %c0_i32 = arith.constant 0 : i32
    %c0_i32_0 = arith.constant 0 : i32
    %c0_i32_1 = arith.constant 0 : i32
    %c0_i32_2 = arith.constant 0 : i32
    return %c0_i32, %c0_i32_0, %c0_i32_1 : i32, i32, i32
  }
  func.func @transform_2(%arg0: i32) -> (i32, i32) {
    %c0_i32 = arith.constant 0 : i32
    %c0_i32_0 = arith.constant 0 : i32
    %c0_i32_1 = arith.constant 0 : i32
    return %c0_i32, %c0_i32_0 : i32, i32
  }
  func.func @transform_3(%arg0: i32) -> (i32, i32) {
    %c0_i32 = arith.constant 0 : i32
    %c0_i32_0 = arith.constant 0 : i32
    %c0_i32_1 = arith.constant 0 : i32
    return %c0_i32, %c0_i32_0 : i32, i32
  }
  func.func @transform_4(%arg0: i32) -> (i32, i32, i32) {
    %c0_i32 = arith.constant 0 : i32
    %c0_i32_0 = arith.constant 0 : i32
    %c0_i32_1 = arith.constant 0 : i32
    return %arg0, %c0_i32, %c0_i32_0 : i32, i32, i32
  }
}

module attributes {stable_mosaic.version = 11 : i64} {
  func.func @conv3x3_bn_kernel(%arg0: i32, %arg1: memref<1x8x128xbf16, #tpu.memory_space<vmem>>, %arg2: memref<3x128x128xbf16, #tpu.memory_space<vmem>>, %arg3: memref<1x128xf32, #tpu.memory_space<vmem>>, %arg4: memref<1x128xf32, #tpu.memory_space<vmem>>, %arg5: memref<1x8x128xbf16, #tpu.memory_space<vmem>>, %arg6: memref<8x128xf32, #tpu.memory_space<vmem>>) attributes {dimension_semantics = [#tpu.dimension_semantics<parallel>], iteration_bounds = array<i64: 2>, scalar_prefetch = 0 : i64, scratch_operands = 1 : i64, tpu.core_type = #tpu.core_type<tc>, window_params = [{transform_indices = @transform_0, window_bounds = array<i64: 1, 8, 128>}, {pipeline_mode = #tpu.pipeline_mode<synchronous>, transform_indices = @transform_1, window_bounds = array<i64: 3, 128, 128>}, {pipeline_mode = #tpu.pipeline_mode<synchronous>, transform_indices = @transform_2, window_bounds = array<i64: 1, 128>}, {pipeline_mode = #tpu.pipeline_mode<synchronous>, transform_indices = @transform_3, window_bounds = array<i64: 1, 128>}, {transform_indices = @transform_4, window_bounds = array<i64: 1, 8, 128>}]} {
    %c0 = arith.constant 0 : index
    %c0_0 = arith.constant 0 : index
    %c0_1 = arith.constant 0 : index
    %0 = vector.load %arg1[%c0, %c0_0, %c0_1] : memref<1x8x128xbf16, #tpu.memory_space<vmem>>, vector<1x8x128xbf16>
    %1 = vector.shape_cast %0 : vector<1x8x128xbf16> to vector<8x128xbf16>
    %c1 = arith.constant 1 : index
    %c0_2 = arith.constant 0 : index
    %c0_3 = arith.constant 0 : index
    %2 = vector.load %arg2[%c1, %c0_2, %c0_3] : memref<3x128x128xbf16, #tpu.memory_space<vmem>>, vector<1x128x128xbf16>
    %3 = vector.shape_cast %2 : vector<1x128x128xbf16> to vector<128x128xbf16>
    %cst = arith.constant dense<0.000000e+00> : vector<8x128xf32>
    %4 = tpu.matmul %1, %3, %cst {dimension_numbers = #tpu.dot_dimension_numbers<[1], [0], [0], [1], [0, 0, 1, 1], [], []>} : vector<8x128xbf16>, vector<128x128xbf16>, vector<8x128xf32> -> vector<8x128xf32>
    %c0_4 = arith.constant 0 : index
    %c0_5 = arith.constant 0 : index
    %5 = vector.load %arg6[%c0_4, %c0_5] : memref<8x128xf32, #tpu.memory_space<vmem>>, vector<8x128xf32>
    tpu.vector_store %arg6[%c0_4, %c0_5], %4 {strides = array<i32>} : memref<8x128xf32, #tpu.memory_space<vmem>>, vector<8x128xf32>,
    %c1_6 = arith.constant 1 : index
    %c0_7 = arith.constant 0 : index
    %6 = vector.load %arg6[%c1_6, %c0_7] : memref<8x128xf32, #tpu.memory_space<vmem>>, vector<7x128xf32>
    %c0_8 = arith.constant 0 : index
    %c0_9 = arith.constant 0 : index
    %c0_10 = arith.constant 0 : index
    %7 = vector.load %arg1[%c0_8, %c0_9, %c0_10] : memref<1x8x128xbf16, #tpu.memory_space<vmem>>, vector<1x7x128xbf16>
    %8 = vector.shape_cast %7 : vector<1x7x128xbf16> to vector<7x128xbf16>
    %c0_11 = arith.constant 0 : index
    %c0_12 = arith.constant 0 : index
    %c0_13 = arith.constant 0 : index
    %9 = vector.load %arg2[%c0_11, %c0_12, %c0_13] : memref<3x128x128xbf16, #tpu.memory_space<vmem>>, vector<1x128x128xbf16>
    %10 = vector.shape_cast %9 : vector<1x128x128xbf16> to vector<128x128xbf16>
    %cst_14 = arith.constant dense<0.000000e+00> : vector<7x128xf32>
    %11 = tpu.matmul %8, %10, %cst_14 {dimension_numbers = #tpu.dot_dimension_numbers<[1], [0], [0], [1], [0, 0, 1, 1], [], []>} : vector<7x128xbf16>, vector<128x128xbf16>, vector<7x128xf32> -> vector<7x128xf32>
    %12 = arith.addf %6, %11 : vector<7x128xf32>
    %c1_15 = arith.constant 1 : index
    %c0_16 = arith.constant 0 : index
    %13 = vector.load %arg6[%c1_15, %c0_16] : memref<8x128xf32, #tpu.memory_space<vmem>>, vector<7x128xf32>
    tpu.vector_store %arg6[%c1_15, %c0_16], %12 {strides = array<i32>} : memref<8x128xf32, #tpu.memory_space<vmem>>, vector<7x128xf32>,
    %c0_17 = arith.constant 0 : index
    %c0_18 = arith.constant 0 : index
    %14 = vector.load %arg6[%c0_17, %c0_18] : memref<8x128xf32, #tpu.memory_space<vmem>>, vector<7x128xf32>
    %c0_19 = arith.constant 0 : index
    %c1_20 = arith.constant 1 : index
    %c0_21 = arith.constant 0 : index
    %15 = vector.load %arg1[%c0_19, %c1_20, %c0_21] : memref<1x8x128xbf16, #tpu.memory_space<vmem>>, vector<1x7x128xbf16>
    %16 = vector.shape_cast %15 : vector<1x7x128xbf16> to vector<7x128xbf16>
    %c2 = arith.constant 2 : index
    %c0_22 = arith.constant 0 : index
    %c0_23 = arith.constant 0 : index
    %17 = vector.load %arg2[%c2, %c0_22, %c0_23] : memref<3x128x128xbf16, #tpu.memory_space<vmem>>, vector<1x128x128xbf16>
    %18 = vector.shape_cast %17 : vector<1x128x128xbf16> to vector<128x128xbf16>
    %cst_24 = arith.constant dense<0.000000e+00> : vector<7x128xf32>
    %19 = tpu.matmul %16, %18, %cst_24 {dimension_numbers = #tpu.dot_dimension_numbers<[1], [0], [0], [1], [0, 0, 1, 1], [], []>} : vector<7x128xbf16>, vector<128x128xbf16>, vector<7x128xf32> -> vector<7x128xf32>
    %20 = arith.addf %14, %19 : vector<7x128xf32>
    %c0_25 = arith.constant 0 : index
    %c0_26 = arith.constant 0 : index
    %21 = vector.load %arg6[%c0_25, %c0_26] : memref<8x128xf32, #tpu.memory_space<vmem>>, vector<7x128xf32>
    tpu.vector_store %arg6[%c0_25, %c0_26], %20 {strides = array<i32>} : memref<8x128xf32, #tpu.memory_space<vmem>>, vector<7x128xf32>,
    %c0_27 = arith.constant 0 : index
    %c0_28 = arith.constant 0 : index
    %22 = vector.load %arg6[%c0_27, %c0_28] : memref<8x128xf32, #tpu.memory_space<vmem>>, vector<8x128xf32>
    %c0_29 = arith.constant 0 : index
    %c0_30 = arith.constant 0 : index
    %23 = vector.load %arg3[%c0_29, %c0_30] : memref<1x128xf32, #tpu.memory_space<vmem>>, vector<1x128xf32>
    %24 = vector.broadcast %23 : vector<1x128xf32> to vector<8x128xf32>
    %25 = arith.mulf %22, %24 : vector<8x128xf32>
    %c0_31 = arith.constant 0 : index
    %c0_32 = arith.constant 0 : index
    %26 = vector.load %arg4[%c0_31, %c0_32] : memref<1x128xf32, #tpu.memory_space<vmem>>, vector<1x128xf32>
    %27 = vector.broadcast %26 : vector<1x128xf32> to vector<8x128xf32>
    %28 = arith.addf %25, %27 : vector<8x128xf32>
    %cst_33 = arith.constant 0.000000e+00 : f32
    %29 = vector.broadcast %cst_33 : f32 to vector<8x128xf32>
    %30 = arith.maximumf %28, %29 : vector<8x128xf32>
    %31 = arith.truncf %30 : vector<8x128xf32> to vector<8x128xbf16>
    %c0_34 = arith.constant 0 : index
    %c0_35 = arith.constant 0 : index
    %c0_36 = arith.constant 0 : index
    %32 = vector.load %arg5[%c0_34, %c0_35, %c0_36] : memref<1x8x128xbf16, #tpu.memory_space<vmem>>, vector<1x8x128xbf16>
    %33 = vector.shape_cast %32 : vector<1x8x128xbf16> to vector<8x128xbf16>
    %34 = vector.shape_cast %31 : vector<8x128xbf16> to vector<1x8x128xbf16>
    tpu.vector_store %arg5[%c0_34, %c0_35, %c0_36], %34 {strides = array<i32>} : memref<1x8x128xbf16, #tpu.memory_space<vmem>>, vector<1x8x128xbf16>,
    return
  }
  func.func @transform_0(%arg0: i32) -> (i32, i32, i32) {
    %c0_i32 = arith.constant 0 : i32
    %c0_i32_0 = arith.constant 0 : i32
    %c0_i32_1 = arith.constant 0 : i32
    return %arg0, %c0_i32, %c0_i32_0 : i32, i32, i32
  }
  func.func @transform_1(%arg0: i32) -> (i32, i32, i32) {
    %c0_i32 = arith.constant 0 : i32
    %c0_i32_0 = arith.constant 0 : i32
    %c0_i32_1 = arith.constant 0 : i32
    %c0_i32_2 = arith.constant 0 : i32
    return %c0_i32, %c0_i32_0, %c0_i32_1 : i32, i32, i32
  }
  func.func @transform_2(%arg0: i32) -> (i32, i32) {
    %c0_i32 = arith.constant 0 : i32
    %c0_i32_0 = arith.constant 0 : i32
    %c0_i32_1 = arith.constant 0 : i32
    return %c0_i32, %c0_i32_0 : i32, i32
  }
  func.func @transform_3(%arg0: i32) -> (i32, i32) {
    %c0_i32 = arith.constant 0 : i32
    %c0_i32_0 = arith.constant 0 : i32
    %c0_i32_1 = arith.constant 0 : i32
    return %c0_i32, %c0_i32_0 : i32, i32
  }
  func.func @transform_4(%arg0: i32) -> (i32, i32, i32) {
    %c0_i32 = arith.constant 0 : i32
    %c0_i32_0 = arith.constant 0 : i32
    %c0_i32_1 = arith.constant 0 : i32
    return %arg0, %c0_i32, %c0_i32_0 : i32, i32, i32
  }
}

module attributes {stable_mosaic.version = 11 : i64} {
  func.func @maxpool2x2_kernel(%arg0: i32, %arg1: memref<1x4x2x4x2x16xbf16, #tpu.memory_space<vmem>>, %arg2: memref<1x4x4x16xbf16, #tpu.memory_space<vmem>>) attributes {dimension_semantics = [#tpu.dimension_semantics<parallel>], iteration_bounds = array<i64: 2>, scalar_prefetch = 0 : i64, scratch_operands = 0 : i64, tpu.core_type = #tpu.core_type<tc>, window_params = [{transform_indices = @transform_0, window_bounds = array<i64: 1, 4, 2, 4, 2, 16>}, {transform_indices = @transform_1, window_bounds = array<i64: 1, 4, 4, 16>}]} {
    %c0 = arith.constant 0 : index
    %c0_0 = arith.constant 0 : index
    %c0_1 = arith.constant 0 : index
    %c0_2 = arith.constant 0 : index
    %c0_3 = arith.constant 0 : index
    %c0_4 = arith.constant 0 : index
    %0 = vector.load %arg1[%c0, %c0_0, %c0_1, %c0_2, %c0_3, %c0_4] : memref<1x4x2x4x2x16xbf16, #tpu.memory_space<vmem>>, vector<1x4x1x4x1x16xbf16>
    %1 = vector.shape_cast %0 : vector<1x4x1x4x1x16xbf16> to vector<4x4x16xbf16>
    %2 = arith.extf %1 : vector<4x4x16xbf16> to vector<4x4x16xf32>
    %c0_5 = arith.constant 0 : index
    %c0_6 = arith.constant 0 : index
    %c0_7 = arith.constant 0 : index
    %c0_8 = arith.constant 0 : index
    %c1 = arith.constant 1 : index
    %c0_9 = arith.constant 0 : index
    %3 = vector.load %arg1[%c0_5, %c0_6, %c0_7, %c0_8, %c1, %c0_9] : memref<1x4x2x4x2x16xbf16, #tpu.memory_space<vmem>>, vector<1x4x1x4x1x16xbf16>
    %4 = vector.shape_cast %3 : vector<1x4x1x4x1x16xbf16> to vector<4x4x16xbf16>
    %5 = arith.extf %4 : vector<4x4x16xbf16> to vector<4x4x16xf32>
    %c0_10 = arith.constant 0 : index
    %c0_11 = arith.constant 0 : index
    %c1_12 = arith.constant 1 : index
    %c0_13 = arith.constant 0 : index
    %c0_14 = arith.constant 0 : index
    %c0_15 = arith.constant 0 : index
    %6 = vector.load %arg1[%c0_10, %c0_11, %c1_12, %c0_13, %c0_14, %c0_15] : memref<1x4x2x4x2x16xbf16, #tpu.memory_space<vmem>>, vector<1x4x1x4x1x16xbf16>
    %7 = vector.shape_cast %6 : vector<1x4x1x4x1x16xbf16> to vector<4x4x16xbf16>
    %8 = arith.extf %7 : vector<4x4x16xbf16> to vector<4x4x16xf32>
    %c0_16 = arith.constant 0 : index
    %c0_17 = arith.constant 0 : index
    %c1_18 = arith.constant 1 : index
    %c0_19 = arith.constant 0 : index
    %c1_20 = arith.constant 1 : index
    %c0_21 = arith.constant 0 : index
    %9 = vector.load %arg1[%c0_16, %c0_17, %c1_18, %c0_19, %c1_20, %c0_21] : memref<1x4x2x4x2x16xbf16, #tpu.memory_space<vmem>>, vector<1x4x1x4x1x16xbf16>
    %10 = vector.shape_cast %9 : vector<1x4x1x4x1x16xbf16> to vector<4x4x16xbf16>
    %11 = arith.extf %10 : vector<4x4x16xbf16> to vector<4x4x16xf32>
    %12 = arith.maximumf %2, %5 : vector<4x4x16xf32>
    %13 = arith.maximumf %8, %11 : vector<4x4x16xf32>
    %14 = arith.maximumf %12, %13 : vector<4x4x16xf32>
    %15 = arith.truncf %14 : vector<4x4x16xf32> to vector<4x4x16xbf16>
    %c0_22 = arith.constant 0 : index
    %c0_23 = arith.constant 0 : index
    %c0_24 = arith.constant 0 : index
    %c0_25 = arith.constant 0 : index
    %16 = vector.load %arg2[%c0_22, %c0_23, %c0_24, %c0_25] : memref<1x4x4x16xbf16, #tpu.memory_space<vmem>>, vector<1x4x4x16xbf16>
    %17 = vector.shape_cast %16 : vector<1x4x4x16xbf16> to vector<4x4x16xbf16>
    %18 = vector.shape_cast %15 : vector<4x4x16xbf16> to vector<1x4x4x16xbf16>
    tpu.vector_store %arg2[%c0_22, %c0_23, %c0_24, %c0_25], %18 {strides = array<i32>} : memref<1x4x4x16xbf16, #tpu.memory_space<vmem>>, vector<1x4x4x16xbf16>,
    return
  }
  func.func @transform_0(%arg0: i32) -> (i32, i32, i32, i32, i32, i32) {
    %c0_i32 = arith.constant 0 : i32
    %c0_i32_0 = arith.constant 0 : i32
    %c0_i32_1 = arith.constant 0 : i32
    %c0_i32_2 = arith.constant 0 : i32
    %c0_i32_3 = arith.constant 0 : i32
    %c0_i32_4 = arith.constant 0 : i32
    return %arg0, %c0_i32, %c0_i32_0, %c0_i32_1, %c0_i32_2, %c0_i32_3 : i32, i32, i32, i32, i32, i32
  }
  func.func @transform_1(%arg0: i32) -> (i32, i32, i32, i32) {
    %c0_i32 = arith.constant 0 : i32
    %c0_i32_0 = arith.constant 0 : i32
    %c0_i32_1 = arith.constant 0 : i32
    %c0_i32_2 = arith.constant 0 : i32
    return %arg0, %c0_i32, %c0_i32_0, %c0_i32_1 : i32, i32, i32, i32
  }
}

module attributes {stable_mosaic.version = 11 : i64} {
  func.func @conv3x3_bn_kernel(%arg0: i32, %arg1: memref<1x4x64xbf16, #tpu.memory_space<vmem>>, %arg2: memref<3x64x128xbf16, #tpu.memory_space<vmem>>, %arg3: memref<1x128xf32, #tpu.memory_space<vmem>>, %arg4: memref<1x128xf32, #tpu.memory_space<vmem>>, %arg5: memref<1x4x128xbf16, #tpu.memory_space<vmem>>, %arg6: memref<4x128xf32, #tpu.memory_space<vmem>>) attributes {dimension_semantics = [#tpu.dimension_semantics<parallel>], iteration_bounds = array<i64: 2>, scalar_prefetch = 0 : i64, scratch_operands = 1 : i64, tpu.core_type = #tpu.core_type<tc>, window_params = [{transform_indices = @transform_0, window_bounds = array<i64: 1, 4, 64>}, {pipeline_mode = #tpu.pipeline_mode<synchronous>, transform_indices = @transform_1, window_bounds = array<i64: 3, 64, 128>}, {pipeline_mode = #tpu.pipeline_mode<synchronous>, transform_indices = @transform_2, window_bounds = array<i64: 1, 128>}, {pipeline_mode = #tpu.pipeline_mode<synchronous>, transform_indices = @transform_3, window_bounds = array<i64: 1, 128>}, {transform_indices = @transform_4, window_bounds = array<i64: 1, 4, 128>}]} {
    %c0 = arith.constant 0 : index
    %c0_0 = arith.constant 0 : index
    %c0_1 = arith.constant 0 : index
    %0 = vector.load %arg1[%c0, %c0_0, %c0_1] : memref<1x4x64xbf16, #tpu.memory_space<vmem>>, vector<1x4x64xbf16>
    %1 = vector.shape_cast %0 : vector<1x4x64xbf16> to vector<4x64xbf16>
    %c1 = arith.constant 1 : index
    %c0_2 = arith.constant 0 : index
    %c0_3 = arith.constant 0 : index
    %2 = vector.load %arg2[%c1, %c0_2, %c0_3] : memref<3x64x128xbf16, #tpu.memory_space<vmem>>, vector<1x64x128xbf16>
    %3 = vector.shape_cast %2 : vector<1x64x128xbf16> to vector<64x128xbf16>
    %cst = arith.constant dense<0.000000e+00> : vector<4x128xf32>
    %4 = tpu.matmul %1, %3, %cst {dimension_numbers = #tpu.dot_dimension_numbers<[1], [0], [0], [1], [0, 0, 1, 1], [], []>} : vector<4x64xbf16>, vector<64x128xbf16>, vector<4x128xf32> -> vector<4x128xf32>
    %c0_4 = arith.constant 0 : index
    %c0_5 = arith.constant 0 : index
    %5 = vector.load %arg6[%c0_4, %c0_5] : memref<4x128xf32, #tpu.memory_space<vmem>>, vector<4x128xf32>
    tpu.vector_store %arg6[%c0_4, %c0_5], %4 {strides = array<i32>} : memref<4x128xf32, #tpu.memory_space<vmem>>, vector<4x128xf32>,
    %c1_6 = arith.constant 1 : index
    %c0_7 = arith.constant 0 : index
    %6 = vector.load %arg6[%c1_6, %c0_7] : memref<4x128xf32, #tpu.memory_space<vmem>>, vector<3x128xf32>
    %c0_8 = arith.constant 0 : index
    %c0_9 = arith.constant 0 : index
    %c0_10 = arith.constant 0 : index
    %7 = vector.load %arg1[%c0_8, %c0_9, %c0_10] : memref<1x4x64xbf16, #tpu.memory_space<vmem>>, vector<1x3x64xbf16>
    %8 = vector.shape_cast %7 : vector<1x3x64xbf16> to vector<3x64xbf16>
    %c0_11 = arith.constant 0 : index
    %c0_12 = arith.constant 0 : index
    %c0_13 = arith.constant 0 : index
    %9 = vector.load %arg2[%c0_11, %c0_12, %c0_13] : memref<3x64x128xbf16, #tpu.memory_space<vmem>>, vector<1x64x128xbf16>
    %10 = vector.shape_cast %9 : vector<1x64x128xbf16> to vector<64x128xbf16>
    %cst_14 = arith.constant dense<0.000000e+00> : vector<3x128xf32>
    %11 = tpu.matmul %8, %10, %cst_14 {dimension_numbers = #tpu.dot_dimension_numbers<[1], [0], [0], [1], [0, 0, 1, 1], [], []>} : vector<3x64xbf16>, vector<64x128xbf16>, vector<3x128xf32> -> vector<3x128xf32>
    %12 = arith.addf %6, %11 : vector<3x128xf32>
    %c1_15 = arith.constant 1 : index
    %c0_16 = arith.constant 0 : index
    %13 = vector.load %arg6[%c1_15, %c0_16] : memref<4x128xf32, #tpu.memory_space<vmem>>, vector<3x128xf32>
    tpu.vector_store %arg6[%c1_15, %c0_16], %12 {strides = array<i32>} : memref<4x128xf32, #tpu.memory_space<vmem>>, vector<3x128xf32>,
    %c0_17 = arith.constant 0 : index
    %c0_18 = arith.constant 0 : index
    %14 = vector.load %arg6[%c0_17, %c0_18] : memref<4x128xf32, #tpu.memory_space<vmem>>, vector<3x128xf32>
    %c0_19 = arith.constant 0 : index
    %c1_20 = arith.constant 1 : index
    %c0_21 = arith.constant 0 : index
    %15 = vector.load %arg1[%c0_19, %c1_20, %c0_21] : memref<1x4x64xbf16, #tpu.memory_space<vmem>>, vector<1x3x64xbf16>
    %16 = vector.shape_cast %15 : vector<1x3x64xbf16> to vector<3x64xbf16>
    %c2 = arith.constant 2 : index
    %c0_22 = arith.constant 0 : index
    %c0_23 = arith.constant 0 : index
    %17 = vector.load %arg2[%c2, %c0_22, %c0_23] : memref<3x64x128xbf16, #tpu.memory_space<vmem>>, vector<1x64x128xbf16>
    %18 = vector.shape_cast %17 : vector<1x64x128xbf16> to vector<64x128xbf16>
    %cst_24 = arith.constant dense<0.000000e+00> : vector<3x128xf32>
    %19 = tpu.matmul %16, %18, %cst_24 {dimension_numbers = #tpu.dot_dimension_numbers<[1], [0], [0], [1], [0, 0, 1, 1], [], []>} : vector<3x64xbf16>, vector<64x128xbf16>, vector<3x128xf32> -> vector<3x128xf32>
    %20 = arith.addf %14, %19 : vector<3x128xf32>
    %c0_25 = arith.constant 0 : index
    %c0_26 = arith.constant 0 : index
    %21 = vector.load %arg6[%c0_25, %c0_26] : memref<4x128xf32, #tpu.memory_space<vmem>>, vector<3x128xf32>
    tpu.vector_store %arg6[%c0_25, %c0_26], %20 {strides = array<i32>} : memref<4x128xf32, #tpu.memory_space<vmem>>, vector<3x128xf32>,
    %c0_27 = arith.constant 0 : index
    %c0_28 = arith.constant 0 : index
    %22 = vector.load %arg6[%c0_27, %c0_28] : memref<4x128xf32, #tpu.memory_space<vmem>>, vector<4x128xf32>
    %c0_29 = arith.constant 0 : index
    %c0_30 = arith.constant 0 : index
    %23 = vector.load %arg3[%c0_29, %c0_30] : memref<1x128xf32, #tpu.memory_space<vmem>>, vector<1x128xf32>
    %24 = vector.broadcast %23 : vector<1x128xf32> to vector<4x128xf32>
    %25 = arith.mulf %22, %24 : vector<4x128xf32>
    %c0_31 = arith.constant 0 : index
    %c0_32 = arith.constant 0 : index
    %26 = vector.load %arg4[%c0_31, %c0_32] : memref<1x128xf32, #tpu.memory_space<vmem>>, vector<1x128xf32>
    %27 = vector.broadcast %26 : vector<1x128xf32> to vector<4x128xf32>
    %28 = arith.addf %25, %27 : vector<4x128xf32>
    %cst_33 = arith.constant 0.000000e+00 : f32
    %29 = vector.broadcast %cst_33 : f32 to vector<4x128xf32>
    %30 = arith.maximumf %28, %29 : vector<4x128xf32>
    %31 = arith.truncf %30 : vector<4x128xf32> to vector<4x128xbf16>
    %c0_34 = arith.constant 0 : index
    %c0_35 = arith.constant 0 : index
    %c0_36 = arith.constant 0 : index
    %32 = vector.load %arg5[%c0_34, %c0_35, %c0_36] : memref<1x4x128xbf16, #tpu.memory_space<vmem>>, vector<1x4x128xbf16>
    %33 = vector.shape_cast %32 : vector<1x4x128xbf16> to vector<4x128xbf16>
    %34 = vector.shape_cast %31 : vector<4x128xbf16> to vector<1x4x128xbf16>
    tpu.vector_store %arg5[%c0_34, %c0_35, %c0_36], %34 {strides = array<i32>} : memref<1x4x128xbf16, #tpu.memory_space<vmem>>, vector<1x4x128xbf16>,
    return
  }
  func.func @transform_0(%arg0: i32) -> (i32, i32, i32) {
    %c0_i32 = arith.constant 0 : i32
    %c0_i32_0 = arith.constant 0 : i32
    %c0_i32_1 = arith.constant 0 : i32
    return %arg0, %c0_i32, %c0_i32_0 : i32, i32, i32
  }
  func.func @transform_1(%arg0: i32) -> (i32, i32, i32) {
    %c0_i32 = arith.constant 0 : i32
    %c0_i32_0 = arith.constant 0 : i32
    %c0_i32_1 = arith.constant 0 : i32
    %c0_i32_2 = arith.constant 0 : i32
    return %c0_i32, %c0_i32_0, %c0_i32_1 : i32, i32, i32
  }
  func.func @transform_2(%arg0: i32) -> (i32, i32) {
    %c0_i32 = arith.constant 0 : i32
    %c0_i32_0 = arith.constant 0 : i32
    %c0_i32_1 = arith.constant 0 : i32
    return %c0_i32, %c0_i32_0 : i32, i32
  }
  func.func @transform_3(%arg0: i32) -> (i32, i32) {
    %c0_i32 = arith.constant 0 : i32
    %c0_i32_0 = arith.constant 0 : i32
    %c0_i32_1 = arith.constant 0 : i32
    return %c0_i32, %c0_i32_0 : i32, i32
  }
  func.func @transform_4(%arg0: i32) -> (i32, i32, i32) {
    %c0_i32 = arith.constant 0 : i32
    %c0_i32_0 = arith.constant 0 : i32
    %c0_i32_1 = arith.constant 0 : i32
    return %arg0, %c0_i32, %c0_i32_0 : i32, i32, i32
  }
}

module attributes {stable_mosaic.version = 11 : i64} {
  func.func @conv3x3_bn_kernel(%arg0: i32, %arg1: memref<1x4x128xbf16, #tpu.memory_space<vmem>>, %arg2: memref<3x128x128xbf16, #tpu.memory_space<vmem>>, %arg3: memref<1x128xf32, #tpu.memory_space<vmem>>, %arg4: memref<1x128xf32, #tpu.memory_space<vmem>>, %arg5: memref<1x4x128xbf16, #tpu.memory_space<vmem>>, %arg6: memref<4x128xf32, #tpu.memory_space<vmem>>) attributes {dimension_semantics = [#tpu.dimension_semantics<parallel>], iteration_bounds = array<i64: 2>, scalar_prefetch = 0 : i64, scratch_operands = 1 : i64, tpu.core_type = #tpu.core_type<tc>, window_params = [{transform_indices = @transform_0, window_bounds = array<i64: 1, 4, 128>}, {pipeline_mode = #tpu.pipeline_mode<synchronous>, transform_indices = @transform_1, window_bounds = array<i64: 3, 128, 128>}, {pipeline_mode = #tpu.pipeline_mode<synchronous>, transform_indices = @transform_2, window_bounds = array<i64: 1, 128>}, {pipeline_mode = #tpu.pipeline_mode<synchronous>, transform_indices = @transform_3, window_bounds = array<i64: 1, 128>}, {transform_indices = @transform_4, window_bounds = array<i64: 1, 4, 128>}]} {
    %c0 = arith.constant 0 : index
    %c0_0 = arith.constant 0 : index
    %c0_1 = arith.constant 0 : index
    %0 = vector.load %arg1[%c0, %c0_0, %c0_1] : memref<1x4x128xbf16, #tpu.memory_space<vmem>>, vector<1x4x128xbf16>
    %1 = vector.shape_cast %0 : vector<1x4x128xbf16> to vector<4x128xbf16>
    %c1 = arith.constant 1 : index
    %c0_2 = arith.constant 0 : index
    %c0_3 = arith.constant 0 : index
    %2 = vector.load %arg2[%c1, %c0_2, %c0_3] : memref<3x128x128xbf16, #tpu.memory_space<vmem>>, vector<1x128x128xbf16>
    %3 = vector.shape_cast %2 : vector<1x128x128xbf16> to vector<128x128xbf16>
    %cst = arith.constant dense<0.000000e+00> : vector<4x128xf32>
    %4 = tpu.matmul %1, %3, %cst {dimension_numbers = #tpu.dot_dimension_numbers<[1], [0], [0], [1], [0, 0, 1, 1], [], []>} : vector<4x128xbf16>, vector<128x128xbf16>, vector<4x128xf32> -> vector<4x128xf32>
    %c0_4 = arith.constant 0 : index
    %c0_5 = arith.constant 0 : index
    %5 = vector.load %arg6[%c0_4, %c0_5] : memref<4x128xf32, #tpu.memory_space<vmem>>, vector<4x128xf32>
    tpu.vector_store %arg6[%c0_4, %c0_5], %4 {strides = array<i32>} : memref<4x128xf32, #tpu.memory_space<vmem>>, vector<4x128xf32>,
    %c1_6 = arith.constant 1 : index
    %c0_7 = arith.constant 0 : index
    %6 = vector.load %arg6[%c1_6, %c0_7] : memref<4x128xf32, #tpu.memory_space<vmem>>, vector<3x128xf32>
    %c0_8 = arith.constant 0 : index
    %c0_9 = arith.constant 0 : index
    %c0_10 = arith.constant 0 : index
    %7 = vector.load %arg1[%c0_8, %c0_9, %c0_10] : memref<1x4x128xbf16, #tpu.memory_space<vmem>>, vector<1x3x128xbf16>
    %8 = vector.shape_cast %7 : vector<1x3x128xbf16> to vector<3x128xbf16>
    %c0_11 = arith.constant 0 : index
    %c0_12 = arith.constant 0 : index
    %c0_13 = arith.constant 0 : index
    %9 = vector.load %arg2[%c0_11, %c0_12, %c0_13] : memref<3x128x128xbf16, #tpu.memory_space<vmem>>, vector<1x128x128xbf16>
    %10 = vector.shape_cast %9 : vector<1x128x128xbf16> to vector<128x128xbf16>
    %cst_14 = arith.constant dense<0.000000e+00> : vector<3x128xf32>
    %11 = tpu.matmul %8, %10, %cst_14 {dimension_numbers = #tpu.dot_dimension_numbers<[1], [0], [0], [1], [0, 0, 1, 1], [], []>} : vector<3x128xbf16>, vector<128x128xbf16>, vector<3x128xf32> -> vector<3x128xf32>
    %12 = arith.addf %6, %11 : vector<3x128xf32>
    %c1_15 = arith.constant 1 : index
    %c0_16 = arith.constant 0 : index
    %13 = vector.load %arg6[%c1_15, %c0_16] : memref<4x128xf32, #tpu.memory_space<vmem>>, vector<3x128xf32>
    tpu.vector_store %arg6[%c1_15, %c0_16], %12 {strides = array<i32>} : memref<4x128xf32, #tpu.memory_space<vmem>>, vector<3x128xf32>,
    %c0_17 = arith.constant 0 : index
    %c0_18 = arith.constant 0 : index
    %14 = vector.load %arg6[%c0_17, %c0_18] : memref<4x128xf32, #tpu.memory_space<vmem>>, vector<3x128xf32>
    %c0_19 = arith.constant 0 : index
    %c1_20 = arith.constant 1 : index
    %c0_21 = arith.constant 0 : index
    %15 = vector.load %arg1[%c0_19, %c1_20, %c0_21] : memref<1x4x128xbf16, #tpu.memory_space<vmem>>, vector<1x3x128xbf16>
    %16 = vector.shape_cast %15 : vector<1x3x128xbf16> to vector<3x128xbf16>
    %c2 = arith.constant 2 : index
    %c0_22 = arith.constant 0 : index
    %c0_23 = arith.constant 0 : index
    %17 = vector.load %arg2[%c2, %c0_22, %c0_23] : memref<3x128x128xbf16, #tpu.memory_space<vmem>>, vector<1x128x128xbf16>
    %18 = vector.shape_cast %17 : vector<1x128x128xbf16> to vector<128x128xbf16>
    %cst_24 = arith.constant dense<0.000000e+00> : vector<3x128xf32>
    %19 = tpu.matmul %16, %18, %cst_24 {dimension_numbers = #tpu.dot_dimension_numbers<[1], [0], [0], [1], [0, 0, 1, 1], [], []>} : vector<3x128xbf16>, vector<128x128xbf16>, vector<3x128xf32> -> vector<3x128xf32>
    %20 = arith.addf %14, %19 : vector<3x128xf32>
    %c0_25 = arith.constant 0 : index
    %c0_26 = arith.constant 0 : index
    %21 = vector.load %arg6[%c0_25, %c0_26] : memref<4x128xf32, #tpu.memory_space<vmem>>, vector<3x128xf32>
    tpu.vector_store %arg6[%c0_25, %c0_26], %20 {strides = array<i32>} : memref<4x128xf32, #tpu.memory_space<vmem>>, vector<3x128xf32>,
    %c0_27 = arith.constant 0 : index
    %c0_28 = arith.constant 0 : index
    %22 = vector.load %arg6[%c0_27, %c0_28] : memref<4x128xf32, #tpu.memory_space<vmem>>, vector<4x128xf32>
    %c0_29 = arith.constant 0 : index
    %c0_30 = arith.constant 0 : index
    %23 = vector.load %arg3[%c0_29, %c0_30] : memref<1x128xf32, #tpu.memory_space<vmem>>, vector<1x128xf32>
    %24 = vector.broadcast %23 : vector<1x128xf32> to vector<4x128xf32>
    %25 = arith.mulf %22, %24 : vector<4x128xf32>
    %c0_31 = arith.constant 0 : index
    %c0_32 = arith.constant 0 : index
    %26 = vector.load %arg4[%c0_31, %c0_32] : memref<1x128xf32, #tpu.memory_space<vmem>>, vector<1x128xf32>
    %27 = vector.broadcast %26 : vector<1x128xf32> to vector<4x128xf32>
    %28 = arith.addf %25, %27 : vector<4x128xf32>
    %cst_33 = arith.constant 0.000000e+00 : f32
    %29 = vector.broadcast %cst_33 : f32 to vector<4x128xf32>
    %30 = arith.maximumf %28, %29 : vector<4x128xf32>
    %31 = arith.truncf %30 : vector<4x128xf32> to vector<4x128xbf16>
    %c0_34 = arith.constant 0 : index
    %c0_35 = arith.constant 0 : index
    %c0_36 = arith.constant 0 : index
    %32 = vector.load %arg5[%c0_34, %c0_35, %c0_36] : memref<1x4x128xbf16, #tpu.memory_space<vmem>>, vector<1x4x128xbf16>
    %33 = vector.shape_cast %32 : vector<1x4x128xbf16> to vector<4x128xbf16>
    %34 = vector.shape_cast %31 : vector<4x128xbf16> to vector<1x4x128xbf16>
    tpu.vector_store %arg5[%c0_34, %c0_35, %c0_36], %34 {strides = array<i32>} : memref<1x4x128xbf16, #tpu.memory_space<vmem>>, vector<1x4x128xbf16>,
    return
  }
  func.func @transform_0(%arg0: i32) -> (i32, i32, i32) {
    %c0_i32 = arith.constant 0 : i32
    %c0_i32_0 = arith.constant 0 : i32
    %c0_i32_1 = arith.constant 0 : i32
    return %arg0, %c0_i32, %c0_i32_0 : i32, i32, i32
  }
  func.func @transform_1(%arg0: i32) -> (i32, i32, i32) {
    %c0_i32 = arith.constant 0 : i32
    %c0_i32_0 = arith.constant 0 : i32
    %c0_i32_1 = arith.constant 0 : i32
    %c0_i32_2 = arith.constant 0 : i32
    return %c0_i32, %c0_i32_0, %c0_i32_1 : i32, i32, i32
  }
  func.func @transform_2(%arg0: i32) -> (i32, i32) {
    %c0_i32 = arith.constant 0 : i32
    %c0_i32_0 = arith.constant 0 : i32
    %c0_i32_1 = arith.constant 0 : i32
    return %c0_i32, %c0_i32_0 : i32, i32
  }
  func.func @transform_3(%arg0: i32) -> (i32, i32) {
    %c0_i32 = arith.constant 0 : i32
    %c0_i32_0 = arith.constant 0 : i32
    %c0_i32_1 = arith.constant 0 : i32
    return %c0_i32, %c0_i32_0 : i32, i32
  }
  func.func @transform_4(%arg0: i32) -> (i32, i32, i32) {
    %c0_i32 = arith.constant 0 : i32
    %c0_i32_0 = arith.constant 0 : i32
    %c0_i32_1 = arith.constant 0 : i32
    return %arg0, %c0_i32, %c0_i32_0 : i32, i32, i32
  }
}

module attributes {stable_mosaic.version = 11 : i64} {
  func.func @conv3x3_bn_kernel(%arg0: i32, %arg1: memref<1x4x128xbf16, #tpu.memory_space<vmem>>, %arg2: memref<3x128x64xbf16, #tpu.memory_space<vmem>>, %arg3: memref<1x64xf32, #tpu.memory_space<vmem>>, %arg4: memref<1x64xf32, #tpu.memory_space<vmem>>, %arg5: memref<1x4x64xbf16, #tpu.memory_space<vmem>>, %arg6: memref<4x64xf32, #tpu.memory_space<vmem>>) attributes {dimension_semantics = [#tpu.dimension_semantics<parallel>], iteration_bounds = array<i64: 2>, scalar_prefetch = 0 : i64, scratch_operands = 1 : i64, tpu.core_type = #tpu.core_type<tc>, window_params = [{transform_indices = @transform_0, window_bounds = array<i64: 1, 4, 128>}, {pipeline_mode = #tpu.pipeline_mode<synchronous>, transform_indices = @transform_1, window_bounds = array<i64: 3, 128, 64>}, {pipeline_mode = #tpu.pipeline_mode<synchronous>, transform_indices = @transform_2, window_bounds = array<i64: 1, 64>}, {pipeline_mode = #tpu.pipeline_mode<synchronous>, transform_indices = @transform_3, window_bounds = array<i64: 1, 64>}, {transform_indices = @transform_4, window_bounds = array<i64: 1, 4, 64>}]} {
    %c0 = arith.constant 0 : index
    %c0_0 = arith.constant 0 : index
    %c0_1 = arith.constant 0 : index
    %0 = vector.load %arg1[%c0, %c0_0, %c0_1] : memref<1x4x128xbf16, #tpu.memory_space<vmem>>, vector<1x4x128xbf16>
    %1 = vector.shape_cast %0 : vector<1x4x128xbf16> to vector<4x128xbf16>
    %c1 = arith.constant 1 : index
    %c0_2 = arith.constant 0 : index
    %c0_3 = arith.constant 0 : index
    %2 = vector.load %arg2[%c1, %c0_2, %c0_3] : memref<3x128x64xbf16, #tpu.memory_space<vmem>>, vector<1x128x64xbf16>
    %3 = vector.shape_cast %2 : vector<1x128x64xbf16> to vector<128x64xbf16>
    %cst = arith.constant dense<0.000000e+00> : vector<4x64xf32>
    %4 = tpu.matmul %1, %3, %cst {dimension_numbers = #tpu.dot_dimension_numbers<[1], [0], [0], [1], [0, 0, 1, 1], [], []>} : vector<4x128xbf16>, vector<128x64xbf16>, vector<4x64xf32> -> vector<4x64xf32>
    %c0_4 = arith.constant 0 : index
    %c0_5 = arith.constant 0 : index
    %5 = vector.load %arg6[%c0_4, %c0_5] : memref<4x64xf32, #tpu.memory_space<vmem>>, vector<4x64xf32>
    tpu.vector_store %arg6[%c0_4, %c0_5], %4 {strides = array<i32>} : memref<4x64xf32, #tpu.memory_space<vmem>>, vector<4x64xf32>,
    %c1_6 = arith.constant 1 : index
    %c0_7 = arith.constant 0 : index
    %6 = vector.load %arg6[%c1_6, %c0_7] : memref<4x64xf32, #tpu.memory_space<vmem>>, vector<3x64xf32>
    %c0_8 = arith.constant 0 : index
    %c0_9 = arith.constant 0 : index
    %c0_10 = arith.constant 0 : index
    %7 = vector.load %arg1[%c0_8, %c0_9, %c0_10] : memref<1x4x128xbf16, #tpu.memory_space<vmem>>, vector<1x3x128xbf16>
    %8 = vector.shape_cast %7 : vector<1x3x128xbf16> to vector<3x128xbf16>
    %c0_11 = arith.constant 0 : index
    %c0_12 = arith.constant 0 : index
    %c0_13 = arith.constant 0 : index
    %9 = vector.load %arg2[%c0_11, %c0_12, %c0_13] : memref<3x128x64xbf16, #tpu.memory_space<vmem>>, vector<1x128x64xbf16>
    %10 = vector.shape_cast %9 : vector<1x128x64xbf16> to vector<128x64xbf16>
    %cst_14 = arith.constant dense<0.000000e+00> : vector<3x64xf32>
    %11 = tpu.matmul %8, %10, %cst_14 {dimension_numbers = #tpu.dot_dimension_numbers<[1], [0], [0], [1], [0, 0, 1, 1], [], []>} : vector<3x128xbf16>, vector<128x64xbf16>, vector<3x64xf32> -> vector<3x64xf32>
    %12 = arith.addf %6, %11 : vector<3x64xf32>
    %c1_15 = arith.constant 1 : index
    %c0_16 = arith.constant 0 : index
    %13 = vector.load %arg6[%c1_15, %c0_16] : memref<4x64xf32, #tpu.memory_space<vmem>>, vector<3x64xf32>
    tpu.vector_store %arg6[%c1_15, %c0_16], %12 {strides = array<i32>} : memref<4x64xf32, #tpu.memory_space<vmem>>, vector<3x64xf32>,
    %c0_17 = arith.constant 0 : index
    %c0_18 = arith.constant 0 : index
    %14 = vector.load %arg6[%c0_17, %c0_18] : memref<4x64xf32, #tpu.memory_space<vmem>>, vector<3x64xf32>
    %c0_19 = arith.constant 0 : index
    %c1_20 = arith.constant 1 : index
    %c0_21 = arith.constant 0 : index
    %15 = vector.load %arg1[%c0_19, %c1_20, %c0_21] : memref<1x4x128xbf16, #tpu.memory_space<vmem>>, vector<1x3x128xbf16>
    %16 = vector.shape_cast %15 : vector<1x3x128xbf16> to vector<3x128xbf16>
    %c2 = arith.constant 2 : index
    %c0_22 = arith.constant 0 : index
    %c0_23 = arith.constant 0 : index
    %17 = vector.load %arg2[%c2, %c0_22, %c0_23] : memref<3x128x64xbf16, #tpu.memory_space<vmem>>, vector<1x128x64xbf16>
    %18 = vector.shape_cast %17 : vector<1x128x64xbf16> to vector<128x64xbf16>
    %cst_24 = arith.constant dense<0.000000e+00> : vector<3x64xf32>
    %19 = tpu.matmul %16, %18, %cst_24 {dimension_numbers = #tpu.dot_dimension_numbers<[1], [0], [0], [1], [0, 0, 1, 1], [], []>} : vector<3x128xbf16>, vector<128x64xbf16>, vector<3x64xf32> -> vector<3x64xf32>
    %20 = arith.addf %14, %19 : vector<3x64xf32>
    %c0_25 = arith.constant 0 : index
    %c0_26 = arith.constant 0 : index
    %21 = vector.load %arg6[%c0_25, %c0_26] : memref<4x64xf32, #tpu.memory_space<vmem>>, vector<3x64xf32>
    tpu.vector_store %arg6[%c0_25, %c0_26], %20 {strides = array<i32>} : memref<4x64xf32, #tpu.memory_space<vmem>>, vector<3x64xf32>,
    %c0_27 = arith.constant 0 : index
    %c0_28 = arith.constant 0 : index
    %22 = vector.load %arg6[%c0_27, %c0_28] : memref<4x64xf32, #tpu.memory_space<vmem>>, vector<4x64xf32>
    %c0_29 = arith.constant 0 : index
    %c0_30 = arith.constant 0 : index
    %23 = vector.load %arg3[%c0_29, %c0_30] : memref<1x64xf32, #tpu.memory_space<vmem>>, vector<1x64xf32>
    %24 = vector.broadcast %23 : vector<1x64xf32> to vector<4x64xf32>
    %25 = arith.mulf %22, %24 : vector<4x64xf32>
    %c0_31 = arith.constant 0 : index
    %c0_32 = arith.constant 0 : index
    %26 = vector.load %arg4[%c0_31, %c0_32] : memref<1x64xf32, #tpu.memory_space<vmem>>, vector<1x64xf32>
    %27 = vector.broadcast %26 : vector<1x64xf32> to vector<4x64xf32>
    %28 = arith.addf %25, %27 : vector<4x64xf32>
    %cst_33 = arith.constant 0.000000e+00 : f32
    %29 = vector.broadcast %cst_33 : f32 to vector<4x64xf32>
    %30 = arith.maximumf %28, %29 : vector<4x64xf32>
    %31 = arith.truncf %30 : vector<4x64xf32> to vector<4x64xbf16>
    %c0_34 = arith.constant 0 : index
    %c0_35 = arith.constant 0 : index
    %c0_36 = arith.constant 0 : index
    %32 = vector.load %arg5[%c0_34, %c0_35, %c0_36] : memref<1x4x64xbf16, #tpu.memory_space<vmem>>, vector<1x4x64xbf16>
    %33 = vector.shape_cast %32 : vector<1x4x64xbf16> to vector<4x64xbf16>
    %34 = vector.shape_cast %31 : vector<4x64xbf16> to vector<1x4x64xbf16>
    tpu.vector_store %arg5[%c0_34, %c0_35, %c0_36], %34 {strides = array<i32>} : memref<1x4x64xbf16, #tpu.memory_space<vmem>>, vector<1x4x64xbf16>,
    return
  }
  func.func @transform_0(%arg0: i32) -> (i32, i32, i32) {
    %c0_i32 = arith.constant 0 : i32
    %c0_i32_0 = arith.constant 0 : i32
    %c0_i32_1 = arith.constant 0 : i32
    return %arg0, %c0_i32, %c0_i32_0 : i32, i32, i32
  }
  func.func @transform_1(%arg0: i32) -> (i32, i32, i32) {
    %c0_i32 = arith.constant 0 : i32
    %c0_i32_0 = arith.constant 0 : i32
    %c0_i32_1 = arith.constant 0 : i32
    %c0_i32_2 = arith.constant 0 : i32
    return %c0_i32, %c0_i32_0, %c0_i32_1 : i32, i32, i32
  }
  func.func @transform_2(%arg0: i32) -> (i32, i32) {
    %c0_i32 = arith.constant 0 : i32
    %c0_i32_0 = arith.constant 0 : i32
    %c0_i32_1 = arith.constant 0 : i32
    return %c0_i32, %c0_i32_0 : i32, i32
  }
  func.func @transform_3(%arg0: i32) -> (i32, i32) {
    %c0_i32 = arith.constant 0 : i32
    %c0_i32_0 = arith.constant 0 : i32
    %c0_i32_1 = arith.constant 0 : i32
    return %c0_i32, %c0_i32_0 : i32, i32
  }
  func.func @transform_4(%arg0: i32) -> (i32, i32, i32) {
    %c0_i32 = arith.constant 0 : i32
    %c0_i32_0 = arith.constant 0 : i32
    %c0_i32_1 = arith.constant 0 : i32
    return %arg0, %c0_i32, %c0_i32_0 : i32, i32, i32
  }
}

module attributes {stable_mosaic.version = 11 : i64} {
  func.func @upsample2x_kernel(%arg0: i32, %arg1: memref<1x4x4x16xbf16, #tpu.memory_space<vmem>>, %arg2: memref<1x4x2x4x2x16xbf16, #tpu.memory_space<vmem>>) attributes {dimension_semantics = [#tpu.dimension_semantics<parallel>], iteration_bounds = array<i64: 2>, scalar_prefetch = 0 : i64, scratch_operands = 0 : i64, tpu.core_type = #tpu.core_type<tc>, window_params = [{transform_indices = @transform_0, window_bounds = array<i64: 1, 4, 4, 16>}, {transform_indices = @transform_1, window_bounds = array<i64: 1, 4, 2, 4, 2, 16>}]} {
    %c0 = arith.constant 0 : index
    %c0_0 = arith.constant 0 : index
    %c0_1 = arith.constant 0 : index
    %c0_2 = arith.constant 0 : index
    %0 = vector.load %arg1[%c0, %c0_0, %c0_1, %c0_2] : memref<1x4x4x16xbf16, #tpu.memory_space<vmem>>, vector<1x4x4x16xbf16>
    %1 = vector.shape_cast %0 : vector<1x4x4x16xbf16> to vector<4x4x16xbf16>
    %2 = arith.extf %1 : vector<4x4x16xbf16> to vector<4x4x16xf32>
    %3 = vector.extract_strided_slice %2 {offsets = [0, 0, 0], sizes = [1, 4, 16], strides = [1, 1, 1]} : vector<4x4x16xf32> to vector<1x4x16xf32>
    %4 = vector.extract_strided_slice %2 {offsets = [0, 0, 0], sizes = [3, 4, 16], strides = [1, 1, 1]} : vector<4x4x16xf32> to vector<3x4x16xf32>
    %5 = tpu.concatenate %3, %4 in 0 : vector<1x4x16xf32>, vector<3x4x16xf32> -> vector<4x4x16xf32>
    %6 = vector.extract_strided_slice %2 {offsets = [1, 0, 0], sizes = [3, 4, 16], strides = [1, 1, 1]} : vector<4x4x16xf32> to vector<3x4x16xf32>
    %7 = vector.extract_strided_slice %2 {offsets = [3, 0, 0], sizes = [1, 4, 16], strides = [1, 1, 1]} : vector<4x4x16xf32> to vector<1x4x16xf32>
    %8 = tpu.concatenate %6, %7 in 0 : vector<3x4x16xf32>, vector<1x4x16xf32> -> vector<4x4x16xf32>
    %cst = arith.constant 2.500000e-01 : f32
    %9 = vector.broadcast %cst : f32 to vector<4x4x16xf32>
    %10 = arith.mulf %9, %5 : vector<4x4x16xf32>
    %cst_3 = arith.constant 7.500000e-01 : f32
    %11 = vector.broadcast %cst_3 : f32 to vector<4x4x16xf32>
    %12 = arith.mulf %11, %2 : vector<4x4x16xf32>
    %13 = arith.addf %10, %12 : vector<4x4x16xf32>
    %cst_4 = arith.constant 7.500000e-01 : f32
    %14 = vector.broadcast %cst_4 : f32 to vector<4x4x16xf32>
    %15 = arith.mulf %14, %2 : vector<4x4x16xf32>
    %cst_5 = arith.constant 2.500000e-01 : f32
    %16 = vector.broadcast %cst_5 : f32 to vector<4x4x16xf32>
    %17 = arith.mulf %16, %8 : vector<4x4x16xf32>
    %18 = arith.addf %15, %17 : vector<4x4x16xf32>
    %19 = vector.extract_strided_slice %13 {offsets = [0, 0, 0], sizes = [4, 1, 16], strides = [1, 1, 1]} : vector<4x4x16xf32> to vector<4x1x16xf32>
    %20 = arith.truncf %19 : vector<4x1x16xf32> to vector<4x1x16xbf16>
    %c0_6 = arith.constant 0 : index
    %c0_7 = arith.constant 0 : index
    %c0_8 = arith.constant 0 : index
    %c0_9 = arith.constant 0 : index
    %c0_10 = arith.constant 0 : index
    %c0_11 = arith.constant 0 : index
    %21 = vector.load %arg2[%c0_6, %c0_7, %c0_8, %c0_9, %c0_10, %c0_11] : memref<1x4x2x4x2x16xbf16, #tpu.memory_space<vmem>>, vector<1x4x1x1x1x16xbf16>
    %22 = vector.shape_cast %21 : vector<1x4x1x1x1x16xbf16> to vector<4x1x16xbf16>
    %23 = vector.shape_cast %20 : vector<4x1x16xbf16> to vector<1x4x1x1x1x16xbf16>
    tpu.vector_store %arg2[%c0_6, %c0_7, %c0_8, %c0_9, %c0_10, %c0_11], %23 {strides = array<i32>} : memref<1x4x2x4x2x16xbf16, #tpu.memory_space<vmem>>, vector<1x4x1x1x1x16xbf16>,
    %24 = vector.extract_strided_slice %13 {offsets = [0, 0, 0], sizes = [4, 3, 16], strides = [1, 1, 1]} : vector<4x4x16xf32> to vector<4x3x16xf32>
    %cst_12 = arith.constant 2.500000e-01 : f32
    %25 = vector.broadcast %cst_12 : f32 to vector<4x3x16xf32>
    %26 = arith.mulf %25, %24 : vector<4x3x16xf32>
    %27 = vector.extract_strided_slice %13 {offsets = [0, 1, 0], sizes = [4, 3, 16], strides = [1, 1, 1]} : vector<4x4x16xf32> to vector<4x3x16xf32>
    %cst_13 = arith.constant 7.500000e-01 : f32
    %28 = vector.broadcast %cst_13 : f32 to vector<4x3x16xf32>
    %29 = arith.mulf %28, %27 : vector<4x3x16xf32>
    %30 = arith.addf %26, %29 : vector<4x3x16xf32>
    %31 = arith.truncf %30 : vector<4x3x16xf32> to vector<4x3x16xbf16>
    %c0_14 = arith.constant 0 : index
    %c0_15 = arith.constant 0 : index
    %c0_16 = arith.constant 0 : index
    %c1 = arith.constant 1 : index
    %c0_17 = arith.constant 0 : index
    %c0_18 = arith.constant 0 : index
    %32 = vector.load %arg2[%c0_14, %c0_15, %c0_16, %c1, %c0_17, %c0_18] : memref<1x4x2x4x2x16xbf16, #tpu.memory_space<vmem>>, vector<1x4x1x3x1x16xbf16>
    %33 = vector.shape_cast %32 : vector<1x4x1x3x1x16xbf16> to vector<4x3x16xbf16>
    %34 = vector.shape_cast %31 : vector<4x3x16xbf16> to vector<1x4x1x3x1x16xbf16>
    tpu.vector_store %arg2[%c0_14, %c0_15, %c0_16, %c1, %c0_17, %c0_18], %34 {strides = array<i32>} : memref<1x4x2x4x2x16xbf16, #tpu.memory_space<vmem>>, vector<1x4x1x3x1x16xbf16>,
    %35 = vector.extract_strided_slice %13 {offsets = [0, 0, 0], sizes = [4, 3, 16], strides = [1, 1, 1]} : vector<4x4x16xf32> to vector<4x3x16xf32>
    %cst_19 = arith.constant 7.500000e-01 : f32
    %36 = vector.broadcast %cst_19 : f32 to vector<4x3x16xf32>
    %37 = arith.mulf %36, %35 : vector<4x3x16xf32>
    %38 = vector.extract_strided_slice %13 {offsets = [0, 1, 0], sizes = [4, 3, 16], strides = [1, 1, 1]} : vector<4x4x16xf32> to vector<4x3x16xf32>
    %cst_20 = arith.constant 2.500000e-01 : f32
    %39 = vector.broadcast %cst_20 : f32 to vector<4x3x16xf32>
    %40 = arith.mulf %39, %38 : vector<4x3x16xf32>
    %41 = arith.addf %37, %40 : vector<4x3x16xf32>
    %42 = arith.truncf %41 : vector<4x3x16xf32> to vector<4x3x16xbf16>
    %c0_21 = arith.constant 0 : index
    %c0_22 = arith.constant 0 : index
    %c0_23 = arith.constant 0 : index
    %c0_24 = arith.constant 0 : index
    %c1_25 = arith.constant 1 : index
    %c0_26 = arith.constant 0 : index
    %43 = vector.load %arg2[%c0_21, %c0_22, %c0_23, %c0_24, %c1_25, %c0_26] : memref<1x4x2x4x2x16xbf16, #tpu.memory_space<vmem>>, vector<1x4x1x3x1x16xbf16>
    %44 = vector.shape_cast %43 : vector<1x4x1x3x1x16xbf16> to vector<4x3x16xbf16>
    %45 = vector.shape_cast %42 : vector<4x3x16xbf16> to vector<1x4x1x3x1x16xbf16>
    tpu.vector_store %arg2[%c0_21, %c0_22, %c0_23, %c0_24, %c1_25, %c0_26], %45 {strides = array<i32>} : memref<1x4x2x4x2x16xbf16, #tpu.memory_space<vmem>>, vector<1x4x1x3x1x16xbf16>,
    %46 = vector.extract_strided_slice %13 {offsets = [0, 3, 0], sizes = [4, 1, 16], strides = [1, 1, 1]} : vector<4x4x16xf32> to vector<4x1x16xf32>
    %47 = arith.truncf %46 : vector<4x1x16xf32> to vector<4x1x16xbf16>
    %c0_27 = arith.constant 0 : index
    %c0_28 = arith.constant 0 : index
    %c0_29 = arith.constant 0 : index
    %c3 = arith.constant 3 : index
    %c1_30 = arith.constant 1 : index
    %c0_31 = arith.constant 0 : index
    %48 = vector.load %arg2[%c0_27, %c0_28, %c0_29, %c3, %c1_30, %c0_31] : memref<1x4x2x4x2x16xbf16, #tpu.memory_space<vmem>>, vector<1x4x1x1x1x16xbf16>
    %49 = vector.shape_cast %48 : vector<1x4x1x1x1x16xbf16> to vector<4x1x16xbf16>
    %50 = vector.shape_cast %47 : vector<4x1x16xbf16> to vector<1x4x1x1x1x16xbf16>
    tpu.vector_store %arg2[%c0_27, %c0_28, %c0_29, %c3, %c1_30, %c0_31], %50 {strides = array<i32>} : memref<1x4x2x4x2x16xbf16, #tpu.memory_space<vmem>>, vector<1x4x1x1x1x16xbf16>,
    %51 = vector.extract_strided_slice %18 {offsets = [0, 0, 0], sizes = [4, 1, 16], strides = [1, 1, 1]} : vector<4x4x16xf32> to vector<4x1x16xf32>
    %52 = arith.truncf %51 : vector<4x1x16xf32> to vector<4x1x16xbf16>
    %c0_32 = arith.constant 0 : index
    %c0_33 = arith.constant 0 : index
    %c1_34 = arith.constant 1 : index
    %c0_35 = arith.constant 0 : index
    %c0_36 = arith.constant 0 : index
    %c0_37 = arith.constant 0 : index
    %53 = vector.load %arg2[%c0_32, %c0_33, %c1_34, %c0_35, %c0_36, %c0_37] : memref<1x4x2x4x2x16xbf16, #tpu.memory_space<vmem>>, vector<1x4x1x1x1x16xbf16>
    %54 = vector.shape_cast %53 : vector<1x4x1x1x1x16xbf16> to vector<4x1x16xbf16>
    %55 = vector.shape_cast %52 : vector<4x1x16xbf16> to vector<1x4x1x1x1x16xbf16>
    tpu.vector_store %arg2[%c0_32, %c0_33, %c1_34, %c0_35, %c0_36, %c0_37], %55 {strides = array<i32>} : memref<1x4x2x4x2x16xbf16, #tpu.memory_space<vmem>>, vector<1x4x1x1x1x16xbf16>,
    %56 = vector.extract_strided_slice %18 {offsets = [0, 0, 0], sizes = [4, 3, 16], strides = [1, 1, 1]} : vector<4x4x16xf32> to vector<4x3x16xf32>
    %cst_38 = arith.constant 2.500000e-01 : f32
    %57 = vector.broadcast %cst_38 : f32 to vector<4x3x16xf32>
    %58 = arith.mulf %57, %56 : vector<4x3x16xf32>
    %59 = vector.extract_strided_slice %18 {offsets = [0, 1, 0], sizes = [4, 3, 16], strides = [1, 1, 1]} : vector<4x4x16xf32> to vector<4x3x16xf32>
    %cst_39 = arith.constant 7.500000e-01 : f32
    %60 = vector.broadcast %cst_39 : f32 to vector<4x3x16xf32>
    %61 = arith.mulf %60, %59 : vector<4x3x16xf32>
    %62 = arith.addf %58, %61 : vector<4x3x16xf32>
    %63 = arith.truncf %62 : vector<4x3x16xf32> to vector<4x3x16xbf16>
    %c0_40 = arith.constant 0 : index
    %c0_41 = arith.constant 0 : index
    %c1_42 = arith.constant 1 : index
    %c1_43 = arith.constant 1 : index
    %c0_44 = arith.constant 0 : index
    %c0_45 = arith.constant 0 : index
    %64 = vector.load %arg2[%c0_40, %c0_41, %c1_42, %c1_43, %c0_44, %c0_45] : memref<1x4x2x4x2x16xbf16, #tpu.memory_space<vmem>>, vector<1x4x1x3x1x16xbf16>
    %65 = vector.shape_cast %64 : vector<1x4x1x3x1x16xbf16> to vector<4x3x16xbf16>
    %66 = vector.shape_cast %63 : vector<4x3x16xbf16> to vector<1x4x1x3x1x16xbf16>
    tpu.vector_store %arg2[%c0_40, %c0_41, %c1_42, %c1_43, %c0_44, %c0_45], %66 {strides = array<i32>} : memref<1x4x2x4x2x16xbf16, #tpu.memory_space<vmem>>, vector<1x4x1x3x1x16xbf16>,
    %67 = vector.extract_strided_slice %18 {offsets = [0, 0, 0], sizes = [4, 3, 16], strides = [1, 1, 1]} : vector<4x4x16xf32> to vector<4x3x16xf32>
    %cst_46 = arith.constant 7.500000e-01 : f32
    %68 = vector.broadcast %cst_46 : f32 to vector<4x3x16xf32>
    %69 = arith.mulf %68, %67 : vector<4x3x16xf32>
    %70 = vector.extract_strided_slice %18 {offsets = [0, 1, 0], sizes = [4, 3, 16], strides = [1, 1, 1]} : vector<4x4x16xf32> to vector<4x3x16xf32>
    %cst_47 = arith.constant 2.500000e-01 : f32
    %71 = vector.broadcast %cst_47 : f32 to vector<4x3x16xf32>
    %72 = arith.mulf %71, %70 : vector<4x3x16xf32>
    %73 = arith.addf %69, %72 : vector<4x3x16xf32>
    %74 = arith.truncf %73 : vector<4x3x16xf32> to vector<4x3x16xbf16>
    %c0_48 = arith.constant 0 : index
    %c0_49 = arith.constant 0 : index
    %c1_50 = arith.constant 1 : index
    %c0_51 = arith.constant 0 : index
    %c1_52 = arith.constant 1 : index
    %c0_53 = arith.constant 0 : index
    %75 = vector.load %arg2[%c0_48, %c0_49, %c1_50, %c0_51, %c1_52, %c0_53] : memref<1x4x2x4x2x16xbf16, #tpu.memory_space<vmem>>, vector<1x4x1x3x1x16xbf16>
    %76 = vector.shape_cast %75 : vector<1x4x1x3x1x16xbf16> to vector<4x3x16xbf16>
    %77 = vector.shape_cast %74 : vector<4x3x16xbf16> to vector<1x4x1x3x1x16xbf16>
    tpu.vector_store %arg2[%c0_48, %c0_49, %c1_50, %c0_51, %c1_52, %c0_53], %77 {strides = array<i32>} : memref<1x4x2x4x2x16xbf16, #tpu.memory_space<vmem>>, vector<1x4x1x3x1x16xbf16>,
    %78 = vector.extract_strided_slice %18 {offsets = [0, 3, 0], sizes = [4, 1, 16], strides = [1, 1, 1]} : vector<4x4x16xf32> to vector<4x1x16xf32>
    %79 = arith.truncf %78 : vector<4x1x16xf32> to vector<4x1x16xbf16>
    %c0_54 = arith.constant 0 : index
    %c0_55 = arith.constant 0 : index
    %c1_56 = arith.constant 1 : index
    %c3_57 = arith.constant 3 : index
    %c1_58 = arith.constant 1 : index
    %c0_59 = arith.constant 0 : index
    %80 = vector.load %arg2[%c0_54, %c0_55, %c1_56, %c3_57, %c1_58, %c0_59] : memref<1x4x2x4x2x16xbf16, #tpu.memory_space<vmem>>, vector<1x4x1x1x1x16xbf16>
    %81 = vector.shape_cast %80 : vector<1x4x1x1x1x16xbf16> to vector<4x1x16xbf16>
    %82 = vector.shape_cast %79 : vector<4x1x16xbf16> to vector<1x4x1x1x1x16xbf16>
    tpu.vector_store %arg2[%c0_54, %c0_55, %c1_56, %c3_57, %c1_58, %c0_59], %82 {strides = array<i32>} : memref<1x4x2x4x2x16xbf16, #tpu.memory_space<vmem>>, vector<1x4x1x1x1x16xbf16>,
    return
  }
  func.func @transform_0(%arg0: i32) -> (i32, i32, i32, i32) {
    %c0_i32 = arith.constant 0 : i32
    %c0_i32_0 = arith.constant 0 : i32
    %c0_i32_1 = arith.constant 0 : i32
    %c0_i32_2 = arith.constant 0 : i32
    return %arg0, %c0_i32, %c0_i32_0, %c0_i32_1 : i32, i32, i32, i32
  }
  func.func @transform_1(%arg0: i32) -> (i32, i32, i32, i32, i32, i32) {
    %c0_i32 = arith.constant 0 : i32
    %c0_i32_0 = arith.constant 0 : i32
    %c0_i32_1 = arith.constant 0 : i32
    %c0_i32_2 = arith.constant 0 : i32
    %c0_i32_3 = arith.constant 0 : i32
    %c0_i32_4 = arith.constant 0 : i32
    return %arg0, %c0_i32, %c0_i32_0, %c0_i32_1, %c0_i32_2, %c0_i32_3 : i32, i32, i32, i32, i32, i32
  }
}

module attributes {stable_mosaic.version = 11 : i64} {
  func.func @upsample2x_kernel(%arg0: i32, %arg1: memref<1x8x8x16xbf16, #tpu.memory_space<vmem>>, %arg2: memref<1x8x2x8x2x16xbf16, #tpu.memory_space<vmem>>) attributes {dimension_semantics = [#tpu.dimension_semantics<parallel>], iteration_bounds = array<i64: 2>, scalar_prefetch = 0 : i64, scratch_operands = 0 : i64, tpu.core_type = #tpu.core_type<tc>, window_params = [{transform_indices = @transform_0, window_bounds = array<i64: 1, 8, 8, 16>}, {transform_indices = @transform_1, window_bounds = array<i64: 1, 8, 2, 8, 2, 16>}]} {
    %c0 = arith.constant 0 : index
    %c0_0 = arith.constant 0 : index
    %c0_1 = arith.constant 0 : index
    %c0_2 = arith.constant 0 : index
    %0 = vector.load %arg1[%c0, %c0_0, %c0_1, %c0_2] : memref<1x8x8x16xbf16, #tpu.memory_space<vmem>>, vector<1x8x8x16xbf16>
    %1 = vector.shape_cast %0 : vector<1x8x8x16xbf16> to vector<8x8x16xbf16>
    %2 = arith.extf %1 : vector<8x8x16xbf16> to vector<8x8x16xf32>
    %3 = vector.extract_strided_slice %2 {offsets = [0, 0, 0], sizes = [1, 8, 16], strides = [1, 1, 1]} : vector<8x8x16xf32> to vector<1x8x16xf32>
    %4 = vector.extract_strided_slice %2 {offsets = [0, 0, 0], sizes = [7, 8, 16], strides = [1, 1, 1]} : vector<8x8x16xf32> to vector<7x8x16xf32>
    %5 = tpu.concatenate %3, %4 in 0 : vector<1x8x16xf32>, vector<7x8x16xf32> -> vector<8x8x16xf32>
    %6 = vector.extract_strided_slice %2 {offsets = [1, 0, 0], sizes = [7, 8, 16], strides = [1, 1, 1]} : vector<8x8x16xf32> to vector<7x8x16xf32>
    %7 = vector.extract_strided_slice %2 {offsets = [7, 0, 0], sizes = [1, 8, 16], strides = [1, 1, 1]} : vector<8x8x16xf32> to vector<1x8x16xf32>
    %8 = tpu.concatenate %6, %7 in 0 : vector<7x8x16xf32>, vector<1x8x16xf32> -> vector<8x8x16xf32>
    %cst = arith.constant 2.500000e-01 : f32
    %9 = vector.broadcast %cst : f32 to vector<8x8x16xf32>
    %10 = arith.mulf %9, %5 : vector<8x8x16xf32>
    %cst_3 = arith.constant 7.500000e-01 : f32
    %11 = vector.broadcast %cst_3 : f32 to vector<8x8x16xf32>
    %12 = arith.mulf %11, %2 : vector<8x8x16xf32>
    %13 = arith.addf %10, %12 : vector<8x8x16xf32>
    %cst_4 = arith.constant 7.500000e-01 : f32
    %14 = vector.broadcast %cst_4 : f32 to vector<8x8x16xf32>
    %15 = arith.mulf %14, %2 : vector<8x8x16xf32>
    %cst_5 = arith.constant 2.500000e-01 : f32
    %16 = vector.broadcast %cst_5 : f32 to vector<8x8x16xf32>
    %17 = arith.mulf %16, %8 : vector<8x8x16xf32>
    %18 = arith.addf %15, %17 : vector<8x8x16xf32>
    %19 = vector.extract_strided_slice %13 {offsets = [0, 0, 0], sizes = [8, 1, 16], strides = [1, 1, 1]} : vector<8x8x16xf32> to vector<8x1x16xf32>
    %20 = arith.truncf %19 : vector<8x1x16xf32> to vector<8x1x16xbf16>
    %c0_6 = arith.constant 0 : index
    %c0_7 = arith.constant 0 : index
    %c0_8 = arith.constant 0 : index
    %c0_9 = arith.constant 0 : index
    %c0_10 = arith.constant 0 : index
    %c0_11 = arith.constant 0 : index
    %21 = vector.load %arg2[%c0_6, %c0_7, %c0_8, %c0_9, %c0_10, %c0_11] : memref<1x8x2x8x2x16xbf16, #tpu.memory_space<vmem>>, vector<1x8x1x1x1x16xbf16>
    %22 = vector.shape_cast %21 : vector<1x8x1x1x1x16xbf16> to vector<8x1x16xbf16>
    %23 = vector.shape_cast %20 : vector<8x1x16xbf16> to vector<1x8x1x1x1x16xbf16>
    tpu.vector_store %arg2[%c0_6, %c0_7, %c0_8, %c0_9, %c0_10, %c0_11], %23 {strides = array<i32>} : memref<1x8x2x8x2x16xbf16, #tpu.memory_space<vmem>>, vector<1x8x1x1x1x16xbf16>,
    %24 = vector.extract_strided_slice %13 {offsets = [0, 0, 0], sizes = [8, 7, 16], strides = [1, 1, 1]} : vector<8x8x16xf32> to vector<8x7x16xf32>
    %cst_12 = arith.constant 2.500000e-01 : f32
    %25 = vector.broadcast %cst_12 : f32 to vector<8x7x16xf32>
    %26 = arith.mulf %25, %24 : vector<8x7x16xf32>
    %27 = vector.extract_strided_slice %13 {offsets = [0, 1, 0], sizes = [8, 7, 16], strides = [1, 1, 1]} : vector<8x8x16xf32> to vector<8x7x16xf32>
    %cst_13 = arith.constant 7.500000e-01 : f32
    %28 = vector.broadcast %cst_13 : f32 to vector<8x7x16xf32>
    %29 = arith.mulf %28, %27 : vector<8x7x16xf32>
    %30 = arith.addf %26, %29 : vector<8x7x16xf32>
    %31 = arith.truncf %30 : vector<8x7x16xf32> to vector<8x7x16xbf16>
    %c0_14 = arith.constant 0 : index
    %c0_15 = arith.constant 0 : index
    %c0_16 = arith.constant 0 : index
    %c1 = arith.constant 1 : index
    %c0_17 = arith.constant 0 : index
    %c0_18 = arith.constant 0 : index
    %32 = vector.load %arg2[%c0_14, %c0_15, %c0_16, %c1, %c0_17, %c0_18] : memref<1x8x2x8x2x16xbf16, #tpu.memory_space<vmem>>, vector<1x8x1x7x1x16xbf16>
    %33 = vector.shape_cast %32 : vector<1x8x1x7x1x16xbf16> to vector<8x7x16xbf16>
    %34 = vector.shape_cast %31 : vector<8x7x16xbf16> to vector<1x8x1x7x1x16xbf16>
    tpu.vector_store %arg2[%c0_14, %c0_15, %c0_16, %c1, %c0_17, %c0_18], %34 {strides = array<i32>} : memref<1x8x2x8x2x16xbf16, #tpu.memory_space<vmem>>, vector<1x8x1x7x1x16xbf16>,
    %35 = vector.extract_strided_slice %13 {offsets = [0, 0, 0], sizes = [8, 7, 16], strides = [1, 1, 1]} : vector<8x8x16xf32> to vector<8x7x16xf32>
    %cst_19 = arith.constant 7.500000e-01 : f32
    %36 = vector.broadcast %cst_19 : f32 to vector<8x7x16xf32>
    %37 = arith.mulf %36, %35 : vector<8x7x16xf32>
    %38 = vector.extract_strided_slice %13 {offsets = [0, 1, 0], sizes = [8, 7, 16], strides = [1, 1, 1]} : vector<8x8x16xf32> to vector<8x7x16xf32>
    %cst_20 = arith.constant 2.500000e-01 : f32
    %39 = vector.broadcast %cst_20 : f32 to vector<8x7x16xf32>
    %40 = arith.mulf %39, %38 : vector<8x7x16xf32>
    %41 = arith.addf %37, %40 : vector<8x7x16xf32>
    %42 = arith.truncf %41 : vector<8x7x16xf32> to vector<8x7x16xbf16>
    %c0_21 = arith.constant 0 : index
    %c0_22 = arith.constant 0 : index
    %c0_23 = arith.constant 0 : index
    %c0_24 = arith.constant 0 : index
    %c1_25 = arith.constant 1 : index
    %c0_26 = arith.constant 0 : index
    %43 = vector.load %arg2[%c0_21, %c0_22, %c0_23, %c0_24, %c1_25, %c0_26] : memref<1x8x2x8x2x16xbf16, #tpu.memory_space<vmem>>, vector<1x8x1x7x1x16xbf16>
    %44 = vector.shape_cast %43 : vector<1x8x1x7x1x16xbf16> to vector<8x7x16xbf16>
    %45 = vector.shape_cast %42 : vector<8x7x16xbf16> to vector<1x8x1x7x1x16xbf16>
    tpu.vector_store %arg2[%c0_21, %c0_22, %c0_23, %c0_24, %c1_25, %c0_26], %45 {strides = array<i32>} : memref<1x8x2x8x2x16xbf16, #tpu.memory_space<vmem>>, vector<1x8x1x7x1x16xbf16>,
    %46 = vector.extract_strided_slice %13 {offsets = [0, 7, 0], sizes = [8, 1, 16], strides = [1, 1, 1]} : vector<8x8x16xf32> to vector<8x1x16xf32>
    %47 = arith.truncf %46 : vector<8x1x16xf32> to vector<8x1x16xbf16>
    %c0_27 = arith.constant 0 : index
    %c0_28 = arith.constant 0 : index
    %c0_29 = arith.constant 0 : index
    %c7 = arith.constant 7 : index
    %c1_30 = arith.constant 1 : index
    %c0_31 = arith.constant 0 : index
    %48 = vector.load %arg2[%c0_27, %c0_28, %c0_29, %c7, %c1_30, %c0_31] : memref<1x8x2x8x2x16xbf16, #tpu.memory_space<vmem>>, vector<1x8x1x1x1x16xbf16>
    %49 = vector.shape_cast %48 : vector<1x8x1x1x1x16xbf16> to vector<8x1x16xbf16>
    %50 = vector.shape_cast %47 : vector<8x1x16xbf16> to vector<1x8x1x1x1x16xbf16>
    tpu.vector_store %arg2[%c0_27, %c0_28, %c0_29, %c7, %c1_30, %c0_31], %50 {strides = array<i32>} : memref<1x8x2x8x2x16xbf16, #tpu.memory_space<vmem>>, vector<1x8x1x1x1x16xbf16>,
    %51 = vector.extract_strided_slice %18 {offsets = [0, 0, 0], sizes = [8, 1, 16], strides = [1, 1, 1]} : vector<8x8x16xf32> to vector<8x1x16xf32>
    %52 = arith.truncf %51 : vector<8x1x16xf32> to vector<8x1x16xbf16>
    %c0_32 = arith.constant 0 : index
    %c0_33 = arith.constant 0 : index
    %c1_34 = arith.constant 1 : index
    %c0_35 = arith.constant 0 : index
    %c0_36 = arith.constant 0 : index
    %c0_37 = arith.constant 0 : index
    %53 = vector.load %arg2[%c0_32, %c0_33, %c1_34, %c0_35, %c0_36, %c0_37] : memref<1x8x2x8x2x16xbf16, #tpu.memory_space<vmem>>, vector<1x8x1x1x1x16xbf16>
    %54 = vector.shape_cast %53 : vector<1x8x1x1x1x16xbf16> to vector<8x1x16xbf16>
    %55 = vector.shape_cast %52 : vector<8x1x16xbf16> to vector<1x8x1x1x1x16xbf16>
    tpu.vector_store %arg2[%c0_32, %c0_33, %c1_34, %c0_35, %c0_36, %c0_37], %55 {strides = array<i32>} : memref<1x8x2x8x2x16xbf16, #tpu.memory_space<vmem>>, vector<1x8x1x1x1x16xbf16>,
    %56 = vector.extract_strided_slice %18 {offsets = [0, 0, 0], sizes = [8, 7, 16], strides = [1, 1, 1]} : vector<8x8x16xf32> to vector<8x7x16xf32>
    %cst_38 = arith.constant 2.500000e-01 : f32
    %57 = vector.broadcast %cst_38 : f32 to vector<8x7x16xf32>
    %58 = arith.mulf %57, %56 : vector<8x7x16xf32>
    %59 = vector.extract_strided_slice %18 {offsets = [0, 1, 0], sizes = [8, 7, 16], strides = [1, 1, 1]} : vector<8x8x16xf32> to vector<8x7x16xf32>
    %cst_39 = arith.constant 7.500000e-01 : f32
    %60 = vector.broadcast %cst_39 : f32 to vector<8x7x16xf32>
    %61 = arith.mulf %60, %59 : vector<8x7x16xf32>
    %62 = arith.addf %58, %61 : vector<8x7x16xf32>
    %63 = arith.truncf %62 : vector<8x7x16xf32> to vector<8x7x16xbf16>
    %c0_40 = arith.constant 0 : index
    %c0_41 = arith.constant 0 : index
    %c1_42 = arith.constant 1 : index
    %c1_43 = arith.constant 1 : index
    %c0_44 = arith.constant 0 : index
    %c0_45 = arith.constant 0 : index
    %64 = vector.load %arg2[%c0_40, %c0_41, %c1_42, %c1_43, %c0_44, %c0_45] : memref<1x8x2x8x2x16xbf16, #tpu.memory_space<vmem>>, vector<1x8x1x7x1x16xbf16>
    %65 = vector.shape_cast %64 : vector<1x8x1x7x1x16xbf16> to vector<8x7x16xbf16>
    %66 = vector.shape_cast %63 : vector<8x7x16xbf16> to vector<1x8x1x7x1x16xbf16>
    tpu.vector_store %arg2[%c0_40, %c0_41, %c1_42, %c1_43, %c0_44, %c0_45], %66 {strides = array<i32>} : memref<1x8x2x8x2x16xbf16, #tpu.memory_space<vmem>>, vector<1x8x1x7x1x16xbf16>,
    %67 = vector.extract_strided_slice %18 {offsets = [0, 0, 0], sizes = [8, 7, 16], strides = [1, 1, 1]} : vector<8x8x16xf32> to vector<8x7x16xf32>
    %cst_46 = arith.constant 7.500000e-01 : f32
    %68 = vector.broadcast %cst_46 : f32 to vector<8x7x16xf32>
    %69 = arith.mulf %68, %67 : vector<8x7x16xf32>
    %70 = vector.extract_strided_slice %18 {offsets = [0, 1, 0], sizes = [8, 7, 16], strides = [1, 1, 1]} : vector<8x8x16xf32> to vector<8x7x16xf32>
    %cst_47 = arith.constant 2.500000e-01 : f32
    %71 = vector.broadcast %cst_47 : f32 to vector<8x7x16xf32>
    %72 = arith.mulf %71, %70 : vector<8x7x16xf32>
    %73 = arith.addf %69, %72 : vector<8x7x16xf32>
    %74 = arith.truncf %73 : vector<8x7x16xf32> to vector<8x7x16xbf16>
    %c0_48 = arith.constant 0 : index
    %c0_49 = arith.constant 0 : index
    %c1_50 = arith.constant 1 : index
    %c0_51 = arith.constant 0 : index
    %c1_52 = arith.constant 1 : index
    %c0_53 = arith.constant 0 : index
    %75 = vector.load %arg2[%c0_48, %c0_49, %c1_50, %c0_51, %c1_52, %c0_53] : memref<1x8x2x8x2x16xbf16, #tpu.memory_space<vmem>>, vector<1x8x1x7x1x16xbf16>
    %76 = vector.shape_cast %75 : vector<1x8x1x7x1x16xbf16> to vector<8x7x16xbf16>
    %77 = vector.shape_cast %74 : vector<8x7x16xbf16> to vector<1x8x1x7x1x16xbf16>
    tpu.vector_store %arg2[%c0_48, %c0_49, %c1_50, %c0_51, %c1_52, %c0_53], %77 {strides = array<i32>} : memref<1x8x2x8x2x16xbf16, #tpu.memory_space<vmem>>, vector<1x8x1x7x1x16xbf16>,
    %78 = vector.extract_strided_slice %18 {offsets = [0, 7, 0], sizes = [8, 1, 16], strides = [1, 1, 1]} : vector<8x8x16xf32> to vector<8x1x16xf32>
    %79 = arith.truncf %78 : vector<8x1x16xf32> to vector<8x1x16xbf16>
    %c0_54 = arith.constant 0 : index
    %c0_55 = arith.constant 0 : index
    %c1_56 = arith.constant 1 : index
    %c7_57 = arith.constant 7 : index
    %c1_58 = arith.constant 1 : index
    %c0_59 = arith.constant 0 : index
    %80 = vector.load %arg2[%c0_54, %c0_55, %c1_56, %c7_57, %c1_58, %c0_59] : memref<1x8x2x8x2x16xbf16, #tpu.memory_space<vmem>>, vector<1x8x1x1x1x16xbf16>
    %81 = vector.shape_cast %80 : vector<1x8x1x1x1x16xbf16> to vector<8x1x16xbf16>
    %82 = vector.shape_cast %79 : vector<8x1x16xbf16> to vector<1x8x1x1x1x16xbf16>
    tpu.vector_store %arg2[%c0_54, %c0_55, %c1_56, %c7_57, %c1_58, %c0_59], %82 {strides = array<i32>} : memref<1x8x2x8x2x16xbf16, #tpu.memory_space<vmem>>, vector<1x8x1x1x1x16xbf16>,
    return
  }
  func.func @transform_0(%arg0: i32) -> (i32, i32, i32, i32) {
    %c0_i32 = arith.constant 0 : i32
    %c0_i32_0 = arith.constant 0 : i32
    %c0_i32_1 = arith.constant 0 : i32
    %c0_i32_2 = arith.constant 0 : i32
    return %arg0, %c0_i32, %c0_i32_0, %c0_i32_1 : i32, i32, i32, i32
  }
  func.func @transform_1(%arg0: i32) -> (i32, i32, i32, i32, i32, i32) {
    %c0_i32 = arith.constant 0 : i32
    %c0_i32_0 = arith.constant 0 : i32
    %c0_i32_1 = arith.constant 0 : i32
    %c0_i32_2 = arith.constant 0 : i32
    %c0_i32_3 = arith.constant 0 : i32
    %c0_i32_4 = arith.constant 0 : i32
    return %arg0, %c0_i32, %c0_i32_0, %c0_i32_1, %c0_i32_2, %c0_i32_3 : i32, i32, i32, i32, i32, i32
  }
}

module attributes {stable_mosaic.version = 11 : i64} {
  func.func @conv3x3_bn_kernel(%arg0: i32, %arg1: memref<1x16x256xbf16, #tpu.memory_space<vmem>>, %arg2: memref<3x256x128xbf16, #tpu.memory_space<vmem>>, %arg3: memref<1x128xf32, #tpu.memory_space<vmem>>, %arg4: memref<1x128xf32, #tpu.memory_space<vmem>>, %arg5: memref<1x16x128xbf16, #tpu.memory_space<vmem>>, %arg6: memref<16x128xf32, #tpu.memory_space<vmem>>) attributes {dimension_semantics = [#tpu.dimension_semantics<parallel>], iteration_bounds = array<i64: 2>, scalar_prefetch = 0 : i64, scratch_operands = 1 : i64, tpu.core_type = #tpu.core_type<tc>, window_params = [{transform_indices = @transform_0, window_bounds = array<i64: 1, 16, 256>}, {pipeline_mode = #tpu.pipeline_mode<synchronous>, transform_indices = @transform_1, window_bounds = array<i64: 3, 256, 128>}, {pipeline_mode = #tpu.pipeline_mode<synchronous>, transform_indices = @transform_2, window_bounds = array<i64: 1, 128>}, {pipeline_mode = #tpu.pipeline_mode<synchronous>, transform_indices = @transform_3, window_bounds = array<i64: 1, 128>}, {transform_indices = @transform_4, window_bounds = array<i64: 1, 16, 128>}]} {
    %c0 = arith.constant 0 : index
    %c0_0 = arith.constant 0 : index
    %c0_1 = arith.constant 0 : index
    %0 = vector.load %arg1[%c0, %c0_0, %c0_1] : memref<1x16x256xbf16, #tpu.memory_space<vmem>>, vector<1x16x256xbf16>
    %1 = vector.shape_cast %0 : vector<1x16x256xbf16> to vector<16x256xbf16>
    %c1 = arith.constant 1 : index
    %c0_2 = arith.constant 0 : index
    %c0_3 = arith.constant 0 : index
    %2 = vector.load %arg2[%c1, %c0_2, %c0_3] : memref<3x256x128xbf16, #tpu.memory_space<vmem>>, vector<1x256x128xbf16>
    %3 = vector.shape_cast %2 : vector<1x256x128xbf16> to vector<256x128xbf16>
    %cst = arith.constant dense<0.000000e+00> : vector<16x128xf32>
    %4 = tpu.matmul %1, %3, %cst {dimension_numbers = #tpu.dot_dimension_numbers<[1], [0], [0], [1], [0, 0, 1, 1], [], []>} : vector<16x256xbf16>, vector<256x128xbf16>, vector<16x128xf32> -> vector<16x128xf32>
    %c0_4 = arith.constant 0 : index
    %c0_5 = arith.constant 0 : index
    %5 = vector.load %arg6[%c0_4, %c0_5] : memref<16x128xf32, #tpu.memory_space<vmem>>, vector<16x128xf32>
    tpu.vector_store %arg6[%c0_4, %c0_5], %4 {strides = array<i32>} : memref<16x128xf32, #tpu.memory_space<vmem>>, vector<16x128xf32>,
    %c1_6 = arith.constant 1 : index
    %c0_7 = arith.constant 0 : index
    %6 = vector.load %arg6[%c1_6, %c0_7] : memref<16x128xf32, #tpu.memory_space<vmem>>, vector<15x128xf32>
    %c0_8 = arith.constant 0 : index
    %c0_9 = arith.constant 0 : index
    %c0_10 = arith.constant 0 : index
    %7 = vector.load %arg1[%c0_8, %c0_9, %c0_10] : memref<1x16x256xbf16, #tpu.memory_space<vmem>>, vector<1x15x256xbf16>
    %8 = vector.shape_cast %7 : vector<1x15x256xbf16> to vector<15x256xbf16>
    %c0_11 = arith.constant 0 : index
    %c0_12 = arith.constant 0 : index
    %c0_13 = arith.constant 0 : index
    %9 = vector.load %arg2[%c0_11, %c0_12, %c0_13] : memref<3x256x128xbf16, #tpu.memory_space<vmem>>, vector<1x256x128xbf16>
    %10 = vector.shape_cast %9 : vector<1x256x128xbf16> to vector<256x128xbf16>
    %cst_14 = arith.constant dense<0.000000e+00> : vector<15x128xf32>
    %11 = tpu.matmul %8, %10, %cst_14 {dimension_numbers = #tpu.dot_dimension_numbers<[1], [0], [0], [1], [0, 0, 1, 1], [], []>} : vector<15x256xbf16>, vector<256x128xbf16>, vector<15x128xf32> -> vector<15x128xf32>
    %12 = arith.addf %6, %11 : vector<15x128xf32>
    %c1_15 = arith.constant 1 : index
    %c0_16 = arith.constant 0 : index
    %13 = vector.load %arg6[%c1_15, %c0_16] : memref<16x128xf32, #tpu.memory_space<vmem>>, vector<15x128xf32>
    tpu.vector_store %arg6[%c1_15, %c0_16], %12 {strides = array<i32>} : memref<16x128xf32, #tpu.memory_space<vmem>>, vector<15x128xf32>,
    %c0_17 = arith.constant 0 : index
    %c0_18 = arith.constant 0 : index
    %14 = vector.load %arg6[%c0_17, %c0_18] : memref<16x128xf32, #tpu.memory_space<vmem>>, vector<15x128xf32>
    %c0_19 = arith.constant 0 : index
    %c1_20 = arith.constant 1 : index
    %c0_21 = arith.constant 0 : index
    %15 = vector.load %arg1[%c0_19, %c1_20, %c0_21] : memref<1x16x256xbf16, #tpu.memory_space<vmem>>, vector<1x15x256xbf16>
    %16 = vector.shape_cast %15 : vector<1x15x256xbf16> to vector<15x256xbf16>
    %c2 = arith.constant 2 : index
    %c0_22 = arith.constant 0 : index
    %c0_23 = arith.constant 0 : index
    %17 = vector.load %arg2[%c2, %c0_22, %c0_23] : memref<3x256x128xbf16, #tpu.memory_space<vmem>>, vector<1x256x128xbf16>
    %18 = vector.shape_cast %17 : vector<1x256x128xbf16> to vector<256x128xbf16>
    %cst_24 = arith.constant dense<0.000000e+00> : vector<15x128xf32>
    %19 = tpu.matmul %16, %18, %cst_24 {dimension_numbers = #tpu.dot_dimension_numbers<[1], [0], [0], [1], [0, 0, 1, 1], [], []>} : vector<15x256xbf16>, vector<256x128xbf16>, vector<15x128xf32> -> vector<15x128xf32>
    %20 = arith.addf %14, %19 : vector<15x128xf32>
    %c0_25 = arith.constant 0 : index
    %c0_26 = arith.constant 0 : index
    %21 = vector.load %arg6[%c0_25, %c0_26] : memref<16x128xf32, #tpu.memory_space<vmem>>, vector<15x128xf32>
    tpu.vector_store %arg6[%c0_25, %c0_26], %20 {strides = array<i32>} : memref<16x128xf32, #tpu.memory_space<vmem>>, vector<15x128xf32>,
    %c0_27 = arith.constant 0 : index
    %c0_28 = arith.constant 0 : index
    %22 = vector.load %arg6[%c0_27, %c0_28] : memref<16x128xf32, #tpu.memory_space<vmem>>, vector<16x128xf32>
    %c0_29 = arith.constant 0 : index
    %c0_30 = arith.constant 0 : index
    %23 = vector.load %arg3[%c0_29, %c0_30] : memref<1x128xf32, #tpu.memory_space<vmem>>, vector<1x128xf32>
    %24 = vector.broadcast %23 : vector<1x128xf32> to vector<16x128xf32>
    %25 = arith.mulf %22, %24 : vector<16x128xf32>
    %c0_31 = arith.constant 0 : index
    %c0_32 = arith.constant 0 : index
    %26 = vector.load %arg4[%c0_31, %c0_32] : memref<1x128xf32, #tpu.memory_space<vmem>>, vector<1x128xf32>
    %27 = vector.broadcast %26 : vector<1x128xf32> to vector<16x128xf32>
    %28 = arith.addf %25, %27 : vector<16x128xf32>
    %cst_33 = arith.constant 0.000000e+00 : f32
    %29 = vector.broadcast %cst_33 : f32 to vector<16x128xf32>
    %30 = arith.maximumf %28, %29 : vector<16x128xf32>
    %31 = arith.truncf %30 : vector<16x128xf32> to vector<16x128xbf16>
    %c0_34 = arith.constant 0 : index
    %c0_35 = arith.constant 0 : index
    %c0_36 = arith.constant 0 : index
    %32 = vector.load %arg5[%c0_34, %c0_35, %c0_36] : memref<1x16x128xbf16, #tpu.memory_space<vmem>>, vector<1x16x128xbf16>
    %33 = vector.shape_cast %32 : vector<1x16x128xbf16> to vector<16x128xbf16>
    %34 = vector.shape_cast %31 : vector<16x128xbf16> to vector<1x16x128xbf16>
    tpu.vector_store %arg5[%c0_34, %c0_35, %c0_36], %34 {strides = array<i32>} : memref<1x16x128xbf16, #tpu.memory_space<vmem>>, vector<1x16x128xbf16>,
    return
  }
  func.func @transform_0(%arg0: i32) -> (i32, i32, i32) {
    %c0_i32 = arith.constant 0 : i32
    %c0_i32_0 = arith.constant 0 : i32
    %c0_i32_1 = arith.constant 0 : i32
    return %arg0, %c0_i32, %c0_i32_0 : i32, i32, i32
  }
  func.func @transform_1(%arg0: i32) -> (i32, i32, i32) {
    %c0_i32 = arith.constant 0 : i32
    %c0_i32_0 = arith.constant 0 : i32
    %c0_i32_1 = arith.constant 0 : i32
    %c0_i32_2 = arith.constant 0 : i32
    return %c0_i32, %c0_i32_0, %c0_i32_1 : i32, i32, i32
  }
  func.func @transform_2(%arg0: i32) -> (i32, i32) {
    %c0_i32 = arith.constant 0 : i32
    %c0_i32_0 = arith.constant 0 : i32
    %c0_i32_1 = arith.constant 0 : i32
    return %c0_i32, %c0_i32_0 : i32, i32
  }
  func.func @transform_3(%arg0: i32) -> (i32, i32) {
    %c0_i32 = arith.constant 0 : i32
    %c0_i32_0 = arith.constant 0 : i32
    %c0_i32_1 = arith.constant 0 : i32
    return %c0_i32, %c0_i32_0 : i32, i32
  }
  func.func @transform_4(%arg0: i32) -> (i32, i32, i32) {
    %c0_i32 = arith.constant 0 : i32
    %c0_i32_0 = arith.constant 0 : i32
    %c0_i32_1 = arith.constant 0 : i32
    return %arg0, %c0_i32, %c0_i32_0 : i32, i32, i32
  }
}

module attributes {stable_mosaic.version = 11 : i64} {
  func.func @conv3x3_bn_kernel(%arg0: i32, %arg1: memref<1x16x128xbf16, #tpu.memory_space<vmem>>, %arg2: memref<3x128x16xbf16, #tpu.memory_space<vmem>>, %arg3: memref<1x16xf32, #tpu.memory_space<vmem>>, %arg4: memref<1x16xf32, #tpu.memory_space<vmem>>, %arg5: memref<1x16x16xf32, #tpu.memory_space<vmem>>, %arg6: memref<16x16xf32, #tpu.memory_space<vmem>>) attributes {dimension_semantics = [#tpu.dimension_semantics<parallel>], iteration_bounds = array<i64: 2>, scalar_prefetch = 0 : i64, scratch_operands = 1 : i64, tpu.core_type = #tpu.core_type<tc>, window_params = [{transform_indices = @transform_0, window_bounds = array<i64: 1, 16, 128>}, {pipeline_mode = #tpu.pipeline_mode<synchronous>, transform_indices = @transform_1, window_bounds = array<i64: 3, 128, 16>}, {pipeline_mode = #tpu.pipeline_mode<synchronous>, transform_indices = @transform_2, window_bounds = array<i64: 1, 16>}, {pipeline_mode = #tpu.pipeline_mode<synchronous>, transform_indices = @transform_3, window_bounds = array<i64: 1, 16>}, {transform_indices = @transform_4, window_bounds = array<i64: 1, 16, 16>}]} {
    %c0 = arith.constant 0 : index
    %c0_0 = arith.constant 0 : index
    %c0_1 = arith.constant 0 : index
    %0 = vector.load %arg1[%c0, %c0_0, %c0_1] : memref<1x16x128xbf16, #tpu.memory_space<vmem>>, vector<1x16x128xbf16>
    %1 = vector.shape_cast %0 : vector<1x16x128xbf16> to vector<16x128xbf16>
    %c1 = arith.constant 1 : index
    %c0_2 = arith.constant 0 : index
    %c0_3 = arith.constant 0 : index
    %2 = vector.load %arg2[%c1, %c0_2, %c0_3] : memref<3x128x16xbf16, #tpu.memory_space<vmem>>, vector<1x128x16xbf16>
    %3 = vector.shape_cast %2 : vector<1x128x16xbf16> to vector<128x16xbf16>
    %cst = arith.constant dense<0.000000e+00> : vector<16x16xf32>
    %4 = tpu.matmul %1, %3, %cst {dimension_numbers = #tpu.dot_dimension_numbers<[1], [0], [0], [1], [0, 0, 1, 1], [], []>} : vector<16x128xbf16>, vector<128x16xbf16>, vector<16x16xf32> -> vector<16x16xf32>
    %c0_4 = arith.constant 0 : index
    %c0_5 = arith.constant 0 : index
    %5 = vector.load %arg6[%c0_4, %c0_5] : memref<16x16xf32, #tpu.memory_space<vmem>>, vector<16x16xf32>
    tpu.vector_store %arg6[%c0_4, %c0_5], %4 {strides = array<i32>} : memref<16x16xf32, #tpu.memory_space<vmem>>, vector<16x16xf32>,
    %c1_6 = arith.constant 1 : index
    %c0_7 = arith.constant 0 : index
    %6 = vector.load %arg6[%c1_6, %c0_7] : memref<16x16xf32, #tpu.memory_space<vmem>>, vector<15x16xf32>
    %c0_8 = arith.constant 0 : index
    %c0_9 = arith.constant 0 : index
    %c0_10 = arith.constant 0 : index
    %7 = vector.load %arg1[%c0_8, %c0_9, %c0_10] : memref<1x16x128xbf16, #tpu.memory_space<vmem>>, vector<1x15x128xbf16>
    %8 = vector.shape_cast %7 : vector<1x15x128xbf16> to vector<15x128xbf16>
    %c0_11 = arith.constant 0 : index
    %c0_12 = arith.constant 0 : index
    %c0_13 = arith.constant 0 : index
    %9 = vector.load %arg2[%c0_11, %c0_12, %c0_13] : memref<3x128x16xbf16, #tpu.memory_space<vmem>>, vector<1x128x16xbf16>
    %10 = vector.shape_cast %9 : vector<1x128x16xbf16> to vector<128x16xbf16>
    %cst_14 = arith.constant dense<0.000000e+00> : vector<15x16xf32>
    %11 = tpu.matmul %8, %10, %cst_14 {dimension_numbers = #tpu.dot_dimension_numbers<[1], [0], [0], [1], [0, 0, 1, 1], [], []>} : vector<15x128xbf16>, vector<128x16xbf16>, vector<15x16xf32> -> vector<15x16xf32>
    %12 = arith.addf %6, %11 : vector<15x16xf32>
    %c1_15 = arith.constant 1 : index
    %c0_16 = arith.constant 0 : index
    %13 = vector.load %arg6[%c1_15, %c0_16] : memref<16x16xf32, #tpu.memory_space<vmem>>, vector<15x16xf32>
    tpu.vector_store %arg6[%c1_15, %c0_16], %12 {strides = array<i32>} : memref<16x16xf32, #tpu.memory_space<vmem>>, vector<15x16xf32>,
    %c0_17 = arith.constant 0 : index
    %c0_18 = arith.constant 0 : index
    %14 = vector.load %arg6[%c0_17, %c0_18] : memref<16x16xf32, #tpu.memory_space<vmem>>, vector<15x16xf32>
    %c0_19 = arith.constant 0 : index
    %c1_20 = arith.constant 1 : index
    %c0_21 = arith.constant 0 : index
    %15 = vector.load %arg1[%c0_19, %c1_20, %c0_21] : memref<1x16x128xbf16, #tpu.memory_space<vmem>>, vector<1x15x128xbf16>
    %16 = vector.shape_cast %15 : vector<1x15x128xbf16> to vector<15x128xbf16>
    %c2 = arith.constant 2 : index
    %c0_22 = arith.constant 0 : index
    %c0_23 = arith.constant 0 : index
    %17 = vector.load %arg2[%c2, %c0_22, %c0_23] : memref<3x128x16xbf16, #tpu.memory_space<vmem>>, vector<1x128x16xbf16>
    %18 = vector.shape_cast %17 : vector<1x128x16xbf16> to vector<128x16xbf16>
    %cst_24 = arith.constant dense<0.000000e+00> : vector<15x16xf32>
    %19 = tpu.matmul %16, %18, %cst_24 {dimension_numbers = #tpu.dot_dimension_numbers<[1], [0], [0], [1], [0, 0, 1, 1], [], []>} : vector<15x128xbf16>, vector<128x16xbf16>, vector<15x16xf32> -> vector<15x16xf32>
    %20 = arith.addf %14, %19 : vector<15x16xf32>
    %c0_25 = arith.constant 0 : index
    %c0_26 = arith.constant 0 : index
    %21 = vector.load %arg6[%c0_25, %c0_26] : memref<16x16xf32, #tpu.memory_space<vmem>>, vector<15x16xf32>
    tpu.vector_store %arg6[%c0_25, %c0_26], %20 {strides = array<i32>} : memref<16x16xf32, #tpu.memory_space<vmem>>, vector<15x16xf32>,
    %c0_27 = arith.constant 0 : index
    %c0_28 = arith.constant 0 : index
    %22 = vector.load %arg6[%c0_27, %c0_28] : memref<16x16xf32, #tpu.memory_space<vmem>>, vector<16x16xf32>
    %c0_29 = arith.constant 0 : index
    %c0_30 = arith.constant 0 : index
    %23 = vector.load %arg3[%c0_29, %c0_30] : memref<1x16xf32, #tpu.memory_space<vmem>>, vector<1x16xf32>
    %24 = vector.broadcast %23 : vector<1x16xf32> to vector<16x16xf32>
    %25 = arith.mulf %22, %24 : vector<16x16xf32>
    %c0_31 = arith.constant 0 : index
    %c0_32 = arith.constant 0 : index
    %26 = vector.load %arg4[%c0_31, %c0_32] : memref<1x16xf32, #tpu.memory_space<vmem>>, vector<1x16xf32>
    %27 = vector.broadcast %26 : vector<1x16xf32> to vector<16x16xf32>
    %28 = arith.addf %25, %27 : vector<16x16xf32>
    %c0_33 = arith.constant 0 : index
    %c0_34 = arith.constant 0 : index
    %c0_35 = arith.constant 0 : index
    %29 = vector.load %arg5[%c0_33, %c0_34, %c0_35] : memref<1x16x16xf32, #tpu.memory_space<vmem>>, vector<1x16x16xf32>
    %30 = vector.shape_cast %29 : vector<1x16x16xf32> to vector<16x16xf32>
    %31 = vector.shape_cast %28 : vector<16x16xf32> to vector<1x16x16xf32>
    tpu.vector_store %arg5[%c0_33, %c0_34, %c0_35], %31 {strides = array<i32>} : memref<1x16x16xf32, #tpu.memory_space<vmem>>, vector<1x16x16xf32>,
    return
  }
  func.func @transform_0(%arg0: i32) -> (i32, i32, i32) {
    %c0_i32 = arith.constant 0 : i32
    %c0_i32_0 = arith.constant 0 : i32
    %c0_i32_1 = arith.constant 0 : i32
    return %arg0, %c0_i32, %c0_i32_0 : i32, i32, i32
  }
  func.func @transform_1(%arg0: i32) -> (i32, i32, i32) {
    %c0_i32 = arith.constant 0 : i32
    %c0_i32_0 = arith.constant 0 : i32
    %c0_i32_1 = arith.constant 0 : i32
    %c0_i32_2 = arith.constant 0 : i32
    return %c0_i32, %c0_i32_0, %c0_i32_1 : i32, i32, i32
  }
  func.func @transform_2(%arg0: i32) -> (i32, i32) {
    %c0_i32 = arith.constant 0 : i32
    %c0_i32_0 = arith.constant 0 : i32
    %c0_i32_1 = arith.constant 0 : i32
    return %c0_i32, %c0_i32_0 : i32, i32
  }
  func.func @transform_3(%arg0: i32) -> (i32, i32) {
    %c0_i32 = arith.constant 0 : i32
    %c0_i32_0 = arith.constant 0 : i32
    %c0_i32_1 = arith.constant 0 : i32
    return %c0_i32, %c0_i32_0 : i32, i32
  }
  func.func @transform_4(%arg0: i32) -> (i32, i32, i32) {
    %c0_i32 = arith.constant 0 : i32
    %c0_i32_0 = arith.constant 0 : i32
    %c0_i32_1 = arith.constant 0 : i32
    return %arg0, %c0_i32, %c0_i32_0 : i32, i32, i32
  }
}

</mosaic_0001>

<llo_original>
// kernel: tile.90
$region0: #{tile.90}
  #allocation0 [shape = 's32[1]{0}', space=sflag, size = 0x4, scoped, tag = 'scoped memory for tile.90']
  %s0 = inlined_call_operand.vmem [shape: f32[8], index: 0, kind: input, shape index: {}]
  %s1 = inlined_call_operand.vmem [shape: f32[16,8], index: 1, kind: output, shape index: {}]
  // Predicated region
  $region2: #{tile.90} parent=0 // pred_check
    _
  $region3: #{tile.90} parent=0 // pred_check_branch
    %3 = sbr.rel (0) target = $region5
  $region4: #{tile.90} parent=0 // pred_region
    _
  $region5: #{tile.90} parent=0 // pred_fallthru
    _
  %v4 = vld [vmem:[%s0] ss:$0 sm:$0xff]
  %5 = vst [vmem:[%s1] sm:$0xff] %v4
  %s6 = scalar_lea.vmem %s1, 8
  %7 = vst [vmem:[%s6] sm:$0xff] %v4

// kernel: tile.91
$region0: #{tile.91}
  %s0 = inlined_call_operand.vmem [shape: f32[16,8], index: 0, kind: input, shape index: {}]
  %s1 = inlined_call_operand.vmem [shape: f32[1,128], index: 1, kind: output, shape index: {}]
  $region1: #{tile.91} parent=0
    #allocation0 [shape = 'u8[4096]{0}', space=vmem, size = 0x1000, scoped, tag = 'scoped mem for output reshape']
    %v2 = vld [vmem:[%s0] sm:$0x1]
    %vm3 = vcmask 64512
    %4 = vst.msk [vmem:[#allocation0] sm:$0x1] %vm3, %v2
    %s5 = scalar_lea.vmem %s0, 15
    %v6 = vld [vmem:[%s5] sm:$0x1]
    %7 = vrot.lane.b32.xlu0 %v6, 120
    %v8 = vpop.permute.xlu0 %7
    %vm9 = vcmask 1048512
    %10 = vst.msk [vmem:[#allocation0] sm:$0x1] %vm9, %v8
    %s11 = scalar_lea.vmem %s0, 14
    %v12 = vld [vmem:[%s11] sm:$0x1]
    %13 = vrot.lane.b32.xlu0 %v12, 112
    %v14 = vpop.permute.xlu0 %13
    %vm15 = vcmask 982912
    %16 = vst.msk [vmem:[#allocation0] sm:$0x1] %vm15, %v14
    %s17 = scalar_lea.vmem %s0, 13
    %v18 = vld [vmem:[%s17] sm:$0x1]
    %19 = vrot.lane.b32.xlu0 %v18, 104
    %v20 = vpop.permute.xlu0 %19
    %vm21 = vcmask 917312
    %22 = vst.msk [vmem:[#allocation0] sm:$0x1] %vm21, %v20
    %s23 = scalar_lea.vmem %s0, 12
    %v24 = vld [vmem:[%s23] sm:$0x1]
    %25 = vrot.lane.b32.xlu0 %v24, 96
    %v26 = vpop.permute.xlu0 %25
    %vm27 = vcmask 851712
    %28 = vst.msk [vmem:[#allocation0] sm:$0x1] %vm27, %v26
    %s29 = scalar_lea.vmem %s0, 11
    %v30 = vld [vmem:[%s29] sm:$0x1]
    %31 = vrot.lane.b32.xlu0 %v30, 88
    %v32 = vpop.permute.xlu0 %31
    %vm33 = vcmask 786112
    %34 = vst.msk [vmem:[#allocation0] sm:$0x1] %vm33, %v32
    %s35 = scalar_lea.vmem %s0, 10
    %v36 = vld [vmem:[%s35] sm:$0x1]
    %37 = vrot.lane.b32.xlu0 %v36, 80
    %v38 = vpop.permute.xlu0 %37
    %vm39 = vcmask 720512
    %40 = vst.msk [vmem:[#allocation0] sm:$0x1] %vm39, %v38
    %s41 = scalar_lea.vmem %s0, 9
    %v42 = vld [vmem:[%s41] sm:$0x1]
    %43 = vrot.lane.b32.xlu0 %v42, 72
    %v44 = vpop.permute.xlu0 %43
    %vm45 = vcmask 654912
    %46 = vst.msk [vmem:[#allocation0] sm:$0x1] %vm45, %v44
    %s47 = scalar_lea.vmem %s0, 8
    %v48 = vld [vmem:[%s47] sm:$0x1]
    %49 = vrot.lane.b32.xlu0 %v48, 64
    %v50 = vpop.permute.xlu0 %49
    %vm51 = vcmask 589312
    %52 = vst.msk [vmem:[#allocation0] sm:$0x1] %vm51, %v50
    %s53 = scalar_lea.vmem %s0, 7
    %v54 = vld [vmem:[%s53] sm:$0x1]
    %55 = vrot.lane.b32.xlu0 %v54, 56
    %v56 = vpop.permute.xlu0 %55
    %vm57 = vcmask 523712
    %58 = vst.msk [vmem:[#allocation0] sm:$0x1] %vm57, %v56
    %s59 = scalar_lea.vmem %s0, 6
    %v60 = vld [vmem:[%s59] sm:$0x1]
    %61 = vrot.lane.b32.xlu0 %v60, 48
    %v62 = vpop.permute.xlu0 %61
    %vm63 = vcmask 458112
    %64 = vst.msk [vmem:[#allocation0] sm:$0x1] %vm63, %v62
    %s65 = scalar_lea.vmem %s0, 5
    %v66 = vld [vmem:[%s65] sm:$0x1]
    %67 = vrot.lane.b32.xlu0 %v66, 40
    %v68 = vpop.permute.xlu0 %67
    %vm69 = vcmask 392512
    %70 = vst.msk [vmem:[#allocation0] sm:$0x1] %vm69, %v68
    %s71 = scalar_lea.vmem %s0, 4
    %v72 = vld [vmem:[%s71] sm:$0x1]
    %73 = vrot.lane.b32.xlu0 %v72, 32
    %v74 = vpop.permute.xlu0 %73
    %vm75 = vcmask 326912
    %76 = vst.msk [vmem:[#allocation0] sm:$0x1] %vm75, %v74
    %s77 = scalar_lea.vmem %s0, 3
    %v78 = vld [vmem:[%s77] sm:$0x1]
    %79 = vrot.lane.b32.xlu0 %v78, 24
    %v80 = vpop.permute.xlu0 %79
    %vm81 = vcmask 261312
    %82 = vst.msk [vmem:[#allocation0] sm:$0x1] %vm81, %v80
    %s83 = scalar_lea.vmem %s0, 2
    %v84 = vld [vmem:[%s83] sm:$0x1]
    %85 = vrot.lane.b32.xlu0 %v84, 16
    %v86 = vpop.permute.xlu0 %85
    %vm87 = vcmask 195712
    %88 = vst.msk [vmem:[#allocation0] sm:$0x1] %vm87, %v86
    %s89 = scalar_lea.vmem %s0, 1
    %v90 = vld [vmem:[%s89] sm:$0x1]
    %91 = vrot.lane.b32.xlu0 %v90, 8
    %v92 = vpop.permute.xlu0 %91
    %vm93 = vcmask 130112
    %94 = vst.msk [vmem:[#allocation0] sm:$0x1] %vm93, %v92
    %s96 = ssub.s32 2, 1
    %v97 = vld [vmem:[#allocation0] sm:%s96]
    %s99 = ssub.s32 2, 1
    %100 = vst [vmem:[%s1] sm:%s99] %v97

// kernel: _lambda_.17
$region0: #{_lambda_.17}
  #allocation0 [shape = 'u32[]', space=smem, size = 0x4, offset = 0x4, fixed_abs, tag = 'smem constant byte address 0x4 - core index']
  #allocation1 [shape = 'u32[72,128]{1,0:T(1,128)}', space=vmem, size = 0x9000, scoped, tag = 'internal scratch']
  #allocation2 [shape = 'f32[16,128]{1,0:T(8,128)}', space=vmem, size = 0x2000, scoped, tag = 'scratch operand']
  %s0 = inlined_call_operand.vmem [shape: bf16[2,16,128], index: 0, kind: input, shape index: {}]
  %s1 = inlined_call_operand.vmem [shape: bf16[3,128,128], index: 1, kind: input, shape index: {}]
  %s2 = inlined_call_operand.vmem [shape: f32[1,128], index: 2, kind: input, shape index: {}]
  %s3 = inlined_call_operand.vmem [shape: f32[1,128], index: 3, kind: input, shape index: {}]
  %s4 = inlined_call_operand.vmem [shape: bf16[2,16,128], index: 4, kind: output, shape index: {}]
  %s5 = sld [smem:[#allocation0]]
  $region49: #{_lambda_.17} parent=0
    _
  %s7 = ssub.s32 1, %s5
  %s8 = scalar_select 0, %s7, %s5
  loop: start=0, step=1, limit=4
  $region2: #{_lambda_.17} parent=0 // loop_pre_header
    _
  $region3: #{_lambda_.17} parent=0 // loop_header
    %s10 = sphi 0, %s14
    %p11 = scmp.ge.s32.totalorder %s10, 4
    %s20 = sphi 0, %s22
    %s23 = sphi 0, %s20
    %s24 = sphi 0, %s23
    %s40 = sphi 0, %s24
    %s44 = sphi 0, %s44
    %s46 = sphi 0, %s44
    %s47 = sphi 0, %s46
    %s61 = sphi 0, %s47
    %s65 = sphi 0, %s65
    %s67 = sphi 0, %s65
    %s68 = sphi 0, %s67
    %s82 = sphi 0, %s68
    %s86 = sphi 0, %s86
    %s88 = sphi 0, %s86
    %s89 = sphi 0, %s88
    %s103 = sphi 0, %s89
    %s109 = sphi 0, %s111
    %s112 = sphi 0, %s109
    %s113 = sphi 0, %s112
    %s129 = sphi 0, %s113
  $region4: #{_lambda_.17} parent=0 // loop_header_branch
    %13 = sbr.rel (%p11) target = $region8
  $region5: #{_lambda_.17} parent=0 // loop_body
    %s15 = ssub.s32 %s10, 1
    %s16 = ssub.s32 %s10, 2
    %s17 = sadd.s32 %s10, 1
    %s18 = ssub.s32 %s10, %s17
    %p19 = scmp.eq.s32.totalorder %s18, 0
    %s21 = sadd.s32 %s20, 1
    %s22 = scalar_select %p19, %s20, %s21
    %p25 = pneg %p19
    %p26 = scmp.eq.s32.totalorder %s10, 1
    %p27 = por %p25, %p26
    %p28 = scmp.ne.s32.totalorder %s20, %s23
    %p29 = scmp.eq.s32.totalorder %s10, 0
    %p30 = por %p28, %p29
    %p31 = scmp.ne.s32.totalorder %s20, %s23
    %p32 = scmp.eq.s32.totalorder %s15, 1
    %p33 = por %p31, %p32
    %p34 = scmp.ne.s32.totalorder %s23, %s24
    %p35 = scmp.eq.s32.totalorder %s15, 0
    %p36 = por %p34, %p35
    %p37 = scmp.ne.s32.totalorder %s23, %s24
    %p38 = scmp.eq.s32.totalorder %s16, 1
    %p39 = por %p37, %p38
    %p41 = scmp.ne.s32.totalorder %s24, %s40
    %p42 = scmp.eq.s32.totalorder %s16, 0
    %p43 = por %p41, %p42
    %s45 = sadd.s32 %s44, 1
    %p48 = scmp.eq.s32.totalorder %s10, 1
    %p49 = scmp.ne.s32.totalorder %s44, %s46
    %p50 = scmp.eq.s32.totalorder %s10, 0
    %p51 = por %p49, %p50
    %p52 = scmp.ne.s32.totalorder %s44, %s46
    %p53 = scmp.eq.s32.totalorder %s15, 1
    %p54 = por %p52, %p53
    %p55 = scmp.ne.s32.totalorder %s46, %s47
    %p56 = scmp.eq.s32.totalorder %s15, 0
    %p57 = por %p55, %p56
    %p58 = scmp.ne.s32.totalorder %s46, %s47
    %p59 = scmp.eq.s32.totalorder %s16, 1
    %p60 = por %p58, %p59
    %p62 = scmp.ne.s32.totalorder %s47, %s61
    %p63 = scmp.eq.s32.totalorder %s16, 0
    %p64 = por %p62, %p63
    %s66 = sadd.s32 %s65, 1
    %p69 = scmp.eq.s32.totalorder %s10, 1
    %p70 = scmp.ne.s32.totalorder %s65, %s67
    %p71 = scmp.eq.s32.totalorder %s10, 0
    %p72 = por %p70, %p71
    %p73 = scmp.ne.s32.totalorder %s65, %s67
    %p74 = scmp.eq.s32.totalorder %s15, 1
    %p75 = por %p73, %p74
    %p76 = scmp.ne.s32.totalorder %s67, %s68
    %p77 = scmp.eq.s32.totalorder %s15, 0
    %p78 = por %p76, %p77
    %p79 = scmp.ne.s32.totalorder %s67, %s68
    %p80 = scmp.eq.s32.totalorder %s16, 1
    %p81 = por %p79, %p80
    %p83 = scmp.ne.s32.totalorder %s68, %s82
    %p84 = scmp.eq.s32.totalorder %s16, 0
    %p85 = por %p83, %p84
    %s87 = sadd.s32 %s86, 1
    %p90 = scmp.eq.s32.totalorder %s10, 1
    %p91 = scmp.ne.s32.totalorder %s86, %s88
    %p92 = scmp.eq.s32.totalorder %s10, 0
    %p93 = por %p91, %p92
    %p94 = scmp.ne.s32.totalorder %s86, %s88
    %p95 = scmp.eq.s32.totalorder %s15, 1
    %p96 = por %p94, %p95
    %p97 = scmp.ne.s32.totalorder %s88, %s89
    %p98 = scmp.eq.s32.totalorder %s15, 0
    %p99 = por %p97, %p98
    %p100 = scmp.ne.s32.totalorder %s88, %s89
    %p101 = scmp.eq.s32.totalorder %s16, 1
    %p102 = por %p100, %p101
    %p104 = scmp.ne.s32.totalorder %s89, %s103
    %p105 = scmp.eq.s32.totalorder %s16, 0
    %p106 = por %p104, %p105
    %s107 = ssub.s32 %s10, %s17
    %p108 = scmp.eq.s32.totalorder %s107, 0
    %s110 = sadd.s32 %s109, 1
    %s111 = scalar_select %p108, %s109, %s110
    %p114 = pneg %p108
    %p115 = scmp.eq.s32.totalorder %s10, 1
    %p116 = por %p114, %p115
    %p117 = scmp.ne.s32.totalorder %s109, %s112
    %p118 = scmp.eq.s32.totalorder %s10, 0
    %p119 = por %p117, %p118
    %p120 = scmp.ne.s32.totalorder %s109, %s112
    %p121 = scmp.eq.s32.totalorder %s15, 1
    %p122 = por %p120, %p121
    %p123 = scmp.ne.s32.totalorder %s112, %s113
    %p124 = scmp.eq.s32.totalorder %s15, 0
    %p125 = por %p123, %p124
    %p126 = scmp.ne.s32.totalorder %s112, %s113
    %p127 = scmp.eq.s32.totalorder %s16, 1
    %p128 = por %p126, %p127
    %p130 = scmp.ne.s32.totalorder %s113, %s129
    %p131 = scmp.eq.s32.totalorder %s16, 0
    %p132 = por %p130, %p131
    %p133 = scmp.le.s32.totalorder 1, %s10
    %p134 = scmp.lt.s32.totalorder %s10, 3
    %p135 = pnand %p133, %p134
    %p136 = pneg %p135
    // Predicated region
    $region9: #{_lambda_.17} parent=5 // pred_check
      _
    $region10: #{_lambda_.17} parent=5 // pred_check_branch
      %138 = sbr.rel (%p135) target = $region12
    $region11: #{_lambda_.17} parent=5 // pred_region
      %s139 = ssub.s32 %s10, 1
      // Predicated region
      $region13: #{_lambda_.17} parent=11 // pred_check
        %p140 = pneg %p57
      $region14: #{_lambda_.17} parent=11 // pred_check_branch
        %142 = sbr.rel (%p140) target = $region16
      $region15: #{_lambda_.17} parent=11 // pred_region
        _
      $region16: #{_lambda_.17} parent=11 // pred_fallthru
        _
      // Predicated region
      $region17: #{_lambda_.17} parent=11 // pred_check
        %p143 = pneg %p78
      $region18: #{_lambda_.17} parent=11 // pred_check_branch
        %145 = sbr.rel (%p143) target = $region20
      $region19: #{_lambda_.17} parent=11 // pred_region
        _
      $region20: #{_lambda_.17} parent=11 // pred_fallthru
        _
      // Predicated region
      $region21: #{_lambda_.17} parent=11 // pred_check
        %p146 = pneg %p99
      $region22: #{_lambda_.17} parent=11 // pred_check_branch
        %148 = sbr.rel (%p146) target = $region24
      $region23: #{_lambda_.17} parent=11 // pred_region
        _
      $region24: #{_lambda_.17} parent=11 // pred_fallthru
        _
    $region12: #{_lambda_.17} parent=5 // pred_fallthru
      _
    %p149 = scmp.lt.s32.totalorder %s10, 2
    // Predicated region
    $region25: #{_lambda_.17} parent=5 // pred_check
      %p150 = pneg %p149
    $region26: #{_lambda_.17} parent=5 // pred_check_branch
      %152 = sbr.rel (%p150) target = $region28
    $region27: #{_lambda_.17} parent=5 // pred_region
      // Predicated region
      $region29: #{_lambda_.17} parent=27 // pred_check
        %p153 = pneg %p30
      $region30: #{_lambda_.17} parent=27 // pred_check_branch
        %155 = sbr.rel (%p153) target = $region32
      $region31: #{_lambda_.17} parent=27 // pred_region
        %p156 = scmp.lt.s32.totalorder %s10, 1
        %s157 = scalar_select %p156, %s10, 1
        %s158 = smul.addr %s157, 2
        %s159 = smul.addr %s158, 4
        %s160 = scalar_lea.vmem %s0, %s159
      $region32: #{_lambda_.17} parent=27 // pred_fallthru
        _
    $region28: #{_lambda_.17} parent=5 // pred_fallthru
      _
    %p161 = scmp.le.s32.totalorder 1, %s10
    %p162 = scmp.lt.s32.totalorder %s10, 3
    %p163 = pnand %p161, %p162
    %p164 = pneg %p163
    // Predicated region
    $region33: #{_lambda_.17} parent=5 // pred_check
      _
    $region34: #{_lambda_.17} parent=5 // pred_check_branch
      %166 = sbr.rel (%p163) target = $region36
    $region35: #{_lambda_.17} parent=5 // pred_region
      %s167 = ssub.s32 %s10, 1
      %p168 = scmp.lt.s32.totalorder %s15, 1
      %s169 = scalar_select %p168, %s15, 1
      %s170 = smul.addr %s169, 2
      %s171 = smul.addr %s170, 4
      %s172 = scalar_lea.vmem %s0, %s171
      %p173 = pneg %p36
      %p174 = pneg %p33
      %p175 = pneg %p57
      %p176 = pneg %p54
      %p177 = pneg %p78
      %p178 = pneg %p75
      %p179 = pneg %p99
      %p180 = pneg %p96
      %p181 = pneg %p125
      %p182 = pneg %p122
      %p183 = scmp.lt.s32.totalorder %s15, 1
      %s184 = scalar_select %p183, %s15, 1
      %s185 = smul.addr %s184, 2
      %s186 = smul.addr %s185, 4
      %s187 = scalar_lea.vmem %s4, %s186
      %p188 = scmp.lt.s32.totalorder %s15, 1
      %s189 = scalar_select %p188, %s15, 1
      %s190 = smul.addr %s189, 2
      %s191 = smul.addr %s190, 4
      %s192 = scalar_lea.vmem %s0, %s191
      %p193 = scmp.lt.s32.totalorder %s15, 1
      %s194 = scalar_select %p193, %s15, 1
      %s195 = smul.addr %s194, 2
      %s196 = smul.addr %s195, 4
      %s197 = scalar_lea.vmem %s4, %s196
      %v198 = vld [vmem:[%s192] sm:$0xf]
      %v199 = vld [vmem:[%s192 + $0x4] sm:$0xf]
      %s200 = scalar_lea.vmem %s1, 64
      %v201 = vld [vmem:[%s200] sm:$0xf]
      %v202 = vld [vmem:[%s200 + $0x4] sm:$0xf]
      %v203 = vld [vmem:[%s200 + $0x8] sm:$0xf]
      %v204 = vld [vmem:[%s200 + $0xc] sm:$0xf]
      %v205 = vld [vmem:[%s200 + $0x10] sm:$0xf]
      %v206 = vld [vmem:[%s200 + $0x14] sm:$0xf]
      %v207 = vld [vmem:[%s200 + $0x18] sm:$0xf]
      %v208 = vld [vmem:[%s200 + $0x1c] sm:$0xf]
      %v209 = vld [vmem:[%s200 + $0x20] sm:$0xf]
      %v210 = vld [vmem:[%s200 + $0x24] sm:$0xf]
      %v211 = vld [vmem:[%s200 + $0x28] sm:$0xf]
      %v212 = vld [vmem:[%s200 + $0x2c] sm:$0xf]
      %v213 = vld [vmem:[%s200 + $0x30] sm:$0xf]
      %v214 = vld [vmem:[%s200 + $0x34] sm:$0xf]
      %v215 = vld [vmem:[%s200 + $0x38] sm:$0xf]
      %v216 = vld [vmem:[%s200 + $0x3c] sm:$0xf]
      %v219 = vunpack.c.l.b16 %v198
      %v220 = vunpack.c.l.b16 %v199
      %v221 = vpack.c.b16 %v220, %v219
      %v239 = vunpack.c.l.b16 %v201
      %v240 = vunpack.c.l.b16 %v202
      %v241 = vunpack.c.l.b16 %v203
      %v242 = vunpack.c.l.b16 %v204
      %v243 = vunpack.c.l.b16 %v205
      %v244 = vunpack.c.l.b16 %v206
      %v245 = vunpack.c.l.b16 %v207
      %v246 = vunpack.c.l.b16 %v208
      %v247 = vunpack.c.l.b16 %v209
      %v248 = vunpack.c.l.b16 %v210
      %v249 = vunpack.c.l.b16 %v211
      %v250 = vunpack.c.l.b16 %v212
      %v251 = vunpack.c.l.b16 %v213
      %v252 = vunpack.c.l.b16 %v214
      %v253 = vunpack.c.l.b16 %v215
      %v254 = vunpack.c.l.b16 %v216
      %v255 = vpack.c.b16 %v240, %v239
      %v256 = vpack.c.b16 %v242, %v241
      %v257 = vpack.c.b16 %v244, %v243
      %v258 = vpack.c.b16 %v246, %v245
      %v259 = vpack.c.b16 %v248, %v247
      %v260 = vpack.c.b16 %v250, %v249
      %v261 = vpack.c.b16 %v252, %v251
      %v262 = vpack.c.b16 %v254, %v253
      %271 = vmatpush.bf16.msra.mxu0 %v262
      %272 = vmatpush.bf16.msra.mxu0 %v261
      %273 = vmatpush.bf16.msra.mxu0 %v260
      %274 = vmatpush.bf16.msra.mxu0 %v259
      %275 = vmatpush.bf16.msra.mxu0 %v258
      %276 = vmatpush.bf16.msra.mxu0 %v257
      %277 = vmatpush.bf16.msra.mxu0 %v256
      %278 = vmatpush.bf16.msra.mxu0 %v255
      %279 = vmatmul.bf16.gmra.mxu0 %v221
      %v280 = vpop.f32.mrf.mxu0
      %v281 = vadd.f32 0.0, %v280
      %v282 = vpop.f32.mrf.mxu0
      %v283 = vadd.f32 0.0, %v282
      %284 = vdwg.mxu0
      %285 = vst [vmem:[#allocation2] sm:$0xff] %v281
      %286 = vst [vmem:[#allocation2 + $0x8] sm:$0xff] %v283
      %v287 = vld [vmem:[#allocation2 + $0x1] sm:$0xff]
      %v288 = vld [vmem:[#allocation2 + $0x9] sm:$0x7f]
      %v289 = vld [vmem:[%s192] sm:$0xf]
      %v290 = vld [vmem:[%s192 + $0x4] sm:$0xf]
      %v291 = vld [vmem:[%s1] sm:$0xf]
      %v292 = vld [vmem:[%s1 + $0x4] sm:$0xf]
      %v293 = vld [vmem:[%s1 + $0x8] sm:$0xf]
      %v294 = vld [vmem:[%s1 + $0xc] sm:$0xf]
      %v295 = vld [vmem:[%s1 + $0x10] sm:$0xf]
      %v296 = vld [vmem:[%s1 + $0x14] sm:$0xf]
      %v297 = vld [vmem:[%s1 + $0x18] sm:$0xf]
      %v298 = vld [vmem:[%s1 + $0x1c] sm:$0xf]
      %v299 = vld [vmem:[%s1 + $0x20] sm:$0xf]
      %v300 = vld [vmem:[%s1 + $0x24] sm:$0xf]
      %v301 = vld [vmem:[%s1 + $0x28] sm:$0xf]
      %v302 = vld [vmem:[%s1 + $0x2c] sm:$0xf]
      %v303 = vld [vmem:[%s1 + $0x30] sm:$0xf]
      %v304 = vld [vmem:[%s1 + $0x34] sm:$0xf]
      %v305 = vld [vmem:[%s1 + $0x38] sm:$0xf]
      %v306 = vld [vmem:[%s1 + $0x3c] sm:$0xf]
      %v309 = vunpack.c.l.b16 %v289
      %v310 = vunpack.c.l.b16 %v290
      %v311 = vpack.c.b16 %v310, %v309
      %v329 = vunpack.c.l.b16 %v291
      %v330 = vunpack.c.l.b16 %v292
      %v331 = vunpack.c.l.b16 %v293
      %v332 = vunpack.c.l.b16 %v294
      %v333 = vunpack.c.l.b16 %v295
      %v334 = vunpack.c.l.b16 %v296
      %v335 = vunpack.c.l.b16 %v297
      %v336 = vunpack.c.l.b16 %v298
      %v337 = vunpack.c.l.b16 %v299
      %v338 = vunpack.c.l.b16 %v300
      %v339 = vunpack.c.l.b16 %v301
      %v340 = vunpack.c.l.b16 %v302
      %v341 = vunpack.c.l.b16 %v303
      %v342 = vunpack.c.l.b16 %v304
      %v343 = vunpack.c.l.b16 %v305
      %v344 = vunpack.c.l.b16 %v306
      %v345 = vpack.c.b16 %v330, %v329
      %v346 = vpack.c.b16 %v332, %v331
      %v347 = vpack.c.b16 %v334, %v333
      %v348 = vpack.c.b16 %v336, %v335
      %v349 = vpack.c.b16 %v338, %v337
      %v350 = vpack.c.b16 %v340, %v339
      %v351 = vpack.c.b16 %v342, %v341
      %v352 = vpack.c.b16 %v344, %v343
      %361 = vmatpush.bf16.msra.mxu0 %v352
      %362 = vmatpush.bf16.msra.mxu0 %v351
      %363 = vmatpush.bf16.msra.mxu0 %v350
      %364 = vmatpush.bf16.msra.mxu0 %v349
      %365 = vmatpush.bf16.msra.mxu0 %v348
      %366 = vmatpush.bf16.msra.mxu0 %v347
      %367 = vmatpush.bf16.msra.mxu0 %v346
      %368 = vmatpush.bf16.msra.mxu0 %v345
      %369 = vmatmul.bf16.gmra.mxu0 %v311
      %v370 = vpop.f32.mrf.mxu0
      %v371 = vadd.f32 0.0, %v370
      %v372 = vpop.f32.mrf.mxu0
      %v373 = vadd.f32 0.0, %v372
      %374 = vdwg.mxu0
      %v375 = vadd.f32 %v287, %v371
      %v376 = vadd.f32 %v288, %v373
      %377 = vst [vmem:[#allocation2 + $0x1] sm:$0xff] %v375
      %378 = vst [vmem:[#allocation2 + $0x9] sm:$0x7f] %v376
      %v379 = vld [vmem:[#allocation2] sm:$0xff]
      %v380 = vld [vmem:[#allocation2 + $0x8] sm:$0x7f]
      %v381 = vld [vmem:[%s192] sm:$0xf]
      %v382 = vld [vmem:[%s192 + $0x4] sm:$0xf]
      %s383 = scalar_lea.vmem %s1, 128
      %v384 = vld [vmem:[%s383] sm:$0xf]
      %v385 = vld [vmem:[%s383 + $0x4] sm:$0xf]
      %v386 = vld [vmem:[%s383 + $0x8] sm:$0xf]
      %v387 = vld [vmem:[%s383 + $0xc] sm:$0xf]
      %v388 = vld [vmem:[%s383 + $0x10] sm:$0xf]
      %v389 = vld [vmem:[%s383 + $0x14] sm:$0xf]
      %v390 = vld [vmem:[%s383 + $0x18] sm:$0xf]
      %v391 = vld [vmem:[%s383 + $0x1c] sm:$0xf]
      %v392 = vld [vmem:[%s383 + $0x20] sm:$0xf]
      %v393 = vld [vmem:[%s383 + $0x24] sm:$0xf]
      %v394 = vld [vmem:[%s383 + $0x28] sm:$0xf]
      %v395 = vld [vmem:[%s383 + $0x2c] sm:$0xf]
      %v396 = vld [vmem:[%s383 + $0x30] sm:$0xf]
      %v397 = vld [vmem:[%s383 + $0x34] sm:$0xf]
      %v398 = vld [vmem:[%s383 + $0x38] sm:$0xf]
      %v399 = vld [vmem:[%s383 + $0x3c] sm:$0xf]
      %v402 = vunpack.c.l.b16 %v381
      %v403 = vunpack.c.l.b16 %v382
      %v404 = vpack.c.b16 %v403, %v402
      %v406 = vshrl.u32 %v404, 16
      %v408 = vshll.u32 %v404, 16
      %v410 = vrot.slane %v408, 1
      %v411 = vor.u32 %v406, %v410
      %v429 = vunpack.c.l.b16 %v384
      %v430 = vunpack.c.l.b16 %v385
      %v431 = vunpack.c.l.b16 %v386
      %v432 = vunpack.c.l.b16 %v387
      %v433 = vunpack.c.l.b16 %v388
      %v434 = vunpack.c.l.b16 %v389
      %v435 = vunpack.c.l.b16 %v390
      %v436 = vunpack.c.l.b16 %v391
      %v437 = vunpack.c.l.b16 %v392
      %v438 = vunpack.c.l.b16 %v393
      %v439 = vunpack.c.l.b16 %v394
      %v440 = vunpack.c.l.b16 %v395
      %v441 = vunpack.c.l.b16 %v396
      %v442 = vunpack.c.l.b16 %v397
      %v443 = vunpack.c.l.b16 %v398
      %v444 = vunpack.c.l.b16 %v399
      %v445 = vpack.c.b16 %v430, %v429
      %v446 = vpack.c.b16 %v432, %v431
      %v447 = vpack.c.b16 %v434, %v433
      %v448 = vpack.c.b16 %v436, %v435
      %v449 = vpack.c.b16 %v438, %v437
      %v450 = vpack.c.b16 %v440, %v439
      %v451 = vpack.c.b16 %v442, %v441
      %v452 = vpack.c.b16 %v444, %v443
      %461 = vmatpush.bf16.msra.mxu0 %v452
      %462 = vmatpush.bf16.msra.mxu0 %v451
      %463 = vmatpush.bf16.msra.mxu0 %v450
      %464 = vmatpush.bf16.msra.mxu0 %v449
      %465 = vmatpush.bf16.msra.mxu0 %v448
      %466 = vmatpush.bf16.msra.mxu0 %v447
      %467 = vmatpush.bf16.msra.mxu0 %v446
      %468 = vmatpush.bf16.msra.mxu0 %v445
      %469 = vmatmul.bf16.gmra.mxu0 %v411
      %v470 = vpop.f32.mrf.mxu0
      %v471 = vadd.f32 0.0, %v470
      %v472 = vpop.f32.mrf.mxu0
      %v473 = vadd.f32 0.0, %v472
      %474 = vdwg.mxu0
      %v475 = vadd.f32 %v379, %v471
      %v476 = vadd.f32 %v380, %v473
      %477 = vst [vmem:[#allocation2] sm:$0xff] %v475
      %478 = vst [vmem:[#allocation2 + $0x8] sm:$0x7f] %v476
      %v479 = vld [vmem:[#allocation2] sm:$0xff]
      %v480 = vld [vmem:[#allocation2 + $0x8] sm:$0xff]
      %v481 = vld [vmem:[%s2] sm:$0x1]
      %v483 = vperm.slane %v481, 0
      %v485 = vmul.f32 %v479, %v483
      %v486 = vmul.f32 %v480, %v483
      %v487 = vld [vmem:[%s3] sm:$0x1]
      %v489 = vperm.slane %v487, 0
      %v491 = vadd.f32 %v485, %v489
      %v492 = vadd.f32 %v486, %v489
      %v493 = vmax.f32 %v491, 0.0
      %v494 = vmax.f32 %v492, 0.0
      %v495 = vpack.c.bf16 %v493, %v493
      %v496 = vpack.c.bf16 %v494, %v494
      %497 = vst [vmem:[%s197] sm:$0xf] %v495
      %498 = vst [vmem:[%s197 + $0x4] sm:$0xf] %v496
      %p499 = scmp.lt.s32.totalorder %s15, 1
      %s500 = scalar_select %p499, %s15, 1
      %s501 = smul.addr %s500, 2
      %s502 = smul.addr %s501, 4
      %s503 = scalar_lea.vmem %s4, %s502
      // Predicated region
      $region37: #{_lambda_.17} parent=35 // pred_check
        %p504 = pneg %p122
      $region38: #{_lambda_.17} parent=35 // pred_check_branch
        %506 = sbr.rel (%p504) target = $region40
      $region39: #{_lambda_.17} parent=35 // pred_region
        _
      $region40: #{_lambda_.17} parent=35 // pred_fallthru
        _
    $region36: #{_lambda_.17} parent=5 // pred_fallthru
      _
    %p507 = scmp.le.s32.totalorder 2, %s10
    // Predicated region
    $region41: #{_lambda_.17} parent=5 // pred_check
      %p508 = pneg %p507
    $region42: #{_lambda_.17} parent=5 // pred_check_branch
      %510 = sbr.rel (%p508) target = $region44
    $region43: #{_lambda_.17} parent=5 // pred_region
      %s511 = ssub.s32 %s10, 2
      // Predicated region
      $region45: #{_lambda_.17} parent=43 // pred_check
        %p512 = pneg %p128
      $region46: #{_lambda_.17} parent=43 // pred_check_branch
        %514 = sbr.rel (%p512) target = $region48
      $region47: #{_lambda_.17} parent=43 // pred_region
        %p515 = scmp.lt.s32.totalorder %s16, 1
        %s516 = scalar_select %p515, %s16, 1
        %s517 = smul.addr %s516, 2
        %s518 = smul.addr %s517, 4
        %s519 = scalar_lea.vmem %s4, %s518
      $region48: #{_lambda_.17} parent=43 // pred_fallthru
        _
    $region44: #{_lambda_.17} parent=5 // pred_fallthru
      _
  $region6: #{_lambda_.17} parent=0 // loop_footer
    %s14 = sadd.s32 1, %s10
  $region7: #{_lambda_.17} parent=0 // loop_footer_branch
    %9 = sbr.rel target = $region3
  $region8: #{_lambda_.17} parent=0 // loop_exit
    _

// kernel: _lambda_.16
$region0: #{_lambda_.16}
  #allocation0 [shape = 'u32[]', space=smem, size = 0x4, offset = 0x4, fixed_abs, tag = 'smem constant byte address 0x4 - core index']
  #allocation1 [shape = 'u32[72,128]{1,0:T(1,128)}', space=vmem, size = 0x9000, scoped, tag = 'internal scratch']
  #allocation2 [shape = 'f32[16,128]{1,0:T(8,128)}', space=vmem, size = 0x2000, scoped, tag = 'scratch operand']
  %s0 = inlined_call_operand.vmem [shape: bf16[2,16,48], index: 0, kind: input, shape index: {}]
  %s1 = inlined_call_operand.vmem [shape: bf16[3,48,128], index: 1, kind: input, shape index: {}]
  %s2 = inlined_call_operand.vmem [shape: f32[1,128], index: 2, kind: input, shape index: {}]
  %s3 = inlined_call_operand.vmem [shape: f32[1,128], index: 3, kind: input, shape index: {}]
  %s4 = inlined_call_operand.vmem [shape: bf16[2,16,128], index: 4, kind: output, shape index: {}]
  %s5 = sld [smem:[#allocation0]]
  $region49: #{_lambda_.16} parent=0
    _
  %s7 = ssub.s32 1, %s5
  %s8 = scalar_select 0, %s7, %s5
  loop: start=0, step=1, limit=4
  $region2: #{_lambda_.16} parent=0 // loop_pre_header
    _
  $region3: #{_lambda_.16} parent=0 // loop_header
    %s10 = sphi 0, %s14
    %p11 = scmp.ge.s32.totalorder %s10, 4
    %s20 = sphi 0, %s22
    %s23 = sphi 0, %s20
    %s24 = sphi 0, %s23
    %s40 = sphi 0, %s24
    %s44 = sphi 0, %s44
    %s46 = sphi 0, %s44
    %s47 = sphi 0, %s46
    %s61 = sphi 0, %s47
    %s65 = sphi 0, %s65
    %s67 = sphi 0, %s65
    %s68 = sphi 0, %s67
    %s82 = sphi 0, %s68
    %s86 = sphi 0, %s86
    %s88 = sphi 0, %s86
    %s89 = sphi 0, %s88
    %s103 = sphi 0, %s89
    %s109 = sphi 0, %s111
    %s112 = sphi 0, %s109
    %s113 = sphi 0, %s112
    %s129 = sphi 0, %s113
  $region4: #{_lambda_.16} parent=0 // loop_header_branch
    %13 = sbr.rel (%p11) target = $region8
  $region5: #{_lambda_.16} parent=0 // loop_body
    %s15 = ssub.s32 %s10, 1
    %s16 = ssub.s32 %s10, 2
    %s17 = sadd.s32 %s10, 1
    %s18 = ssub.s32 %s10, %s17
    %p19 = scmp.eq.s32.totalorder %s18, 0
    %s21 = sadd.s32 %s20, 1
    %s22 = scalar_select %p19, %s20, %s21
    %p25 = pneg %p19
    %p26 = scmp.eq.s32.totalorder %s10, 1
    %p27 = por %p25, %p26
    %p28 = scmp.ne.s32.totalorder %s20, %s23
    %p29 = scmp.eq.s32.totalorder %s10, 0
    %p30 = por %p28, %p29
    %p31 = scmp.ne.s32.totalorder %s20, %s23
    %p32 = scmp.eq.s32.totalorder %s15, 1
    %p33 = por %p31, %p32
    %p34 = scmp.ne.s32.totalorder %s23, %s24
    %p35 = scmp.eq.s32.totalorder %s15, 0
    %p36 = por %p34, %p35
    %p37 = scmp.ne.s32.totalorder %s23, %s24
    %p38 = scmp.eq.s32.totalorder %s16, 1
    %p39 = por %p37, %p38
    %p41 = scmp.ne.s32.totalorder %s24, %s40
    %p42 = scmp.eq.s32.totalorder %s16, 0
    %p43 = por %p41, %p42
    %s45 = sadd.s32 %s44, 1
    %p48 = scmp.eq.s32.totalorder %s10, 1
    %p49 = scmp.ne.s32.totalorder %s44, %s46
    %p50 = scmp.eq.s32.totalorder %s10, 0
    %p51 = por %p49, %p50
    %p52 = scmp.ne.s32.totalorder %s44, %s46
    %p53 = scmp.eq.s32.totalorder %s15, 1
    %p54 = por %p52, %p53
    %p55 = scmp.ne.s32.totalorder %s46, %s47
    %p56 = scmp.eq.s32.totalorder %s15, 0
    %p57 = por %p55, %p56
    %p58 = scmp.ne.s32.totalorder %s46, %s47
    %p59 = scmp.eq.s32.totalorder %s16, 1
    %p60 = por %p58, %p59
    %p62 = scmp.ne.s32.totalorder %s47, %s61
    %p63 = scmp.eq.s32.totalorder %s16, 0
    %p64 = por %p62, %p63
    %s66 = sadd.s32 %s65, 1
    %p69 = scmp.eq.s32.totalorder %s10, 1
    %p70 = scmp.ne.s32.totalorder %s65, %s67
    %p71 = scmp.eq.s32.totalorder %s10, 0
    %p72 = por %p70, %p71
    %p73 = scmp.ne.s32.totalorder %s65, %s67
    %p74 = scmp.eq.s32.totalorder %s15, 1
    %p75 = por %p73, %p74
    %p76 = scmp.ne.s32.totalorder %s67, %s68
    %p77 = scmp.eq.s32.totalorder %s15, 0
    %p78 = por %p76, %p77
    %p79 = scmp.ne.s32.totalorder %s67, %s68
    %p80 = scmp.eq.s32.totalorder %s16, 1
    %p81 = por %p79, %p80
    %p83 = scmp.ne.s32.totalorder %s68, %s82
    %p84 = scmp.eq.s32.totalorder %s16, 0
    %p85 = por %p83, %p84
    %s87 = sadd.s32 %s86, 1
    %p90 = scmp.eq.s32.totalorder %s10, 1
    %p91 = scmp.ne.s32.totalorder %s86, %s88
    %p92 = scmp.eq.s32.totalorder %s10, 0
    %p93 = por %p91, %p92
    %p94 = scmp.ne.s32.totalorder %s86, %s88
    %p95 = scmp.eq.s32.totalorder %s15, 1
    %p96 = por %p94, %p95
    %p97 = scmp.ne.s32.totalorder %s88, %s89
    %p98 = scmp.eq.s32.totalorder %s15, 0
    %p99 = por %p97, %p98
    %p100 = scmp.ne.s32.totalorder %s88, %s89
    %p101 = scmp.eq.s32.totalorder %s16, 1
    %p102 = por %p100, %p101
    %p104 = scmp.ne.s32.totalorder %s89, %s103
    %p105 = scmp.eq.s32.totalorder %s16, 0
    %p106 = por %p104, %p105
    %s107 = ssub.s32 %s10, %s17
    %p108 = scmp.eq.s32.totalorder %s107, 0
    %s110 = sadd.s32 %s109, 1
    %s111 = scalar_select %p108, %s109, %s110
    %p114 = pneg %p108
    %p115 = scmp.eq.s32.totalorder %s10, 1
    %p116 = por %p114, %p115
    %p117 = scmp.ne.s32.totalorder %s109, %s112
    %p118 = scmp.eq.s32.totalorder %s10, 0
    %p119 = por %p117, %p118
    %p120 = scmp.ne.s32.totalorder %s109, %s112
    %p121 = scmp.eq.s32.totalorder %s15, 1
    %p122 = por %p120, %p121
    %p123 = scmp.ne.s32.totalorder %s112, %s113
    %p124 = scmp.eq.s32.totalorder %s15, 0
    %p125 = por %p123, %p124
    %p126 = scmp.ne.s32.totalorder %s112, %s113
    %p127 = scmp.eq.s32.totalorder %s16, 1
    %p128 = por %p126, %p127
    %p130 = scmp.ne.s32.totalorder %s113, %s129
    %p131 = scmp.eq.s32.totalorder %s16, 0
    %p132 = por %p130, %p131
    %p133 = scmp.le.s32.totalorder 1, %s10
    %p134 = scmp.lt.s32.totalorder %s10, 3
    %p135 = pnand %p133, %p134
    %p136 = pneg %p135
    // Predicated region
    $region9: #{_lambda_.16} parent=5 // pred_check
      _
    $region10: #{_lambda_.16} parent=5 // pred_check_branch
      %138 = sbr.rel (%p135) target = $region12
    $region11: #{_lambda_.16} parent=5 // pred_region
      %s139 = ssub.s32 %s10, 1
      // Predicated region
      $region13: #{_lambda_.16} parent=11 // pred_check
        %p140 = pneg %p57
      $region14: #{_lambda_.16} parent=11 // pred_check_branch
        %142 = sbr.rel (%p140) target = $region16
      $region15: #{_lambda_.16} parent=11 // pred_region
        _
      $region16: #{_lambda_.16} parent=11 // pred_fallthru
        _
      // Predicated region
      $region17: #{_lambda_.16} parent=11 // pred_check
        %p143 = pneg %p78
      $region18: #{_lambda_.16} parent=11 // pred_check_branch
        %145 = sbr.rel (%p143) target = $region20
      $region19: #{_lambda_.16} parent=11 // pred_region
        _
      $region20: #{_lambda_.16} parent=11 // pred_fallthru
        _
      // Predicated region
      $region21: #{_lambda_.16} parent=11 // pred_check
        %p146 = pneg %p99
      $region22: #{_lambda_.16} parent=11 // pred_check_branch
        %148 = sbr.rel (%p146) target = $region24
      $region23: #{_lambda_.16} parent=11 // pred_region
        _
      $region24: #{_lambda_.16} parent=11 // pred_fallthru
        _
    $region12: #{_lambda_.16} parent=5 // pred_fallthru
      _
    %p149 = scmp.lt.s32.totalorder %s10, 2
    // Predicated region
    $region25: #{_lambda_.16} parent=5 // pred_check
      %p150 = pneg %p149
    $region26: #{_lambda_.16} parent=5 // pred_check_branch
      %152 = sbr.rel (%p150) target = $region28
    $region27: #{_lambda_.16} parent=5 // pred_region
      // Predicated region
      $region29: #{_lambda_.16} parent=27 // pred_check
        %p153 = pneg %p30
      $region30: #{_lambda_.16} parent=27 // pred_check_branch
        %155 = sbr.rel (%p153) target = $region32
      $region31: #{_lambda_.16} parent=27 // pred_region
        %p156 = scmp.lt.s32.totalorder %s10, 1
        %s157 = scalar_select %p156, %s10, 1
        %s158 = smul.addr %s157, 2
        %s159 = smul.addr %s158, 4
        %s160 = scalar_lea.vmem %s0, %s159
      $region32: #{_lambda_.16} parent=27 // pred_fallthru
        _
    $region28: #{_lambda_.16} parent=5 // pred_fallthru
      _
    %p161 = scmp.le.s32.totalorder 1, %s10
    %p162 = scmp.lt.s32.totalorder %s10, 3
    %p163 = pnand %p161, %p162
    %p164 = pneg %p163
    // Predicated region
    $region33: #{_lambda_.16} parent=5 // pred_check
      _
    $region34: #{_lambda_.16} parent=5 // pred_check_branch
      %166 = sbr.rel (%p163) target = $region36
    $region35: #{_lambda_.16} parent=5 // pred_region
      %s167 = ssub.s32 %s10, 1
      %p168 = scmp.lt.s32.totalorder %s15, 1
      %s169 = scalar_select %p168, %s15, 1
      %s170 = smul.addr %s169, 2
      %s171 = smul.addr %s170, 4
      %s172 = scalar_lea.vmem %s0, %s171
      %p173 = pneg %p36
      %p174 = pneg %p33
      %p175 = pneg %p57
      %p176 = pneg %p54
      %p177 = pneg %p78
      %p178 = pneg %p75
      %p179 = pneg %p99
      %p180 = pneg %p96
      %p181 = pneg %p125
      %p182 = pneg %p122
      %p183 = scmp.lt.s32.totalorder %s15, 1
      %s184 = scalar_select %p183, %s15, 1
      %s185 = smul.addr %s184, 2
      %s186 = smul.addr %s185, 4
      %s187 = scalar_lea.vmem %s4, %s186
      %p188 = scmp.lt.s32.totalorder %s15, 1
      %s189 = scalar_select %p188, %s15, 1
      %s190 = smul.addr %s189, 2
      %s191 = smul.addr %s190, 4
      %s192 = scalar_lea.vmem %s0, %s191
      %p193 = scmp.lt.s32.totalorder %s15, 1
      %s194 = scalar_select %p193, %s15, 1
      %s195 = smul.addr %s194, 2
      %s196 = smul.addr %s195, 4
      %s197 = scalar_lea.vmem %s4, %s196
      %v199 = vld [vmem:[%s192] sm:$0xf]
      %v200 = vld [vmem:[%s192 + $0x4] sm:$0xf]
      %s201 = scalar_lea.vmem %s1, 24
      %v202 = vld [vmem:[%s201] sm:$0xf]
      %v203 = vld [vmem:[%s201 + $0x4] sm:$0xf]
      %v204 = vld [vmem:[%s201 + $0x8] sm:$0xf]
      %v205 = vld [vmem:[%s201 + $0xc] sm:$0xf]
      %v206 = vld [vmem:[%s201 + $0x10] sm:$0xf]
      %v207 = vld [vmem:[%s201 + $0x14] sm:$0xf]
      %v210 = vunpack.c.l.b16 %v199
      %v211 = vunpack.c.l.b16 %v200
      %v212 = vpack.c.b16 %v211, %v210
      %v219 = vunpack.c.l.b16 %v202
      %v220 = vunpack.c.l.b16 %v203
      %v221 = vunpack.c.l.b16 %v204
      %v222 = vunpack.c.l.b16 %v205
      %v223 = vunpack.c.l.b16 %v206
      %v224 = vunpack.c.l.b16 %v207
      %v225 = vpack.c.b16 %v220, %v219
      %v226 = vpack.c.b16 %v222, %v221
      %v227 = vpack.c.b16 %v224, %v223
      %vm231 = vcmask 392192
      %v233 = vsel %vm231, %v212, 0
      %235 = vmatpush.bf16.msra.mxu0 0
      %236 = vmatpush.bf16.msra.mxu0 0
      %237 = vmatpush.bf16.msra.mxu0 0
      %238 = vmatpush.bf16.msra.mxu0 0
      %239 = vmatpush.bf16.msra.mxu0 0
      %240 = vmatpush.bf16.msra.mxu0 %v227
      %241 = vmatpush.bf16.msra.mxu0 %v226
      %242 = vmatpush.bf16.msra.mxu0 %v225
      %243 = vmatmul.bf16.gmra.mxu0 %v233
      %v244 = vpop.f32.mrf.mxu0
      %v245 = vadd.f32 0.0, %v244
      %v246 = vpop.f32.mrf.mxu0
      %v247 = vadd.f32 0.0, %v246
      %248 = vdwg.mxu0
      %249 = vst [vmem:[#allocation2] sm:$0xff] %v245
      %250 = vst [vmem:[#allocation2 + $0x8] sm:$0xff] %v247
      %v251 = vld [vmem:[#allocation2 + $0x1] sm:$0xff]
      %v252 = vld [vmem:[#allocation2 + $0x9] sm:$0x7f]
      %v253 = vld [vmem:[%s192] sm:$0xf]
      %v254 = vld [vmem:[%s192 + $0x4] sm:$0xf]
      %v255 = vld [vmem:[%s1] sm:$0xf]
      %v256 = vld [vmem:[%s1 + $0x4] sm:$0xf]
      %v257 = vld [vmem:[%s1 + $0x8] sm:$0xf]
      %v258 = vld [vmem:[%s1 + $0xc] sm:$0xf]
      %v259 = vld [vmem:[%s1 + $0x10] sm:$0xf]
      %v260 = vld [vmem:[%s1 + $0x14] sm:$0xf]
      %v263 = vunpack.c.l.b16 %v253
      %v264 = vunpack.c.l.b16 %v254
      %v265 = vpack.c.b16 %v264, %v263
      %v272 = vunpack.c.l.b16 %v255
      %v273 = vunpack.c.l.b16 %v256
      %v274 = vunpack.c.l.b16 %v257
      %v275 = vunpack.c.l.b16 %v258
      %v276 = vunpack.c.l.b16 %v259
      %v277 = vunpack.c.l.b16 %v260
      %v278 = vpack.c.b16 %v273, %v272
      %v279 = vpack.c.b16 %v275, %v274
      %v280 = vpack.c.b16 %v277, %v276
      %v285 = vsel %vm231, %v265, 0
      %287 = vmatpush.bf16.msra.mxu0 0
      %288 = vmatpush.bf16.msra.mxu0 0
      %289 = vmatpush.bf16.msra.mxu0 0
      %290 = vmatpush.bf16.msra.mxu0 0
      %291 = vmatpush.bf16.msra.mxu0 0
      %292 = vmatpush.bf16.msra.mxu0 %v280
      %293 = vmatpush.bf16.msra.mxu0 %v279
      %294 = vmatpush.bf16.msra.mxu0 %v278
      %295 = vmatmul.bf16.gmra.mxu0 %v285
      %v296 = vpop.f32.mrf.mxu0
      %v297 = vadd.f32 0.0, %v296
      %v298 = vpop.f32.mrf.mxu0
      %v299 = vadd.f32 0.0, %v298
      %300 = vdwg.mxu0
      %v301 = vadd.f32 %v251, %v297
      %v302 = vadd.f32 %v252, %v299
      %303 = vst [vmem:[#allocation2 + $0x1] sm:$0xff] %v301
      %304 = vst [vmem:[#allocation2 + $0x9] sm:$0x7f] %v302
      %v305 = vld [vmem:[#allocation2] sm:$0xff]
      %v306 = vld [vmem:[#allocation2 + $0x8] sm:$0x7f]
      %v307 = vld [vmem:[%s192] sm:$0xf]
      %v308 = vld [vmem:[%s192 + $0x4] sm:$0xf]
      %s309 = scalar_lea.vmem %s1, 48
      %v310 = vld [vmem:[%s309] sm:$0xf]
      %v311 = vld [vmem:[%s309 + $0x4] sm:$0xf]
      %v312 = vld [vmem:[%s309 + $0x8] sm:$0xf]
      %v313 = vld [vmem:[%s309 + $0xc] sm:$0xf]
      %v314 = vld [vmem:[%s309 + $0x10] sm:$0xf]
      %v315 = vld [vmem:[%s309 + $0x14] sm:$0xf]
      %v318 = vunpack.c.l.b16 %v307
      %v319 = vunpack.c.l.b16 %v308
      %v320 = vpack.c.b16 %v319, %v318
      %v322 = vshrl.u32 %v320, 16
      %v324 = vshll.u32 %v320, 16
      %v326 = vrot.slane %v324, 1
      %v327 = vor.u32 %v322, %v326
      %v334 = vunpack.c.l.b16 %v310
      %v335 = vunpack.c.l.b16 %v311
      %v336 = vunpack.c.l.b16 %v312
      %v337 = vunpack.c.l.b16 %v313
      %v338 = vunpack.c.l.b16 %v314
      %v339 = vunpack.c.l.b16 %v315
      %v340 = vpack.c.b16 %v335, %v334
      %v341 = vpack.c.b16 %v337, %v336
      %v342 = vpack.c.b16 %v339, %v338
      %v347 = vsel %vm231, %v327, 0
      %349 = vmatpush.bf16.msra.mxu0 0
      %350 = vmatpush.bf16.msra.mxu0 0
      %351 = vmatpush.bf16.msra.mxu0 0
      %352 = vmatpush.bf16.msra.mxu0 0
      %353 = vmatpush.bf16.msra.mxu0 0
      %354 = vmatpush.bf16.msra.mxu0 %v342
      %355 = vmatpush.bf16.msra.mxu0 %v341
      %356 = vmatpush.bf16.msra.mxu0 %v340
      %357 = vmatmul.bf16.gmra.mxu0 %v347
      %v358 = vpop.f32.mrf.mxu0
      %v359 = vadd.f32 0.0, %v358
      %v360 = vpop.f32.mrf.mxu0
      %v361 = vadd.f32 0.0, %v360
      %362 = vdwg.mxu0
      %v363 = vadd.f32 %v305, %v359
      %v364 = vadd.f32 %v306, %v361
      %365 = vst [vmem:[#allocation2] sm:$0xff] %v363
      %366 = vst [vmem:[#allocation2 + $0x8] sm:$0x7f] %v364
      %v367 = vld [vmem:[#allocation2] sm:$0xff]
      %v368 = vld [vmem:[#allocation2 + $0x8] sm:$0xff]
      %v369 = vld [vmem:[%s2] sm:$0x1]
      %v371 = vperm.slane %v369, 0
      %v373 = vmul.f32 %v367, %v371
      %v374 = vmul.f32 %v368, %v371
      %v375 = vld [vmem:[%s3] sm:$0x1]
      %v377 = vperm.slane %v375, 0
      %v379 = vadd.f32 %v373, %v377
      %v380 = vadd.f32 %v374, %v377
      %v381 = vmax.f32 %v379, 0.0
      %v382 = vmax.f32 %v380, 0.0
      %v383 = vpack.c.bf16 %v381, %v381
      %v384 = vpack.c.bf16 %v382, %v382
      %385 = vst [vmem:[%s197] sm:$0xf] %v383
      %386 = vst [vmem:[%s197 + $0x4] sm:$0xf] %v384
      %p387 = scmp.lt.s32.totalorder %s15, 1
      %s388 = scalar_select %p387, %s15, 1
      %s389 = smul.addr %s388, 2
      %s390 = smul.addr %s389, 4
      %s391 = scalar_lea.vmem %s4, %s390
      // Predicated region
      $region37: #{_lambda_.16} parent=35 // pred_check
        %p392 = pneg %p122
      $region38: #{_lambda_.16} parent=35 // pred_check_branch
        %394 = sbr.rel (%p392) target = $region40
      $region39: #{_lambda_.16} parent=35 // pred_region
        _
      $region40: #{_lambda_.16} parent=35 // pred_fallthru
        _
    $region36: #{_lambda_.16} parent=5 // pred_fallthru
      _
    %p395 = scmp.le.s32.totalorder 2, %s10
    // Predicated region
    $region41: #{_lambda_.16} parent=5 // pred_check
      %p396 = pneg %p395
    $region42: #{_lambda_.16} parent=5 // pred_check_branch
      %398 = sbr.rel (%p396) target = $region44
    $region43: #{_lambda_.16} parent=5 // pred_region
      %s399 = ssub.s32 %s10, 2
      // Predicated region
      $region45: #{_lambda_.16} parent=43 // pred_check
        %p400 = pneg %p128
      $region46: #{_lambda_.16} parent=43 // pred_check_branch
        %402 = sbr.rel (%p400) target = $region48
      $region47: #{_lambda_.16} parent=43 // pred_region
        %p403 = scmp.lt.s32.totalorder %s16, 1
        %s404 = scalar_select %p403, %s16, 1
        %s405 = smul.addr %s404, 2
        %s406 = smul.addr %s405, 4
        %s407 = scalar_lea.vmem %s4, %s406
      $region48: #{_lambda_.16} parent=43 // pred_fallthru
        _
    $region44: #{_lambda_.16} parent=5 // pred_fallthru
      _
  $region6: #{_lambda_.16} parent=0 // loop_footer
    %s14 = sadd.s32 1, %s10
  $region7: #{_lambda_.16} parent=0 // loop_footer_branch
    %9 = sbr.rel target = $region3
  $region8: #{_lambda_.16} parent=0 // loop_exit
    _

// kernel: _lambda_.18
$region0: #{_lambda_.18}
  #allocation0 [shape = 'u32[]', space=smem, size = 0x4, offset = 0x4, fixed_abs, tag = 'smem constant byte address 0x4 - core index']
  #allocation1 [shape = 'u32[72,128]{1,0:T(1,128)}', space=vmem, size = 0x9000, scoped, tag = 'internal scratch']
  %s0 = inlined_call_operand.vmem [shape: bf16[2,8,2,8,2,8], index: 0, kind: input, shape index: {}]
  %s1 = inlined_call_operand.vmem [shape: bf16[2,8,8,8], index: 1, kind: output, shape index: {}]
  %s2 = sld [smem:[#allocation0]]
  $region37: #{_lambda_.18} parent=0
    _
  %s4 = ssub.s32 1, %s2
  %s5 = scalar_select 0, %s4, %s2
  loop: start=0, step=1, limit=4
  $region2: #{_lambda_.18} parent=0 // loop_pre_header
    _
  $region3: #{_lambda_.18} parent=0 // loop_header
    %s7 = sphi 0, %s11
    %p8 = scmp.ge.s32.totalorder %s7, 4
    %s17 = sphi 0, %s19
    %s20 = sphi 0, %s17
    %s21 = sphi 0, %s20
    %s37 = sphi 0, %s21
    %s43 = sphi 0, %s45
    %s46 = sphi 0, %s43
    %s47 = sphi 0, %s46
    %s63 = sphi 0, %s47
  $region4: #{_lambda_.18} parent=0 // loop_header_branch
    %10 = sbr.rel (%p8) target = $region8
  $region5: #{_lambda_.18} parent=0 // loop_body
    %s12 = ssub.s32 %s7, 1
    %s13 = ssub.s32 %s7, 2
    %s14 = sadd.s32 %s7, 1
    %s15 = ssub.s32 %s7, %s14
    %p16 = scmp.eq.s32.totalorder %s15, 0
    %s18 = sadd.s32 %s17, 1
    %s19 = scalar_select %p16, %s17, %s18
    %p22 = pneg %p16
    %p23 = scmp.eq.s32.totalorder %s7, 1
    %p24 = por %p22, %p23
    %p25 = scmp.ne.s32.totalorder %s17, %s20
    %p26 = scmp.eq.s32.totalorder %s7, 0
    %p27 = por %p25, %p26
    %p28 = scmp.ne.s32.totalorder %s17, %s20
    %p29 = scmp.eq.s32.totalorder %s12, 1
    %p30 = por %p28, %p29
    %p31 = scmp.ne.s32.totalorder %s20, %s21
    %p32 = scmp.eq.s32.totalorder %s12, 0
    %p33 = por %p31, %p32
    %p34 = scmp.ne.s32.totalorder %s20, %s21
    %p35 = scmp.eq.s32.totalorder %s13, 1
    %p36 = por %p34, %p35
    %p38 = scmp.ne.s32.totalorder %s21, %s37
    %p39 = scmp.eq.s32.totalorder %s13, 0
    %p40 = por %p38, %p39
    %s41 = ssub.s32 %s7, %s14
    %p42 = scmp.eq.s32.totalorder %s41, 0
    %s44 = sadd.s32 %s43, 1
    %s45 = scalar_select %p42, %s43, %s44
    %p48 = pneg %p42
    %p49 = scmp.eq.s32.totalorder %s7, 1
    %p50 = por %p48, %p49
    %p51 = scmp.ne.s32.totalorder %s43, %s46
    %p52 = scmp.eq.s32.totalorder %s7, 0
    %p53 = por %p51, %p52
    %p54 = scmp.ne.s32.totalorder %s43, %s46
    %p55 = scmp.eq.s32.totalorder %s12, 1
    %p56 = por %p54, %p55
    %p57 = scmp.ne.s32.totalorder %s46, %s47
    %p58 = scmp.eq.s32.totalorder %s12, 0
    %p59 = por %p57, %p58
    %p60 = scmp.ne.s32.totalorder %s46, %s47
    %p61 = scmp.eq.s32.totalorder %s13, 1
    %p62 = por %p60, %p61
    %p64 = scmp.ne.s32.totalorder %s47, %s63
    %p65 = scmp.eq.s32.totalorder %s13, 0
    %p66 = por %p64, %p65
    %p67 = scmp.le.s32.totalorder 1, %s7
    %p68 = scmp.lt.s32.totalorder %s7, 3
    %p69 = pnand %p67, %p68
    %p70 = pneg %p69
    // Predicated region
    $region9: #{_lambda_.18} parent=5 // pred_check
      _
    $region10: #{_lambda_.18} parent=5 // pred_check_branch
      %72 = sbr.rel (%p69) target = $region12
    $region11: #{_lambda_.18} parent=5 // pred_region
      %s73 = ssub.s32 %s7, 1
    $region12: #{_lambda_.18} parent=5 // pred_fallthru
      _
    %p74 = scmp.lt.s32.totalorder %s7, 2
    // Predicated region
    $region13: #{_lambda_.18} parent=5 // pred_check
      %p75 = pneg %p74
    $region14: #{_lambda_.18} parent=5 // pred_check_branch
      %77 = sbr.rel (%p75) target = $region16
    $region15: #{_lambda_.18} parent=5 // pred_region
      // Predicated region
      $region17: #{_lambda_.18} parent=15 // pred_check
        %p78 = pneg %p27
      $region18: #{_lambda_.18} parent=15 // pred_check_branch
        %80 = sbr.rel (%p78) target = $region20
      $region19: #{_lambda_.18} parent=15 // pred_region
        %p81 = scmp.lt.s32.totalorder %s7, 1
        %s82 = scalar_select %p81, %s7, 1
        %s83 = smul.addr %s82, 128
        %s84 = scalar_lea.vmem %s0, %s83
      $region20: #{_lambda_.18} parent=15 // pred_fallthru
        _
    $region16: #{_lambda_.18} parent=5 // pred_fallthru
      _
    %p85 = scmp.le.s32.totalorder 1, %s7
    %p86 = scmp.lt.s32.totalorder %s7, 3
    %p87 = pnand %p85, %p86
    %p88 = pneg %p87
    // Predicated region
    $region21: #{_lambda_.18} parent=5 // pred_check
      _
    $region22: #{_lambda_.18} parent=5 // pred_check_branch
      %90 = sbr.rel (%p87) target = $region24
    $region23: #{_lambda_.18} parent=5 // pred_region
      %s91 = ssub.s32 %s7, 1
      %p92 = scmp.lt.s32.totalorder %s12, 1
      %s93 = scalar_select %p92, %s12, 1
      %s94 = smul.addr %s93, 128
      %s95 = scalar_lea.vmem %s0, %s94
      %p96 = pneg %p33
      %p97 = pneg %p30
      %p98 = pneg %p59
      %p99 = pneg %p56
      %p100 = scmp.lt.s32.totalorder %s12, 1
      %s101 = scalar_select %p100, %s12, 1
      %s102 = smul.addr %s101, 8
      %s103 = smul.addr %s102, 4
      %s104 = scalar_lea.vmem %s1, %s103
      %p105 = scmp.lt.s32.totalorder %s12, 1
      %s106 = scalar_select %p105, %s12, 1
      %s107 = smul.addr %s106, 128
      %s108 = scalar_lea.vmem %s0, %s107
      %p109 = scmp.lt.s32.totalorder %s12, 1
      %s110 = scalar_select %p109, %s12, 1
      %s111 = smul.addr %s110, 8
      %s112 = smul.addr %s111, 4
      %s113 = scalar_lea.vmem %s1, %s112
      %v114 = vld [vmem:[%s108] sm:$0x1]
      %v115 = vld [vmem:[%s108 + $0x1] sm:$0x1]
      %v116 = vld [vmem:[%s108 + $0x2] sm:$0x1]
      %v117 = vld [vmem:[%s108 + $0x3] sm:$0x1]
      %v118 = vld [vmem:[%s108 + $0x4] sm:$0x1]
      %v119 = vld [vmem:[%s108 + $0x5] sm:$0x1]
      %v120 = vld [vmem:[%s108 + $0x6] sm:$0x1]
      %v121 = vld [vmem:[%s108 + $0x7] sm:$0x1]
      %v122 = vld [vmem:[%s108 + $0x10] sm:$0x1]
      %v123 = vld [vmem:[%s108 + $0x11] sm:$0x1]
      %v124 = vld [vmem:[%s108 + $0x12] sm:$0x1]
      %v125 = vld [vmem:[%s108 + $0x13] sm:$0x1]
      %v126 = vld [vmem:[%s108 + $0x14] sm:$0x1]
      %v127 = vld [vmem:[%s108 + $0x15] sm:$0x1]
      %v128 = vld [vmem:[%s108 + $0x16] sm:$0x1]
      %v129 = vld [vmem:[%s108 + $0x17] sm:$0x1]
      %v130 = vld [vmem:[%s108 + $0x20] sm:$0x1]
      %v131 = vld [vmem:[%s108 + $0x21] sm:$0x1]
      %v132 = vld [vmem:[%s108 + $0x22] sm:$0x1]
      %v133 = vld [vmem:[%s108 + $0x23] sm:$0x1]
      %v134 = vld [vmem:[%s108 + $0x24] sm:$0x1]
      %v135 = vld [vmem:[%s108 + $0x25] sm:$0x1]
      %v136 = vld [vmem:[%s108 + $0x26] sm:$0x1]
      %v137 = vld [vmem:[%s108 + $0x27] sm:$0x1]
      %v138 = vld [vmem:[%s108 + $0x30] sm:$0x1]
      %v139 = vld [vmem:[%s108 + $0x31] sm:$0x1]
      %v140 = vld [vmem:[%s108 + $0x32] sm:$0x1]
      %v141 = vld [vmem:[%s108 + $0x33] sm:$0x1]
      %v142 = vld [vmem:[%s108 + $0x34] sm:$0x1]
      %v143 = vld [vmem:[%s108 + $0x35] sm:$0x1]
      %v144 = vld [vmem:[%s108 + $0x36] sm:$0x1]
      %v145 = vld [vmem:[%s108 + $0x37] sm:$0x1]
      %v146 = vld [vmem:[%s108 + $0x40] sm:$0x1]
      %v147 = vld [vmem:[%s108 + $0x41] sm:$0x1]
      %v148 = vld [vmem:[%s108 + $0x42] sm:$0x1]
      %v149 = vld [vmem:[%s108 + $0x43] sm:$0x1]
      %v150 = vld [vmem:[%s108 + $0x44] sm:$0x1]
      %v151 = vld [vmem:[%s108 + $0x45] sm:$0x1]
      %v152 = vld [vmem:[%s108 + $0x46] sm:$0x1]
      %v153 = vld [vmem:[%s108 + $0x47] sm:$0x1]
      %v154 = vld [vmem:[%s108 + $0x50] sm:$0x1]
      %v155 = vld [vmem:[%s108 + $0x51] sm:$0x1]
      %v156 = vld [vmem:[%s108 + $0x52] sm:$0x1]
      %v157 = vld [vmem:[%s108 + $0x53] sm:$0x1]
      %v158 = vld [vmem:[%s108 + $0x54] sm:$0x1]
      %v159 = vld [vmem:[%s108 + $0x55] sm:$0x1]
      %v160 = vld [vmem:[%s108 + $0x56] sm:$0x1]
      %v161 = vld [vmem:[%s108 + $0x57] sm:$0x1]
      %v162 = vld [vmem:[%s108 + $0x60] sm:$0x1]
      %v163 = vld [vmem:[%s108 + $0x61] sm:$0x1]
      %v164 = vld [vmem:[%s108 + $0x62] sm:$0x1]
      %v165 = vld [vmem:[%s108 + $0x63] sm:$0x1]
      %v166 = vld [vmem:[%s108 + $0x64] sm:$0x1]
      %v167 = vld [vmem:[%s108 + $0x65] sm:$0x1]
      %v168 = vld [vmem:[%s108 + $0x66] sm:$0x1]
      %v169 = vld [vmem:[%s108 + $0x67] sm:$0x1]
      %v170 = vld [vmem:[%s108 + $0x70] sm:$0x1]
      %v171 = vld [vmem:[%s108 + $0x71] sm:$0x1]
      %v172 = vld [vmem:[%s108 + $0x72] sm:$0x1]
      %v173 = vld [vmem:[%s108 + $0x73] sm:$0x1]
      %v174 = vld [vmem:[%s108 + $0x74] sm:$0x1]
      %v175 = vld [vmem:[%s108 + $0x75] sm:$0x1]
      %v176 = vld [vmem:[%s108 + $0x76] sm:$0x1]
      %v177 = vld [vmem:[%s108 + $0x77] sm:$0x1]
      %v178 = vunpack.c.l.bf16 %v114
      %v179 = vunpack.c.l.bf16 %v115
      %v180 = vunpack.c.l.bf16 %v116
      %v181 = vunpack.c.l.bf16 %v117
      %v182 = vunpack.c.l.bf16 %v118
      %v183 = vunpack.c.l.bf16 %v119
      %v184 = vunpack.c.l.bf16 %v120
      %v185 = vunpack.c.l.bf16 %v121
      %v186 = vunpack.c.l.bf16 %v122
      %v187 = vunpack.c.l.bf16 %v123
      %v188 = vunpack.c.l.bf16 %v124
      %v189 = vunpack.c.l.bf16 %v125
      %v190 = vunpack.c.l.bf16 %v126
      %v191 = vunpack.c.l.bf16 %v127
      %v192 = vunpack.c.l.bf16 %v128
      %v193 = vunpack.c.l.bf16 %v129
      %v194 = vunpack.c.l.bf16 %v130
      %v195 = vunpack.c.l.bf16 %v131
      %v196 = vunpack.c.l.bf16 %v132
      %v197 = vunpack.c.l.bf16 %v133
      %v198 = vunpack.c.l.bf16 %v134
      %v199 = vunpack.c.l.bf16 %v135
      %v200 = vunpack.c.l.bf16 %v136
      %v201 = vunpack.c.l.bf16 %v137
      %v202 = vunpack.c.l.bf16 %v138
      %v203 = vunpack.c.l.bf16 %v139
      %v204 = vunpack.c.l.bf16 %v140
      %v205 = vunpack.c.l.bf16 %v141
      %v206 = vunpack.c.l.bf16 %v142
      %v207 = vunpack.c.l.bf16 %v143
      %v208 = vunpack.c.l.bf16 %v144
      %v209 = vunpack.c.l.bf16 %v145
      %v210 = vunpack.c.l.bf16 %v146
      %v211 = vunpack.c.l.bf16 %v147
      %v212 = vunpack.c.l.bf16 %v148
      %v213 = vunpack.c.l.bf16 %v149
      %v214 = vunpack.c.l.bf16 %v150
      %v215 = vunpack.c.l.bf16 %v151
      %v216 = vunpack.c.l.bf16 %v152
      %v217 = vunpack.c.l.bf16 %v153
      %v218 = vunpack.c.l.bf16 %v154
      %v219 = vunpack.c.l.bf16 %v155
      %v220 = vunpack.c.l.bf16 %v156
      %v221 = vunpack.c.l.bf16 %v157
      %v222 = vunpack.c.l.bf16 %v158
      %v223 = vunpack.c.l.bf16 %v159
      %v224 = vunpack.c.l.bf16 %v160
      %v225 = vunpack.c.l.bf16 %v161
      %v226 = vunpack.c.l.bf16 %v162
      %v227 = vunpack.c.l.bf16 %v163
      %v228 = vunpack.c.l.bf16 %v164
      %v229 = vunpack.c.l.bf16 %v165
      %v230 = vunpack.c.l.bf16 %v166
      %v231 = vunpack.c.l.bf16 %v167
      %v232 = vunpack.c.l.bf16 %v168
      %v233 = vunpack.c.l.bf16 %v169
      %v234 = vunpack.c.l.bf16 %v170
      %v235 = vunpack.c.l.bf16 %v171
      %v236 = vunpack.c.l.bf16 %v172
      %v237 = vunpack.c.l.bf16 %v173
      %v238 = vunpack.c.l.bf16 %v174
      %v239 = vunpack.c.l.bf16 %v175
      %v240 = vunpack.c.l.bf16 %v176
      %v241 = vunpack.c.l.bf16 %v177
      %s242 = scalar_lea.vmem %s108, 8
      %v243 = vld [vmem:[%s242] sm:$0x1]
      %v244 = vld [vmem:[%s242 + $0x1] sm:$0x1]
      %v245 = vld [vmem:[%s242 + $0x2] sm:$0x1]
      %v246 = vld [vmem:[%s242 + $0x3] sm:$0x1]
      %v247 = vld [vmem:[%s242 + $0x4] sm:$0x1]
      %v248 = vld [vmem:[%s242 + $0x5] sm:$0x1]
      %v249 = vld [vmem:[%s242 + $0x6] sm:$0x1]
      %v250 = vld [vmem:[%s242 + $0x7] sm:$0x1]
      %v251 = vld [vmem:[%s242 + $0x10] sm:$0x1]
      %v252 = vld [vmem:[%s242 + $0x11] sm:$0x1]
      %v253 = vld [vmem:[%s242 + $0x12] sm:$0x1]
      %v254 = vld [vmem:[%s242 + $0x13] sm:$0x1]
      %v255 = vld [vmem:[%s242 + $0x14] sm:$0x1]
      %v256 = vld [vmem:[%s242 + $0x15] sm:$0x1]
      %v257 = vld [vmem:[%s242 + $0x16] sm:$0x1]
      %v258 = vld [vmem:[%s242 + $0x17] sm:$0x1]
      %v259 = vld [vmem:[%s242 + $0x20] sm:$0x1]
      %v260 = vld [vmem:[%s242 + $0x21] sm:$0x1]
      %v261 = vld [vmem:[%s242 + $0x22] sm:$0x1]
      %v262 = vld [vmem:[%s242 + $0x23] sm:$0x1]
      %v263 = vld [vmem:[%s242 + $0x24] sm:$0x1]
      %v264 = vld [vmem:[%s242 + $0x25] sm:$0x1]
      %v265 = vld [vmem:[%s242 + $0x26] sm:$0x1]
      %v266 = vld [vmem:[%s242 + $0x27] sm:$0x1]
      %v267 = vld [vmem:[%s242 + $0x30] sm:$0x1]
      %v268 = vld [vmem:[%s242 + $0x31] sm:$0x1]
      %v269 = vld [vmem:[%s242 + $0x32] sm:$0x1]
      %v270 = vld [vmem:[%s242 + $0x33] sm:$0x1]
      %v271 = vld [vmem:[%s242 + $0x34] sm:$0x1]
      %v272 = vld [vmem:[%s242 + $0x35] sm:$0x1]
      %v273 = vld [vmem:[%s242 + $0x36] sm:$0x1]
      %v274 = vld [vmem:[%s242 + $0x37] sm:$0x1]
      %v275 = vld [vmem:[%s242 + $0x40] sm:$0x1]
      %v276 = vld [vmem:[%s242 + $0x41] sm:$0x1]
      %v277 = vld [vmem:[%s242 + $0x42] sm:$0x1]
      %v278 = vld [vmem:[%s242 + $0x43] sm:$0x1]
      %v279 = vld [vmem:[%s242 + $0x44] sm:$0x1]
      %v280 = vld [vmem:[%s242 + $0x45] sm:$0x1]
      %v281 = vld [vmem:[%s242 + $0x46] sm:$0x1]
      %v282 = vld [vmem:[%s242 + $0x47] sm:$0x1]
      %v283 = vld [vmem:[%s242 + $0x50] sm:$0x1]
      %v284 = vld [vmem:[%s242 + $0x51] sm:$0x1]
      %v285 = vld [vmem:[%s242 + $0x52] sm:$0x1]
      %v286 = vld [vmem:[%s242 + $0x53] sm:$0x1]
      %v287 = vld [vmem:[%s242 + $0x54] sm:$0x1]
      %v288 = vld [vmem:[%s242 + $0x55] sm:$0x1]
      %v289 = vld [vmem:[%s242 + $0x56] sm:$0x1]
      %v290 = vld [vmem:[%s242 + $0x57] sm:$0x1]
      %v291 = vld [vmem:[%s242 + $0x60] sm:$0x1]
      %v292 = vld [vmem:[%s242 + $0x61] sm:$0x1]
      %v293 = vld [vmem:[%s242 + $0x62] sm:$0x1]
      %v294 = vld [vmem:[%s242 + $0x63] sm:$0x1]
      %v295 = vld [vmem:[%s242 + $0x64] sm:$0x1]
      %v296 = vld [vmem:[%s242 + $0x65] sm:$0x1]
      %v297 = vld [vmem:[%s242 + $0x66] sm:$0x1]
      %v298 = vld [vmem:[%s242 + $0x67] sm:$0x1]
      %v299 = vld [vmem:[%s242 + $0x70] sm:$0x1]
      %v300 = vld [vmem:[%s242 + $0x71] sm:$0x1]
      %v301 = vld [vmem:[%s242 + $0x72] sm:$0x1]
      %v302 = vld [vmem:[%s242 + $0x73] sm:$0x1]
      %v303 = vld [vmem:[%s242 + $0x74] sm:$0x1]
      %v304 = vld [vmem:[%s242 + $0x75] sm:$0x1]
      %v305 = vld [vmem:[%s242 + $0x76] sm:$0x1]
      %v306 = vld [vmem:[%s242 + $0x77] sm:$0x1]
      %v307 = vunpack.c.l.bf16 %v243
      %v308 = vunpack.c.l.bf16 %v244
      %v309 = vunpack.c.l.bf16 %v245
      %v310 = vunpack.c.l.bf16 %v246
      %v311 = vunpack.c.l.bf16 %v247
      %v312 = vunpack.c.l.bf16 %v248
      %v313 = vunpack.c.l.bf16 %v249
      %v314 = vunpack.c.l.bf16 %v250
      %v315 = vunpack.c.l.bf16 %v251
      %v316 = vunpack.c.l.bf16 %v252
      %v317 = vunpack.c.l.bf16 %v253
      %v318 = vunpack.c.l.bf16 %v254
      %v319 = vunpack.c.l.bf16 %v255
      %v320 = vunpack.c.l.bf16 %v256
      %v321 = vunpack.c.l.bf16 %v257
      %v322 = vunpack.c.l.bf16 %v258
      %v323 = vunpack.c.l.bf16 %v259
      %v324 = vunpack.c.l.bf16 %v260
      %v325 = vunpack.c.l.bf16 %v261
      %v326 = vunpack.c.l.bf16 %v262
      %v327 = vunpack.c.l.bf16 %v263
      %v328 = vunpack.c.l.bf16 %v264
      %v329 = vunpack.c.l.bf16 %v265
      %v330 = vunpack.c.l.bf16 %v266
      %v331 = vunpack.c.l.bf16 %v267
      %v332 = vunpack.c.l.bf16 %v268
      %v333 = vunpack.c.l.bf16 %v269
      %v334 = vunpack.c.l.bf16 %v270
      %v335 = vunpack.c.l.bf16 %v271
      %v336 = vunpack.c.l.bf16 %v272
      %v337 = vunpack.c.l.bf16 %v273
      %v338 = vunpack.c.l.bf16 %v274
      %v339 = vunpack.c.l.bf16 %v275
      %v340 = vunpack.c.l.bf16 %v276
      %v341 = vunpack.c.l.bf16 %v277
      %v342 = vunpack.c.l.bf16 %v278
      %v343 = vunpack.c.l.bf16 %v279
      %v344 = vunpack.c.l.bf16 %v280
      %v345 = vunpack.c.l.bf16 %v281
      %v346 = vunpack.c.l.bf16 %v282
      %v347 = vunpack.c.l.bf16 %v283
      %v348 = vunpack.c.l.bf16 %v284
      %v349 = vunpack.c.l.bf16 %v285
      %v350 = vunpack.c.l.bf16 %v286
      %v351 = vunpack.c.l.bf16 %v287
      %v352 = vunpack.c.l.bf16 %v288
      %v353 = vunpack.c.l.bf16 %v289
      %v354 = vunpack.c.l.bf16 %v290
      %v355 = vunpack.c.l.bf16 %v291
      %v356 = vunpack.c.l.bf16 %v292
      %v357 = vunpack.c.l.bf16 %v293
      %v358 = vunpack.c.l.bf16 %v294
      %v359 = vunpack.c.l.bf16 %v295
      %v360 = vunpack.c.l.bf16 %v296
      %v361 = vunpack.c.l.bf16 %v297
      %v362 = vunpack.c.l.bf16 %v298
      %v363 = vunpack.c.l.bf16 %v299
      %v364 = vunpack.c.l.bf16 %v300
      %v365 = vunpack.c.l.bf16 %v301
      %v366 = vunpack.c.l.bf16 %v302
      %v367 = vunpack.c.l.bf16 %v303
      %v368 = vunpack.c.l.bf16 %v304
      %v369 = vunpack.c.l.bf16 %v305
      %v370 = vunpack.c.l.bf16 %v306
      %v435 = vrot.slane %v178, 7
      %v436 = vrot.slane %v435, 2
      %v437 = vrot.slane %v179, 7
      %v438 = vrot.slane %v437, 2
      %v439 = vrot.slane %v180, 7
      %v440 = vrot.slane %v439, 2
      %v441 = vrot.slane %v181, 7
      %v442 = vrot.slane %v441, 2
      %v443 = vrot.slane %v182, 7
      %v444 = vrot.slane %v443, 2
      %v445 = vrot.slane %v183, 7
      %v446 = vrot.slane %v445, 2
      %v447 = vrot.slane %v184, 7
      %v448 = vrot.slane %v447, 2
      %v449 = vrot.slane %v185, 7
      %v450 = vrot.slane %v449, 2
      %v451 = vrot.slane %v186, 7
      %v452 = vrot.slane %v451, 2
      %v453 = vrot.slane %v187, 7
      %v454 = vrot.slane %v453, 2
      %v455 = vrot.slane %v188, 7
      %v456 = vrot.slane %v455, 2
      %v457 = vrot.slane %v189, 7
      %v458 = vrot.slane %v457, 2
      %v459 = vrot.slane %v190, 7
      %v460 = vrot.slane %v459, 2
      %v461 = vrot.slane %v191, 7
      %v462 = vrot.slane %v461, 2
      %v463 = vrot.slane %v192, 7
      %v464 = vrot.slane %v463, 2
      %v465 = vrot.slane %v193, 7
      %v466 = vrot.slane %v465, 2
      %v467 = vrot.slane %v194, 7
      %v468 = vrot.slane %v467, 2
      %v469 = vrot.slane %v195, 7
      %v470 = vrot.slane %v469, 2
      %v471 = vrot.slane %v196, 7
      %v472 = vrot.slane %v471, 2
      %v473 = vrot.slane %v197, 7
      %v474 = vrot.slane %v473, 2
      %v475 = vrot.slane %v198, 7
      %v476 = vrot.slane %v475, 2
      %v477 = vrot.slane %v199, 7
      %v478 = vrot.slane %v477, 2
      %v479 = vrot.slane %v200, 7
      %v480 = vrot.slane %v479, 2
      %v481 = vrot.slane %v201, 7
      %v482 = vrot.slane %v481, 2
      %v483 = vrot.slane %v202, 7
      %v484 = vrot.slane %v483, 2
      %v485 = vrot.slane %v203, 7
      %v486 = vrot.slane %v485, 2
      %v487 = vrot.slane %v204, 7
      %v488 = vrot.slane %v487, 2
      %v489 = vrot.slane %v205, 7
      %v490 = vrot.slane %v489, 2
      %v491 = vrot.slane %v206, 7
      %v492 = vrot.slane %v491, 2
      %v493 = vrot.slane %v207, 7
      %v494 = vrot.slane %v493, 2
      %v495 = vrot.slane %v208, 7
      %v496 = vrot.slane %v495, 2
      %v497 = vrot.slane %v209, 7
      %v498 = vrot.slane %v497, 2
      %v499 = vrot.slane %v210, 7
      %v500 = vrot.slane %v499, 2
      %v501 = vrot.slane %v211, 7
      %v502 = vrot.slane %v501, 2
      %v503 = vrot.slane %v212, 7
      %v504 = vrot.slane %v503, 2
      %v505 = vrot.slane %v213, 7
      %v506 = vrot.slane %v505, 2
      %v507 = vrot.slane %v214, 7
      %v508 = vrot.slane %v507, 2
      %v509 = vrot.slane %v215, 7
      %v510 = vrot.slane %v509, 2
      %v511 = vrot.slane %v216, 7
      %v512 = vrot.slane %v511, 2
      %v513 = vrot.slane %v217, 7
      %v514 = vrot.slane %v513, 2
      %v515 = vrot.slane %v218, 7
      %v516 = vrot.slane %v515, 2
      %v517 = vrot.slane %v219, 7
      %v518 = vrot.slane %v517, 2
      %v519 = vrot.slane %v220, 7
      %v520 = vrot.slane %v519, 2
      %v521 = vrot.slane %v221, 7
      %v522 = vrot.slane %v521, 2
      %v523 = vrot.slane %v222, 7
      %v524 = vrot.slane %v523, 2
      %v525 = vrot.slane %v223, 7
      %v526 = vrot.slane %v525, 2
      %v527 = vrot.slane %v224, 7
      %v528 = vrot.slane %v527, 2
      %v529 = vrot.slane %v225, 7
      %v530 = vrot.slane %v529, 2
      %v531 = vrot.slane %v226, 7
      %v532 = vrot.slane %v531, 2
      %v533 = vrot.slane %v227, 7
      %v534 = vrot.slane %v533, 2
      %v535 = vrot.slane %v228, 7
      %v536 = vrot.slane %v535, 2
      %v537 = vrot.slane %v229, 7
      %v538 = vrot.slane %v537, 2
      %v539 = vrot.slane %v230, 7
      %v540 = vrot.slane %v539, 2
      %v541 = vrot.slane %v231, 7
      %v542 = vrot.slane %v541, 2
      %v543 = vrot.slane %v232, 7
      %v544 = vrot.slane %v543, 2
      %v545 = vrot.slane %v233, 7
      %v546 = vrot.slane %v545, 2
      %v547 = vrot.slane %v234, 7
      %v548 = vrot.slane %v547, 2
      %v549 = vrot.slane %v235, 7
      %v550 = vrot.slane %v549, 2
      %v551 = vrot.slane %v236, 7
      %v552 = vrot.slane %v551, 2
      %v553 = vrot.slane %v237, 7
      %v554 = vrot.slane %v553, 2
      %v555 = vrot.slane %v238, 7
      %v556 = vrot.slane %v555, 2
      %v557 = vrot.slane %v239, 7
      %v558 = vrot.slane %v557, 2
      %v559 = vrot.slane %v240, 7
      %v560 = vrot.slane %v559, 2
      %v561 = vrot.slane %v241, 7
      %v562 = vrot.slane %v561, 2
      %v627 = vmax.f32 %v178, %v436
      %v628 = vmax.f32 %v179, %v438
      %v629 = vmax.f32 %v180, %v440
      %v630 = vmax.f32 %v181, %v442
      %v631 = vmax.f32 %v182, %v444
      %v632 = vmax.f32 %v183, %v446
      %v633 = vmax.f32 %v184, %v448
      %v634 = vmax.f32 %v185, %v450
      %v635 = vmax.f32 %v186, %v452
      %v636 = vmax.f32 %v187, %v454
      %v637 = vmax.f32 %v188, %v456
      %v638 = vmax.f32 %v189, %v458
      %v639 = vmax.f32 %v190, %v460
      %v640 = vmax.f32 %v191, %v462
      %v641 = vmax.f32 %v192, %v464
      %v642 = vmax.f32 %v193, %v466
      %v643 = vmax.f32 %v194, %v468
      %v644 = vmax.f32 %v195, %v470
      %v645 = vmax.f32 %v196, %v472
      %v646 = vmax.f32 %v197, %v474
      %v647 = vmax.f32 %v198, %v476
      %v648 = vmax.f32 %v199, %v478
      %v649 = vmax.f32 %v200, %v480
      %v650 = vmax.f32 %v201, %v482
      %v651 = vmax.f32 %v202, %v484
      %v652 = vmax.f32 %v203, %v486
      %v653 = vmax.f32 %v204, %v488
      %v654 = vmax.f32 %v205, %v490
      %v655 = vmax.f32 %v206, %v492
      %v656 = vmax.f32 %v207, %v494
      %v657 = vmax.f32 %v208, %v496
      %v658 = vmax.f32 %v209, %v498
      %v659 = vmax.f32 %v210, %v500
      %v660 = vmax.f32 %v211, %v502
      %v661 = vmax.f32 %v212, %v504
      %v662 = vmax.f32 %v213, %v506
      %v663 = vmax.f32 %v214, %v508
      %v664 = vmax.f32 %v215, %v510
      %v665 = vmax.f32 %v216, %v512
      %v666 = vmax.f32 %v217, %v514
      %v667 = vmax.f32 %v218, %v516
      %v668 = vmax.f32 %v219, %v518
      %v669 = vmax.f32 %v220, %v520
      %v670 = vmax.f32 %v221, %v522
      %v671 = vmax.f32 %v222, %v524
      %v672 = vmax.f32 %v223, %v526
      %v673 = vmax.f32 %v224, %v528
      %v674 = vmax.f32 %v225, %v530
      %v675 = vmax.f32 %v226, %v532
      %v676 = vmax.f32 %v227, %v534
      %v677 = vmax.f32 %v228, %v536
      %v678 = vmax.f32 %v229, %v538
      %v679 = vmax.f32 %v230, %v540
      %v680 = vmax.f32 %v231, %v542
      %v681 = vmax.f32 %v232, %v544
      %v682 = vmax.f32 %v233, %v546
      %v683 = vmax.f32 %v234, %v548
      %v684 = vmax.f32 %v235, %v550
      %v685 = vmax.f32 %v236, %v552
      %v686 = vmax.f32 %v237, %v554
      %v687 = vmax.f32 %v238, %v556
      %v688 = vmax.f32 %v239, %v558
      %v689 = vmax.f32 %v240, %v560
      %v690 = vmax.f32 %v241, %v562
      %v755 = vrot.slane %v307, 7
      %v756 = vrot.slane %v755, 2
      %v757 = vrot.slane %v308, 7
      %v758 = vrot.slane %v757, 2
      %v759 = vrot.slane %v309, 7
      %v760 = vrot.slane %v759, 2
      %v761 = vrot.slane %v310, 7
      %v762 = vrot.slane %v761, 2
      %v763 = vrot.slane %v311, 7
      %v764 = vrot.slane %v763, 2
      %v765 = vrot.slane %v312, 7
      %v766 = vrot.slane %v765, 2
      %v767 = vrot.slane %v313, 7
      %v768 = vrot.slane %v767, 2
      %v769 = vrot.slane %v314, 7
      %v770 = vrot.slane %v769, 2
      %v771 = vrot.slane %v315, 7
      %v772 = vrot.slane %v771, 2
      %v773 = vrot.slane %v316, 7
      %v774 = vrot.slane %v773, 2
      %v775 = vrot.slane %v317, 7
      %v776 = vrot.slane %v775, 2
      %v777 = vrot.slane %v318, 7
      %v778 = vrot.slane %v777, 2
      %v779 = vrot.slane %v319, 7
      %v780 = vrot.slane %v779, 2
      %v781 = vrot.slane %v320, 7
      %v782 = vrot.slane %v781, 2
      %v783 = vrot.slane %v321, 7
      %v784 = vrot.slane %v783, 2
      %v785 = vrot.slane %v322, 7
      %v786 = vrot.slane %v785, 2
      %v787 = vrot.slane %v323, 7
      %v788 = vrot.slane %v787, 2
      %v789 = vrot.slane %v324, 7
      %v790 = vrot.slane %v789, 2
      %v791 = vrot.slane %v325, 7
      %v792 = vrot.slane %v791, 2
      %v793 = vrot.slane %v326, 7
      %v794 = vrot.slane %v793, 2
      %v795 = vrot.slane %v327, 7
      %v796 = vrot.slane %v795, 2
      %v797 = vrot.slane %v328, 7
      %v798 = vrot.slane %v797, 2
      %v799 = vrot.slane %v329, 7
      %v800 = vrot.slane %v799, 2
      %v801 = vrot.slane %v330, 7
      %v802 = vrot.slane %v801, 2
      %v803 = vrot.slane %v331, 7
      %v804 = vrot.slane %v803, 2
      %v805 = vrot.slane %v332, 7
      %v806 = vrot.slane %v805, 2
      %v807 = vrot.slane %v333, 7
      %v808 = vrot.slane %v807, 2
      %v809 = vrot.slane %v334, 7
      %v810 = vrot.slane %v809, 2
      %v811 = vrot.slane %v335, 7
      %v812 = vrot.slane %v811, 2
      %v813 = vrot.slane %v336, 7
      %v814 = vrot.slane %v813, 2
      %v815 = vrot.slane %v337, 7
      %v816 = vrot.slane %v815, 2
      %v817 = vrot.slane %v338, 7
      %v818 = vrot.slane %v817, 2
      %v819 = vrot.slane %v339, 7
      %v820 = vrot.slane %v819, 2
      %v821 = vrot.slane %v340, 7
      %v822 = vrot.slane %v821, 2
      %v823 = vrot.slane %v341, 7
      %v824 = vrot.slane %v823, 2
      %v825 = vrot.slane %v342, 7
      %v826 = vrot.slane %v825, 2
      %v827 = vrot.slane %v343, 7
      %v828 = vrot.slane %v827, 2
      %v829 = vrot.slane %v344, 7
      %v830 = vrot.slane %v829, 2
      %v831 = vrot.slane %v345, 7
      %v832 = vrot.slane %v831, 2
      %v833 = vrot.slane %v346, 7
      %v834 = vrot.slane %v833, 2
      %v835 = vrot.slane %v347, 7
      %v836 = vrot.slane %v835, 2
      %v837 = vrot.slane %v348, 7
      %v838 = vrot.slane %v837, 2
      %v839 = vrot.slane %v349, 7
      %v840 = vrot.slane %v839, 2
      %v841 = vrot.slane %v350, 7
      %v842 = vrot.slane %v841, 2
      %v843 = vrot.slane %v351, 7
      %v844 = vrot.slane %v843, 2
      %v845 = vrot.slane %v352, 7
      %v846 = vrot.slane %v845, 2
      %v847 = vrot.slane %v353, 7
      %v848 = vrot.slane %v847, 2
      %v849 = vrot.slane %v354, 7
      %v850 = vrot.slane %v849, 2
      %v851 = vrot.slane %v355, 7
      %v852 = vrot.slane %v851, 2
      %v853 = vrot.slane %v356, 7
      %v854 = vrot.slane %v853, 2
      %v855 = vrot.slane %v357, 7
      %v856 = vrot.slane %v855, 2
      %v857 = vrot.slane %v358, 7
      %v858 = vrot.slane %v857, 2
      %v859 = vrot.slane %v359, 7
      %v860 = vrot.slane %v859, 2
      %v861 = vrot.slane %v360, 7
      %v862 = vrot.slane %v861, 2
      %v863 = vrot.slane %v361, 7
      %v864 = vrot.slane %v863, 2
      %v865 = vrot.slane %v362, 7
      %v866 = vrot.slane %v865, 2
      %v867 = vrot.slane %v363, 7
      %v868 = vrot.slane %v867, 2
      %v869 = vrot.slane %v364, 7
      %v870 = vrot.slane %v869, 2
      %v871 = vrot.slane %v365, 7
      %v872 = vrot.slane %v871, 2
      %v873 = vrot.slane %v366, 7
      %v874 = vrot.slane %v873, 2
      %v875 = vrot.slane %v367, 7
      %v876 = vrot.slane %v875, 2
      %v877 = vrot.slane %v368, 7
      %v878 = vrot.slane %v877, 2
      %v879 = vrot.slane %v369, 7
      %v880 = vrot.slane %v879, 2
      %v881 = vrot.slane %v370, 7
      %v882 = vrot.slane %v881, 2
      %v947 = vmax.f32 %v307, %v756
      %v948 = vmax.f32 %v308, %v758
      %v949 = vmax.f32 %v309, %v760
      %v950 = vmax.f32 %v310, %v762
      %v951 = vmax.f32 %v311, %v764
      %v952 = vmax.f32 %v312, %v766
      %v953 = vmax.f32 %v313, %v768
      %v954 = vmax.f32 %v314, %v770
      %v955 = vmax.f32 %v315, %v772
      %v956 = vmax.f32 %v316, %v774
      %v957 = vmax.f32 %v317, %v776
      %v958 = vmax.f32 %v318, %v778
      %v959 = vmax.f32 %v319, %v780
      %v960 = vmax.f32 %v320, %v782
      %v961 = vmax.f32 %v321, %v784
      %v962 = vmax.f32 %v322, %v786
      %v963 = vmax.f32 %v323, %v788
      %v964 = vmax.f32 %v324, %v790
      %v965 = vmax.f32 %v325, %v792
      %v966 = vmax.f32 %v326, %v794
      %v967 = vmax.f32 %v327, %v796
      %v968 = vmax.f32 %v328, %v798
      %v969 = vmax.f32 %v329, %v800
      %v970 = vmax.f32 %v330, %v802
      %v971 = vmax.f32 %v331, %v804
      %v972 = vmax.f32 %v332, %v806
      %v973 = vmax.f32 %v333, %v808
      %v974 = vmax.f32 %v334, %v810
      %v975 = vmax.f32 %v335, %v812
      %v976 = vmax.f32 %v336, %v814
      %v977 = vmax.f32 %v337, %v816
      %v978 = vmax.f32 %v338, %v818
      %v979 = vmax.f32 %v339, %v820
      %v980 = vmax.f32 %v340, %v822
      %v981 = vmax.f32 %v341, %v824
      %v982 = vmax.f32 %v342, %v826
      %v983 = vmax.f32 %v343, %v828
      %v984 = vmax.f32 %v344, %v830
      %v985 = vmax.f32 %v345, %v832
      %v986 = vmax.f32 %v346, %v834
      %v987 = vmax.f32 %v347, %v836
      %v988 = vmax.f32 %v348, %v838
      %v989 = vmax.f32 %v349, %v840
      %v990 = vmax.f32 %v350, %v842
      %v991 = vmax.f32 %v351, %v844
      %v992 = vmax.f32 %v352, %v846
      %v993 = vmax.f32 %v353, %v848
      %v994 = vmax.f32 %v354, %v850
      %v995 = vmax.f32 %v355, %v852
      %v996 = vmax.f32 %v356, %v854
      %v997 = vmax.f32 %v357, %v856
      %v998 = vmax.f32 %v358, %v858
      %v999 = vmax.f32 %v359, %v860
      %v1000 = vmax.f32 %v360, %v862
      %v1001 = vmax.f32 %v361, %v864
      %v1002 = vmax.f32 %v362, %v866
      %v1003 = vmax.f32 %v363, %v868
      %v1004 = vmax.f32 %v364, %v870
      %v1005 = vmax.f32 %v365, %v872
      %v1006 = vmax.f32 %v366, %v874
      %v1007 = vmax.f32 %v367, %v876
      %v1008 = vmax.f32 %v368, %v878
      %v1009 = vmax.f32 %v369, %v880
      %v1010 = vmax.f32 %v370, %v882
      %v1011 = vmax.f32 %v627, %v947
      %v1012 = vmax.f32 %v628, %v948
      %v1013 = vmax.f32 %v629, %v949
      %v1014 = vmax.f32 %v630, %v950
      %v1015 = vmax.f32 %v631, %v951
      %v1016 = vmax.f32 %v632, %v952
      %v1017 = vmax.f32 %v633, %v953
      %v1018 = vmax.f32 %v634, %v954
      %v1019 = vmax.f32 %v635, %v955
      %v1020 = vmax.f32 %v636, %v956
      %v1021 = vmax.f32 %v637, %v957
      %v1022 = vmax.f32 %v638, %v958
      %v1023 = vmax.f32 %v639, %v959
      %v1024 = vmax.f32 %v640, %v960
      %v1025 = vmax.f32 %v641, %v961
      %v1026 = vmax.f32 %v642, %v962
      %v1027 = vmax.f32 %v643, %v963
      %v1028 = vmax.f32 %v644, %v964
      %v1029 = vmax.f32 %v645, %v965
      %v1030 = vmax.f32 %v646, %v966
      %v1031 = vmax.f32 %v647, %v967
      %v1032 = vmax.f32 %v648, %v968
      %v1033 = vmax.f32 %v649, %v969
      %v1034 = vmax.f32 %v650, %v970
      %v1035 = vmax.f32 %v651, %v971
      %v1036 = vmax.f32 %v652, %v972
      %v1037 = vmax.f32 %v653, %v973
      %v1038 = vmax.f32 %v654, %v974
      %v1039 = vmax.f32 %v655, %v975
      %v1040 = vmax.f32 %v656, %v976
      %v1041 = vmax.f32 %v657, %v977
      %v1042 = vmax.f32 %v658, %v978
      %v1043 = vmax.f32 %v659, %v979
      %v1044 = vmax.f32 %v660, %v980
      %v1045 = vmax.f32 %v661, %v981
      %v1046 = vmax.f32 %v662, %v982
      %v1047 = vmax.f32 %v663, %v983
      %v1048 = vmax.f32 %v664, %v984
      %v1049 = vmax.f32 %v665, %v985
      %v1050 = vmax.f32 %v666, %v986
      %v1051 = vmax.f32 %v667, %v987
      %v1052 = vmax.f32 %v668, %v988
      %v1053 = vmax.f32 %v669, %v989
      %v1054 = vmax.f32 %v670, %v990
      %v1055 = vmax.f32 %v671, %v991
      %v1056 = vmax.f32 %v672, %v992
      %v1057 = vmax.f32 %v673, %v993
      %v1058 = vmax.f32 %v674, %v994
      %v1059 = vmax.f32 %v675, %v995
      %v1060 = vmax.f32 %v676, %v996
      %v1061 = vmax.f32 %v677, %v997
      %v1062 = vmax.f32 %v678, %v998
      %v1063 = vmax.f32 %v679, %v999
      %v1064 = vmax.f32 %v680, %v1000
      %v1065 = vmax.f32 %v681, %v1001
      %v1066 = vmax.f32 %v682, %v1002
      %v1067 = vmax.f32 %v683, %v1003
      %v1068 = vmax.f32 %v684, %v1004
      %v1069 = vmax.f32 %v685, %v1005
      %v1070 = vmax.f32 %v686, %v1006
      %v1071 = vmax.f32 %v687, %v1007
      %v1072 = vmax.f32 %v688, %v1008
      %v1073 = vmax.f32 %v689, %v1009
      %v1074 = vmax.f32 %v690, %v1010
      %v1075 = vpack.c.bf16 %v1011, %v1011
      %v1076 = vpack.c.bf16 %v1012, %v1012
      %v1077 = vpack.c.bf16 %v1013, %v1013
      %v1078 = vpack.c.bf16 %v1014, %v1014
      %v1079 = vpack.c.bf16 %v1015, %v1015
      %v1080 = vpack.c.bf16 %v1016, %v1016
      %v1081 = vpack.c.bf16 %v1017, %v1017
      %v1082 = vpack.c.bf16 %v1018, %v1018
      %v1083 = vpack.c.bf16 %v1019, %v1019
      %v1084 = vpack.c.bf16 %v1020, %v1020
      %v1085 = vpack.c.bf16 %v1021, %v1021
      %v1086 = vpack.c.bf16 %v1022, %v1022
      %v1087 = vpack.c.bf16 %v1023, %v1023
      %v1088 = vpack.c.bf16 %v1024, %v1024
      %v1089 = vpack.c.bf16 %v1025, %v1025
      %v1090 = vpack.c.bf16 %v1026, %v1026
      %v1091 = vpack.c.bf16 %v1027, %v1027
      %v1092 = vpack.c.bf16 %v1028, %v1028
      %v1093 = vpack.c.bf16 %v1029, %v1029
      %v1094 = vpack.c.bf16 %v1030, %v1030
      %v1095 = vpack.c.bf16 %v1031, %v1031
      %v1096 = vpack.c.bf16 %v1032, %v1032
      %v1097 = vpack.c.bf16 %v1033, %v1033
      %v1098 = vpack.c.bf16 %v1034, %v1034
      %v1099 = vpack.c.bf16 %v1035, %v1035
      %v1100 = vpack.c.bf16 %v1036, %v1036
      %v1101 = vpack.c.bf16 %v1037, %v1037
      %v1102 = vpack.c.bf16 %v1038, %v1038
      %v1103 = vpack.c.bf16 %v1039, %v1039
      %v1104 = vpack.c.bf16 %v1040, %v1040
      %v1105 = vpack.c.bf16 %v1041, %v1041
      %v1106 = vpack.c.bf16 %v1042, %v1042
      %v1107 = vpack.c.bf16 %v1043, %v1043
      %v1108 = vpack.c.bf16 %v1044, %v1044
      %v1109 = vpack.c.bf16 %v1045, %v1045
      %v1110 = vpack.c.bf16 %v1046, %v1046
      %v1111 = vpack.c.bf16 %v1047, %v1047
      %v1112 = vpack.c.bf16 %v1048, %v1048
      %v1113 = vpack.c.bf16 %v1049, %v1049
      %v1114 = vpack.c.bf16 %v1050, %v1050
      %v1115 = vpack.c.bf16 %v1051, %v1051
      %v1116 = vpack.c.bf16 %v1052, %v1052
      %v1117 = vpack.c.bf16 %v1053, %v1053
      %v1118 = vpack.c.bf16 %v1054, %v1054
      %v1119 = vpack.c.bf16 %v1055, %v1055
      %v1120 = vpack.c.bf16 %v1056, %v1056
      %v1121 = vpack.c.bf16 %v1057, %v1057
      %v1122 = vpack.c.bf16 %v1058, %v1058
      %v1123 = vpack.c.bf16 %v1059, %v1059
      %v1124 = vpack.c.bf16 %v1060, %v1060
      %v1125 = vpack.c.bf16 %v1061, %v1061
      %v1126 = vpack.c.bf16 %v1062, %v1062
      %v1127 = vpack.c.bf16 %v1063, %v1063
      %v1128 = vpack.c.bf16 %v1064, %v1064
      %v1129 = vpack.c.bf16 %v1065, %v1065
      %v1130 = vpack.c.bf16 %v1066, %v1066
      %v1131 = vpack.c.bf16 %v1067, %v1067
      %v1132 = vpack.c.bf16 %v1068, %v1068
      %v1133 = vpack.c.bf16 %v1069, %v1069
      %v1134 = vpack.c.bf16 %v1070, %v1070
      %v1135 = vpack.c.bf16 %v1071, %v1071
      %v1136 = vpack.c.bf16 %v1072, %v1072
      %v1137 = vpack.c.bf16 %v1073, %v1073
      %v1138 = vpack.c.bf16 %v1074, %v1074
      %v1203 = vunpack.c.l.b16 %v1075
      %v1204 = vunpack.c.l.b16 %v1076
      %v1205 = vunpack.c.l.b16 %v1077
      %v1206 = vunpack.c.l.b16 %v1078
      %v1207 = vunpack.c.l.b16 %v1079
      %v1208 = vunpack.c.l.b16 %v1080
      %v1209 = vunpack.c.l.b16 %v1081
      %v1210 = vunpack.c.l.b16 %v1082
      %v1211 = vunpack.c.l.b16 %v1083
      %v1212 = vunpack.c.l.b16 %v1084
      %v1213 = vunpack.c.l.b16 %v1085
      %v1214 = vunpack.c.l.b16 %v1086
      %v1215 = vunpack.c.l.b16 %v1087
      %v1216 = vunpack.c.l.b16 %v1088
      %v1217 = vunpack.c.l.b16 %v1089
      %v1218 = vunpack.c.l.b16 %v1090
      %v1219 = vunpack.c.l.b16 %v1091
      %v1220 = vunpack.c.l.b16 %v1092
      %v1221 = vunpack.c.l.b16 %v1093
      %v1222 = vunpack.c.l.b16 %v1094
      %v1223 = vunpack.c.l.b16 %v1095
      %v1224 = vunpack.c.l.b16 %v1096
      %v1225 = vunpack.c.l.b16 %v1097
      %v1226 = vunpack.c.l.b16 %v1098
      %v1227 = vunpack.c.l.b16 %v1099
      %v1228 = vunpack.c.l.b16 %v1100
      %v1229 = vunpack.c.l.b16 %v1101
      %v1230 = vunpack.c.l.b16 %v1102
      %v1231 = vunpack.c.l.b16 %v1103
      %v1232 = vunpack.c.l.b16 %v1104
      %v1233 = vunpack.c.l.b16 %v1105
      %v1234 = vunpack.c.l.b16 %v1106
      %v1235 = vunpack.c.l.b16 %v1107
      %v1236 = vunpack.c.l.b16 %v1108
      %v1237 = vunpack.c.l.b16 %v1109
      %v1238 = vunpack.c.l.b16 %v1110
      %v1239 = vunpack.c.l.b16 %v1111
      %v1240 = vunpack.c.l.b16 %v1112
      %v1241 = vunpack.c.l.b16 %v1113
      %v1242 = vunpack.c.l.b16 %v1114
      %v1243 = vunpack.c.l.b16 %v1115
      %v1244 = vunpack.c.l.b16 %v1116
      %v1245 = vunpack.c.l.b16 %v1117
      %v1246 = vunpack.c.l.b16 %v1118
      %v1247 = vunpack.c.l.b16 %v1119
      %v1248 = vunpack.c.l.b16 %v1120
      %v1249 = vunpack.c.l.b16 %v1121
      %v1250 = vunpack.c.l.b16 %v1122
      %v1251 = vunpack.c.l.b16 %v1123
      %v1252 = vunpack.c.l.b16 %v1124
      %v1253 = vunpack.c.l.b16 %v1125
      %v1254 = vunpack.c.l.b16 %v1126
      %v1255 = vunpack.c.l.b16 %v1127
      %v1256 = vunpack.c.l.b16 %v1128
      %v1257 = vunpack.c.l.b16 %v1129
      %v1258 = vunpack.c.l.b16 %v1130
      %v1259 = vunpack.c.l.b16 %v1131
      %v1260 = vunpack.c.l.b16 %v1132
      %v1261 = vunpack.c.l.b16 %v1133
      %v1262 = vunpack.c.l.b16 %v1134
      %v1263 = vunpack.c.l.b16 %v1135
      %v1264 = vunpack.c.l.b16 %v1136
      %v1265 = vunpack.c.l.b16 %v1137
      %v1266 = vunpack.c.l.b16 %v1138
      %v1267 = vrot.slane %v1204, 7
      %vm1268 = vcmask 1041409
      %v1269 = vsel %vm1268, %v1267, %v1203
      %v1270 = vrot.slane %v1205, 6
      %vm1271 = vcmask 1042434
      %v1272 = vsel %vm1271, %v1270, %v1269
      %v1273 = vrot.slane %v1206, 5
      %vm1274 = vcmask 1043459
      %v1275 = vsel %vm1274, %v1273, %v1272
      %v1276 = vrot.slane %v1207, 4
      %vm1277 = vcmask 1044484
      %v1278 = vsel %vm1277, %v1276, %v1275
      %v1279 = vrot.slane %v1208, 3
      %vm1280 = vcmask 1045509
      %v1281 = vsel %vm1280, %v1279, %v1278
      %v1282 = vrot.slane %v1209, 2
      %vm1283 = vcmask 1046534
      %v1284 = vsel %vm1283, %v1282, %v1281
      %v1285 = vrot.slane %v1210, 1
      %vm1286 = vcmask 1047559
      %v1287 = vsel %vm1286, %v1285, %v1284
      %v1288 = vrot.slane %v1212, 7
      %v1289 = vsel %vm1268, %v1288, %v1211
      %v1290 = vrot.slane %v1213, 6
      %v1291 = vsel %vm1271, %v1290, %v1289
      %v1292 = vrot.slane %v1214, 5
      %v1293 = vsel %vm1274, %v1292, %v1291
      %v1294 = vrot.slane %v1215, 4
      %v1295 = vsel %vm1277, %v1294, %v1293
      %v1296 = vrot.slane %v1216, 3
      %v1297 = vsel %vm1280, %v1296, %v1295
      %v1298 = vrot.slane %v1217, 2
      %v1299 = vsel %vm1283, %v1298, %v1297
      %v1300 = vrot.slane %v1218, 1
      %v1301 = vsel %vm1286, %v1300, %v1299
      %v1302 = vrot.slane %v1220, 7
      %v1303 = vsel %vm1268, %v1302, %v1219
      %v1304 = vrot.slane %v1221, 6
      %v1305 = vsel %vm1271, %v1304, %v1303
      %v1306 = vrot.slane %v1222, 5
      %v1307 = vsel %vm1274, %v1306, %v1305
      %v1308 = vrot.slane %v1223, 4
      %v1309 = vsel %vm1277, %v1308, %v1307
      %v1310 = vrot.slane %v1224, 3
      %v1311 = vsel %vm1280, %v1310, %v1309
      %v1312 = vrot.slane %v1225, 2
      %v1313 = vsel %vm1283, %v1312, %v1311
      %v1314 = vrot.slane %v1226, 1
      %v1315 = vsel %vm1286, %v1314, %v1313
      %v1316 = vrot.slane %v1228, 7
      %v1317 = vsel %vm1268, %v1316, %v1227
      %v1318 = vrot.slane %v1229, 6
      %v1319 = vsel %vm1271, %v1318, %v1317
      %v1320 = vrot.slane %v1230, 5
      %v1321 = vsel %vm1274, %v1320, %v1319
      %v1322 = vrot.slane %v1231, 4
      %v1323 = vsel %vm1277, %v1322, %v1321
      %v1324 = vrot.slane %v1232, 3
      %v1325 = vsel %vm1280, %v1324, %v1323
      %v1326 = vrot.slane %v1233, 2
      %v1327 = vsel %vm1283, %v1326, %v1325
      %v1328 = vrot.slane %v1234, 1
      %v1329 = vsel %vm1286, %v1328, %v1327
      %v1330 = vrot.slane %v1236, 7
      %v1331 = vsel %vm1268, %v1330, %v1235
      %v1332 = vrot.slane %v1237, 6
      %v1333 = vsel %vm1271, %v1332, %v1331
      %v1334 = vrot.slane %v1238, 5
      %v1335 = vsel %vm1274, %v1334, %v1333
      %v1336 = vrot.slane %v1239, 4
      %v1337 = vsel %vm1277, %v1336, %v1335
      %v1338 = vrot.slane %v1240, 3
      %v1339 = vsel %vm1280, %v1338, %v1337
      %v1340 = vrot.slane %v1241, 2
      %v1341 = vsel %vm1283, %v1340, %v1339
      %v1342 = vrot.slane %v1242, 1
      %v1343 = vsel %vm1286, %v1342, %v1341
      %v1344 = vrot.slane %v1244, 7
      %v1345 = vsel %vm1268, %v1344, %v1243
      %v1346 = vrot.slane %v1245, 6
      %v1347 = vsel %vm1271, %v1346, %v1345
      %v1348 = vrot.slane %v1246, 5
      %v1349 = vsel %vm1274, %v1348, %v1347
      %v1350 = vrot.slane %v1247, 4
      %v1351 = vsel %vm1277, %v1350, %v1349
      %v1352 = vrot.slane %v1248, 3
      %v1353 = vsel %vm1280, %v1352, %v1351
      %v1354 = vrot.slane %v1249, 2
      %v1355 = vsel %vm1283, %v1354, %v1353
      %v1356 = vrot.slane %v1250, 1
      %v1357 = vsel %vm1286, %v1356, %v1355
      %v1358 = vrot.slane %v1252, 7
      %v1359 = vsel %vm1268, %v1358, %v1251
      %v1360 = vrot.slane %v1253, 6
      %v1361 = vsel %vm1271, %v1360, %v1359
      %v1362 = vrot.slane %v1254, 5
      %v1363 = vsel %vm1274, %v1362, %v1361
      %v1364 = vrot.slane %v1255, 4
      %v1365 = vsel %vm1277, %v1364, %v1363
      %v1366 = vrot.slane %v1256, 3
      %v1367 = vsel %vm1280, %v1366, %v1365
      %v1368 = vrot.slane %v1257, 2
      %v1369 = vsel %vm1283, %v1368, %v1367
      %v1370 = vrot.slane %v1258, 1
      %v1371 = vsel %vm1286, %v1370, %v1369
      %v1372 = vrot.slane %v1260, 7
      %v1373 = vsel %vm1268, %v1372, %v1259
      %v1374 = vrot.slane %v1261, 6
      %v1375 = vsel %vm1271, %v1374, %v1373
      %v1376 = vrot.slane %v1262, 5
      %v1377 = vsel %vm1274, %v1376, %v1375
      %v1378 = vrot.slane %v1263, 4
      %v1379 = vsel %vm1277, %v1378, %v1377
      %v1380 = vrot.slane %v1264, 3
      %v1381 = vsel %vm1280, %v1380, %v1379
      %v1382 = vrot.slane %v1265, 2
      %v1383 = vsel %vm1283, %v1382, %v1381
      %v1384 = vrot.slane %v1266, 1
      %v1385 = vsel %vm1286, %v1384, %v1383
      %v1386 = vpack.c.b16 %v1287, %v1287
      %v1387 = vpack.c.b16 %v1301, %v1301
      %v1388 = vpack.c.b16 %v1315, %v1315
      %v1389 = vpack.c.b16 %v1329, %v1329
      %v1390 = vpack.c.b16 %v1343, %v1343
      %v1391 = vpack.c.b16 %v1357, %v1357
      %v1392 = vpack.c.b16 %v1371, %v1371
      %v1393 = vpack.c.b16 %v1385, %v1385
      %vm1402 = vcmask 60416
      %1403 = vst.msk [vmem:[%s113] sm:$0xf] %vm1402, %v1386
      %1404 = vst.msk [vmem:[%s113 + $0x4] sm:$0xf] %vm1402, %v1387
      %1405 = vst.msk [vmem:[%s113 + $0x8] sm:$0xf] %vm1402, %v1388
      %1406 = vst.msk [vmem:[%s113 + $0xc] sm:$0xf] %vm1402, %v1389
      %1407 = vst.msk [vmem:[%s113 + $0x10] sm:$0xf] %vm1402, %v1390
      %1408 = vst.msk [vmem:[%s113 + $0x14] sm:$0xf] %vm1402, %v1391
      %1409 = vst.msk [vmem:[%s113 + $0x18] sm:$0xf] %vm1402, %v1392
      %1410 = vst.msk [vmem:[%s113 + $0x1c] sm:$0xf] %vm1402, %v1393
      %p1411 = scmp.lt.s32.totalorder %s12, 1
      %s1412 = scalar_select %p1411, %s12, 1
      %s1413 = smul.addr %s1412, 8
      %s1414 = smul.addr %s1413, 4
      %s1415 = scalar_lea.vmem %s1, %s1414
      // Predicated region
      $region25: #{_lambda_.18} parent=23 // pred_check
        %p1416 = pneg %p56
      $region26: #{_lambda_.18} parent=23 // pred_check_branch
        %1418 = sbr.rel (%p1416) target = $region28
      $region27: #{_lambda_.18} parent=23 // pred_region
        _
      $region28: #{_lambda_.18} parent=23 // pred_fallthru
        _
    $region24: #{_lambda_.18} parent=5 // pred_fallthru
      _
    %p1419 = scmp.le.s32.totalorder 2, %s7
    // Predicated region
    $region29: #{_lambda_.18} parent=5 // pred_check
      %p1420 = pneg %p1419
    $region30: #{_lambda_.18} parent=5 // pred_check_branch
      %1422 = sbr.rel (%p1420) target = $region32
    $region31: #{_lambda_.18} parent=5 // pred_region
      %s1423 = ssub.s32 %s7, 2
      // Predicated region
      $region33: #{_lambda_.18} parent=31 // pred_check
        %p1424 = pneg %p62
      $region34: #{_lambda_.18} parent=31 // pred_check_branch
        %1426 = sbr.rel (%p1424) target = $region36
      $region35: #{_lambda_.18} parent=31 // pred_region
        %p1427 = scmp.lt.s32.totalorder %s13, 1
        %s1428 = scalar_select %p1427, %s13, 1
        %s1429 = smul.addr %s1428, 8
        %s1430 = smul.addr %s1429, 4
        %s1431 = scalar_lea.vmem %s1, %s1430
      $region36: #{_lambda_.18} parent=31 // pred_fallthru
        _
    $region32: #{_lambda_.18} parent=5 // pred_fallthru
      _
  $region6: #{_lambda_.18} parent=0 // loop_footer
    %s11 = sadd.s32 1, %s7
  $region7: #{_lambda_.18} parent=0 // loop_footer_branch
    %6 = sbr.rel target = $region3
  $region8: #{_lambda_.18} parent=0 // loop_exit
    _

// kernel: tile.106
$region0: #{tile.106}
  #allocation0 [shape = 's32[1]{0}', space=sflag, size = 0x4, scoped, tag = 'scoped memory for tile.106']
  %s0 = inlined_call_operand.vmem [shape: f32[16], index: 0, kind: input, shape index: {}]
  %s1 = inlined_call_operand.vmem [shape: f32[8,16], index: 1, kind: output, shape index: {}]
  // Predicated region
  $region2: #{tile.106} parent=0 // pred_check
    _
  $region3: #{tile.106} parent=0 // pred_check_branch
    %3 = sbr.rel (0) target = $region5
  $region4: #{tile.106} parent=0 // pred_region
    _
  $region5: #{tile.106} parent=0 // pred_fallthru
    _
  %v4 = vld [vmem:[%s0] ss:$0 sm:$0xff]
  %5 = vst [vmem:[%s1] sm:$0xff] %v4

// kernel: tile.107
$region0: #{tile.107}
  %s0 = inlined_call_operand.vmem [shape: f32[8,16], index: 0, kind: input, shape index: {}]
  %s1 = inlined_call_operand.vmem [shape: f32[1,128], index: 1, kind: output, shape index: {}]
  $region1: #{tile.107} parent=0
    #allocation0 [shape = 'u8[4096]{0}', space=vmem, size = 0x1000, scoped, tag = 'scoped mem for output reshape']
    %v2 = vld [vmem:[%s0] sm:$0x1]
    %vm3 = vcmask 130048
    %4 = vst.msk [vmem:[#allocation0] sm:$0x1] %vm3, %v2
    %s5 = scalar_lea.vmem %s0, 7
    %v6 = vld [vmem:[%s5] sm:$0x1]
    %7 = vrot.lane.b32.xlu0 %v6, 112
    %v8 = vpop.permute.xlu0 %7
    %vm9 = vcmask 1048448
    %10 = vst.msk [vmem:[#allocation0] sm:$0x1] %vm9, %v8
    %s11 = scalar_lea.vmem %s0, 6
    %v12 = vld [vmem:[%s11] sm:$0x1]
    %13 = vrot.lane.b32.xlu0 %v12, 96
    %v14 = vpop.permute.xlu0 %13
    %vm15 = vcmask 917248
    %16 = vst.msk [vmem:[#allocation0] sm:$0x1] %vm15, %v14
    %s17 = scalar_lea.vmem %s0, 5
    %v18 = vld [vmem:[%s17] sm:$0x1]
    %19 = vrot.lane.b32.xlu0 %v18, 80
    %v20 = vpop.permute.xlu0 %19
    %vm21 = vcmask 786048
    %22 = vst.msk [vmem:[#allocation0] sm:$0x1] %vm21, %v20
    %s23 = scalar_lea.vmem %s0, 4
    %v24 = vld [vmem:[%s23] sm:$0x1]
    %25 = vrot.lane.b32.xlu0 %v24, 64
    %v26 = vpop.permute.xlu0 %25
    %vm27 = vcmask 654848
    %28 = vst.msk [vmem:[#allocation0] sm:$0x1] %vm27, %v26
    %s29 = scalar_lea.vmem %s0, 3
    %v30 = vld [vmem:[%s29] sm:$0x1]
    %31 = vrot.lane.b32.xlu0 %v30, 48
    %v32 = vpop.permute.xlu0 %31
    %vm33 = vcmask 523648
    %34 = vst.msk [vmem:[#allocation0] sm:$0x1] %vm33, %v32
    %s35 = scalar_lea.vmem %s0, 2
    %v36 = vld [vmem:[%s35] sm:$0x1]
    %37 = vrot.lane.b32.xlu0 %v36, 32
    %v38 = vpop.permute.xlu0 %37
    %vm39 = vcmask 392448
    %40 = vst.msk [vmem:[#allocation0] sm:$0x1] %vm39, %v38
    %s41 = scalar_lea.vmem %s0, 1
    %v42 = vld [vmem:[%s41] sm:$0x1]
    %43 = vrot.lane.b32.xlu0 %v42, 16
    %v44 = vpop.permute.xlu0 %43
    %vm45 = vcmask 261248
    %46 = vst.msk [vmem:[#allocation0] sm:$0x1] %vm45, %v44
    %s48 = ssub.s32 2, 1
    %v49 = vld [vmem:[#allocation0] sm:%s48]
    %s51 = ssub.s32 2, 1
    %52 = vst [vmem:[%s1] sm:%s51] %v49

// kernel: _lambda_.19
$region0: #{_lambda_.19}
  #allocation0 [shape = 'u32[]', space=smem, size = 0x4, offset = 0x4, fixed_abs, tag = 'smem constant byte address 0x4 - core index']
  #allocation1 [shape = 'u32[72,128]{1,0:T(1,128)}', space=vmem, size = 0x9000, scoped, tag = 'internal scratch']
  #allocation2 [shape = 'f32[8,128]{1,0:T(8,128)}', space=vmem, size = 0x1000, scoped, tag = 'scratch operand']
  %s0 = inlined_call_operand.vmem [shape: bf16[2,8,64], index: 0, kind: input, shape index: {}]
  %s1 = inlined_call_operand.vmem [shape: bf16[3,64,128], index: 1, kind: input, shape index: {}]
  %s2 = inlined_call_operand.vmem [shape: f32[1,128], index: 2, kind: input, shape index: {}]
  %s3 = inlined_call_operand.vmem [shape: f32[1,128], index: 3, kind: input, shape index: {}]
  %s4 = inlined_call_operand.vmem [shape: bf16[2,8,128], index: 4, kind: output, shape index: {}]
  %s5 = sld [smem:[#allocation0]]
  $region49: #{_lambda_.19} parent=0
    _
  %s7 = ssub.s32 1, %s5
  %s8 = scalar_select 0, %s7, %s5
  loop: start=0, step=1, limit=4
  $region2: #{_lambda_.19} parent=0 // loop_pre_header
    _
  $region3: #{_lambda_.19} parent=0 // loop_header
    %s10 = sphi 0, %s14
    %p11 = scmp.ge.s32.totalorder %s10, 4
    %s20 = sphi 0, %s22
    %s23 = sphi 0, %s20
    %s24 = sphi 0, %s23
    %s40 = sphi 0, %s24
    %s44 = sphi 0, %s44
    %s46 = sphi 0, %s44
    %s47 = sphi 0, %s46
    %s61 = sphi 0, %s47
    %s65 = sphi 0, %s65
    %s67 = sphi 0, %s65
    %s68 = sphi 0, %s67
    %s82 = sphi 0, %s68
    %s86 = sphi 0, %s86
    %s88 = sphi 0, %s86
    %s89 = sphi 0, %s88
    %s103 = sphi 0, %s89
    %s109 = sphi 0, %s111
    %s112 = sphi 0, %s109
    %s113 = sphi 0, %s112
    %s129 = sphi 0, %s113
  $region4: #{_lambda_.19} parent=0 // loop_header_branch
    %13 = sbr.rel (%p11) target = $region8
  $region5: #{_lambda_.19} parent=0 // loop_body
    %s15 = ssub.s32 %s10, 1
    %s16 = ssub.s32 %s10, 2
    %s17 = sadd.s32 %s10, 1
    %s18 = ssub.s32 %s10, %s17
    %p19 = scmp.eq.s32.totalorder %s18, 0
    %s21 = sadd.s32 %s20, 1
    %s22 = scalar_select %p19, %s20, %s21
    %p25 = pneg %p19
    %p26 = scmp.eq.s32.totalorder %s10, 1
    %p27 = por %p25, %p26
    %p28 = scmp.ne.s32.totalorder %s20, %s23
    %p29 = scmp.eq.s32.totalorder %s10, 0
    %p30 = por %p28, %p29
    %p31 = scmp.ne.s32.totalorder %s20, %s23
    %p32 = scmp.eq.s32.totalorder %s15, 1
    %p33 = por %p31, %p32
    %p34 = scmp.ne.s32.totalorder %s23, %s24
    %p35 = scmp.eq.s32.totalorder %s15, 0
    %p36 = por %p34, %p35
    %p37 = scmp.ne.s32.totalorder %s23, %s24
    %p38 = scmp.eq.s32.totalorder %s16, 1
    %p39 = por %p37, %p38
    %p41 = scmp.ne.s32.totalorder %s24, %s40
    %p42 = scmp.eq.s32.totalorder %s16, 0
    %p43 = por %p41, %p42
    %s45 = sadd.s32 %s44, 1
    %p48 = scmp.eq.s32.totalorder %s10, 1
    %p49 = scmp.ne.s32.totalorder %s44, %s46
    %p50 = scmp.eq.s32.totalorder %s10, 0
    %p51 = por %p49, %p50
    %p52 = scmp.ne.s32.totalorder %s44, %s46
    %p53 = scmp.eq.s32.totalorder %s15, 1
    %p54 = por %p52, %p53
    %p55 = scmp.ne.s32.totalorder %s46, %s47
    %p56 = scmp.eq.s32.totalorder %s15, 0
    %p57 = por %p55, %p56
    %p58 = scmp.ne.s32.totalorder %s46, %s47
    %p59 = scmp.eq.s32.totalorder %s16, 1
    %p60 = por %p58, %p59
    %p62 = scmp.ne.s32.totalorder %s47, %s61
    %p63 = scmp.eq.s32.totalorder %s16, 0
    %p64 = por %p62, %p63
    %s66 = sadd.s32 %s65, 1
    %p69 = scmp.eq.s32.totalorder %s10, 1
    %p70 = scmp.ne.s32.totalorder %s65, %s67
    %p71 = scmp.eq.s32.totalorder %s10, 0
    %p72 = por %p70, %p71
    %p73 = scmp.ne.s32.totalorder %s65, %s67
    %p74 = scmp.eq.s32.totalorder %s15, 1
    %p75 = por %p73, %p74
    %p76 = scmp.ne.s32.totalorder %s67, %s68
    %p77 = scmp.eq.s32.totalorder %s15, 0
    %p78 = por %p76, %p77
    %p79 = scmp.ne.s32.totalorder %s67, %s68
    %p80 = scmp.eq.s32.totalorder %s16, 1
    %p81 = por %p79, %p80
    %p83 = scmp.ne.s32.totalorder %s68, %s82
    %p84 = scmp.eq.s32.totalorder %s16, 0
    %p85 = por %p83, %p84
    %s87 = sadd.s32 %s86, 1
    %p90 = scmp.eq.s32.totalorder %s10, 1
    %p91 = scmp.ne.s32.totalorder %s86, %s88
    %p92 = scmp.eq.s32.totalorder %s10, 0
    %p93 = por %p91, %p92
    %p94 = scmp.ne.s32.totalorder %s86, %s88
    %p95 = scmp.eq.s32.totalorder %s15, 1
    %p96 = por %p94, %p95
    %p97 = scmp.ne.s32.totalorder %s88, %s89
    %p98 = scmp.eq.s32.totalorder %s15, 0
    %p99 = por %p97, %p98
    %p100 = scmp.ne.s32.totalorder %s88, %s89
    %p101 = scmp.eq.s32.totalorder %s16, 1
    %p102 = por %p100, %p101
    %p104 = scmp.ne.s32.totalorder %s89, %s103
    %p105 = scmp.eq.s32.totalorder %s16, 0
    %p106 = por %p104, %p105
    %s107 = ssub.s32 %s10, %s17
    %p108 = scmp.eq.s32.totalorder %s107, 0
    %s110 = sadd.s32 %s109, 1
    %s111 = scalar_select %p108, %s109, %s110
    %p114 = pneg %p108
    %p115 = scmp.eq.s32.totalorder %s10, 1
    %p116 = por %p114, %p115
    %p117 = scmp.ne.s32.totalorder %s109, %s112
    %p118 = scmp.eq.s32.totalorder %s10, 0
    %p119 = por %p117, %p118
    %p120 = scmp.ne.s32.totalorder %s109, %s112
    %p121 = scmp.eq.s32.totalorder %s15, 1
    %p122 = por %p120, %p121
    %p123 = scmp.ne.s32.totalorder %s112, %s113
    %p124 = scmp.eq.s32.totalorder %s15, 0
    %p125 = por %p123, %p124
    %p126 = scmp.ne.s32.totalorder %s112, %s113
    %p127 = scmp.eq.s32.totalorder %s16, 1
    %p128 = por %p126, %p127
    %p130 = scmp.ne.s32.totalorder %s113, %s129
    %p131 = scmp.eq.s32.totalorder %s16, 0
    %p132 = por %p130, %p131
    %p133 = scmp.le.s32.totalorder 1, %s10
    %p134 = scmp.lt.s32.totalorder %s10, 3
    %p135 = pnand %p133, %p134
    %p136 = pneg %p135
    // Predicated region
    $region9: #{_lambda_.19} parent=5 // pred_check
      _
    $region10: #{_lambda_.19} parent=5 // pred_check_branch
      %138 = sbr.rel (%p135) target = $region12
    $region11: #{_lambda_.19} parent=5 // pred_region
      %s139 = ssub.s32 %s10, 1
      // Predicated region
      $region13: #{_lambda_.19} parent=11 // pred_check
        %p140 = pneg %p57
      $region14: #{_lambda_.19} parent=11 // pred_check_branch
        %142 = sbr.rel (%p140) target = $region16
      $region15: #{_lambda_.19} parent=11 // pred_region
        _
      $region16: #{_lambda_.19} parent=11 // pred_fallthru
        _
      // Predicated region
      $region17: #{_lambda_.19} parent=11 // pred_check
        %p143 = pneg %p78
      $region18: #{_lambda_.19} parent=11 // pred_check_branch
        %145 = sbr.rel (%p143) target = $region20
      $region19: #{_lambda_.19} parent=11 // pred_region
        _
      $region20: #{_lambda_.19} parent=11 // pred_fallthru
        _
      // Predicated region
      $region21: #{_lambda_.19} parent=11 // pred_check
        %p146 = pneg %p99
      $region22: #{_lambda_.19} parent=11 // pred_check_branch
        %148 = sbr.rel (%p146) target = $region24
      $region23: #{_lambda_.19} parent=11 // pred_region
        _
      $region24: #{_lambda_.19} parent=11 // pred_fallthru
        _
    $region12: #{_lambda_.19} parent=5 // pred_fallthru
      _
    %p149 = scmp.lt.s32.totalorder %s10, 2
    // Predicated region
    $region25: #{_lambda_.19} parent=5 // pred_check
      %p150 = pneg %p149
    $region26: #{_lambda_.19} parent=5 // pred_check_branch
      %152 = sbr.rel (%p150) target = $region28
    $region27: #{_lambda_.19} parent=5 // pred_region
      // Predicated region
      $region29: #{_lambda_.19} parent=27 // pred_check
        %p153 = pneg %p30
      $region30: #{_lambda_.19} parent=27 // pred_check_branch
        %155 = sbr.rel (%p153) target = $region32
      $region31: #{_lambda_.19} parent=27 // pred_region
        %p156 = scmp.lt.s32.totalorder %s10, 1
        %s157 = scalar_select %p156, %s10, 1
        %s158 = smul.addr %s157, 4
        %s159 = scalar_lea.vmem %s0, %s158
      $region32: #{_lambda_.19} parent=27 // pred_fallthru
        _
    $region28: #{_lambda_.19} parent=5 // pred_fallthru
      _
    %p160 = scmp.le.s32.totalorder 1, %s10
    %p161 = scmp.lt.s32.totalorder %s10, 3
    %p162 = pnand %p160, %p161
    %p163 = pneg %p162
    // Predicated region
    $region33: #{_lambda_.19} parent=5 // pred_check
      _
    $region34: #{_lambda_.19} parent=5 // pred_check_branch
      %165 = sbr.rel (%p162) target = $region36
    $region35: #{_lambda_.19} parent=5 // pred_region
      %s166 = ssub.s32 %s10, 1
      %p167 = scmp.lt.s32.totalorder %s15, 1
      %s168 = scalar_select %p167, %s15, 1
      %s169 = smul.addr %s168, 4
      %s170 = scalar_lea.vmem %s0, %s169
      %p171 = pneg %p36
      %p172 = pneg %p33
      %p173 = pneg %p57
      %p174 = pneg %p54
      %p175 = pneg %p78
      %p176 = pneg %p75
      %p177 = pneg %p99
      %p178 = pneg %p96
      %p179 = pneg %p125
      %p180 = pneg %p122
      %p181 = scmp.lt.s32.totalorder %s15, 1
      %s182 = scalar_select %p181, %s15, 1
      %s183 = smul.addr %s182, 4
      %s184 = scalar_lea.vmem %s4, %s183
      %p185 = scmp.lt.s32.totalorder %s15, 1
      %s186 = scalar_select %p185, %s15, 1
      %s187 = smul.addr %s186, 4
      %s188 = scalar_lea.vmem %s0, %s187
      %p189 = scmp.lt.s32.totalorder %s15, 1
      %s190 = scalar_select %p189, %s15, 1
      %s191 = smul.addr %s190, 4
      %s192 = scalar_lea.vmem %s4, %s191
      %v194 = vld [vmem:[%s188] sm:$0xf]
      %s195 = scalar_lea.vmem %s1, 32
      %v196 = vld [vmem:[%s195] sm:$0xf]
      %v197 = vld [vmem:[%s195 + $0x4] sm:$0xf]
      %v198 = vld [vmem:[%s195 + $0x8] sm:$0xf]
      %v199 = vld [vmem:[%s195 + $0xc] sm:$0xf]
      %v200 = vld [vmem:[%s195 + $0x10] sm:$0xf]
      %v201 = vld [vmem:[%s195 + $0x14] sm:$0xf]
      %v202 = vld [vmem:[%s195 + $0x18] sm:$0xf]
      %v203 = vld [vmem:[%s195 + $0x1c] sm:$0xf]
      %v212 = vunpack.c.l.b16 %v196
      %v213 = vunpack.c.l.b16 %v197
      %v214 = vunpack.c.l.b16 %v198
      %v215 = vunpack.c.l.b16 %v199
      %v216 = vunpack.c.l.b16 %v200
      %v217 = vunpack.c.l.b16 %v201
      %v218 = vunpack.c.l.b16 %v202
      %v219 = vunpack.c.l.b16 %v203
      %v220 = vpack.c.b16 %v213, %v212
      %v221 = vpack.c.b16 %v215, %v214
      %v222 = vpack.c.b16 %v217, %v216
      %v223 = vpack.c.b16 %v219, %v218
      %vm228 = vcmask 523264
      %v230 = vsel %vm228, %v194, 0
      %232 = vmatpush.bf16.msra.mxu0 0
      %233 = vmatpush.bf16.msra.mxu0 0
      %234 = vmatpush.bf16.msra.mxu0 0
      %235 = vmatpush.bf16.msra.mxu0 0
      %236 = vmatpush.bf16.msra.mxu0 %v223
      %237 = vmatpush.bf16.msra.mxu0 %v222
      %238 = vmatpush.bf16.msra.mxu0 %v221
      %239 = vmatpush.bf16.msra.mxu0 %v220
      %240 = vmatmul.bf16.gmra.mxu0 %v230
      %v241 = vpop.f32.mrf.mxu0
      %v242 = vadd.f32 0.0, %v241
      %v243 = vpop.f32.mrf.mxu0
      %244 = vdwg.mxu0
      %245 = vst [vmem:[#allocation2] sm:$0xff] %v242
      %v246 = vld [vmem:[#allocation2 + $0x1] sm:$0x7f]
      %v247 = vld [vmem:[%s188] sm:$0xf]
      %v248 = vld [vmem:[%s1] sm:$0xf]
      %v249 = vld [vmem:[%s1 + $0x4] sm:$0xf]
      %v250 = vld [vmem:[%s1 + $0x8] sm:$0xf]
      %v251 = vld [vmem:[%s1 + $0xc] sm:$0xf]
      %v252 = vld [vmem:[%s1 + $0x10] sm:$0xf]
      %v253 = vld [vmem:[%s1 + $0x14] sm:$0xf]
      %v254 = vld [vmem:[%s1 + $0x18] sm:$0xf]
      %v255 = vld [vmem:[%s1 + $0x1c] sm:$0xf]
      %v264 = vunpack.c.l.b16 %v248
      %v265 = vunpack.c.l.b16 %v249
      %v266 = vunpack.c.l.b16 %v250
      %v267 = vunpack.c.l.b16 %v251
      %v268 = vunpack.c.l.b16 %v252
      %v269 = vunpack.c.l.b16 %v253
      %v270 = vunpack.c.l.b16 %v254
      %v271 = vunpack.c.l.b16 %v255
      %v272 = vpack.c.b16 %v265, %v264
      %v273 = vpack.c.b16 %v267, %v266
      %v274 = vpack.c.b16 %v269, %v268
      %v275 = vpack.c.b16 %v271, %v270
      %v281 = vsel %vm228, %v247, 0
      %283 = vmatpush.bf16.msra.mxu0 0
      %284 = vmatpush.bf16.msra.mxu0 0
      %285 = vmatpush.bf16.msra.mxu0 0
      %286 = vmatpush.bf16.msra.mxu0 0
      %287 = vmatpush.bf16.msra.mxu0 %v275
      %288 = vmatpush.bf16.msra.mxu0 %v274
      %289 = vmatpush.bf16.msra.mxu0 %v273
      %290 = vmatpush.bf16.msra.mxu0 %v272
      %291 = vmatmul.bf16.gmra.mxu0 %v281
      %v292 = vpop.f32.mrf.mxu0
      %v293 = vadd.f32 0.0, %v292
      %v294 = vpop.f32.mrf.mxu0
      %295 = vdwg.mxu0
      %v296 = vadd.f32 %v246, %v293
      %297 = vst [vmem:[#allocation2 + $0x1] sm:$0x7f] %v296
      %v298 = vld [vmem:[#allocation2] sm:$0x7f]
      %v299 = vld [vmem:[%s188] sm:$0xf]
      %s300 = scalar_lea.vmem %s1, 64
      %v301 = vld [vmem:[%s300] sm:$0xf]
      %v302 = vld [vmem:[%s300 + $0x4] sm:$0xf]
      %v303 = vld [vmem:[%s300 + $0x8] sm:$0xf]
      %v304 = vld [vmem:[%s300 + $0xc] sm:$0xf]
      %v305 = vld [vmem:[%s300 + $0x10] sm:$0xf]
      %v306 = vld [vmem:[%s300 + $0x14] sm:$0xf]
      %v307 = vld [vmem:[%s300 + $0x18] sm:$0xf]
      %v308 = vld [vmem:[%s300 + $0x1c] sm:$0xf]
      %v310 = vunpack.c.l.b16 %v299
      %v311 = vpack.c.b16 %v310, %v310
      %v313 = vshrl.u32 %v311, 16
      %v315 = vshll.u32 %v311, 16
      %v317 = vrot.slane %v315, 1
      %v318 = vor.u32 %v313, %v317
      %v327 = vunpack.c.l.b16 %v301
      %v328 = vunpack.c.l.b16 %v302
      %v329 = vunpack.c.l.b16 %v303
      %v330 = vunpack.c.l.b16 %v304
      %v331 = vunpack.c.l.b16 %v305
      %v332 = vunpack.c.l.b16 %v306
      %v333 = vunpack.c.l.b16 %v307
      %v334 = vunpack.c.l.b16 %v308
      %v335 = vpack.c.b16 %v328, %v327
      %v336 = vpack.c.b16 %v330, %v329
      %v337 = vpack.c.b16 %v332, %v331
      %v338 = vpack.c.b16 %v334, %v333
      %v344 = vsel %vm228, %v318, 0
      %346 = vmatpush.bf16.msra.mxu0 0
      %347 = vmatpush.bf16.msra.mxu0 0
      %348 = vmatpush.bf16.msra.mxu0 0
      %349 = vmatpush.bf16.msra.mxu0 0
      %350 = vmatpush.bf16.msra.mxu0 %v338
      %351 = vmatpush.bf16.msra.mxu0 %v337
      %352 = vmatpush.bf16.msra.mxu0 %v336
      %353 = vmatpush.bf16.msra.mxu0 %v335
      %354 = vmatmul.bf16.gmra.mxu0 %v344
      %v355 = vpop.f32.mrf.mxu0
      %v356 = vadd.f32 0.0, %v355
      %v357 = vpop.f32.mrf.mxu0
      %358 = vdwg.mxu0
      %v359 = vadd.f32 %v298, %v356
      %360 = vst [vmem:[#allocation2] sm:$0x7f] %v359
      %v361 = vld [vmem:[#allocation2] sm:$0xff]
      %v362 = vld [vmem:[%s2] sm:$0x1]
      %v364 = vperm.slane %v362, 0
      %v366 = vmul.f32 %v361, %v364
      %v367 = vld [vmem:[%s3] sm:$0x1]
      %v369 = vperm.slane %v367, 0
      %v371 = vadd.f32 %v366, %v369
      %v372 = vmax.f32 %v371, 0.0
      %v373 = vpack.c.bf16 %v372, %v372
      %374 = vst [vmem:[%s192] sm:$0xf] %v373
      %p375 = scmp.lt.s32.totalorder %s15, 1
      %s376 = scalar_select %p375, %s15, 1
      %s377 = smul.addr %s376, 4
      %s378 = scalar_lea.vmem %s4, %s377
      // Predicated region
      $region37: #{_lambda_.19} parent=35 // pred_check
        %p379 = pneg %p122
      $region38: #{_lambda_.19} parent=35 // pred_check_branch
        %381 = sbr.rel (%p379) target = $region40
      $region39: #{_lambda_.19} parent=35 // pred_region
        _
      $region40: #{_lambda_.19} parent=35 // pred_fallthru
        _
    $region36: #{_lambda_.19} parent=5 // pred_fallthru
      _
    %p382 = scmp.le.s32.totalorder 2, %s10
    // Predicated region
    $region41: #{_lambda_.19} parent=5 // pred_check
      %p383 = pneg %p382
    $region42: #{_lambda_.19} parent=5 // pred_check_branch
      %385 = sbr.rel (%p383) target = $region44
    $region43: #{_lambda_.19} parent=5 // pred_region
      %s386 = ssub.s32 %s10, 2
      // Predicated region
      $region45: #{_lambda_.19} parent=43 // pred_check
        %p387 = pneg %p128
      $region46: #{_lambda_.19} parent=43 // pred_check_branch
        %389 = sbr.rel (%p387) target = $region48
      $region47: #{_lambda_.19} parent=43 // pred_region
        %p390 = scmp.lt.s32.totalorder %s16, 1
        %s391 = scalar_select %p390, %s16, 1
        %s392 = smul.addr %s391, 4
        %s393 = scalar_lea.vmem %s4, %s392
      $region48: #{_lambda_.19} parent=43 // pred_fallthru
        _
    $region44: #{_lambda_.19} parent=5 // pred_fallthru
      _
  $region6: #{_lambda_.19} parent=0 // loop_footer
    %s14 = sadd.s32 1, %s10
  $region7: #{_lambda_.19} parent=0 // loop_footer_branch
    %9 = sbr.rel target = $region3
  $region8: #{_lambda_.19} parent=0 // loop_exit
    _

// kernel: _lambda_.20
$region0: #{_lambda_.20}
  #allocation0 [shape = 'u32[]', space=smem, size = 0x4, offset = 0x4, fixed_abs, tag = 'smem constant byte address 0x4 - core index']
  #allocation1 [shape = 'u32[72,128]{1,0:T(1,128)}', space=vmem, size = 0x9000, scoped, tag = 'internal scratch']
  #allocation2 [shape = 'f32[8,128]{1,0:T(8,128)}', space=vmem, size = 0x1000, scoped, tag = 'scratch operand']
  %s0 = inlined_call_operand.vmem [shape: bf16[2,8,128], index: 0, kind: input, shape index: {}]
  %s1 = inlined_call_operand.vmem [shape: bf16[3,128,128], index: 1, kind: input, shape index: {}]
  %s2 = inlined_call_operand.vmem [shape: f32[1,128], index: 2, kind: input, shape index: {}]
  %s3 = inlined_call_operand.vmem [shape: f32[1,128], index: 3, kind: input, shape index: {}]
  %s4 = inlined_call_operand.vmem [shape: bf16[2,8,128], index: 4, kind: output, shape index: {}]
  %s5 = sld [smem:[#allocation0]]
  $region49: #{_lambda_.20} parent=0
    _
  %s7 = ssub.s32 1, %s5
  %s8 = scalar_select 0, %s7, %s5
  loop: start=0, step=1, limit=4
  $region2: #{_lambda_.20} parent=0 // loop_pre_header
    _
  $region3: #{_lambda_.20} parent=0 // loop_header
    %s10 = sphi 0, %s14
    %p11 = scmp.ge.s32.totalorder %s10, 4
    %s20 = sphi 0, %s22
    %s23 = sphi 0, %s20
    %s24 = sphi 0, %s23
    %s40 = sphi 0, %s24
    %s44 = sphi 0, %s44
    %s46 = sphi 0, %s44
    %s47 = sphi 0, %s46
    %s61 = sphi 0, %s47
    %s65 = sphi 0, %s65
    %s67 = sphi 0, %s65
    %s68 = sphi 0, %s67
    %s82 = sphi 0, %s68
    %s86 = sphi 0, %s86
    %s88 = sphi 0, %s86
    %s89 = sphi 0, %s88
    %s103 = sphi 0, %s89
    %s109 = sphi 0, %s111
    %s112 = sphi 0, %s109
    %s113 = sphi 0, %s112
    %s129 = sphi 0, %s113
  $region4: #{_lambda_.20} parent=0 // loop_header_branch
    %13 = sbr.rel (%p11) target = $region8
  $region5: #{_lambda_.20} parent=0 // loop_body
    %s15 = ssub.s32 %s10, 1
    %s16 = ssub.s32 %s10, 2
    %s17 = sadd.s32 %s10, 1
    %s18 = ssub.s32 %s10, %s17
    %p19 = scmp.eq.s32.totalorder %s18, 0
    %s21 = sadd.s32 %s20, 1
    %s22 = scalar_select %p19, %s20, %s21
    %p25 = pneg %p19
    %p26 = scmp.eq.s32.totalorder %s10, 1
    %p27 = por %p25, %p26
    %p28 = scmp.ne.s32.totalorder %s20, %s23
    %p29 = scmp.eq.s32.totalorder %s10, 0
    %p30 = por %p28, %p29
    %p31 = scmp.ne.s32.totalorder %s20, %s23
    %p32 = scmp.eq.s32.totalorder %s15, 1
    %p33 = por %p31, %p32
    %p34 = scmp.ne.s32.totalorder %s23, %s24
    %p35 = scmp.eq.s32.totalorder %s15, 0
    %p36 = por %p34, %p35
    %p37 = scmp.ne.s32.totalorder %s23, %s24
    %p38 = scmp.eq.s32.totalorder %s16, 1
    %p39 = por %p37, %p38
    %p41 = scmp.ne.s32.totalorder %s24, %s40
    %p42 = scmp.eq.s32.totalorder %s16, 0
    %p43 = por %p41, %p42
    %s45 = sadd.s32 %s44, 1
    %p48 = scmp.eq.s32.totalorder %s10, 1
    %p49 = scmp.ne.s32.totalorder %s44, %s46
    %p50 = scmp.eq.s32.totalorder %s10, 0
    %p51 = por %p49, %p50
    %p52 = scmp.ne.s32.totalorder %s44, %s46
    %p53 = scmp.eq.s32.totalorder %s15, 1
    %p54 = por %p52, %p53
    %p55 = scmp.ne.s32.totalorder %s46, %s47
    %p56 = scmp.eq.s32.totalorder %s15, 0
    %p57 = por %p55, %p56
    %p58 = scmp.ne.s32.totalorder %s46, %s47
    %p59 = scmp.eq.s32.totalorder %s16, 1
    %p60 = por %p58, %p59
    %p62 = scmp.ne.s32.totalorder %s47, %s61
    %p63 = scmp.eq.s32.totalorder %s16, 0
    %p64 = por %p62, %p63
    %s66 = sadd.s32 %s65, 1
    %p69 = scmp.eq.s32.totalorder %s10, 1
    %p70 = scmp.ne.s32.totalorder %s65, %s67
    %p71 = scmp.eq.s32.totalorder %s10, 0
    %p72 = por %p70, %p71
    %p73 = scmp.ne.s32.totalorder %s65, %s67
    %p74 = scmp.eq.s32.totalorder %s15, 1
    %p75 = por %p73, %p74
    %p76 = scmp.ne.s32.totalorder %s67, %s68
    %p77 = scmp.eq.s32.totalorder %s15, 0
    %p78 = por %p76, %p77
    %p79 = scmp.ne.s32.totalorder %s67, %s68
    %p80 = scmp.eq.s32.totalorder %s16, 1
    %p81 = por %p79, %p80
    %p83 = scmp.ne.s32.totalorder %s68, %s82
    %p84 = scmp.eq.s32.totalorder %s16, 0
    %p85 = por %p83, %p84
    %s87 = sadd.s32 %s86, 1
    %p90 = scmp.eq.s32.totalorder %s10, 1
    %p91 = scmp.ne.s32.totalorder %s86, %s88
    %p92 = scmp.eq.s32.totalorder %s10, 0
    %p93 = por %p91, %p92
    %p94 = scmp.ne.s32.totalorder %s86, %s88
    %p95 = scmp.eq.s32.totalorder %s15, 1
    %p96 = por %p94, %p95
    %p97 = scmp.ne.s32.totalorder %s88, %s89
    %p98 = scmp.eq.s32.totalorder %s15, 0
    %p99 = por %p97, %p98
    %p100 = scmp.ne.s32.totalorder %s88, %s89
    %p101 = scmp.eq.s32.totalorder %s16, 1
    %p102 = por %p100, %p101
    %p104 = scmp.ne.s32.totalorder %s89, %s103
    %p105 = scmp.eq.s32.totalorder %s16, 0
    %p106 = por %p104, %p105
    %s107 = ssub.s32 %s10, %s17
    %p108 = scmp.eq.s32.totalorder %s107, 0
    %s110 = sadd.s32 %s109, 1
    %s111 = scalar_select %p108, %s109, %s110
    %p114 = pneg %p108
    %p115 = scmp.eq.s32.totalorder %s10, 1
    %p116 = por %p114, %p115
    %p117 = scmp.ne.s32.totalorder %s109, %s112
    %p118 = scmp.eq.s32.totalorder %s10, 0
    %p119 = por %p117, %p118
    %p120 = scmp.ne.s32.totalorder %s109, %s112
    %p121 = scmp.eq.s32.totalorder %s15, 1
    %p122 = por %p120, %p121
    %p123 = scmp.ne.s32.totalorder %s112, %s113
    %p124 = scmp.eq.s32.totalorder %s15, 0
    %p125 = por %p123, %p124
    %p126 = scmp.ne.s32.totalorder %s112, %s113
    %p127 = scmp.eq.s32.totalorder %s16, 1
    %p128 = por %p126, %p127
    %p130 = scmp.ne.s32.totalorder %s113, %s129
    %p131 = scmp.eq.s32.totalorder %s16, 0
    %p132 = por %p130, %p131
    %p133 = scmp.le.s32.totalorder 1, %s10
    %p134 = scmp.lt.s32.totalorder %s10, 3
    %p135 = pnand %p133, %p134
    %p136 = pneg %p135
    // Predicated region
    $region9: #{_lambda_.20} parent=5 // pred_check
      _
    $region10: #{_lambda_.20} parent=5 // pred_check_branch
      %138 = sbr.rel (%p135) target = $region12
    $region11: #{_lambda_.20} parent=5 // pred_region
      %s139 = ssub.s32 %s10, 1
      // Predicated region
      $region13: #{_lambda_.20} parent=11 // pred_check
        %p140 = pneg %p57
      $region14: #{_lambda_.20} parent=11 // pred_check_branch
        %142 = sbr.rel (%p140) target = $region16
      $region15: #{_lambda_.20} parent=11 // pred_region
        _
      $region16: #{_lambda_.20} parent=11 // pred_fallthru
        _
      // Predicated region
      $region17: #{_lambda_.20} parent=11 // pred_check
        %p143 = pneg %p78
      $region18: #{_lambda_.20} parent=11 // pred_check_branch
        %145 = sbr.rel (%p143) target = $region20
      $region19: #{_lambda_.20} parent=11 // pred_region
        _
      $region20: #{_lambda_.20} parent=11 // pred_fallthru
        _
      // Predicated region
      $region21: #{_lambda_.20} parent=11 // pred_check
        %p146 = pneg %p99
      $region22: #{_lambda_.20} parent=11 // pred_check_branch
        %148 = sbr.rel (%p146) target = $region24
      $region23: #{_lambda_.20} parent=11 // pred_region
        _
      $region24: #{_lambda_.20} parent=11 // pred_fallthru
        _
    $region12: #{_lambda_.20} parent=5 // pred_fallthru
      _
    %p149 = scmp.lt.s32.totalorder %s10, 2
    // Predicated region
    $region25: #{_lambda_.20} parent=5 // pred_check
      %p150 = pneg %p149
    $region26: #{_lambda_.20} parent=5 // pred_check_branch
      %152 = sbr.rel (%p150) target = $region28
    $region27: #{_lambda_.20} parent=5 // pred_region
      // Predicated region
      $region29: #{_lambda_.20} parent=27 // pred_check
        %p153 = pneg %p30
      $region30: #{_lambda_.20} parent=27 // pred_check_branch
        %155 = sbr.rel (%p153) target = $region32
      $region31: #{_lambda_.20} parent=27 // pred_region
        %p156 = scmp.lt.s32.totalorder %s10, 1
        %s157 = scalar_select %p156, %s10, 1
        %s158 = smul.addr %s157, 4
        %s159 = scalar_lea.vmem %s0, %s158
      $region32: #{_lambda_.20} parent=27 // pred_fallthru
        _
    $region28: #{_lambda_.20} parent=5 // pred_fallthru
      _
    %p160 = scmp.le.s32.totalorder 1, %s10
    %p161 = scmp.lt.s32.totalorder %s10, 3
    %p162 = pnand %p160, %p161
    %p163 = pneg %p162
    // Predicated region
    $region33: #{_lambda_.20} parent=5 // pred_check
      _
    $region34: #{_lambda_.20} parent=5 // pred_check_branch
      %165 = sbr.rel (%p162) target = $region36
    $region35: #{_lambda_.20} parent=5 // pred_region
      %s166 = ssub.s32 %s10, 1
      %p167 = scmp.lt.s32.totalorder %s15, 1
      %s168 = scalar_select %p167, %s15, 1
      %s169 = smul.addr %s168, 4
      %s170 = scalar_lea.vmem %s0, %s169
      %p171 = pneg %p36
      %p172 = pneg %p33
      %p173 = pneg %p57
      %p174 = pneg %p54
      %p175 = pneg %p78
      %p176 = pneg %p75
      %p177 = pneg %p99
      %p178 = pneg %p96
      %p179 = pneg %p125
      %p180 = pneg %p122
      %p181 = scmp.lt.s32.totalorder %s15, 1
      %s182 = scalar_select %p181, %s15, 1
      %s183 = smul.addr %s182, 4
      %s184 = scalar_lea.vmem %s4, %s183
      %p185 = scmp.lt.s32.totalorder %s15, 1
      %s186 = scalar_select %p185, %s15, 1
      %s187 = smul.addr %s186, 4
      %s188 = scalar_lea.vmem %s0, %s187
      %p189 = scmp.lt.s32.totalorder %s15, 1
      %s190 = scalar_select %p189, %s15, 1
      %s191 = smul.addr %s190, 4
      %s192 = scalar_lea.vmem %s4, %s191
      %v193 = vld [vmem:[%s188] sm:$0xf]
      %s194 = scalar_lea.vmem %s1, 64
      %v195 = vld [vmem:[%s194] sm:$0xf]
      %v196 = vld [vmem:[%s194 + $0x4] sm:$0xf]
      %v197 = vld [vmem:[%s194 + $0x8] sm:$0xf]
      %v198 = vld [vmem:[%s194 + $0xc] sm:$0xf]
      %v199 = vld [vmem:[%s194 + $0x10] sm:$0xf]
      %v200 = vld [vmem:[%s194 + $0x14] sm:$0xf]
      %v201 = vld [vmem:[%s194 + $0x18] sm:$0xf]
      %v202 = vld [vmem:[%s194 + $0x1c] sm:$0xf]
      %v203 = vld [vmem:[%s194 + $0x20] sm:$0xf]
      %v204 = vld [vmem:[%s194 + $0x24] sm:$0xf]
      %v205 = vld [vmem:[%s194 + $0x28] sm:$0xf]
      %v206 = vld [vmem:[%s194 + $0x2c] sm:$0xf]
      %v207 = vld [vmem:[%s194 + $0x30] sm:$0xf]
      %v208 = vld [vmem:[%s194 + $0x34] sm:$0xf]
      %v209 = vld [vmem:[%s194 + $0x38] sm:$0xf]
      %v210 = vld [vmem:[%s194 + $0x3c] sm:$0xf]
      %v227 = vunpack.c.l.b16 %v195
      %v228 = vunpack.c.l.b16 %v196
      %v229 = vunpack.c.l.b16 %v197
      %v230 = vunpack.c.l.b16 %v198
      %v231 = vunpack.c.l.b16 %v199
      %v232 = vunpack.c.l.b16 %v200
      %v233 = vunpack.c.l.b16 %v201
      %v234 = vunpack.c.l.b16 %v202
      %v235 = vunpack.c.l.b16 %v203
      %v236 = vunpack.c.l.b16 %v204
      %v237 = vunpack.c.l.b16 %v205
      %v238 = vunpack.c.l.b16 %v206
      %v239 = vunpack.c.l.b16 %v207
      %v240 = vunpack.c.l.b16 %v208
      %v241 = vunpack.c.l.b16 %v209
      %v242 = vunpack.c.l.b16 %v210
      %v243 = vpack.c.b16 %v228, %v227
      %v244 = vpack.c.b16 %v230, %v229
      %v245 = vpack.c.b16 %v232, %v231
      %v246 = vpack.c.b16 %v234, %v233
      %v247 = vpack.c.b16 %v236, %v235
      %v248 = vpack.c.b16 %v238, %v237
      %v249 = vpack.c.b16 %v240, %v239
      %v250 = vpack.c.b16 %v242, %v241
      %259 = vmatpush.bf16.msra.mxu0 %v250
      %260 = vmatpush.bf16.msra.mxu0 %v249
      %261 = vmatpush.bf16.msra.mxu0 %v248
      %262 = vmatpush.bf16.msra.mxu0 %v247
      %263 = vmatpush.bf16.msra.mxu0 %v246
      %264 = vmatpush.bf16.msra.mxu0 %v245
      %265 = vmatpush.bf16.msra.mxu0 %v244
      %266 = vmatpush.bf16.msra.mxu0 %v243
      %267 = vmatmul.bf16.gmra.mxu0 %v193
      %v268 = vpop.f32.mrf.mxu0
      %v269 = vadd.f32 0.0, %v268
      %v270 = vpop.f32.mrf.mxu0
      %271 = vdwg.mxu0
      %272 = vst [vmem:[#allocation2] sm:$0xff] %v269
      %v273 = vld [vmem:[#allocation2 + $0x1] sm:$0x7f]
      %v274 = vld [vmem:[%s188] sm:$0xf]
      %v275 = vld [vmem:[%s1] sm:$0xf]
      %v276 = vld [vmem:[%s1 + $0x4] sm:$0xf]
      %v277 = vld [vmem:[%s1 + $0x8] sm:$0xf]
      %v278 = vld [vmem:[%s1 + $0xc] sm:$0xf]
      %v279 = vld [vmem:[%s1 + $0x10] sm:$0xf]
      %v280 = vld [vmem:[%s1 + $0x14] sm:$0xf]
      %v281 = vld [vmem:[%s1 + $0x18] sm:$0xf]
      %v282 = vld [vmem:[%s1 + $0x1c] sm:$0xf]
      %v283 = vld [vmem:[%s1 + $0x20] sm:$0xf]
      %v284 = vld [vmem:[%s1 + $0x24] sm:$0xf]
      %v285 = vld [vmem:[%s1 + $0x28] sm:$0xf]
      %v286 = vld [vmem:[%s1 + $0x2c] sm:$0xf]
      %v287 = vld [vmem:[%s1 + $0x30] sm:$0xf]
      %v288 = vld [vmem:[%s1 + $0x34] sm:$0xf]
      %v289 = vld [vmem:[%s1 + $0x38] sm:$0xf]
      %v290 = vld [vmem:[%s1 + $0x3c] sm:$0xf]
      %v307 = vunpack.c.l.b16 %v275
      %v308 = vunpack.c.l.b16 %v276
      %v309 = vunpack.c.l.b16 %v277
      %v310 = vunpack.c.l.b16 %v278
      %v311 = vunpack.c.l.b16 %v279
      %v312 = vunpack.c.l.b16 %v280
      %v313 = vunpack.c.l.b16 %v281
      %v314 = vunpack.c.l.b16 %v282
      %v315 = vunpack.c.l.b16 %v283
      %v316 = vunpack.c.l.b16 %v284
      %v317 = vunpack.c.l.b16 %v285
      %v318 = vunpack.c.l.b16 %v286
      %v319 = vunpack.c.l.b16 %v287
      %v320 = vunpack.c.l.b16 %v288
      %v321 = vunpack.c.l.b16 %v289
      %v322 = vunpack.c.l.b16 %v290
      %v323 = vpack.c.b16 %v308, %v307
      %v324 = vpack.c.b16 %v310, %v309
      %v325 = vpack.c.b16 %v312, %v311
      %v326 = vpack.c.b16 %v314, %v313
      %v327 = vpack.c.b16 %v316, %v315
      %v328 = vpack.c.b16 %v318, %v317
      %v329 = vpack.c.b16 %v320, %v319
      %v330 = vpack.c.b16 %v322, %v321
      %339 = vmatpush.bf16.msra.mxu0 %v330
      %340 = vmatpush.bf16.msra.mxu0 %v329
      %341 = vmatpush.bf16.msra.mxu0 %v328
      %342 = vmatpush.bf16.msra.mxu0 %v327
      %343 = vmatpush.bf16.msra.mxu0 %v326
      %344 = vmatpush.bf16.msra.mxu0 %v325
      %345 = vmatpush.bf16.msra.mxu0 %v324
      %346 = vmatpush.bf16.msra.mxu0 %v323
      %347 = vmatmul.bf16.gmra.mxu0 %v274
      %v348 = vpop.f32.mrf.mxu0
      %v349 = vadd.f32 0.0, %v348
      %v350 = vpop.f32.mrf.mxu0
      %351 = vdwg.mxu0
      %v352 = vadd.f32 %v273, %v349
      %353 = vst [vmem:[#allocation2 + $0x1] sm:$0x7f] %v352
      %v354 = vld [vmem:[#allocation2] sm:$0x7f]
      %v355 = vld [vmem:[%s188] sm:$0xf]
      %s356 = scalar_lea.vmem %s1, 128
      %v357 = vld [vmem:[%s356] sm:$0xf]
      %v358 = vld [vmem:[%s356 + $0x4] sm:$0xf]
      %v359 = vld [vmem:[%s356 + $0x8] sm:$0xf]
      %v360 = vld [vmem:[%s356 + $0xc] sm:$0xf]
      %v361 = vld [vmem:[%s356 + $0x10] sm:$0xf]
      %v362 = vld [vmem:[%s356 + $0x14] sm:$0xf]
      %v363 = vld [vmem:[%s356 + $0x18] sm:$0xf]
      %v364 = vld [vmem:[%s356 + $0x1c] sm:$0xf]
      %v365 = vld [vmem:[%s356 + $0x20] sm:$0xf]
      %v366 = vld [vmem:[%s356 + $0x24] sm:$0xf]
      %v367 = vld [vmem:[%s356 + $0x28] sm:$0xf]
      %v368 = vld [vmem:[%s356 + $0x2c] sm:$0xf]
      %v369 = vld [vmem:[%s356 + $0x30] sm:$0xf]
      %v370 = vld [vmem:[%s356 + $0x34] sm:$0xf]
      %v371 = vld [vmem:[%s356 + $0x38] sm:$0xf]
      %v372 = vld [vmem:[%s356 + $0x3c] sm:$0xf]
      %v374 = vunpack.c.l.b16 %v355
      %v375 = vpack.c.b16 %v374, %v374
      %v377 = vshrl.u32 %v375, 16
      %v379 = vshll.u32 %v375, 16
      %v381 = vrot.slane %v379, 1
      %v382 = vor.u32 %v377, %v381
      %v400 = vunpack.c.l.b16 %v357
      %v401 = vunpack.c.l.b16 %v358
      %v402 = vunpack.c.l.b16 %v359
      %v403 = vunpack.c.l.b16 %v360
      %v404 = vunpack.c.l.b16 %v361
      %v405 = vunpack.c.l.b16 %v362
      %v406 = vunpack.c.l.b16 %v363
      %v407 = vunpack.c.l.b16 %v364
      %v408 = vunpack.c.l.b16 %v365
      %v409 = vunpack.c.l.b16 %v366
      %v410 = vunpack.c.l.b16 %v367
      %v411 = vunpack.c.l.b16 %v368
      %v412 = vunpack.c.l.b16 %v369
      %v413 = vunpack.c.l.b16 %v370
      %v414 = vunpack.c.l.b16 %v371
      %v415 = vunpack.c.l.b16 %v372
      %v416 = vpack.c.b16 %v401, %v400
      %v417 = vpack.c.b16 %v403, %v402
      %v418 = vpack.c.b16 %v405, %v404
      %v419 = vpack.c.b16 %v407, %v406
      %v420 = vpack.c.b16 %v409, %v408
      %v421 = vpack.c.b16 %v411, %v410
      %v422 = vpack.c.b16 %v413, %v412
      %v423 = vpack.c.b16 %v415, %v414
      %432 = vmatpush.bf16.msra.mxu0 %v423
      %433 = vmatpush.bf16.msra.mxu0 %v422
      %434 = vmatpush.bf16.msra.mxu0 %v421
      %435 = vmatpush.bf16.msra.mxu0 %v420
      %436 = vmatpush.bf16.msra.mxu0 %v419
      %437 = vmatpush.bf16.msra.mxu0 %v418
      %438 = vmatpush.bf16.msra.mxu0 %v417
      %439 = vmatpush.bf16.msra.mxu0 %v416
      %440 = vmatmul.bf16.gmra.mxu0 %v382
      %v441 = vpop.f32.mrf.mxu0
      %v442 = vadd.f32 0.0, %v441
      %v443 = vpop.f32.mrf.mxu0
      %444 = vdwg.mxu0
      %v445 = vadd.f32 %v354, %v442
      %446 = vst [vmem:[#allocation2] sm:$0x7f] %v445
      %v447 = vld [vmem:[#allocation2] sm:$0xff]
      %v448 = vld [vmem:[%s2] sm:$0x1]
      %v450 = vperm.slane %v448, 0
      %v452 = vmul.f32 %v447, %v450
      %v453 = vld [vmem:[%s3] sm:$0x1]
      %v455 = vperm.slane %v453, 0
      %v457 = vadd.f32 %v452, %v455
      %v458 = vmax.f32 %v457, 0.0
      %v459 = vpack.c.bf16 %v458, %v458
      %460 = vst [vmem:[%s192] sm:$0xf] %v459
      %p461 = scmp.lt.s32.totalorder %s15, 1
      %s462 = scalar_select %p461, %s15, 1
      %s463 = smul.addr %s462, 4
      %s464 = scalar_lea.vmem %s4, %s463
      // Predicated region
      $region37: #{_lambda_.20} parent=35 // pred_check
        %p465 = pneg %p122
      $region38: #{_lambda_.20} parent=35 // pred_check_branch
        %467 = sbr.rel (%p465) target = $region40
      $region39: #{_lambda_.20} parent=35 // pred_region
        _
      $region40: #{_lambda_.20} parent=35 // pred_fallthru
        _
    $region36: #{_lambda_.20} parent=5 // pred_fallthru
      _
    %p468 = scmp.le.s32.totalorder 2, %s10
    // Predicated region
    $region41: #{_lambda_.20} parent=5 // pred_check
      %p469 = pneg %p468
    $region42: #{_lambda_.20} parent=5 // pred_check_branch
      %471 = sbr.rel (%p469) target = $region44
    $region43: #{_lambda_.20} parent=5 // pred_region
      %s472 = ssub.s32 %s10, 2
      // Predicated region
      $region45: #{_lambda_.20} parent=43 // pred_check
        %p473 = pneg %p128
      $region46: #{_lambda_.20} parent=43 // pred_check_branch
        %475 = sbr.rel (%p473) target = $region48
      $region47: #{_lambda_.20} parent=43 // pred_region
        %p476 = scmp.lt.s32.totalorder %s16, 1
        %s477 = scalar_select %p476, %s16, 1
        %s478 = smul.addr %s477, 4
        %s479 = scalar_lea.vmem %s4, %s478
      $region48: #{_lambda_.20} parent=43 // pred_fallthru
        _
    $region44: #{_lambda_.20} parent=5 // pred_fallthru
      _
  $region6: #{_lambda_.20} parent=0 // loop_footer
    %s14 = sadd.s32 1, %s10
  $region7: #{_lambda_.20} parent=0 // loop_footer_branch
    %9 = sbr.rel target = $region3
  $region8: #{_lambda_.20} parent=0 // loop_exit
    _

// kernel: _lambda_.21
$region0: #{_lambda_.21}
  #allocation0 [shape = 'u32[]', space=smem, size = 0x4, offset = 0x4, fixed_abs, tag = 'smem constant byte address 0x4 - core index']
  #allocation1 [shape = 'u32[72,128]{1,0:T(1,128)}', space=vmem, size = 0x9000, scoped, tag = 'internal scratch']
  %s0 = inlined_call_operand.vmem [shape: bf16[2,4,2,4,2,16], index: 0, kind: input, shape index: {}]
  %s1 = inlined_call_operand.vmem [shape: bf16[2,4,4,16], index: 1, kind: output, shape index: {}]
  %s2 = sld [smem:[#allocation0]]
  $region37: #{_lambda_.21} parent=0
    _
  %s4 = ssub.s32 1, %s2
  %s5 = scalar_select 0, %s4, %s2
  loop: start=0, step=1, limit=4
  $region2: #{_lambda_.21} parent=0 // loop_pre_header
    _
  $region3: #{_lambda_.21} parent=0 // loop_header
    %s7 = sphi 0, %s11
    %p8 = scmp.ge.s32.totalorder %s7, 4
    %s17 = sphi 0, %s19
    %s20 = sphi 0, %s17
    %s21 = sphi 0, %s20
    %s37 = sphi 0, %s21
    %s43 = sphi 0, %s45
    %s46 = sphi 0, %s43
    %s47 = sphi 0, %s46
    %s63 = sphi 0, %s47
  $region4: #{_lambda_.21} parent=0 // loop_header_branch
    %10 = sbr.rel (%p8) target = $region8
  $region5: #{_lambda_.21} parent=0 // loop_body
    %s12 = ssub.s32 %s7, 1
    %s13 = ssub.s32 %s7, 2
    %s14 = sadd.s32 %s7, 1
    %s15 = ssub.s32 %s7, %s14
    %p16 = scmp.eq.s32.totalorder %s15, 0
    %s18 = sadd.s32 %s17, 1
    %s19 = scalar_select %p16, %s17, %s18
    %p22 = pneg %p16
    %p23 = scmp.eq.s32.totalorder %s7, 1
    %p24 = por %p22, %p23
    %p25 = scmp.ne.s32.totalorder %s17, %s20
    %p26 = scmp.eq.s32.totalorder %s7, 0
    %p27 = por %p25, %p26
    %p28 = scmp.ne.s32.totalorder %s17, %s20
    %p29 = scmp.eq.s32.totalorder %s12, 1
    %p30 = por %p28, %p29
    %p31 = scmp.ne.s32.totalorder %s20, %s21
    %p32 = scmp.eq.s32.totalorder %s12, 0
    %p33 = por %p31, %p32
    %p34 = scmp.ne.s32.totalorder %s20, %s21
    %p35 = scmp.eq.s32.totalorder %s13, 1
    %p36 = por %p34, %p35
    %p38 = scmp.ne.s32.totalorder %s21, %s37
    %p39 = scmp.eq.s32.totalorder %s13, 0
    %p40 = por %p38, %p39
    %s41 = ssub.s32 %s7, %s14
    %p42 = scmp.eq.s32.totalorder %s41, 0
    %s44 = sadd.s32 %s43, 1
    %s45 = scalar_select %p42, %s43, %s44
    %p48 = pneg %p42
    %p49 = scmp.eq.s32.totalorder %s7, 1
    %p50 = por %p48, %p49
    %p51 = scmp.ne.s32.totalorder %s43, %s46
    %p52 = scmp.eq.s32.totalorder %s7, 0
    %p53 = por %p51, %p52
    %p54 = scmp.ne.s32.totalorder %s43, %s46
    %p55 = scmp.eq.s32.totalorder %s12, 1
    %p56 = por %p54, %p55
    %p57 = scmp.ne.s32.totalorder %s46, %s47
    %p58 = scmp.eq.s32.totalorder %s12, 0
    %p59 = por %p57, %p58
    %p60 = scmp.ne.s32.totalorder %s46, %s47
    %p61 = scmp.eq.s32.totalorder %s13, 1
    %p62 = por %p60, %p61
    %p64 = scmp.ne.s32.totalorder %s47, %s63
    %p65 = scmp.eq.s32.totalorder %s13, 0
    %p66 = por %p64, %p65
    %p67 = scmp.le.s32.totalorder 1, %s7
    %p68 = scmp.lt.s32.totalorder %s7, 3
    %p69 = pnand %p67, %p68
    %p70 = pneg %p69
    // Predicated region
    $region9: #{_lambda_.21} parent=5 // pred_check
      _
    $region10: #{_lambda_.21} parent=5 // pred_check_branch
      %72 = sbr.rel (%p69) target = $region12
    $region11: #{_lambda_.21} parent=5 // pred_region
      %s73 = ssub.s32 %s7, 1
    $region12: #{_lambda_.21} parent=5 // pred_fallthru
      _
    %p74 = scmp.lt.s32.totalorder %s7, 2
    // Predicated region
    $region13: #{_lambda_.21} parent=5 // pred_check
      %p75 = pneg %p74
    $region14: #{_lambda_.21} parent=5 // pred_check_branch
      %77 = sbr.rel (%p75) target = $region16
    $region15: #{_lambda_.21} parent=5 // pred_region
      // Predicated region
      $region17: #{_lambda_.21} parent=15 // pred_check
        %p78 = pneg %p27
      $region18: #{_lambda_.21} parent=15 // pred_check_branch
        %80 = sbr.rel (%p78) target = $region20
      $region19: #{_lambda_.21} parent=15 // pred_region
        %p81 = scmp.lt.s32.totalorder %s7, 1
        %s82 = scalar_select %p81, %s7, 1
        %s83 = smul.addr %s82, 32
        %s84 = scalar_lea.vmem %s0, %s83
      $region20: #{_lambda_.21} parent=15 // pred_fallthru
        _
    $region16: #{_lambda_.21} parent=5 // pred_fallthru
      _
    %p85 = scmp.le.s32.totalorder 1, %s7
    %p86 = scmp.lt.s32.totalorder %s7, 3
    %p87 = pnand %p85, %p86
    %p88 = pneg %p87
    // Predicated region
    $region21: #{_lambda_.21} parent=5 // pred_check
      _
    $region22: #{_lambda_.21} parent=5 // pred_check_branch
      %90 = sbr.rel (%p87) target = $region24
    $region23: #{_lambda_.21} parent=5 // pred_region
      %s91 = ssub.s32 %s7, 1
      %p92 = scmp.lt.s32.totalorder %s12, 1
      %s93 = scalar_select %p92, %s12, 1
      %s94 = smul.addr %s93, 32
      %s95 = scalar_lea.vmem %s0, %s94
      %p96 = pneg %p33
      %p97 = pneg %p30
      %p98 = pneg %p59
      %p99 = pneg %p56
      %p100 = scmp.lt.s32.totalorder %s12, 1
      %s101 = scalar_select %p100, %s12, 1
      %s102 = smul.addr %s101, 4
      %s103 = smul.addr %s102, 2
      %s104 = scalar_lea.vmem %s1, %s103
      %p105 = scmp.lt.s32.totalorder %s12, 1
      %s106 = scalar_select %p105, %s12, 1
      %s107 = smul.addr %s106, 32
      %s108 = scalar_lea.vmem %s0, %s107
      %p109 = scmp.lt.s32.totalorder %s12, 1
      %s110 = scalar_select %p109, %s12, 1
      %s111 = smul.addr %s110, 4
      %s112 = smul.addr %s111, 2
      %s113 = scalar_lea.vmem %s1, %s112
      %v114 = vld [vmem:[%s108] sm:$0x1]
      %v115 = vld [vmem:[%s108 + $0x1] sm:$0x1]
      %v116 = vld [vmem:[%s108 + $0x2] sm:$0x1]
      %v117 = vld [vmem:[%s108 + $0x3] sm:$0x1]
      %v118 = vld [vmem:[%s108 + $0x8] sm:$0x1]
      %v119 = vld [vmem:[%s108 + $0x9] sm:$0x1]
      %v120 = vld [vmem:[%s108 + $0xa] sm:$0x1]
      %v121 = vld [vmem:[%s108 + $0xb] sm:$0x1]
      %v122 = vld [vmem:[%s108 + $0x10] sm:$0x1]
      %v123 = vld [vmem:[%s108 + $0x11] sm:$0x1]
      %v124 = vld [vmem:[%s108 + $0x12] sm:$0x1]
      %v125 = vld [vmem:[%s108 + $0x13] sm:$0x1]
      %v126 = vld [vmem:[%s108 + $0x18] sm:$0x1]
      %v127 = vld [vmem:[%s108 + $0x19] sm:$0x1]
      %v128 = vld [vmem:[%s108 + $0x1a] sm:$0x1]
      %v129 = vld [vmem:[%s108 + $0x1b] sm:$0x1]
      %v130 = vunpack.c.l.bf16 %v114
      %v131 = vunpack.c.l.bf16 %v115
      %v132 = vunpack.c.l.bf16 %v116
      %v133 = vunpack.c.l.bf16 %v117
      %v134 = vunpack.c.l.bf16 %v118
      %v135 = vunpack.c.l.bf16 %v119
      %v136 = vunpack.c.l.bf16 %v120
      %v137 = vunpack.c.l.bf16 %v121
      %v138 = vunpack.c.l.bf16 %v122
      %v139 = vunpack.c.l.bf16 %v123
      %v140 = vunpack.c.l.bf16 %v124
      %v141 = vunpack.c.l.bf16 %v125
      %v142 = vunpack.c.l.bf16 %v126
      %v143 = vunpack.c.l.bf16 %v127
      %v144 = vunpack.c.l.bf16 %v128
      %v145 = vunpack.c.l.bf16 %v129
      %s146 = scalar_lea.vmem %s108, 4
      %v147 = vld [vmem:[%s146] sm:$0x1]
      %v148 = vld [vmem:[%s146 + $0x1] sm:$0x1]
      %v149 = vld [vmem:[%s146 + $0x2] sm:$0x1]
      %v150 = vld [vmem:[%s146 + $0x3] sm:$0x1]
      %v151 = vld [vmem:[%s146 + $0x8] sm:$0x1]
      %v152 = vld [vmem:[%s146 + $0x9] sm:$0x1]
      %v153 = vld [vmem:[%s146 + $0xa] sm:$0x1]
      %v154 = vld [vmem:[%s146 + $0xb] sm:$0x1]
      %v155 = vld [vmem:[%s146 + $0x10] sm:$0x1]
      %v156 = vld [vmem:[%s146 + $0x11] sm:$0x1]
      %v157 = vld [vmem:[%s146 + $0x12] sm:$0x1]
      %v158 = vld [vmem:[%s146 + $0x13] sm:$0x1]
      %v159 = vld [vmem:[%s146 + $0x18] sm:$0x1]
      %v160 = vld [vmem:[%s146 + $0x19] sm:$0x1]
      %v161 = vld [vmem:[%s146 + $0x1a] sm:$0x1]
      %v162 = vld [vmem:[%s146 + $0x1b] sm:$0x1]
      %v163 = vunpack.c.l.bf16 %v147
      %v164 = vunpack.c.l.bf16 %v148
      %v165 = vunpack.c.l.bf16 %v149
      %v166 = vunpack.c.l.bf16 %v150
      %v167 = vunpack.c.l.bf16 %v151
      %v168 = vunpack.c.l.bf16 %v152
      %v169 = vunpack.c.l.bf16 %v153
      %v170 = vunpack.c.l.bf16 %v154
      %v171 = vunpack.c.l.bf16 %v155
      %v172 = vunpack.c.l.bf16 %v156
      %v173 = vunpack.c.l.bf16 %v157
      %v174 = vunpack.c.l.bf16 %v158
      %v175 = vunpack.c.l.bf16 %v159
      %v176 = vunpack.c.l.bf16 %v160
      %v177 = vunpack.c.l.bf16 %v161
      %v178 = vunpack.c.l.bf16 %v162
      %v195 = vrot.slane %v130, 7
      %v196 = vrot.slane %v195, 2
      %v197 = vrot.slane %v131, 7
      %v198 = vrot.slane %v197, 2
      %v199 = vrot.slane %v132, 7
      %v200 = vrot.slane %v199, 2
      %v201 = vrot.slane %v133, 7
      %v202 = vrot.slane %v201, 2
      %v203 = vrot.slane %v134, 7
      %v204 = vrot.slane %v203, 2
      %v205 = vrot.slane %v135, 7
      %v206 = vrot.slane %v205, 2
      %v207 = vrot.slane %v136, 7
      %v208 = vrot.slane %v207, 2
      %v209 = vrot.slane %v137, 7
      %v210 = vrot.slane %v209, 2
      %v211 = vrot.slane %v138, 7
      %v212 = vrot.slane %v211, 2
      %v213 = vrot.slane %v139, 7
      %v214 = vrot.slane %v213, 2
      %v215 = vrot.slane %v140, 7
      %v216 = vrot.slane %v215, 2
      %v217 = vrot.slane %v141, 7
      %v218 = vrot.slane %v217, 2
      %v219 = vrot.slane %v142, 7
      %v220 = vrot.slane %v219, 2
      %v221 = vrot.slane %v143, 7
      %v222 = vrot.slane %v221, 2
      %v223 = vrot.slane %v144, 7
      %v224 = vrot.slane %v223, 2
      %v225 = vrot.slane %v145, 7
      %v226 = vrot.slane %v225, 2
      %v243 = vmax.f32 %v130, %v196
      %v244 = vmax.f32 %v131, %v198
      %v245 = vmax.f32 %v132, %v200
      %v246 = vmax.f32 %v133, %v202
      %v247 = vmax.f32 %v134, %v204
      %v248 = vmax.f32 %v135, %v206
      %v249 = vmax.f32 %v136, %v208
      %v250 = vmax.f32 %v137, %v210
      %v251 = vmax.f32 %v138, %v212
      %v252 = vmax.f32 %v139, %v214
      %v253 = vmax.f32 %v140, %v216
      %v254 = vmax.f32 %v141, %v218
      %v255 = vmax.f32 %v142, %v220
      %v256 = vmax.f32 %v143, %v222
      %v257 = vmax.f32 %v144, %v224
      %v258 = vmax.f32 %v145, %v226
      %v275 = vrot.slane %v163, 7
      %v276 = vrot.slane %v275, 2
      %v277 = vrot.slane %v164, 7
      %v278 = vrot.slane %v277, 2
      %v279 = vrot.slane %v165, 7
      %v280 = vrot.slane %v279, 2
      %v281 = vrot.slane %v166, 7
      %v282 = vrot.slane %v281, 2
      %v283 = vrot.slane %v167, 7
      %v284 = vrot.slane %v283, 2
      %v285 = vrot.slane %v168, 7
      %v286 = vrot.slane %v285, 2
      %v287 = vrot.slane %v169, 7
      %v288 = vrot.slane %v287, 2
      %v289 = vrot.slane %v170, 7
      %v290 = vrot.slane %v289, 2
      %v291 = vrot.slane %v171, 7
      %v292 = vrot.slane %v291, 2
      %v293 = vrot.slane %v172, 7
      %v294 = vrot.slane %v293, 2
      %v295 = vrot.slane %v173, 7
      %v296 = vrot.slane %v295, 2
      %v297 = vrot.slane %v174, 7
      %v298 = vrot.slane %v297, 2
      %v299 = vrot.slane %v175, 7
      %v300 = vrot.slane %v299, 2
      %v301 = vrot.slane %v176, 7
      %v302 = vrot.slane %v301, 2
      %v303 = vrot.slane %v177, 7
      %v304 = vrot.slane %v303, 2
      %v305 = vrot.slane %v178, 7
      %v306 = vrot.slane %v305, 2
      %v323 = vmax.f32 %v163, %v276
      %v324 = vmax.f32 %v164, %v278
      %v325 = vmax.f32 %v165, %v280
      %v326 = vmax.f32 %v166, %v282
      %v327 = vmax.f32 %v167, %v284
      %v328 = vmax.f32 %v168, %v286
      %v329 = vmax.f32 %v169, %v288
      %v330 = vmax.f32 %v170, %v290
      %v331 = vmax.f32 %v171, %v292
      %v332 = vmax.f32 %v172, %v294
      %v333 = vmax.f32 %v173, %v296
      %v334 = vmax.f32 %v174, %v298
      %v335 = vmax.f32 %v175, %v300
      %v336 = vmax.f32 %v176, %v302
      %v337 = vmax.f32 %v177, %v304
      %v338 = vmax.f32 %v178, %v306
      %v339 = vmax.f32 %v243, %v323
      %v340 = vmax.f32 %v244, %v324
      %v341 = vmax.f32 %v245, %v325
      %v342 = vmax.f32 %v246, %v326
      %v343 = vmax.f32 %v247, %v327
      %v344 = vmax.f32 %v248, %v328
      %v345 = vmax.f32 %v249, %v329
      %v346 = vmax.f32 %v250, %v330
      %v347 = vmax.f32 %v251, %v331
      %v348 = vmax.f32 %v252, %v332
      %v349 = vmax.f32 %v253, %v333
      %v350 = vmax.f32 %v254, %v334
      %v351 = vmax.f32 %v255, %v335
      %v352 = vmax.f32 %v256, %v336
      %v353 = vmax.f32 %v257, %v337
      %v354 = vmax.f32 %v258, %v338
      %v355 = vpack.c.bf16 %v339, %v339
      %v356 = vpack.c.bf16 %v340, %v340
      %v357 = vpack.c.bf16 %v341, %v341
      %v358 = vpack.c.bf16 %v342, %v342
      %v359 = vpack.c.bf16 %v343, %v343
      %v360 = vpack.c.bf16 %v344, %v344
      %v361 = vpack.c.bf16 %v345, %v345
      %v362 = vpack.c.bf16 %v346, %v346
      %v363 = vpack.c.bf16 %v347, %v347
      %v364 = vpack.c.bf16 %v348, %v348
      %v365 = vpack.c.bf16 %v349, %v349
      %v366 = vpack.c.bf16 %v350, %v350
      %v367 = vpack.c.bf16 %v351, %v351
      %v368 = vpack.c.bf16 %v352, %v352
      %v369 = vpack.c.bf16 %v353, %v353
      %v370 = vpack.c.bf16 %v354, %v354
      %v387 = vrot.slane %v355, 2
      %v388 = vrot.slane %v356, 2
      %v389 = vrot.slane %v357, 2
      %v390 = vrot.slane %v358, 2
      %v391 = vrot.slane %v359, 2
      %v392 = vrot.slane %v360, 2
      %v393 = vrot.slane %v361, 2
      %v394 = vrot.slane %v362, 2
      %v395 = vrot.slane %v363, 2
      %v396 = vrot.slane %v364, 2
      %v397 = vrot.slane %v365, 2
      %v398 = vrot.slane %v366, 2
      %v399 = vrot.slane %v367, 2
      %v400 = vrot.slane %v368, 2
      %v401 = vrot.slane %v369, 2
      %v402 = vrot.slane %v370, 2
      %vm403 = vcmask 1041408
      %v406 = vsel %vm403, %v355, %v387
      %v409 = vsel %vm403, %v356, %v388
      %v412 = vsel %vm403, %v357, %v389
      %v415 = vsel %vm403, %v358, %v390
      %v418 = vsel %vm403, %v359, %v391
      %v421 = vsel %vm403, %v360, %v392
      %v424 = vsel %vm403, %v361, %v393
      %v427 = vsel %vm403, %v362, %v394
      %v430 = vsel %vm403, %v363, %v395
      %v433 = vsel %vm403, %v364, %v396
      %v436 = vsel %vm403, %v365, %v397
      %v439 = vsel %vm403, %v366, %v398
      %v442 = vsel %vm403, %v367, %v399
      %v445 = vsel %vm403, %v368, %v400
      %v448 = vsel %vm403, %v369, %v401
      %v451 = vsel %vm403, %v370, %v402
      %452 = vst [vmem:[#allocation1] ss:$2 sm:$0xff] %v406
      %v453 = vld.sshfl [vmem:[#allocation1] sm:$0xff pattern:$0x75643120]
      %s455 = scalar_lea.vmem [#allocation1], 16
      %456 = vst [vmem:[%s455] ss:$2 sm:$0xff] %v409
      %v457 = vld.sshfl [vmem:[#allocation1 + $0x10] sm:$0xff pattern:$0x75643120]
      %s459 = scalar_lea.vmem [#allocation1], 32
      %460 = vst [vmem:[%s459] ss:$2 sm:$0xff] %v412
      %v461 = vld.sshfl [vmem:[#allocation1 + $0x20] sm:$0xff pattern:$0x75643120]
      %s463 = scalar_lea.vmem [#allocation1], 48
      %464 = vst [vmem:[%s463] ss:$2 sm:$0xff] %v415
      %v465 = vld.sshfl [vmem:[#allocation1 + $0x30] sm:$0xff pattern:$0x75643120]
      %467 = vst [vmem:[#allocation1] ss:$2 sm:$0xff] %v418
      %v468 = vld.sshfl [vmem:[#allocation1] sm:$0xff pattern:$0x75643120]
      %470 = vst [vmem:[%s455] ss:$2 sm:$0xff] %v421
      %v471 = vld.sshfl [vmem:[#allocation1 + $0x10] sm:$0xff pattern:$0x75643120]
      %473 = vst [vmem:[%s459] ss:$2 sm:$0xff] %v424
      %v474 = vld.sshfl [vmem:[#allocation1 + $0x20] sm:$0xff pattern:$0x75643120]
      %476 = vst [vmem:[%s463] ss:$2 sm:$0xff] %v427
      %v477 = vld.sshfl [vmem:[#allocation1 + $0x30] sm:$0xff pattern:$0x75643120]
      %479 = vst [vmem:[#allocation1] ss:$2 sm:$0xff] %v430
      %v480 = vld.sshfl [vmem:[#allocation1] sm:$0xff pattern:$0x75643120]
      %482 = vst [vmem:[%s455] ss:$2 sm:$0xff] %v433
      %v483 = vld.sshfl [vmem:[#allocation1 + $0x10] sm:$0xff pattern:$0x75643120]
      %485 = vst [vmem:[%s459] ss:$2 sm:$0xff] %v436
      %v486 = vld.sshfl [vmem:[#allocation1 + $0x20] sm:$0xff pattern:$0x75643120]
      %488 = vst [vmem:[%s463] ss:$2 sm:$0xff] %v439
      %v489 = vld.sshfl [vmem:[#allocation1 + $0x30] sm:$0xff pattern:$0x75643120]
      %491 = vst [vmem:[#allocation1] ss:$2 sm:$0xff] %v442
      %v492 = vld.sshfl [vmem:[#allocation1] sm:$0xff pattern:$0x75643120]
      %494 = vst [vmem:[%s455] ss:$2 sm:$0xff] %v445
      %v495 = vld.sshfl [vmem:[#allocation1 + $0x10] sm:$0xff pattern:$0x75643120]
      %497 = vst [vmem:[%s459] ss:$2 sm:$0xff] %v448
      %v498 = vld.sshfl [vmem:[#allocation1 + $0x20] sm:$0xff pattern:$0x75643120]
      %500 = vst [vmem:[%s463] ss:$2 sm:$0xff] %v451
      %v501 = vld.sshfl [vmem:[#allocation1 + $0x30] sm:$0xff pattern:$0x75643120]
      %v503 = vunpack.c.l.b16 %v453
      %v504 = vunpack.c.l.b16 %v457
      %v505 = vunpack.c.l.b16 %v461
      %v506 = vunpack.c.l.b16 %v465
      %v507 = vunpack.c.l.b16 %v468
      %v508 = vunpack.c.l.b16 %v471
      %v509 = vunpack.c.l.b16 %v474
      %v510 = vunpack.c.l.b16 %v477
      %v511 = vunpack.c.l.b16 %v480
      %v512 = vunpack.c.l.b16 %v483
      %v513 = vunpack.c.l.b16 %v486
      %v514 = vunpack.c.l.b16 %v489
      %v515 = vunpack.c.l.b16 %v492
      %v516 = vunpack.c.l.b16 %v495
      %v517 = vunpack.c.l.b16 %v498
      %v518 = vunpack.c.l.b16 %v501
      %v519 = vrot.slane %v504, 7
      %vm520 = vcmask 1041409
      %v521 = vsel %vm520, %v519, %v503
      %v522 = vrot.slane %v505, 6
      %vm523 = vcmask 1042434
      %v524 = vsel %vm523, %v522, %v521
      %v525 = vrot.slane %v506, 5
      %vm526 = vcmask 1043459
      %v527 = vsel %vm526, %v525, %v524
      %v528 = vrot.slane %v508, 7
      %v529 = vsel %vm520, %v528, %v507
      %v530 = vrot.slane %v509, 6
      %v531 = vsel %vm523, %v530, %v529
      %v532 = vrot.slane %v510, 5
      %v533 = vsel %vm526, %v532, %v531
      %v534 = vrot.slane %v512, 7
      %v535 = vsel %vm520, %v534, %v511
      %v536 = vrot.slane %v513, 6
      %v537 = vsel %vm523, %v536, %v535
      %v538 = vrot.slane %v514, 5
      %v539 = vsel %vm526, %v538, %v537
      %v540 = vrot.slane %v516, 7
      %v541 = vsel %vm520, %v540, %v515
      %v542 = vrot.slane %v517, 6
      %v543 = vsel %vm523, %v542, %v541
      %v544 = vrot.slane %v518, 5
      %v545 = vsel %vm526, %v544, %v543
      %v546 = vpack.c.b16 %v527, %v527
      %v547 = vpack.c.b16 %v533, %v533
      %v548 = vpack.c.b16 %v539, %v539
      %v549 = vpack.c.b16 %v545, %v545
      %v550 = vrot.slane %v546, 2
      %v551 = vrot.slane %v547, 2
      %v552 = vrot.slane %v548, 2
      %v553 = vrot.slane %v549, 2
      %v556 = vsel %vm403, %v546, %v550
      %v559 = vsel %vm403, %v547, %v551
      %v562 = vsel %vm403, %v548, %v552
      %v565 = vsel %vm403, %v549, %v553
      %vm570 = vcmask 123904
      %571 = vst.msk [vmem:[%s113] sm:$0x3] %vm570, %v556
      %572 = vst.msk [vmem:[%s113 + $0x2] sm:$0x3] %vm570, %v559
      %573 = vst.msk [vmem:[%s113 + $0x4] sm:$0x3] %vm570, %v562
      %574 = vst.msk [vmem:[%s113 + $0x6] sm:$0x3] %vm570, %v565
      %p575 = scmp.lt.s32.totalorder %s12, 1
      %s576 = scalar_select %p575, %s12, 1
      %s577 = smul.addr %s576, 4
      %s578 = smul.addr %s577, 2
      %s579 = scalar_lea.vmem %s1, %s578
      // Predicated region
      $region25: #{_lambda_.21} parent=23 // pred_check
        %p580 = pneg %p56
      $region26: #{_lambda_.21} parent=23 // pred_check_branch
        %582 = sbr.rel (%p580) target = $region28
      $region27: #{_lambda_.21} parent=23 // pred_region
        _
      $region28: #{_lambda_.21} parent=23 // pred_fallthru
        _
    $region24: #{_lambda_.21} parent=5 // pred_fallthru
      _
    %p583 = scmp.le.s32.totalorder 2, %s7
    // Predicated region
    $region29: #{_lambda_.21} parent=5 // pred_check
      %p584 = pneg %p583
    $region30: #{_lambda_.21} parent=5 // pred_check_branch
      %586 = sbr.rel (%p584) target = $region32
    $region31: #{_lambda_.21} parent=5 // pred_region
      %s587 = ssub.s32 %s7, 2
      // Predicated region
      $region33: #{_lambda_.21} parent=31 // pred_check
        %p588 = pneg %p62
      $region34: #{_lambda_.21} parent=31 // pred_check_branch
        %590 = sbr.rel (%p588) target = $region36
      $region35: #{_lambda_.21} parent=31 // pred_region
        %p591 = scmp.lt.s32.totalorder %s13, 1
        %s592 = scalar_select %p591, %s13, 1
        %s593 = smul.addr %s592, 4
        %s594 = smul.addr %s593, 2
        %s595 = scalar_lea.vmem %s1, %s594
      $region36: #{_lambda_.21} parent=31 // pred_fallthru
        _
    $region32: #{_lambda_.21} parent=5 // pred_fallthru
      _
  $region6: #{_lambda_.21} parent=0 // loop_footer
    %s11 = sadd.s32 1, %s7
  $region7: #{_lambda_.21} parent=0 // loop_footer_branch
    %6 = sbr.rel target = $region3
  $region8: #{_lambda_.21} parent=0 // loop_exit
    _

// kernel: tile.122
$region0: #{tile.122}
  #allocation0 [shape = 's32[1]{0}', space=sflag, size = 0x4, scoped, tag = 'scoped memory for tile.122']
  %s0 = inlined_call_operand.vmem [shape: f32[32], index: 0, kind: input, shape index: {}]
  %s1 = inlined_call_operand.vmem [shape: f32[4,32], index: 1, kind: output, shape index: {}]
  // Predicated region
  $region2: #{tile.122} parent=0 // pred_check
    _
  $region3: #{tile.122} parent=0 // pred_check_branch
    %3 = sbr.rel (0) target = $region5
  $region4: #{tile.122} parent=0 // pred_region
    _
  $region5: #{tile.122} parent=0 // pred_fallthru
    _
  %v4 = vld [vmem:[%s0] ss:$0 sm:$0xff]
  %5 = vst [vmem:[%s1] sm:$0xf] %v4

// kernel: tile.123
$region0: #{tile.123}
  %s0 = inlined_call_operand.vmem [shape: f32[4,32], index: 0, kind: input, shape index: {}]
  %s1 = inlined_call_operand.vmem [shape: f32[1,128], index: 1, kind: output, shape index: {}]
  $region1: #{tile.123} parent=0
    #allocation0 [shape = 'u8[4096]{0}', space=vmem, size = 0x1000, scoped, tag = 'scoped mem for output reshape']
    #allocation1 [shape = 'u8[4096]{0}', space=vmem, size = 0x1000, scoped, tag = 'scoped mem for input reshape']
    %s3 = ssub.s32 16, 1
    %v4 = vld [vmem:[%s0] sm:%s3]
    %5 = vst [vmem:[#allocation1] sm:%s3] %v4
    %v6 = vld [vmem:[#allocation1] sm:$0x1]
    %vm7 = vcmask 261120
    %8 = vst.msk [vmem:[#allocation0] sm:$0x1] %vm7, %v6
    %s9 = scalar_lea.vmem [#allocation1], 3
    %v10 = vld [vmem:[%s9] sm:$0x1]
    %11 = vrot.lane.b32.xlu0 %v10, 96
    %v12 = vpop.permute.xlu0 %11
    %vm13 = vcmask 1048320
    %14 = vst.msk [vmem:[#allocation0] sm:$0x1] %vm13, %v12
    %s15 = scalar_lea.vmem [#allocation1], 2
    %v16 = vld [vmem:[%s15] sm:$0x1]
    %17 = vrot.lane.b32.xlu0 %v16, 64
    %v18 = vpop.permute.xlu0 %17
    %vm19 = vcmask 785920
    %20 = vst.msk [vmem:[#allocation0] sm:$0x1] %vm19, %v18
    %s21 = scalar_lea.vmem [#allocation1], 1
    %v22 = vld [vmem:[%s21] sm:$0x1]
    %23 = vrot.lane.b32.xlu0 %v22, 32
    %v24 = vpop.permute.xlu0 %23
    %vm25 = vcmask 523520
    %26 = vst.msk [vmem:[#allocation0] sm:$0x1] %vm25, %v24
    %s28 = ssub.s32 2, 1
    %v29 = vld [vmem:[#allocation0] sm:%s28]
    %s31 = ssub.s32 2, 1
    %32 = vst [vmem:[%s1] sm:%s31] %v29

// kernel: _lambda_.22
$region0: #{_lambda_.22}
  #allocation0 [shape = 'u32[]', space=smem, size = 0x4, offset = 0x4, fixed_abs, tag = 'smem constant byte address 0x4 - core index']
  #allocation1 [shape = 'u32[72,128]{1,0:T(1,128)}', space=vmem, size = 0x9000, scoped, tag = 'internal scratch']
  #allocation2 [shape = 'f32[4,128]{1,0:T(4,128)}', space=vmem, size = 0x800, scoped, tag = 'scratch operand']
  %s0 = inlined_call_operand.vmem [shape: bf16[2,4,64], index: 0, kind: input, shape index: {}]
  %s1 = inlined_call_operand.vmem [shape: bf16[3,64,128], index: 1, kind: input, shape index: {}]
  %s2 = inlined_call_operand.vmem [shape: f32[1,128], index: 2, kind: input, shape index: {}]
  %s3 = inlined_call_operand.vmem [shape: f32[1,128], index: 3, kind: input, shape index: {}]
  %s4 = inlined_call_operand.vmem [shape: bf16[2,4,128], index: 4, kind: output, shape index: {}]
  %s5 = sld [smem:[#allocation0]]
  $region49: #{_lambda_.22} parent=0
    _
  %s7 = ssub.s32 1, %s5
  %s8 = scalar_select 0, %s7, %s5
  loop: start=0, step=1, limit=4
  $region2: #{_lambda_.22} parent=0 // loop_pre_header
    _
  $region3: #{_lambda_.22} parent=0 // loop_header
    %s10 = sphi 0, %s14
    %p11 = scmp.ge.s32.totalorder %s10, 4
    %s20 = sphi 0, %s22
    %s23 = sphi 0, %s20
    %s24 = sphi 0, %s23
    %s40 = sphi 0, %s24
    %s44 = sphi 0, %s44
    %s46 = sphi 0, %s44
    %s47 = sphi 0, %s46
    %s61 = sphi 0, %s47
    %s65 = sphi 0, %s65
    %s67 = sphi 0, %s65
    %s68 = sphi 0, %s67
    %s82 = sphi 0, %s68
    %s86 = sphi 0, %s86
    %s88 = sphi 0, %s86
    %s89 = sphi 0, %s88
    %s103 = sphi 0, %s89
    %s109 = sphi 0, %s111
    %s112 = sphi 0, %s109
    %s113 = sphi 0, %s112
    %s129 = sphi 0, %s113
  $region4: #{_lambda_.22} parent=0 // loop_header_branch
    %13 = sbr.rel (%p11) target = $region8
  $region5: #{_lambda_.22} parent=0 // loop_body
    %s15 = ssub.s32 %s10, 1
    %s16 = ssub.s32 %s10, 2
    %s17 = sadd.s32 %s10, 1
    %s18 = ssub.s32 %s10, %s17
    %p19 = scmp.eq.s32.totalorder %s18, 0
    %s21 = sadd.s32 %s20, 1
    %s22 = scalar_select %p19, %s20, %s21
    %p25 = pneg %p19
    %p26 = scmp.eq.s32.totalorder %s10, 1
    %p27 = por %p25, %p26
    %p28 = scmp.ne.s32.totalorder %s20, %s23
    %p29 = scmp.eq.s32.totalorder %s10, 0
    %p30 = por %p28, %p29
    %p31 = scmp.ne.s32.totalorder %s20, %s23
    %p32 = scmp.eq.s32.totalorder %s15, 1
    %p33 = por %p31, %p32
    %p34 = scmp.ne.s32.totalorder %s23, %s24
    %p35 = scmp.eq.s32.totalorder %s15, 0
    %p36 = por %p34, %p35
    %p37 = scmp.ne.s32.totalorder %s23, %s24
    %p38 = scmp.eq.s32.totalorder %s16, 1
    %p39 = por %p37, %p38
    %p41 = scmp.ne.s32.totalorder %s24, %s40
    %p42 = scmp.eq.s32.totalorder %s16, 0
    %p43 = por %p41, %p42
    %s45 = sadd.s32 %s44, 1
    %p48 = scmp.eq.s32.totalorder %s10, 1
    %p49 = scmp.ne.s32.totalorder %s44, %s46
    %p50 = scmp.eq.s32.totalorder %s10, 0
    %p51 = por %p49, %p50
    %p52 = scmp.ne.s32.totalorder %s44, %s46
    %p53 = scmp.eq.s32.totalorder %s15, 1
    %p54 = por %p52, %p53
    %p55 = scmp.ne.s32.totalorder %s46, %s47
    %p56 = scmp.eq.s32.totalorder %s15, 0
    %p57 = por %p55, %p56
    %p58 = scmp.ne.s32.totalorder %s46, %s47
    %p59 = scmp.eq.s32.totalorder %s16, 1
    %p60 = por %p58, %p59
    %p62 = scmp.ne.s32.totalorder %s47, %s61
    %p63 = scmp.eq.s32.totalorder %s16, 0
    %p64 = por %p62, %p63
    %s66 = sadd.s32 %s65, 1
    %p69 = scmp.eq.s32.totalorder %s10, 1
    %p70 = scmp.ne.s32.totalorder %s65, %s67
    %p71 = scmp.eq.s32.totalorder %s10, 0
    %p72 = por %p70, %p71
    %p73 = scmp.ne.s32.totalorder %s65, %s67
    %p74 = scmp.eq.s32.totalorder %s15, 1
    %p75 = por %p73, %p74
    %p76 = scmp.ne.s32.totalorder %s67, %s68
    %p77 = scmp.eq.s32.totalorder %s15, 0
    %p78 = por %p76, %p77
    %p79 = scmp.ne.s32.totalorder %s67, %s68
    %p80 = scmp.eq.s32.totalorder %s16, 1
    %p81 = por %p79, %p80
    %p83 = scmp.ne.s32.totalorder %s68, %s82
    %p84 = scmp.eq.s32.totalorder %s16, 0
    %p85 = por %p83, %p84
    %s87 = sadd.s32 %s86, 1
    %p90 = scmp.eq.s32.totalorder %s10, 1
    %p91 = scmp.ne.s32.totalorder %s86, %s88
    %p92 = scmp.eq.s32.totalorder %s10, 0
    %p93 = por %p91, %p92
    %p94 = scmp.ne.s32.totalorder %s86, %s88
    %p95 = scmp.eq.s32.totalorder %s15, 1
    %p96 = por %p94, %p95
    %p97 = scmp.ne.s32.totalorder %s88, %s89
    %p98 = scmp.eq.s32.totalorder %s15, 0
    %p99 = por %p97, %p98
    %p100 = scmp.ne.s32.totalorder %s88, %s89
    %p101 = scmp.eq.s32.totalorder %s16, 1
    %p102 = por %p100, %p101
    %p104 = scmp.ne.s32.totalorder %s89, %s103
    %p105 = scmp.eq.s32.totalorder %s16, 0
    %p106 = por %p104, %p105
    %s107 = ssub.s32 %s10, %s17
    %p108 = scmp.eq.s32.totalorder %s107, 0
    %s110 = sadd.s32 %s109, 1
    %s111 = scalar_select %p108, %s109, %s110
    %p114 = pneg %p108
    %p115 = scmp.eq.s32.totalorder %s10, 1
    %p116 = por %p114, %p115
    %p117 = scmp.ne.s32.totalorder %s109, %s112
    %p118 = scmp.eq.s32.totalorder %s10, 0
    %p119 = por %p117, %p118
    %p120 = scmp.ne.s32.totalorder %s109, %s112
    %p121 = scmp.eq.s32.totalorder %s15, 1
    %p122 = por %p120, %p121
    %p123 = scmp.ne.s32.totalorder %s112, %s113
    %p124 = scmp.eq.s32.totalorder %s15, 0
    %p125 = por %p123, %p124
    %p126 = scmp.ne.s32.totalorder %s112, %s113
    %p127 = scmp.eq.s32.totalorder %s16, 1
    %p128 = por %p126, %p127
    %p130 = scmp.ne.s32.totalorder %s113, %s129
    %p131 = scmp.eq.s32.totalorder %s16, 0
    %p132 = por %p130, %p131
    %p133 = scmp.le.s32.totalorder 1, %s10
    %p134 = scmp.lt.s32.totalorder %s10, 3
    %p135 = pnand %p133, %p134
    %p136 = pneg %p135
    // Predicated region
    $region9: #{_lambda_.22} parent=5 // pred_check
      _
    $region10: #{_lambda_.22} parent=5 // pred_check_branch
      %138 = sbr.rel (%p135) target = $region12
    $region11: #{_lambda_.22} parent=5 // pred_region
      %s139 = ssub.s32 %s10, 1
      // Predicated region
      $region13: #{_lambda_.22} parent=11 // pred_check
        %p140 = pneg %p57
      $region14: #{_lambda_.22} parent=11 // pred_check_branch
        %142 = sbr.rel (%p140) target = $region16
      $region15: #{_lambda_.22} parent=11 // pred_region
        _
      $region16: #{_lambda_.22} parent=11 // pred_fallthru
        _
      // Predicated region
      $region17: #{_lambda_.22} parent=11 // pred_check
        %p143 = pneg %p78
      $region18: #{_lambda_.22} parent=11 // pred_check_branch
        %145 = sbr.rel (%p143) target = $region20
      $region19: #{_lambda_.22} parent=11 // pred_region
        _
      $region20: #{_lambda_.22} parent=11 // pred_fallthru
        _
      // Predicated region
      $region21: #{_lambda_.22} parent=11 // pred_check
        %p146 = pneg %p99
      $region22: #{_lambda_.22} parent=11 // pred_check_branch
        %148 = sbr.rel (%p146) target = $region24
      $region23: #{_lambda_.22} parent=11 // pred_region
        _
      $region24: #{_lambda_.22} parent=11 // pred_fallthru
        _
    $region12: #{_lambda_.22} parent=5 // pred_fallthru
      _
    %p149 = scmp.lt.s32.totalorder %s10, 2
    // Predicated region
    $region25: #{_lambda_.22} parent=5 // pred_check
      %p150 = pneg %p149
    $region26: #{_lambda_.22} parent=5 // pred_check_branch
      %152 = sbr.rel (%p150) target = $region28
    $region27: #{_lambda_.22} parent=5 // pred_region
      // Predicated region
      $region29: #{_lambda_.22} parent=27 // pred_check
        %p153 = pneg %p30
      $region30: #{_lambda_.22} parent=27 // pred_check_branch
        %155 = sbr.rel (%p153) target = $region32
      $region31: #{_lambda_.22} parent=27 // pred_region
        %p156 = scmp.lt.s32.totalorder %s10, 1
        %s157 = scalar_select %p156, %s10, 1
        %s158 = smul.addr %s157, 2
        %s159 = scalar_lea.vmem %s0, %s158
      $region32: #{_lambda_.22} parent=27 // pred_fallthru
        _
    $region28: #{_lambda_.22} parent=5 // pred_fallthru
      _
    %p160 = scmp.le.s32.totalorder 1, %s10
    %p161 = scmp.lt.s32.totalorder %s10, 3
    %p162 = pnand %p160, %p161
    %p163 = pneg %p162
    // Predicated region
    $region33: #{_lambda_.22} parent=5 // pred_check
      _
    $region34: #{_lambda_.22} parent=5 // pred_check_branch
      %165 = sbr.rel (%p162) target = $region36
    $region35: #{_lambda_.22} parent=5 // pred_region
      %s166 = ssub.s32 %s10, 1
      %p167 = scmp.lt.s32.totalorder %s15, 1
      %s168 = scalar_select %p167, %s15, 1
      %s169 = smul.addr %s168, 2
      %s170 = scalar_lea.vmem %s0, %s169
      %p171 = pneg %p36
      %p172 = pneg %p33
      %p173 = pneg %p57
      %p174 = pneg %p54
      %p175 = pneg %p78
      %p176 = pneg %p75
      %p177 = pneg %p99
      %p178 = pneg %p96
      %p179 = pneg %p125
      %p180 = pneg %p122
      %p181 = scmp.lt.s32.totalorder %s15, 1
      %s182 = scalar_select %p181, %s15, 1
      %s183 = smul.addr %s182, 2
      %s184 = scalar_lea.vmem %s4, %s183
      %p185 = scmp.lt.s32.totalorder %s15, 1
      %s186 = scalar_select %p185, %s15, 1
      %s187 = smul.addr %s186, 2
      %s188 = scalar_lea.vmem %s0, %s187
      %p189 = scmp.lt.s32.totalorder %s15, 1
      %s190 = scalar_select %p189, %s15, 1
      %s191 = smul.addr %s190, 2
      %s192 = scalar_lea.vmem %s4, %s191
      %v194 = vld [vmem:[%s188] sm:$0x3]
      %s195 = scalar_lea.vmem %s1, 32
      %v196 = vld [vmem:[%s195] sm:$0xf]
      %v197 = vld [vmem:[%s195 + $0x4] sm:$0xf]
      %v198 = vld [vmem:[%s195 + $0x8] sm:$0xf]
      %v199 = vld [vmem:[%s195 + $0xc] sm:$0xf]
      %v200 = vld [vmem:[%s195 + $0x10] sm:$0xf]
      %v201 = vld [vmem:[%s195 + $0x14] sm:$0xf]
      %v202 = vld [vmem:[%s195 + $0x18] sm:$0xf]
      %v203 = vld [vmem:[%s195 + $0x1c] sm:$0xf]
      %v212 = vunpack.c.l.b16 %v196
      %v213 = vunpack.c.l.b16 %v197
      %v214 = vunpack.c.l.b16 %v198
      %v215 = vunpack.c.l.b16 %v199
      %v216 = vunpack.c.l.b16 %v200
      %v217 = vunpack.c.l.b16 %v201
      %v218 = vunpack.c.l.b16 %v202
      %v219 = vunpack.c.l.b16 %v203
      %v220 = vpack.c.b16 %v213, %v212
      %v221 = vpack.c.b16 %v215, %v214
      %v222 = vpack.c.b16 %v217, %v216
      %v223 = vpack.c.b16 %v219, %v218
      %vm228 = vcmask 523264
      %v230 = vsel %vm228, %v194, 0
      %232 = vmatpush.bf16.msra.mxu0 0
      %233 = vmatpush.bf16.msra.mxu0 0
      %234 = vmatpush.bf16.msra.mxu0 0
      %235 = vmatpush.bf16.msra.mxu0 0
      %236 = vmatpush.bf16.msra.mxu0 %v223
      %237 = vmatpush.bf16.msra.mxu0 %v222
      %238 = vmatpush.bf16.msra.mxu0 %v221
      %239 = vmatpush.bf16.msra.mxu0 %v220
      %240 = vmatmul.bf16.gmra.mxu0 %v230
      %v241 = vpop.f32.mrf.mxu0
      %v242 = vadd.f32 0.0, %v241
      %v243 = vpop.f32.mrf.mxu0
      %244 = vdwg.mxu0
      %245 = vst [vmem:[#allocation2] sm:$0xf] %v242
      %v246 = vld [vmem:[#allocation2 + $0x1] sm:$0x7]
      %v247 = vld [vmem:[%s188] sm:$0x3]
      %v248 = vld [vmem:[%s1] sm:$0xf]
      %v249 = vld [vmem:[%s1 + $0x4] sm:$0xf]
      %v250 = vld [vmem:[%s1 + $0x8] sm:$0xf]
      %v251 = vld [vmem:[%s1 + $0xc] sm:$0xf]
      %v252 = vld [vmem:[%s1 + $0x10] sm:$0xf]
      %v253 = vld [vmem:[%s1 + $0x14] sm:$0xf]
      %v254 = vld [vmem:[%s1 + $0x18] sm:$0xf]
      %v255 = vld [vmem:[%s1 + $0x1c] sm:$0xf]
      %v264 = vunpack.c.l.b16 %v248
      %v265 = vunpack.c.l.b16 %v249
      %v266 = vunpack.c.l.b16 %v250
      %v267 = vunpack.c.l.b16 %v251
      %v268 = vunpack.c.l.b16 %v252
      %v269 = vunpack.c.l.b16 %v253
      %v270 = vunpack.c.l.b16 %v254
      %v271 = vunpack.c.l.b16 %v255
      %v272 = vpack.c.b16 %v265, %v264
      %v273 = vpack.c.b16 %v267, %v266
      %v274 = vpack.c.b16 %v269, %v268
      %v275 = vpack.c.b16 %v271, %v270
      %v281 = vsel %vm228, %v247, 0
      %283 = vmatpush.bf16.msra.mxu0 0
      %284 = vmatpush.bf16.msra.mxu0 0
      %285 = vmatpush.bf16.msra.mxu0 0
      %286 = vmatpush.bf16.msra.mxu0 0
      %287 = vmatpush.bf16.msra.mxu0 %v275
      %288 = vmatpush.bf16.msra.mxu0 %v274
      %289 = vmatpush.bf16.msra.mxu0 %v273
      %290 = vmatpush.bf16.msra.mxu0 %v272
      %291 = vmatmul.bf16.gmra.mxu0 %v281
      %v292 = vpop.f32.mrf.mxu0
      %v293 = vadd.f32 0.0, %v292
      %v294 = vpop.f32.mrf.mxu0
      %295 = vdwg.mxu0
      %v296 = vadd.f32 %v246, %v293
      %297 = vst [vmem:[#allocation2 + $0x1] sm:$0x7] %v296
      %v298 = vld [vmem:[#allocation2] sm:$0x7]
      %v299 = vld [vmem:[%s188] sm:$0x3]
      %s300 = scalar_lea.vmem %s1, 64
      %v301 = vld [vmem:[%s300] sm:$0xf]
      %v302 = vld [vmem:[%s300 + $0x4] sm:$0xf]
      %v303 = vld [vmem:[%s300 + $0x8] sm:$0xf]
      %v304 = vld [vmem:[%s300 + $0xc] sm:$0xf]
      %v305 = vld [vmem:[%s300 + $0x10] sm:$0xf]
      %v306 = vld [vmem:[%s300 + $0x14] sm:$0xf]
      %v307 = vld [vmem:[%s300 + $0x18] sm:$0xf]
      %v308 = vld [vmem:[%s300 + $0x1c] sm:$0xf]
      %310 = vst [vmem:[#allocation1] ss:$4 sm:$0xff] %v299
      %v311 = vld.sshfl [vmem:[#allocation1] sm:$0xff pattern:$0x73625140]
      %v312 = vshrl.u32 %v311, 16
      %v314 = vshll.u32 %v311, 16
      %v316 = vrot.slane %v314, 1
      %v317 = vor.u32 %v312, %v316
      %v326 = vunpack.c.l.b16 %v301
      %v327 = vunpack.c.l.b16 %v302
      %v328 = vunpack.c.l.b16 %v303
      %v329 = vunpack.c.l.b16 %v304
      %v330 = vunpack.c.l.b16 %v305
      %v331 = vunpack.c.l.b16 %v306
      %v332 = vunpack.c.l.b16 %v307
      %v333 = vunpack.c.l.b16 %v308
      %v334 = vpack.c.b16 %v327, %v326
      %v335 = vpack.c.b16 %v329, %v328
      %v336 = vpack.c.b16 %v331, %v330
      %v337 = vpack.c.b16 %v333, %v332
      %v343 = vsel %vm228, %v317, 0
      %345 = vmatpush.bf16.msra.mxu0 0
      %346 = vmatpush.bf16.msra.mxu0 0
      %347 = vmatpush.bf16.msra.mxu0 0
      %348 = vmatpush.bf16.msra.mxu0 0
      %349 = vmatpush.bf16.msra.mxu0 %v337
      %350 = vmatpush.bf16.msra.mxu0 %v336
      %351 = vmatpush.bf16.msra.mxu0 %v335
      %352 = vmatpush.bf16.msra.mxu0 %v334
      %353 = vmatmul.bf16.gmra.mxu0 %v343
      %v354 = vpop.f32.mrf.mxu0
      %v355 = vadd.f32 0.0, %v354
      %v356 = vpop.f32.mrf.mxu0
      %357 = vdwg.mxu0
      %v358 = vadd.f32 %v298, %v355
      %359 = vst [vmem:[#allocation2] sm:$0x7] %v358
      %v360 = vld [vmem:[#allocation2] sm:$0xf]
      %v361 = vld [vmem:[%s2] sm:$0x1]
      %v363 = vperm.slane %v361, 0
      %v365 = vmul.f32 %v360, %v363
      %v366 = vld [vmem:[%s3] sm:$0x1]
      %v368 = vperm.slane %v366, 0
      %v370 = vadd.f32 %v365, %v368
      %v371 = vmax.f32 %v370, 0.0
      %v372 = vpack.c.bf16 %v371, %v371
      %373 = vst [vmem:[%s192] sm:$0x3] %v372
      %p374 = scmp.lt.s32.totalorder %s15, 1
      %s375 = scalar_select %p374, %s15, 1
      %s376 = smul.addr %s375, 2
      %s377 = scalar_lea.vmem %s4, %s376
      // Predicated region
      $region37: #{_lambda_.22} parent=35 // pred_check
        %p378 = pneg %p122
      $region38: #{_lambda_.22} parent=35 // pred_check_branch
        %380 = sbr.rel (%p378) target = $region40
      $region39: #{_lambda_.22} parent=35 // pred_region
        _
      $region40: #{_lambda_.22} parent=35 // pred_fallthru
        _
    $region36: #{_lambda_.22} parent=5 // pred_fallthru
      _
    %p381 = scmp.le.s32.totalorder 2, %s10
    // Predicated region
    $region41: #{_lambda_.22} parent=5 // pred_check
      %p382 = pneg %p381
    $region42: #{_lambda_.22} parent=5 // pred_check_branch
      %384 = sbr.rel (%p382) target = $region44
    $region43: #{_lambda_.22} parent=5 // pred_region
      %s385 = ssub.s32 %s10, 2
      // Predicated region
      $region45: #{_lambda_.22} parent=43 // pred_check
        %p386 = pneg %p128
      $region46: #{_lambda_.22} parent=43 // pred_check_branch
        %388 = sbr.rel (%p386) target = $region48
      $region47: #{_lambda_.22} parent=43 // pred_region
        %p389 = scmp.lt.s32.totalorder %s16, 1
        %s390 = scalar_select %p389, %s16, 1
        %s391 = smul.addr %s390, 2
        %s392 = scalar_lea.vmem %s4, %s391
      $region48: #{_lambda_.22} parent=43 // pred_fallthru
        _
    $region44: #{_lambda_.22} parent=5 // pred_fallthru
      _
  $region6: #{_lambda_.22} parent=0 // loop_footer
    %s14 = sadd.s32 1, %s10
  $region7: #{_lambda_.22} parent=0 // loop_footer_branch
    %9 = sbr.rel target = $region3
  $region8: #{_lambda_.22} parent=0 // loop_exit
    _

// kernel: _lambda_.23
$region0: #{_lambda_.23}
  #allocation0 [shape = 'u32[]', space=smem, size = 0x4, offset = 0x4, fixed_abs, tag = 'smem constant byte address 0x4 - core index']
  #allocation1 [shape = 'u32[72,128]{1,0:T(1,128)}', space=vmem, size = 0x9000, scoped, tag = 'internal scratch']
  #allocation2 [shape = 'f32[4,128]{1,0:T(4,128)}', space=vmem, size = 0x800, scoped, tag = 'scratch operand']
  %s0 = inlined_call_operand.vmem [shape: bf16[2,4,128], index: 0, kind: input, shape index: {}]
  %s1 = inlined_call_operand.vmem [shape: bf16[3,128,128], index: 1, kind: input, shape index: {}]
  %s2 = inlined_call_operand.vmem [shape: f32[1,128], index: 2, kind: input, shape index: {}]
  %s3 = inlined_call_operand.vmem [shape: f32[1,128], index: 3, kind: input, shape index: {}]
  %s4 = inlined_call_operand.vmem [shape: bf16[2,4,128], index: 4, kind: output, shape index: {}]
  %s5 = sld [smem:[#allocation0]]
  $region49: #{_lambda_.23} parent=0
    _
  %s7 = ssub.s32 1, %s5
  %s8 = scalar_select 0, %s7, %s5
  loop: start=0, step=1, limit=4
  $region2: #{_lambda_.23} parent=0 // loop_pre_header
    _
  $region3: #{_lambda_.23} parent=0 // loop_header
    %s10 = sphi 0, %s14
    %p11 = scmp.ge.s32.totalorder %s10, 4
    %s20 = sphi 0, %s22
    %s23 = sphi 0, %s20
    %s24 = sphi 0, %s23
    %s40 = sphi 0, %s24
    %s44 = sphi 0, %s44
    %s46 = sphi 0, %s44
    %s47 = sphi 0, %s46
    %s61 = sphi 0, %s47
    %s65 = sphi 0, %s65
    %s67 = sphi 0, %s65
    %s68 = sphi 0, %s67
    %s82 = sphi 0, %s68
    %s86 = sphi 0, %s86
    %s88 = sphi 0, %s86
    %s89 = sphi 0, %s88
    %s103 = sphi 0, %s89
    %s109 = sphi 0, %s111
    %s112 = sphi 0, %s109
    %s113 = sphi 0, %s112
    %s129 = sphi 0, %s113
  $region4: #{_lambda_.23} parent=0 // loop_header_branch
    %13 = sbr.rel (%p11) target = $region8
  $region5: #{_lambda_.23} parent=0 // loop_body
    %s15 = ssub.s32 %s10, 1
    %s16 = ssub.s32 %s10, 2
    %s17 = sadd.s32 %s10, 1
    %s18 = ssub.s32 %s10, %s17
    %p19 = scmp.eq.s32.totalorder %s18, 0
    %s21 = sadd.s32 %s20, 1
    %s22 = scalar_select %p19, %s20, %s21
    %p25 = pneg %p19
    %p26 = scmp.eq.s32.totalorder %s10, 1
    %p27 = por %p25, %p26
    %p28 = scmp.ne.s32.totalorder %s20, %s23
    %p29 = scmp.eq.s32.totalorder %s10, 0
    %p30 = por %p28, %p29
    %p31 = scmp.ne.s32.totalorder %s20, %s23
    %p32 = scmp.eq.s32.totalorder %s15, 1
    %p33 = por %p31, %p32
    %p34 = scmp.ne.s32.totalorder %s23, %s24
    %p35 = scmp.eq.s32.totalorder %s15, 0
    %p36 = por %p34, %p35
    %p37 = scmp.ne.s32.totalorder %s23, %s24
    %p38 = scmp.eq.s32.totalorder %s16, 1
    %p39 = por %p37, %p38
    %p41 = scmp.ne.s32.totalorder %s24, %s40
    %p42 = scmp.eq.s32.totalorder %s16, 0
    %p43 = por %p41, %p42
    %s45 = sadd.s32 %s44, 1
    %p48 = scmp.eq.s32.totalorder %s10, 1
    %p49 = scmp.ne.s32.totalorder %s44, %s46
    %p50 = scmp.eq.s32.totalorder %s10, 0
    %p51 = por %p49, %p50
    %p52 = scmp.ne.s32.totalorder %s44, %s46
    %p53 = scmp.eq.s32.totalorder %s15, 1
    %p54 = por %p52, %p53
    %p55 = scmp.ne.s32.totalorder %s46, %s47
    %p56 = scmp.eq.s32.totalorder %s15, 0
    %p57 = por %p55, %p56
    %p58 = scmp.ne.s32.totalorder %s46, %s47
    %p59 = scmp.eq.s32.totalorder %s16, 1
    %p60 = por %p58, %p59
    %p62 = scmp.ne.s32.totalorder %s47, %s61
    %p63 = scmp.eq.s32.totalorder %s16, 0
    %p64 = por %p62, %p63
    %s66 = sadd.s32 %s65, 1
    %p69 = scmp.eq.s32.totalorder %s10, 1
    %p70 = scmp.ne.s32.totalorder %s65, %s67
    %p71 = scmp.eq.s32.totalorder %s10, 0
    %p72 = por %p70, %p71
    %p73 = scmp.ne.s32.totalorder %s65, %s67
    %p74 = scmp.eq.s32.totalorder %s15, 1
    %p75 = por %p73, %p74
    %p76 = scmp.ne.s32.totalorder %s67, %s68
    %p77 = scmp.eq.s32.totalorder %s15, 0
    %p78 = por %p76, %p77
    %p79 = scmp.ne.s32.totalorder %s67, %s68
    %p80 = scmp.eq.s32.totalorder %s16, 1
    %p81 = por %p79, %p80
    %p83 = scmp.ne.s32.totalorder %s68, %s82
    %p84 = scmp.eq.s32.totalorder %s16, 0
    %p85 = por %p83, %p84
    %s87 = sadd.s32 %s86, 1
    %p90 = scmp.eq.s32.totalorder %s10, 1
    %p91 = scmp.ne.s32.totalorder %s86, %s88
    %p92 = scmp.eq.s32.totalorder %s10, 0
    %p93 = por %p91, %p92
    %p94 = scmp.ne.s32.totalorder %s86, %s88
    %p95 = scmp.eq.s32.totalorder %s15, 1
    %p96 = por %p94, %p95
    %p97 = scmp.ne.s32.totalorder %s88, %s89
    %p98 = scmp.eq.s32.totalorder %s15, 0
    %p99 = por %p97, %p98
    %p100 = scmp.ne.s32.totalorder %s88, %s89
    %p101 = scmp.eq.s32.totalorder %s16, 1
    %p102 = por %p100, %p101
    %p104 = scmp.ne.s32.totalorder %s89, %s103
    %p105 = scmp.eq.s32.totalorder %s16, 0
    %p106 = por %p104, %p105
    %s107 = ssub.s32 %s10, %s17
    %p108 = scmp.eq.s32.totalorder %s107, 0
    %s110 = sadd.s32 %s109, 1
    %s111 = scalar_select %p108, %s109, %s110
    %p114 = pneg %p108
    %p115 = scmp.eq.s32.totalorder %s10, 1
    %p116 = por %p114, %p115
    %p117 = scmp.ne.s32.totalorder %s109, %s112
    %p118 = scmp.eq.s32.totalorder %s10, 0
    %p119 = por %p117, %p118
    %p120 = scmp.ne.s32.totalorder %s109, %s112
    %p121 = scmp.eq.s32.totalorder %s15, 1
    %p122 = por %p120, %p121
    %p123 = scmp.ne.s32.totalorder %s112, %s113
    %p124 = scmp.eq.s32.totalorder %s15, 0
    %p125 = por %p123, %p124
    %p126 = scmp.ne.s32.totalorder %s112, %s113
    %p127 = scmp.eq.s32.totalorder %s16, 1
    %p128 = por %p126, %p127
    %p130 = scmp.ne.s32.totalorder %s113, %s129
    %p131 = scmp.eq.s32.totalorder %s16, 0
    %p132 = por %p130, %p131
    %p133 = scmp.le.s32.totalorder 1, %s10
    %p134 = scmp.lt.s32.totalorder %s10, 3
    %p135 = pnand %p133, %p134
    %p136 = pneg %p135
    // Predicated region
    $region9: #{_lambda_.23} parent=5 // pred_check
      _
    $region10: #{_lambda_.23} parent=5 // pred_check_branch
      %138 = sbr.rel (%p135) target = $region12
    $region11: #{_lambda_.23} parent=5 // pred_region
      %s139 = ssub.s32 %s10, 1
      // Predicated region
      $region13: #{_lambda_.23} parent=11 // pred_check
        %p140 = pneg %p57
      $region14: #{_lambda_.23} parent=11 // pred_check_branch
        %142 = sbr.rel (%p140) target = $region16
      $region15: #{_lambda_.23} parent=11 // pred_region
        _
      $region16: #{_lambda_.23} parent=11 // pred_fallthru
        _
      // Predicated region
      $region17: #{_lambda_.23} parent=11 // pred_check
        %p143 = pneg %p78
      $region18: #{_lambda_.23} parent=11 // pred_check_branch
        %145 = sbr.rel (%p143) target = $region20
      $region19: #{_lambda_.23} parent=11 // pred_region
        _
      $region20: #{_lambda_.23} parent=11 // pred_fallthru
        _
      // Predicated region
      $region21: #{_lambda_.23} parent=11 // pred_check
        %p146 = pneg %p99
      $region22: #{_lambda_.23} parent=11 // pred_check_branch
        %148 = sbr.rel (%p146) target = $region24
      $region23: #{_lambda_.23} parent=11 // pred_region
        _
      $region24: #{_lambda_.23} parent=11 // pred_fallthru
        _
    $region12: #{_lambda_.23} parent=5 // pred_fallthru
      _
    %p149 = scmp.lt.s32.totalorder %s10, 2
    // Predicated region
    $region25: #{_lambda_.23} parent=5 // pred_check
      %p150 = pneg %p149
    $region26: #{_lambda_.23} parent=5 // pred_check_branch
      %152 = sbr.rel (%p150) target = $region28
    $region27: #{_lambda_.23} parent=5 // pred_region
      // Predicated region
      $region29: #{_lambda_.23} parent=27 // pred_check
        %p153 = pneg %p30
      $region30: #{_lambda_.23} parent=27 // pred_check_branch
        %155 = sbr.rel (%p153) target = $region32
      $region31: #{_lambda_.23} parent=27 // pred_region
        %p156 = scmp.lt.s32.totalorder %s10, 1
        %s157 = scalar_select %p156, %s10, 1
        %s158 = smul.addr %s157, 2
        %s159 = scalar_lea.vmem %s0, %s158
      $region32: #{_lambda_.23} parent=27 // pred_fallthru
        _
    $region28: #{_lambda_.23} parent=5 // pred_fallthru
      _
    %p160 = scmp.le.s32.totalorder 1, %s10
    %p161 = scmp.lt.s32.totalorder %s10, 3
    %p162 = pnand %p160, %p161
    %p163 = pneg %p162
    // Predicated region
    $region33: #{_lambda_.23} parent=5 // pred_check
      _
    $region34: #{_lambda_.23} parent=5 // pred_check_branch
      %165 = sbr.rel (%p162) target = $region36
    $region35: #{_lambda_.23} parent=5 // pred_region
      %s166 = ssub.s32 %s10, 1
      %p167 = scmp.lt.s32.totalorder %s15, 1
      %s168 = scalar_select %p167, %s15, 1
      %s169 = smul.addr %s168, 2
      %s170 = scalar_lea.vmem %s0, %s169
      %p171 = pneg %p36
      %p172 = pneg %p33
      %p173 = pneg %p57
      %p174 = pneg %p54
      %p175 = pneg %p78
      %p176 = pneg %p75
      %p177 = pneg %p99
      %p178 = pneg %p96
      %p179 = pneg %p125
      %p180 = pneg %p122
      %p181 = scmp.lt.s32.totalorder %s15, 1
      %s182 = scalar_select %p181, %s15, 1
      %s183 = smul.addr %s182, 2
      %s184 = scalar_lea.vmem %s4, %s183
      %p185 = scmp.lt.s32.totalorder %s15, 1
      %s186 = scalar_select %p185, %s15, 1
      %s187 = smul.addr %s186, 2
      %s188 = scalar_lea.vmem %s0, %s187
      %p189 = scmp.lt.s32.totalorder %s15, 1
      %s190 = scalar_select %p189, %s15, 1
      %s191 = smul.addr %s190, 2
      %s192 = scalar_lea.vmem %s4, %s191
      %v193 = vld [vmem:[%s188] sm:$0x3]
      %s194 = scalar_lea.vmem %s1, 64
      %v195 = vld [vmem:[%s194] sm:$0xf]
      %v196 = vld [vmem:[%s194 + $0x4] sm:$0xf]
      %v197 = vld [vmem:[%s194 + $0x8] sm:$0xf]
      %v198 = vld [vmem:[%s194 + $0xc] sm:$0xf]
      %v199 = vld [vmem:[%s194 + $0x10] sm:$0xf]
      %v200 = vld [vmem:[%s194 + $0x14] sm:$0xf]
      %v201 = vld [vmem:[%s194 + $0x18] sm:$0xf]
      %v202 = vld [vmem:[%s194 + $0x1c] sm:$0xf]
      %v203 = vld [vmem:[%s194 + $0x20] sm:$0xf]
      %v204 = vld [vmem:[%s194 + $0x24] sm:$0xf]
      %v205 = vld [vmem:[%s194 + $0x28] sm:$0xf]
      %v206 = vld [vmem:[%s194 + $0x2c] sm:$0xf]
      %v207 = vld [vmem:[%s194 + $0x30] sm:$0xf]
      %v208 = vld [vmem:[%s194 + $0x34] sm:$0xf]
      %v209 = vld [vmem:[%s194 + $0x38] sm:$0xf]
      %v210 = vld [vmem:[%s194 + $0x3c] sm:$0xf]
      %v227 = vunpack.c.l.b16 %v195
      %v228 = vunpack.c.l.b16 %v196
      %v229 = vunpack.c.l.b16 %v197
      %v230 = vunpack.c.l.b16 %v198
      %v231 = vunpack.c.l.b16 %v199
      %v232 = vunpack.c.l.b16 %v200
      %v233 = vunpack.c.l.b16 %v201
      %v234 = vunpack.c.l.b16 %v202
      %v235 = vunpack.c.l.b16 %v203
      %v236 = vunpack.c.l.b16 %v204
      %v237 = vunpack.c.l.b16 %v205
      %v238 = vunpack.c.l.b16 %v206
      %v239 = vunpack.c.l.b16 %v207
      %v240 = vunpack.c.l.b16 %v208
      %v241 = vunpack.c.l.b16 %v209
      %v242 = vunpack.c.l.b16 %v210
      %v243 = vpack.c.b16 %v228, %v227
      %v244 = vpack.c.b16 %v230, %v229
      %v245 = vpack.c.b16 %v232, %v231
      %v246 = vpack.c.b16 %v234, %v233
      %v247 = vpack.c.b16 %v236, %v235
      %v248 = vpack.c.b16 %v238, %v237
      %v249 = vpack.c.b16 %v240, %v239
      %v250 = vpack.c.b16 %v242, %v241
      %259 = vmatpush.bf16.msra.mxu0 %v250
      %260 = vmatpush.bf16.msra.mxu0 %v249
      %261 = vmatpush.bf16.msra.mxu0 %v248
      %262 = vmatpush.bf16.msra.mxu0 %v247
      %263 = vmatpush.bf16.msra.mxu0 %v246
      %264 = vmatpush.bf16.msra.mxu0 %v245
      %265 = vmatpush.bf16.msra.mxu0 %v244
      %266 = vmatpush.bf16.msra.mxu0 %v243
      %267 = vmatmul.bf16.gmra.mxu0 %v193
      %v268 = vpop.f32.mrf.mxu0
      %v269 = vadd.f32 0.0, %v268
      %v270 = vpop.f32.mrf.mxu0
      %271 = vdwg.mxu0
      %272 = vst [vmem:[#allocation2] sm:$0xf] %v269
      %v273 = vld [vmem:[#allocation2 + $0x1] sm:$0x7]
      %v274 = vld [vmem:[%s188] sm:$0x3]
      %v275 = vld [vmem:[%s1] sm:$0xf]
      %v276 = vld [vmem:[%s1 + $0x4] sm:$0xf]
      %v277 = vld [vmem:[%s1 + $0x8] sm:$0xf]
      %v278 = vld [vmem:[%s1 + $0xc] sm:$0xf]
      %v279 = vld [vmem:[%s1 + $0x10] sm:$0xf]
      %v280 = vld [vmem:[%s1 + $0x14] sm:$0xf]
      %v281 = vld [vmem:[%s1 + $0x18] sm:$0xf]
      %v282 = vld [vmem:[%s1 + $0x1c] sm:$0xf]
      %v283 = vld [vmem:[%s1 + $0x20] sm:$0xf]
      %v284 = vld [vmem:[%s1 + $0x24] sm:$0xf]
      %v285 = vld [vmem:[%s1 + $0x28] sm:$0xf]
      %v286 = vld [vmem:[%s1 + $0x2c] sm:$0xf]
      %v287 = vld [vmem:[%s1 + $0x30] sm:$0xf]
      %v288 = vld [vmem:[%s1 + $0x34] sm:$0xf]
      %v289 = vld [vmem:[%s1 + $0x38] sm:$0xf]
      %v290 = vld [vmem:[%s1 + $0x3c] sm:$0xf]
      %v307 = vunpack.c.l.b16 %v275
      %v308 = vunpack.c.l.b16 %v276
      %v309 = vunpack.c.l.b16 %v277
      %v310 = vunpack.c.l.b16 %v278
      %v311 = vunpack.c.l.b16 %v279
      %v312 = vunpack.c.l.b16 %v280
      %v313 = vunpack.c.l.b16 %v281
      %v314 = vunpack.c.l.b16 %v282
      %v315 = vunpack.c.l.b16 %v283
      %v316 = vunpack.c.l.b16 %v284
      %v317 = vunpack.c.l.b16 %v285
      %v318 = vunpack.c.l.b16 %v286
      %v319 = vunpack.c.l.b16 %v287
      %v320 = vunpack.c.l.b16 %v288
      %v321 = vunpack.c.l.b16 %v289
      %v322 = vunpack.c.l.b16 %v290
      %v323 = vpack.c.b16 %v308, %v307
      %v324 = vpack.c.b16 %v310, %v309
      %v325 = vpack.c.b16 %v312, %v311
      %v326 = vpack.c.b16 %v314, %v313
      %v327 = vpack.c.b16 %v316, %v315
      %v328 = vpack.c.b16 %v318, %v317
      %v329 = vpack.c.b16 %v320, %v319
      %v330 = vpack.c.b16 %v322, %v321
      %339 = vmatpush.bf16.msra.mxu0 %v330
      %340 = vmatpush.bf16.msra.mxu0 %v329
      %341 = vmatpush.bf16.msra.mxu0 %v328
      %342 = vmatpush.bf16.msra.mxu0 %v327
      %343 = vmatpush.bf16.msra.mxu0 %v326
      %344 = vmatpush.bf16.msra.mxu0 %v325
      %345 = vmatpush.bf16.msra.mxu0 %v324
      %346 = vmatpush.bf16.msra.mxu0 %v323
      %347 = vmatmul.bf16.gmra.mxu0 %v274
      %v348 = vpop.f32.mrf.mxu0
      %v349 = vadd.f32 0.0, %v348
      %v350 = vpop.f32.mrf.mxu0
      %351 = vdwg.mxu0
      %v352 = vadd.f32 %v273, %v349
      %353 = vst [vmem:[#allocation2 + $0x1] sm:$0x7] %v352
      %v354 = vld [vmem:[#allocation2] sm:$0x7]
      %v355 = vld [vmem:[%s188] sm:$0x3]
      %s356 = scalar_lea.vmem %s1, 128
      %v357 = vld [vmem:[%s356] sm:$0xf]
      %v358 = vld [vmem:[%s356 + $0x4] sm:$0xf]
      %v359 = vld [vmem:[%s356 + $0x8] sm:$0xf]
      %v360 = vld [vmem:[%s356 + $0xc] sm:$0xf]
      %v361 = vld [vmem:[%s356 + $0x10] sm:$0xf]
      %v362 = vld [vmem:[%s356 + $0x14] sm:$0xf]
      %v363 = vld [vmem:[%s356 + $0x18] sm:$0xf]
      %v364 = vld [vmem:[%s356 + $0x1c] sm:$0xf]
      %v365 = vld [vmem:[%s356 + $0x20] sm:$0xf]
      %v366 = vld [vmem:[%s356 + $0x24] sm:$0xf]
      %v367 = vld [vmem:[%s356 + $0x28] sm:$0xf]
      %v368 = vld [vmem:[%s356 + $0x2c] sm:$0xf]
      %v369 = vld [vmem:[%s356 + $0x30] sm:$0xf]
      %v370 = vld [vmem:[%s356 + $0x34] sm:$0xf]
      %v371 = vld [vmem:[%s356 + $0x38] sm:$0xf]
      %v372 = vld [vmem:[%s356 + $0x3c] sm:$0xf]
      %374 = vst [vmem:[#allocation1] ss:$4 sm:$0xff] %v355
      %v375 = vld.sshfl [vmem:[#allocation1] sm:$0xff pattern:$0x73625140]
      %v376 = vshrl.u32 %v375, 16
      %v378 = vshll.u32 %v375, 16
      %v380 = vrot.slane %v378, 1
      %v381 = vor.u32 %v376, %v380
      %v399 = vunpack.c.l.b16 %v357
      %v400 = vunpack.c.l.b16 %v358
      %v401 = vunpack.c.l.b16 %v359
      %v402 = vunpack.c.l.b16 %v360
      %v403 = vunpack.c.l.b16 %v361
      %v404 = vunpack.c.l.b16 %v362
      %v405 = vunpack.c.l.b16 %v363
      %v406 = vunpack.c.l.b16 %v364
      %v407 = vunpack.c.l.b16 %v365
      %v408 = vunpack.c.l.b16 %v366
      %v409 = vunpack.c.l.b16 %v367
      %v410 = vunpack.c.l.b16 %v368
      %v411 = vunpack.c.l.b16 %v369
      %v412 = vunpack.c.l.b16 %v370
      %v413 = vunpack.c.l.b16 %v371
      %v414 = vunpack.c.l.b16 %v372
      %v415 = vpack.c.b16 %v400, %v399
      %v416 = vpack.c.b16 %v402, %v401
      %v417 = vpack.c.b16 %v404, %v403
      %v418 = vpack.c.b16 %v406, %v405
      %v419 = vpack.c.b16 %v408, %v407
      %v420 = vpack.c.b16 %v410, %v409
      %v421 = vpack.c.b16 %v412, %v411
      %v422 = vpack.c.b16 %v414, %v413
      %431 = vmatpush.bf16.msra.mxu0 %v422
      %432 = vmatpush.bf16.msra.mxu0 %v421
      %433 = vmatpush.bf16.msra.mxu0 %v420
      %434 = vmatpush.bf16.msra.mxu0 %v419
      %435 = vmatpush.bf16.msra.mxu0 %v418
      %436 = vmatpush.bf16.msra.mxu0 %v417
      %437 = vmatpush.bf16.msra.mxu0 %v416
      %438 = vmatpush.bf16.msra.mxu0 %v415
      %439 = vmatmul.bf16.gmra.mxu0 %v381
      %v440 = vpop.f32.mrf.mxu0
      %v441 = vadd.f32 0.0, %v440
      %v442 = vpop.f32.mrf.mxu0
      %443 = vdwg.mxu0
      %v444 = vadd.f32 %v354, %v441
      %445 = vst [vmem:[#allocation2] sm:$0x7] %v444
      %v446 = vld [vmem:[#allocation2] sm:$0xf]
      %v447 = vld [vmem:[%s2] sm:$0x1]
      %v449 = vperm.slane %v447, 0
      %v451 = vmul.f32 %v446, %v449
      %v452 = vld [vmem:[%s3] sm:$0x1]
      %v454 = vperm.slane %v452, 0
      %v456 = vadd.f32 %v451, %v454
      %v457 = vmax.f32 %v456, 0.0
      %v458 = vpack.c.bf16 %v457, %v457
      %459 = vst [vmem:[%s192] sm:$0x3] %v458
      %p460 = scmp.lt.s32.totalorder %s15, 1
      %s461 = scalar_select %p460, %s15, 1
      %s462 = smul.addr %s461, 2
      %s463 = scalar_lea.vmem %s4, %s462
      // Predicated region
      $region37: #{_lambda_.23} parent=35 // pred_check
        %p464 = pneg %p122
      $region38: #{_lambda_.23} parent=35 // pred_check_branch
        %466 = sbr.rel (%p464) target = $region40
      $region39: #{_lambda_.23} parent=35 // pred_region
        _
      $region40: #{_lambda_.23} parent=35 // pred_fallthru
        _
    $region36: #{_lambda_.23} parent=5 // pred_fallthru
      _
    %p467 = scmp.le.s32.totalorder 2, %s10
    // Predicated region
    $region41: #{_lambda_.23} parent=5 // pred_check
      %p468 = pneg %p467
    $region42: #{_lambda_.23} parent=5 // pred_check_branch
      %470 = sbr.rel (%p468) target = $region44
    $region43: #{_lambda_.23} parent=5 // pred_region
      %s471 = ssub.s32 %s10, 2
      // Predicated region
      $region45: #{_lambda_.23} parent=43 // pred_check
        %p472 = pneg %p128
      $region46: #{_lambda_.23} parent=43 // pred_check_branch
        %474 = sbr.rel (%p472) target = $region48
      $region47: #{_lambda_.23} parent=43 // pred_region
        %p475 = scmp.lt.s32.totalorder %s16, 1
        %s476 = scalar_select %p475, %s16, 1
        %s477 = smul.addr %s476, 2
        %s478 = scalar_lea.vmem %s4, %s477
      $region48: #{_lambda_.23} parent=43 // pred_fallthru
        _
    $region44: #{_lambda_.23} parent=5 // pred_fallthru
      _
  $region6: #{_lambda_.23} parent=0 // loop_footer
    %s14 = sadd.s32 1, %s10
  $region7: #{_lambda_.23} parent=0 // loop_footer_branch
    %9 = sbr.rel target = $region3
  $region8: #{_lambda_.23} parent=0 // loop_exit
    _

// kernel: tile.138
$region0: #{tile.138}
  #allocation0 [shape = 's32[1]{0}', space=sflag, size = 0x4, scoped, tag = 'scoped memory for tile.138']
  %s0 = inlined_call_operand.vmem [shape: f32[16], index: 0, kind: input, shape index: {}]
  %s1 = inlined_call_operand.vmem [shape: f32[4,16], index: 1, kind: output, shape index: {}]
  // Predicated region
  $region2: #{tile.138} parent=0 // pred_check
    _
  $region3: #{tile.138} parent=0 // pred_check_branch
    %3 = sbr.rel (0) target = $region5
  $region4: #{tile.138} parent=0 // pred_region
    _
  $region5: #{tile.138} parent=0 // pred_fallthru
    _
  %v4 = vld [vmem:[%s0] ss:$0 sm:$0xff]
  %5 = vst [vmem:[%s1] sm:$0xf] %v4

// kernel: tile.139
$region0: #{tile.139}
  %s0 = inlined_call_operand.vmem [shape: f32[4,16], index: 0, kind: input, shape index: {}]
  %s1 = inlined_call_operand.vmem [shape: f32[1,64], index: 1, kind: output, shape index: {}]
  $region1: #{tile.139} parent=0
    #allocation0 [shape = 'u8[4096]{0}', space=vmem, size = 0x1000, scoped, tag = 'scoped mem for output reshape']
    #allocation1 [shape = 'u8[4096]{0}', space=vmem, size = 0x1000, scoped, tag = 'scoped mem for input reshape']
    %s3 = ssub.s32 16, 1
    %v4 = vld [vmem:[%s0] sm:%s3]
    %5 = vst [vmem:[#allocation1] sm:%s3] %v4
    %v6 = vld [vmem:[#allocation1] sm:$0x1]
    %vm7 = vcmask 130048
    %8 = vst.msk [vmem:[#allocation0] sm:$0x1] %vm7, %v6
    %s9 = scalar_lea.vmem [#allocation1], 3
    %v10 = vld [vmem:[%s9] sm:$0x1]
    %11 = vrot.lane.b32.xlu0 %v10, 48
    %v12 = vpop.permute.xlu0 %11
    %vm13 = vcmask 523648
    %14 = vst.msk [vmem:[#allocation0] sm:$0x1] %vm13, %v12
    %s15 = scalar_lea.vmem [#allocation1], 2
    %v16 = vld [vmem:[%s15] sm:$0x1]
    %17 = vrot.lane.b32.xlu0 %v16, 32
    %v18 = vpop.permute.xlu0 %17
    %vm19 = vcmask 392448
    %20 = vst.msk [vmem:[#allocation0] sm:$0x1] %vm19, %v18
    %s21 = scalar_lea.vmem [#allocation1], 1
    %v22 = vld [vmem:[%s21] sm:$0x1]
    %23 = vrot.lane.b32.xlu0 %v22, 16
    %v24 = vpop.permute.xlu0 %23
    %vm25 = vcmask 261248
    %26 = vst.msk [vmem:[#allocation0] sm:$0x1] %vm25, %v24
    %s28 = ssub.s32 2, 1
    %v29 = vld [vmem:[#allocation0] sm:%s28]
    %s31 = ssub.s32 2, 1
    %32 = vst [vmem:[%s1] sm:%s31] %v29

// kernel: _lambda_.24
$region0: #{_lambda_.24}
  #allocation0 [shape = 'u32[]', space=smem, size = 0x4, offset = 0x4, fixed_abs, tag = 'smem constant byte address 0x4 - core index']
  #allocation1 [shape = 'u32[72,128]{1,0:T(1,128)}', space=vmem, size = 0x9000, scoped, tag = 'internal scratch']
  #allocation2 [shape = 'f32[4,64]{1,0:T(4,128)}', space=vmem, size = 0x800, scoped, tag = 'scratch operand']
  %s0 = inlined_call_operand.vmem [shape: bf16[2,4,128], index: 0, kind: input, shape index: {}]
  %s1 = inlined_call_operand.vmem [shape: bf16[3,128,64], index: 1, kind: input, shape index: {}]
  %s2 = inlined_call_operand.vmem [shape: f32[1,64], index: 2, kind: input, shape index: {}]
  %s3 = inlined_call_operand.vmem [shape: f32[1,64], index: 3, kind: input, shape index: {}]
  %s4 = inlined_call_operand.vmem [shape: bf16[2,4,64], index: 4, kind: output, shape index: {}]
  %s5 = sld [smem:[#allocation0]]
  $region49: #{_lambda_.24} parent=0
    _
  %s7 = ssub.s32 1, %s5
  %s8 = scalar_select 0, %s7, %s5
  loop: start=0, step=1, limit=4
  $region2: #{_lambda_.24} parent=0 // loop_pre_header
    _
  $region3: #{_lambda_.24} parent=0 // loop_header
    %s10 = sphi 0, %s14
    %p11 = scmp.ge.s32.totalorder %s10, 4
    %s20 = sphi 0, %s22
    %s23 = sphi 0, %s20
    %s24 = sphi 0, %s23
    %s40 = sphi 0, %s24
    %s44 = sphi 0, %s44
    %s46 = sphi 0, %s44
    %s47 = sphi 0, %s46
    %s61 = sphi 0, %s47
    %s65 = sphi 0, %s65
    %s67 = sphi 0, %s65
    %s68 = sphi 0, %s67
    %s82 = sphi 0, %s68
    %s86 = sphi 0, %s86
    %s88 = sphi 0, %s86
    %s89 = sphi 0, %s88
    %s103 = sphi 0, %s89
    %s109 = sphi 0, %s111
    %s112 = sphi 0, %s109
    %s113 = sphi 0, %s112
    %s129 = sphi 0, %s113
  $region4: #{_lambda_.24} parent=0 // loop_header_branch
    %13 = sbr.rel (%p11) target = $region8
  $region5: #{_lambda_.24} parent=0 // loop_body
    %s15 = ssub.s32 %s10, 1
    %s16 = ssub.s32 %s10, 2
    %s17 = sadd.s32 %s10, 1
    %s18 = ssub.s32 %s10, %s17
    %p19 = scmp.eq.s32.totalorder %s18, 0
    %s21 = sadd.s32 %s20, 1
    %s22 = scalar_select %p19, %s20, %s21
    %p25 = pneg %p19
    %p26 = scmp.eq.s32.totalorder %s10, 1
    %p27 = por %p25, %p26
    %p28 = scmp.ne.s32.totalorder %s20, %s23
    %p29 = scmp.eq.s32.totalorder %s10, 0
    %p30 = por %p28, %p29
    %p31 = scmp.ne.s32.totalorder %s20, %s23
    %p32 = scmp.eq.s32.totalorder %s15, 1
    %p33 = por %p31, %p32
    %p34 = scmp.ne.s32.totalorder %s23, %s24
    %p35 = scmp.eq.s32.totalorder %s15, 0
    %p36 = por %p34, %p35
    %p37 = scmp.ne.s32.totalorder %s23, %s24
    %p38 = scmp.eq.s32.totalorder %s16, 1
    %p39 = por %p37, %p38
    %p41 = scmp.ne.s32.totalorder %s24, %s40
    %p42 = scmp.eq.s32.totalorder %s16, 0
    %p43 = por %p41, %p42
    %s45 = sadd.s32 %s44, 1
    %p48 = scmp.eq.s32.totalorder %s10, 1
    %p49 = scmp.ne.s32.totalorder %s44, %s46
    %p50 = scmp.eq.s32.totalorder %s10, 0
    %p51 = por %p49, %p50
    %p52 = scmp.ne.s32.totalorder %s44, %s46
    %p53 = scmp.eq.s32.totalorder %s15, 1
    %p54 = por %p52, %p53
    %p55 = scmp.ne.s32.totalorder %s46, %s47
    %p56 = scmp.eq.s32.totalorder %s15, 0
    %p57 = por %p55, %p56
    %p58 = scmp.ne.s32.totalorder %s46, %s47
    %p59 = scmp.eq.s32.totalorder %s16, 1
    %p60 = por %p58, %p59
    %p62 = scmp.ne.s32.totalorder %s47, %s61
    %p63 = scmp.eq.s32.totalorder %s16, 0
    %p64 = por %p62, %p63
    %s66 = sadd.s32 %s65, 1
    %p69 = scmp.eq.s32.totalorder %s10, 1
    %p70 = scmp.ne.s32.totalorder %s65, %s67
    %p71 = scmp.eq.s32.totalorder %s10, 0
    %p72 = por %p70, %p71
    %p73 = scmp.ne.s32.totalorder %s65, %s67
    %p74 = scmp.eq.s32.totalorder %s15, 1
    %p75 = por %p73, %p74
    %p76 = scmp.ne.s32.totalorder %s67, %s68
    %p77 = scmp.eq.s32.totalorder %s15, 0
    %p78 = por %p76, %p77
    %p79 = scmp.ne.s32.totalorder %s67, %s68
    %p80 = scmp.eq.s32.totalorder %s16, 1
    %p81 = por %p79, %p80
    %p83 = scmp.ne.s32.totalorder %s68, %s82
    %p84 = scmp.eq.s32.totalorder %s16, 0
    %p85 = por %p83, %p84
    %s87 = sadd.s32 %s86, 1
    %p90 = scmp.eq.s32.totalorder %s10, 1
    %p91 = scmp.ne.s32.totalorder %s86, %s88
    %p92 = scmp.eq.s32.totalorder %s10, 0
    %p93 = por %p91, %p92
    %p94 = scmp.ne.s32.totalorder %s86, %s88
    %p95 = scmp.eq.s32.totalorder %s15, 1
    %p96 = por %p94, %p95
    %p97 = scmp.ne.s32.totalorder %s88, %s89
    %p98 = scmp.eq.s32.totalorder %s15, 0
    %p99 = por %p97, %p98
    %p100 = scmp.ne.s32.totalorder %s88, %s89
    %p101 = scmp.eq.s32.totalorder %s16, 1
    %p102 = por %p100, %p101
    %p104 = scmp.ne.s32.totalorder %s89, %s103
    %p105 = scmp.eq.s32.totalorder %s16, 0
    %p106 = por %p104, %p105
    %s107 = ssub.s32 %s10, %s17
    %p108 = scmp.eq.s32.totalorder %s107, 0
    %s110 = sadd.s32 %s109, 1
    %s111 = scalar_select %p108, %s109, %s110
    %p114 = pneg %p108
    %p115 = scmp.eq.s32.totalorder %s10, 1
    %p116 = por %p114, %p115
    %p117 = scmp.ne.s32.totalorder %s109, %s112
    %p118 = scmp.eq.s32.totalorder %s10, 0
    %p119 = por %p117, %p118
    %p120 = scmp.ne.s32.totalorder %s109, %s112
    %p121 = scmp.eq.s32.totalorder %s15, 1
    %p122 = por %p120, %p121
    %p123 = scmp.ne.s32.totalorder %s112, %s113
    %p124 = scmp.eq.s32.totalorder %s15, 0
    %p125 = por %p123, %p124
    %p126 = scmp.ne.s32.totalorder %s112, %s113
    %p127 = scmp.eq.s32.totalorder %s16, 1
    %p128 = por %p126, %p127
    %p130 = scmp.ne.s32.totalorder %s113, %s129
    %p131 = scmp.eq.s32.totalorder %s16, 0
    %p132 = por %p130, %p131
    %p133 = scmp.le.s32.totalorder 1, %s10
    %p134 = scmp.lt.s32.totalorder %s10, 3
    %p135 = pnand %p133, %p134
    %p136 = pneg %p135
    // Predicated region
    $region9: #{_lambda_.24} parent=5 // pred_check
      _
    $region10: #{_lambda_.24} parent=5 // pred_check_branch
      %138 = sbr.rel (%p135) target = $region12
    $region11: #{_lambda_.24} parent=5 // pred_region
      %s139 = ssub.s32 %s10, 1
      // Predicated region
      $region13: #{_lambda_.24} parent=11 // pred_check
        %p140 = pneg %p57
      $region14: #{_lambda_.24} parent=11 // pred_check_branch
        %142 = sbr.rel (%p140) target = $region16
      $region15: #{_lambda_.24} parent=11 // pred_region
        _
      $region16: #{_lambda_.24} parent=11 // pred_fallthru
        _
      // Predicated region
      $region17: #{_lambda_.24} parent=11 // pred_check
        %p143 = pneg %p78
      $region18: #{_lambda_.24} parent=11 // pred_check_branch
        %145 = sbr.rel (%p143) target = $region20
      $region19: #{_lambda_.24} parent=11 // pred_region
        _
      $region20: #{_lambda_.24} parent=11 // pred_fallthru
        _
      // Predicated region
      $region21: #{_lambda_.24} parent=11 // pred_check
        %p146 = pneg %p99
      $region22: #{_lambda_.24} parent=11 // pred_check_branch
        %148 = sbr.rel (%p146) target = $region24
      $region23: #{_lambda_.24} parent=11 // pred_region
        _
      $region24: #{_lambda_.24} parent=11 // pred_fallthru
        _
    $region12: #{_lambda_.24} parent=5 // pred_fallthru
      _
    %p149 = scmp.lt.s32.totalorder %s10, 2
    // Predicated region
    $region25: #{_lambda_.24} parent=5 // pred_check
      %p150 = pneg %p149
    $region26: #{_lambda_.24} parent=5 // pred_check_branch
      %152 = sbr.rel (%p150) target = $region28
    $region27: #{_lambda_.24} parent=5 // pred_region
      // Predicated region
      $region29: #{_lambda_.24} parent=27 // pred_check
        %p153 = pneg %p30
      $region30: #{_lambda_.24} parent=27 // pred_check_branch
        %155 = sbr.rel (%p153) target = $region32
      $region31: #{_lambda_.24} parent=27 // pred_region
        %p156 = scmp.lt.s32.totalorder %s10, 1
        %s157 = scalar_select %p156, %s10, 1
        %s158 = smul.addr %s157, 2
        %s159 = scalar_lea.vmem %s0, %s158
      $region32: #{_lambda_.24} parent=27 // pred_fallthru
        _
    $region28: #{_lambda_.24} parent=5 // pred_fallthru
      _
    %p160 = scmp.le.s32.totalorder 1, %s10
    %p161 = scmp.lt.s32.totalorder %s10, 3
    %p162 = pnand %p160, %p161
    %p163 = pneg %p162
    // Predicated region
    $region33: #{_lambda_.24} parent=5 // pred_check
      _
    $region34: #{_lambda_.24} parent=5 // pred_check_branch
      %165 = sbr.rel (%p162) target = $region36
    $region35: #{_lambda_.24} parent=5 // pred_region
      %s166 = ssub.s32 %s10, 1
      %p167 = scmp.lt.s32.totalorder %s15, 1
      %s168 = scalar_select %p167, %s15, 1
      %s169 = smul.addr %s168, 2
      %s170 = scalar_lea.vmem %s0, %s169
      %p171 = pneg %p36
      %p172 = pneg %p33
      %p173 = pneg %p57
      %p174 = pneg %p54
      %p175 = pneg %p78
      %p176 = pneg %p75
      %p177 = pneg %p99
      %p178 = pneg %p96
      %p179 = pneg %p125
      %p180 = pneg %p122
      %p181 = scmp.lt.s32.totalorder %s15, 1
      %s182 = scalar_select %p181, %s15, 1
      %s183 = smul.addr %s182, 2
      %s184 = scalar_lea.vmem %s4, %s183
      %p185 = scmp.lt.s32.totalorder %s15, 1
      %s186 = scalar_select %p185, %s15, 1
      %s187 = smul.addr %s186, 2
      %s188 = scalar_lea.vmem %s0, %s187
      %p189 = scmp.lt.s32.totalorder %s15, 1
      %s190 = scalar_select %p189, %s15, 1
      %s191 = smul.addr %s190, 2
      %s192 = scalar_lea.vmem %s4, %s191
      %v193 = vld [vmem:[%s188] sm:$0x3]
      %s194 = scalar_lea.vmem %s1, 64
      %v195 = vld [vmem:[%s194] sm:$0xf]
      %v196 = vld [vmem:[%s194 + $0x4] sm:$0xf]
      %v197 = vld [vmem:[%s194 + $0x8] sm:$0xf]
      %v198 = vld [vmem:[%s194 + $0xc] sm:$0xf]
      %v199 = vld [vmem:[%s194 + $0x10] sm:$0xf]
      %v200 = vld [vmem:[%s194 + $0x14] sm:$0xf]
      %v201 = vld [vmem:[%s194 + $0x18] sm:$0xf]
      %v202 = vld [vmem:[%s194 + $0x1c] sm:$0xf]
      %v203 = vld [vmem:[%s194 + $0x20] sm:$0xf]
      %v204 = vld [vmem:[%s194 + $0x24] sm:$0xf]
      %v205 = vld [vmem:[%s194 + $0x28] sm:$0xf]
      %v206 = vld [vmem:[%s194 + $0x2c] sm:$0xf]
      %v207 = vld [vmem:[%s194 + $0x30] sm:$0xf]
      %v208 = vld [vmem:[%s194 + $0x34] sm:$0xf]
      %v209 = vld [vmem:[%s194 + $0x38] sm:$0xf]
      %v210 = vld [vmem:[%s194 + $0x3c] sm:$0xf]
      %v227 = vunpack.c.l.b16 %v195
      %v228 = vunpack.c.l.b16 %v196
      %v229 = vunpack.c.l.b16 %v197
      %v230 = vunpack.c.l.b16 %v198
      %v231 = vunpack.c.l.b16 %v199
      %v232 = vunpack.c.l.b16 %v200
      %v233 = vunpack.c.l.b16 %v201
      %v234 = vunpack.c.l.b16 %v202
      %v235 = vunpack.c.l.b16 %v203
      %v236 = vunpack.c.l.b16 %v204
      %v237 = vunpack.c.l.b16 %v205
      %v238 = vunpack.c.l.b16 %v206
      %v239 = vunpack.c.l.b16 %v207
      %v240 = vunpack.c.l.b16 %v208
      %v241 = vunpack.c.l.b16 %v209
      %v242 = vunpack.c.l.b16 %v210
      %v243 = vpack.c.b16 %v228, %v227
      %v244 = vpack.c.b16 %v230, %v229
      %v245 = vpack.c.b16 %v232, %v231
      %v246 = vpack.c.b16 %v234, %v233
      %v247 = vpack.c.b16 %v236, %v235
      %v248 = vpack.c.b16 %v238, %v237
      %v249 = vpack.c.b16 %v240, %v239
      %v250 = vpack.c.b16 %v242, %v241
      %259 = vmatpush.bf16.msra.mxu0 %v250
      %260 = vmatpush.bf16.msra.mxu0 %v249
      %261 = vmatpush.bf16.msra.mxu0 %v248
      %262 = vmatpush.bf16.msra.mxu0 %v247
      %263 = vmatpush.bf16.msra.mxu0 %v246
      %264 = vmatpush.bf16.msra.mxu0 %v245
      %265 = vmatpush.bf16.msra.mxu0 %v244
      %266 = vmatpush.bf16.msra.mxu0 %v243
      %267 = vmatmul.bf16.gmra.mxu0 %v193
      %v268 = vpop.f32.mrf.mxu0
      %v269 = vadd.f32 0.0, %v268
      %v270 = vpop.f32.mrf.mxu0
      %271 = vdwg.mxu0
      %vm272 = vcmask 519168
      %273 = vst.msk [vmem:[#allocation2] sm:$0xf] %vm272, %v269
      %v274 = vld [vmem:[#allocation2 + $0x1] sm:$0x7]
      %v275 = vld [vmem:[%s188] sm:$0x3]
      %v276 = vld [vmem:[%s1] sm:$0xf]
      %v277 = vld [vmem:[%s1 + $0x4] sm:$0xf]
      %v278 = vld [vmem:[%s1 + $0x8] sm:$0xf]
      %v279 = vld [vmem:[%s1 + $0xc] sm:$0xf]
      %v280 = vld [vmem:[%s1 + $0x10] sm:$0xf]
      %v281 = vld [vmem:[%s1 + $0x14] sm:$0xf]
      %v282 = vld [vmem:[%s1 + $0x18] sm:$0xf]
      %v283 = vld [vmem:[%s1 + $0x1c] sm:$0xf]
      %v284 = vld [vmem:[%s1 + $0x20] sm:$0xf]
      %v285 = vld [vmem:[%s1 + $0x24] sm:$0xf]
      %v286 = vld [vmem:[%s1 + $0x28] sm:$0xf]
      %v287 = vld [vmem:[%s1 + $0x2c] sm:$0xf]
      %v288 = vld [vmem:[%s1 + $0x30] sm:$0xf]
      %v289 = vld [vmem:[%s1 + $0x34] sm:$0xf]
      %v290 = vld [vmem:[%s1 + $0x38] sm:$0xf]
      %v291 = vld [vmem:[%s1 + $0x3c] sm:$0xf]
      %v308 = vunpack.c.l.b16 %v276
      %v309 = vunpack.c.l.b16 %v277
      %v310 = vunpack.c.l.b16 %v278
      %v311 = vunpack.c.l.b16 %v279
      %v312 = vunpack.c.l.b16 %v280
      %v313 = vunpack.c.l.b16 %v281
      %v314 = vunpack.c.l.b16 %v282
      %v315 = vunpack.c.l.b16 %v283
      %v316 = vunpack.c.l.b16 %v284
      %v317 = vunpack.c.l.b16 %v285
      %v318 = vunpack.c.l.b16 %v286
      %v319 = vunpack.c.l.b16 %v287
      %v320 = vunpack.c.l.b16 %v288
      %v321 = vunpack.c.l.b16 %v289
      %v322 = vunpack.c.l.b16 %v290
      %v323 = vunpack.c.l.b16 %v291
      %v324 = vpack.c.b16 %v309, %v308
      %v325 = vpack.c.b16 %v311, %v310
      %v326 = vpack.c.b16 %v313, %v312
      %v327 = vpack.c.b16 %v315, %v314
      %v328 = vpack.c.b16 %v317, %v316
      %v329 = vpack.c.b16 %v319, %v318
      %v330 = vpack.c.b16 %v321, %v320
      %v331 = vpack.c.b16 %v323, %v322
      %340 = vmatpush.bf16.msra.mxu0 %v331
      %341 = vmatpush.bf16.msra.mxu0 %v330
      %342 = vmatpush.bf16.msra.mxu0 %v329
      %343 = vmatpush.bf16.msra.mxu0 %v328
      %344 = vmatpush.bf16.msra.mxu0 %v327
      %345 = vmatpush.bf16.msra.mxu0 %v326
      %346 = vmatpush.bf16.msra.mxu0 %v325
      %347 = vmatpush.bf16.msra.mxu0 %v324
      %348 = vmatmul.bf16.gmra.mxu0 %v275
      %v349 = vpop.f32.mrf.mxu0
      %v350 = vadd.f32 0.0, %v349
      %v351 = vpop.f32.mrf.mxu0
      %352 = vdwg.mxu0
      %v353 = vadd.f32 %v274, %v350
      %vm354 = vcmask 518144
      %355 = vst.msk [vmem:[#allocation2 + $0x1] sm:$0x7] %vm354, %v353
      %v356 = vld [vmem:[#allocation2] sm:$0x7]
      %v357 = vld [vmem:[%s188] sm:$0x3]
      %s358 = scalar_lea.vmem %s1, 128
      %v359 = vld [vmem:[%s358] sm:$0xf]
      %v360 = vld [vmem:[%s358 + $0x4] sm:$0xf]
      %v361 = vld [vmem:[%s358 + $0x8] sm:$0xf]
      %v362 = vld [vmem:[%s358 + $0xc] sm:$0xf]
      %v363 = vld [vmem:[%s358 + $0x10] sm:$0xf]
      %v364 = vld [vmem:[%s358 + $0x14] sm:$0xf]
      %v365 = vld [vmem:[%s358 + $0x18] sm:$0xf]
      %v366 = vld [vmem:[%s358 + $0x1c] sm:$0xf]
      %v367 = vld [vmem:[%s358 + $0x20] sm:$0xf]
      %v368 = vld [vmem:[%s358 + $0x24] sm:$0xf]
      %v369 = vld [vmem:[%s358 + $0x28] sm:$0xf]
      %v370 = vld [vmem:[%s358 + $0x2c] sm:$0xf]
      %v371 = vld [vmem:[%s358 + $0x30] sm:$0xf]
      %v372 = vld [vmem:[%s358 + $0x34] sm:$0xf]
      %v373 = vld [vmem:[%s358 + $0x38] sm:$0xf]
      %v374 = vld [vmem:[%s358 + $0x3c] sm:$0xf]
      %376 = vst [vmem:[#allocation1] ss:$4 sm:$0xff] %v357
      %v377 = vld.sshfl [vmem:[#allocation1] sm:$0xff pattern:$0x73625140]
      %v378 = vshrl.u32 %v377, 16
      %v380 = vshll.u32 %v377, 16
      %v382 = vrot.slane %v380, 1
      %v383 = vor.u32 %v378, %v382
      %v401 = vunpack.c.l.b16 %v359
      %v402 = vunpack.c.l.b16 %v360
      %v403 = vunpack.c.l.b16 %v361
      %v404 = vunpack.c.l.b16 %v362
      %v405 = vunpack.c.l.b16 %v363
      %v406 = vunpack.c.l.b16 %v364
      %v407 = vunpack.c.l.b16 %v365
      %v408 = vunpack.c.l.b16 %v366
      %v409 = vunpack.c.l.b16 %v367
      %v410 = vunpack.c.l.b16 %v368
      %v411 = vunpack.c.l.b16 %v369
      %v412 = vunpack.c.l.b16 %v370
      %v413 = vunpack.c.l.b16 %v371
      %v414 = vunpack.c.l.b16 %v372
      %v415 = vunpack.c.l.b16 %v373
      %v416 = vunpack.c.l.b16 %v374
      %v417 = vpack.c.b16 %v402, %v401
      %v418 = vpack.c.b16 %v404, %v403
      %v419 = vpack.c.b16 %v406, %v405
      %v420 = vpack.c.b16 %v408, %v407
      %v421 = vpack.c.b16 %v410, %v409
      %v422 = vpack.c.b16 %v412, %v411
      %v423 = vpack.c.b16 %v414, %v413
      %v424 = vpack.c.b16 %v416, %v415
      %433 = vmatpush.bf16.msra.mxu0 %v424
      %434 = vmatpush.bf16.msra.mxu0 %v423
      %435 = vmatpush.bf16.msra.mxu0 %v422
      %436 = vmatpush.bf16.msra.mxu0 %v421
      %437 = vmatpush.bf16.msra.mxu0 %v420
      %438 = vmatpush.bf16.msra.mxu0 %v419
      %439 = vmatpush.bf16.msra.mxu0 %v418
      %440 = vmatpush.bf16.msra.mxu0 %v417
      %441 = vmatmul.bf16.gmra.mxu0 %v383
      %v442 = vpop.f32.mrf.mxu0
      %v443 = vadd.f32 0.0, %v442
      %v444 = vpop.f32.mrf.mxu0
      %445 = vdwg.mxu0
      %v446 = vadd.f32 %v356, %v443
      %447 = vst.msk [vmem:[#allocation2] sm:$0x7] %vm354, %v446
      %v448 = vld [vmem:[#allocation2] sm:$0xf]
      %v449 = vld [vmem:[%s2] sm:$0x1]
      %v451 = vperm.slane %v449, 0
      %v453 = vmul.f32 %v448, %v451
      %v454 = vld [vmem:[%s3] sm:$0x1]
      %v456 = vperm.slane %v454, 0
      %v458 = vadd.f32 %v453, %v456
      %v459 = vmax.f32 %v458, 0.0
      %v460 = vpack.c.bf16 %v459, %v459
      %vm461 = vcmask 517120
      %462 = vst.msk [vmem:[%s192] sm:$0x3] %vm461, %v460
      %p463 = scmp.lt.s32.totalorder %s15, 1
      %s464 = scalar_select %p463, %s15, 1
      %s465 = smul.addr %s464, 2
      %s466 = scalar_lea.vmem %s4, %s465
      // Predicated region
      $region37: #{_lambda_.24} parent=35 // pred_check
        %p467 = pneg %p122
      $region38: #{_lambda_.24} parent=35 // pred_check_branch
        %469 = sbr.rel (%p467) target = $region40
      $region39: #{_lambda_.24} parent=35 // pred_region
        _
      $region40: #{_lambda_.24} parent=35 // pred_fallthru
        _
    $region36: #{_lambda_.24} parent=5 // pred_fallthru
      _
    %p470 = scmp.le.s32.totalorder 2, %s10
    // Predicated region
    $region41: #{_lambda_.24} parent=5 // pred_check
      %p471 = pneg %p470
    $region42: #{_lambda_.24} parent=5 // pred_check_branch
      %473 = sbr.rel (%p471) target = $region44
    $region43: #{_lambda_.24} parent=5 // pred_region
      %s474 = ssub.s32 %s10, 2
      // Predicated region
      $region45: #{_lambda_.24} parent=43 // pred_check
        %p475 = pneg %p128
      $region46: #{_lambda_.24} parent=43 // pred_check_branch
        %477 = sbr.rel (%p475) target = $region48
      $region47: #{_lambda_.24} parent=43 // pred_region
        %p478 = scmp.lt.s32.totalorder %s16, 1
        %s479 = scalar_select %p478, %s16, 1
        %s480 = smul.addr %s479, 2
        %s481 = scalar_lea.vmem %s4, %s480
      $region48: #{_lambda_.24} parent=43 // pred_fallthru
        _
    $region44: #{_lambda_.24} parent=5 // pred_fallthru
      _
  $region6: #{_lambda_.24} parent=0 // loop_footer
    %s14 = sadd.s32 1, %s10
  $region7: #{_lambda_.24} parent=0 // loop_footer_branch
    %9 = sbr.rel target = $region3
  $region8: #{_lambda_.24} parent=0 // loop_exit
    _

// kernel: _lambda_.25
$region0: #{_lambda_.25}
  #allocation0 [shape = 'u32[]', space=smem, size = 0x4, offset = 0x4, fixed_abs, tag = 'smem constant byte address 0x4 - core index']
  #allocation1 [shape = 'u32[72,128]{1,0:T(1,128)}', space=vmem, size = 0x9000, scoped, tag = 'internal scratch']
  %s0 = inlined_call_operand.vmem [shape: bf16[2,4,4,16], index: 0, kind: input, shape index: {}]
  %s1 = inlined_call_operand.vmem [shape: bf16[2,4,2,4,2,16], index: 1, kind: output, shape index: {}]
  %s2 = sld [smem:[#allocation0]]
  $region37: #{_lambda_.25} parent=0
    _
  %s4 = ssub.s32 1, %s2
  %s5 = scalar_select 0, %s4, %s2
  loop: start=0, step=1, limit=4
  $region2: #{_lambda_.25} parent=0 // loop_pre_header
    _
  $region3: #{_lambda_.25} parent=0 // loop_header
    %s7 = sphi 0, %s11
    %p8 = scmp.ge.s32.totalorder %s7, 4
    %s17 = sphi 0, %s19
    %s20 = sphi 0, %s17
    %s21 = sphi 0, %s20
    %s37 = sphi 0, %s21
    %s43 = sphi 0, %s45
    %s46 = sphi 0, %s43
    %s47 = sphi 0, %s46
    %s63 = sphi 0, %s47
  $region4: #{_lambda_.25} parent=0 // loop_header_branch
    %10 = sbr.rel (%p8) target = $region8
  $region5: #{_lambda_.25} parent=0 // loop_body
    %s12 = ssub.s32 %s7, 1
    %s13 = ssub.s32 %s7, 2
    %s14 = sadd.s32 %s7, 1
    %s15 = ssub.s32 %s7, %s14
    %p16 = scmp.eq.s32.totalorder %s15, 0
    %s18 = sadd.s32 %s17, 1
    %s19 = scalar_select %p16, %s17, %s18
    %p22 = pneg %p16
    %p23 = scmp.eq.s32.totalorder %s7, 1
    %p24 = por %p22, %p23
    %p25 = scmp.ne.s32.totalorder %s17, %s20
    %p26 = scmp.eq.s32.totalorder %s7, 0
    %p27 = por %p25, %p26
    %p28 = scmp.ne.s32.totalorder %s17, %s20
    %p29 = scmp.eq.s32.totalorder %s12, 1
    %p30 = por %p28, %p29
    %p31 = scmp.ne.s32.totalorder %s20, %s21
    %p32 = scmp.eq.s32.totalorder %s12, 0
    %p33 = por %p31, %p32
    %p34 = scmp.ne.s32.totalorder %s20, %s21
    %p35 = scmp.eq.s32.totalorder %s13, 1
    %p36 = por %p34, %p35
    %p38 = scmp.ne.s32.totalorder %s21, %s37
    %p39 = scmp.eq.s32.totalorder %s13, 0
    %p40 = por %p38, %p39
    %s41 = ssub.s32 %s7, %s14
    %p42 = scmp.eq.s32.totalorder %s41, 0
    %s44 = sadd.s32 %s43, 1
    %s45 = scalar_select %p42, %s43, %s44
    %p48 = pneg %p42
    %p49 = scmp.eq.s32.totalorder %s7, 1
    %p50 = por %p48, %p49
    %p51 = scmp.ne.s32.totalorder %s43, %s46
    %p52 = scmp.eq.s32.totalorder %s7, 0
    %p53 = por %p51, %p52
    %p54 = scmp.ne.s32.totalorder %s43, %s46
    %p55 = scmp.eq.s32.totalorder %s12, 1
    %p56 = por %p54, %p55
    %p57 = scmp.ne.s32.totalorder %s46, %s47
    %p58 = scmp.eq.s32.totalorder %s12, 0
    %p59 = por %p57, %p58
    %p60 = scmp.ne.s32.totalorder %s46, %s47
    %p61 = scmp.eq.s32.totalorder %s13, 1
    %p62 = por %p60, %p61
    %p64 = scmp.ne.s32.totalorder %s47, %s63
    %p65 = scmp.eq.s32.totalorder %s13, 0
    %p66 = por %p64, %p65
    %p67 = scmp.le.s32.totalorder 1, %s7
    %p68 = scmp.lt.s32.totalorder %s7, 3
    %p69 = pnand %p67, %p68
    %p70 = pneg %p69
    // Predicated region
    $region9: #{_lambda_.25} parent=5 // pred_check
      _
    $region10: #{_lambda_.25} parent=5 // pred_check_branch
      %72 = sbr.rel (%p69) target = $region12
    $region11: #{_lambda_.25} parent=5 // pred_region
      %s73 = ssub.s32 %s7, 1
    $region12: #{_lambda_.25} parent=5 // pred_fallthru
      _
    %p74 = scmp.lt.s32.totalorder %s7, 2
    // Predicated region
    $region13: #{_lambda_.25} parent=5 // pred_check
      %p75 = pneg %p74
    $region14: #{_lambda_.25} parent=5 // pred_check_branch
      %77 = sbr.rel (%p75) target = $region16
    $region15: #{_lambda_.25} parent=5 // pred_region
      // Predicated region
      $region17: #{_lambda_.25} parent=15 // pred_check
        %p78 = pneg %p27
      $region18: #{_lambda_.25} parent=15 // pred_check_branch
        %80 = sbr.rel (%p78) target = $region20
      $region19: #{_lambda_.25} parent=15 // pred_region
        %p81 = scmp.lt.s32.totalorder %s7, 1
        %s82 = scalar_select %p81, %s7, 1
        %s83 = smul.addr %s82, 4
        %s84 = smul.addr %s83, 2
        %s85 = scalar_lea.vmem %s0, %s84
      $region20: #{_lambda_.25} parent=15 // pred_fallthru
        _
    $region16: #{_lambda_.25} parent=5 // pred_fallthru
      _
    %p86 = scmp.le.s32.totalorder 1, %s7
    %p87 = scmp.lt.s32.totalorder %s7, 3
    %p88 = pnand %p86, %p87
    %p89 = pneg %p88
    // Predicated region
    $region21: #{_lambda_.25} parent=5 // pred_check
      _
    $region22: #{_lambda_.25} parent=5 // pred_check_branch
      %91 = sbr.rel (%p88) target = $region24
    $region23: #{_lambda_.25} parent=5 // pred_region
      %s92 = ssub.s32 %s7, 1
      %p93 = scmp.lt.s32.totalorder %s12, 1
      %s94 = scalar_select %p93, %s12, 1
      %s95 = smul.addr %s94, 4
      %s96 = smul.addr %s95, 2
      %s97 = scalar_lea.vmem %s0, %s96
      %p98 = pneg %p33
      %p99 = pneg %p30
      %p100 = pneg %p59
      %p101 = pneg %p56
      %p102 = scmp.lt.s32.totalorder %s12, 1
      %s103 = scalar_select %p102, %s12, 1
      %s104 = smul.addr %s103, 32
      %s105 = scalar_lea.vmem %s1, %s104
      %p106 = scmp.lt.s32.totalorder %s12, 1
      %s107 = scalar_select %p106, %s12, 1
      %s108 = smul.addr %s107, 4
      %s109 = smul.addr %s108, 2
      %s110 = scalar_lea.vmem %s0, %s109
      %p111 = scmp.lt.s32.totalorder %s12, 1
      %s112 = scalar_select %p111, %s12, 1
      %s113 = smul.addr %s112, 32
      %s114 = scalar_lea.vmem %s1, %s113
      %v115 = vld [vmem:[%s110] sm:$0x3]
      %v116 = vld [vmem:[%s110 + $0x2] sm:$0x3]
      %v117 = vld [vmem:[%s110 + $0x4] sm:$0x3]
      %v118 = vld [vmem:[%s110 + $0x6] sm:$0x3]
      %v119 = vunpack.c.l.bf16 %v115
      %v120 = vunpack.c.l.bf16 %v116
      %v121 = vunpack.c.l.bf16 %v117
      %v122 = vunpack.c.l.bf16 %v118
      %v123 = vmul.f32 %v119, 0.25
      %v124 = vmul.f32 %v120, 0.25
      %v125 = vmul.f32 %v121, 0.25
      %v126 = vmul.f32 %v119, 0.75
      %v127 = vmul.f32 %v120, 0.75
      %v128 = vmul.f32 %v121, 0.75
      %v129 = vmul.f32 %v122, 0.75
      %v130 = vadd.f32 %v123, %v126
      %v131 = vadd.f32 %v123, %v127
      %v132 = vadd.f32 %v124, %v128
      %v133 = vadd.f32 %v125, %v129
      %v134 = vmul.f32 %v122, 0.25
      %v135 = vadd.f32 %v126, %v124
      %v136 = vadd.f32 %v127, %v125
      %v137 = vadd.f32 %v128, %v134
      %v138 = vadd.f32 %v129, %v134
      %v139 = vpack.c.bf16 %v130, %v130
      %v140 = vpack.c.bf16 %v131, %v131
      %v141 = vpack.c.bf16 %v132, %v132
      %v142 = vpack.c.bf16 %v133, %v133
      %vm143 = vcmask 122880
      %vm144 = vsmask.f32 256
      %vm145 = vmand %vm143, %vm144
      %v146 = vld [vmem:[%s114] sm:$0x1]
      %v147 = vsel %vm145, %v139, %v146
      %148 = vst [vmem:[%s114] sm:$0x1] %v147
      %v149 = vld [vmem:[%s114 + $0x8] sm:$0x1]
      %v150 = vsel %vm145, %v140, %v149
      %151 = vst [vmem:[%s114 + $0x8] sm:$0x1] %v150
      %v152 = vld [vmem:[%s114 + $0x10] sm:$0x1]
      %v153 = vsel %vm145, %v141, %v152
      %154 = vst [vmem:[%s114 + $0x10] sm:$0x1] %v153
      %v155 = vld [vmem:[%s114 + $0x18] sm:$0x1]
      %v156 = vsel %vm145, %v142, %v155
      %157 = vst [vmem:[%s114 + $0x18] sm:$0x1] %v156
      %v158 = vmul.f32 %v130, 0.25
      %v159 = vmul.f32 %v131, 0.25
      %v160 = vmul.f32 %v132, 0.25
      %v161 = vmul.f32 %v133, 0.25
      %v162 = vmul.f32 %v130, 0.75
      %v163 = vmul.f32 %v131, 0.75
      %v164 = vmul.f32 %v132, 0.75
      %v165 = vmul.f32 %v133, 0.75
      %v170 = vrot.slane %v162, 5
      %v171 = vrot.slane %v170, 4
      %v172 = vrot.slane %v163, 5
      %v173 = vrot.slane %v172, 4
      %v174 = vrot.slane %v164, 5
      %v175 = vrot.slane %v174, 4
      %v176 = vrot.slane %v165, 5
      %v177 = vrot.slane %v176, 4
      %v182 = vadd.f32 %v158, %v171
      %v183 = vadd.f32 %v159, %v173
      %v184 = vadd.f32 %v160, %v175
      %v185 = vadd.f32 %v161, %v177
      %v186 = vpack.c.bf16 %v182, %v182
      %v187 = vpack.c.bf16 %v183, %v183
      %v188 = vpack.c.bf16 %v184, %v184
      %v189 = vpack.c.bf16 %v185, %v185
      %v194 = vrot.slane %v186, 3
      %v195 = vrot.slane %v187, 3
      %v196 = vrot.slane %v188, 3
      %v197 = vrot.slane %v189, 3
      %vm198 = vcmask 1040384
      %v201 = vsel %vm198, %v186, %v194
      %vm203 = vcmask 1041409
      %v204 = vsel %vm203, %v186, %v194
      %v206 = vrot.slane %v204, 1
      %v209 = vsel %vm198, %v187, %v195
      %v211 = vsel %vm203, %v187, %v195
      %v213 = vrot.slane %v211, 1
      %v216 = vsel %vm198, %v188, %v196
      %v218 = vsel %vm203, %v188, %v196
      %v220 = vrot.slane %v218, 1
      %v223 = vsel %vm198, %v189, %v197
      %v225 = vsel %vm203, %v189, %v197
      %v227 = vrot.slane %v225, 1
      %v228 = vunpack.i.l.s16 %v201
      %v229 = vunpack.i.h.s16 %v201
      %v230 = vunpack.i.l.s16 %v206
      %v231 = vunpack.i.l.s16 %v209
      %v232 = vunpack.i.h.s16 %v209
      %v233 = vunpack.i.l.s16 %v213
      %v234 = vunpack.i.l.s16 %v216
      %v235 = vunpack.i.h.s16 %v216
      %v236 = vunpack.i.l.s16 %v220
      %v237 = vunpack.i.l.s16 %v223
      %v238 = vunpack.i.h.s16 %v223
      %v239 = vunpack.i.l.s16 %v227
      %v240 = vpack.i.b16 %v228, %v228
      %v241 = vpack.i.b16 %v229, %v229
      %v242 = vpack.i.b16 %v230, %v230
      %v243 = vpack.i.b16 %v231, %v231
      %v244 = vpack.i.b16 %v232, %v232
      %v245 = vpack.i.b16 %v233, %v233
      %v246 = vpack.i.b16 %v234, %v234
      %v247 = vpack.i.b16 %v235, %v235
      %v248 = vpack.i.b16 %v236, %v236
      %v249 = vpack.i.b16 %v237, %v237
      %v250 = vpack.i.b16 %v238, %v238
      %v251 = vpack.i.b16 %v239, %v239
      %s264 = scalar_lea.vmem %s114, 1
      %v265 = vld [vmem:[%s264] sm:$0x1]
      %v266 = vsel %vm145, %v240, %v265
      %267 = vst [vmem:[%s264] sm:$0x1] %v266
      %v268 = vld [vmem:[%s264 + $0x1] sm:$0x1]
      %v269 = vsel %vm145, %v241, %v268
      %270 = vst [vmem:[%s264 + $0x1] sm:$0x1] %v269
      %v271 = vld [vmem:[%s264 + $0x2] sm:$0x1]
      %v272 = vsel %vm145, %v242, %v271
      %273 = vst [vmem:[%s264 + $0x2] sm:$0x1] %v272
      %v274 = vld [vmem:[%s264 + $0x8] sm:$0x1]
      %v275 = vsel %vm145, %v243, %v274
      %276 = vst [vmem:[%s264 + $0x8] sm:$0x1] %v275
      %v277 = vld [vmem:[%s264 + $0x9] sm:$0x1]
      %v278 = vsel %vm145, %v244, %v277
      %279 = vst [vmem:[%s264 + $0x9] sm:$0x1] %v278
      %v280 = vld [vmem:[%s264 + $0xa] sm:$0x1]
      %v281 = vsel %vm145, %v245, %v280
      %282 = vst [vmem:[%s264 + $0xa] sm:$0x1] %v281
      %v283 = vld [vmem:[%s264 + $0x10] sm:$0x1]
      %v284 = vsel %vm145, %v246, %v283
      %285 = vst [vmem:[%s264 + $0x10] sm:$0x1] %v284
      %v286 = vld [vmem:[%s264 + $0x11] sm:$0x1]
      %v287 = vsel %vm145, %v247, %v286
      %288 = vst [vmem:[%s264 + $0x11] sm:$0x1] %v287
      %v289 = vld [vmem:[%s264 + $0x12] sm:$0x1]
      %v290 = vsel %vm145, %v248, %v289
      %291 = vst [vmem:[%s264 + $0x12] sm:$0x1] %v290
      %v292 = vld [vmem:[%s264 + $0x18] sm:$0x1]
      %v293 = vsel %vm145, %v249, %v292
      %294 = vst [vmem:[%s264 + $0x18] sm:$0x1] %v293
      %v295 = vld [vmem:[%s264 + $0x19] sm:$0x1]
      %v296 = vsel %vm145, %v250, %v295
      %297 = vst [vmem:[%s264 + $0x19] sm:$0x1] %v296
      %v298 = vld [vmem:[%s264 + $0x1a] sm:$0x1]
      %v299 = vsel %vm145, %v251, %v298
      %300 = vst [vmem:[%s264 + $0x1a] sm:$0x1] %v299
      %v305 = vrot.slane %v158, 5
      %v306 = vrot.slane %v305, 4
      %v307 = vrot.slane %v159, 5
      %v308 = vrot.slane %v307, 4
      %v309 = vrot.slane %v160, 5
      %v310 = vrot.slane %v309, 4
      %v311 = vrot.slane %v161, 5
      %v312 = vrot.slane %v311, 4
      %v317 = vadd.f32 %v162, %v306
      %v318 = vadd.f32 %v163, %v308
      %v319 = vadd.f32 %v164, %v310
      %v320 = vadd.f32 %v165, %v312
      %v321 = vpack.c.bf16 %v317, %v317
      %v322 = vpack.c.bf16 %v318, %v318
      %v323 = vpack.c.bf16 %v319, %v319
      %v324 = vpack.c.bf16 %v320, %v320
      %v329 = vrot.slane %v321, 3
      %v330 = vrot.slane %v322, 3
      %v331 = vrot.slane %v323, 3
      %v332 = vrot.slane %v324, 3
      %v335 = vsel %vm198, %v321, %v329
      %v337 = vsel %vm203, %v321, %v329
      %v339 = vrot.slane %v337, 1
      %v342 = vsel %vm198, %v322, %v330
      %v344 = vsel %vm203, %v322, %v330
      %v346 = vrot.slane %v344, 1
      %v349 = vsel %vm198, %v323, %v331
      %v351 = vsel %vm203, %v323, %v331
      %v353 = vrot.slane %v351, 1
      %v356 = vsel %vm198, %v324, %v332
      %v358 = vsel %vm203, %v324, %v332
      %v360 = vrot.slane %v358, 1
      %v361 = vunpack.i.l.s16 %v335
      %v362 = vunpack.i.h.s16 %v335
      %v363 = vunpack.i.l.s16 %v339
      %v364 = vunpack.i.l.s16 %v342
      %v365 = vunpack.i.h.s16 %v342
      %v366 = vunpack.i.l.s16 %v346
      %v367 = vunpack.i.l.s16 %v349
      %v368 = vunpack.i.h.s16 %v349
      %v369 = vunpack.i.l.s16 %v353
      %v370 = vunpack.i.l.s16 %v356
      %v371 = vunpack.i.h.s16 %v356
      %v372 = vunpack.i.l.s16 %v360
      %v373 = vpack.i.b16 %v361, %v361
      %v374 = vpack.i.b16 %v362, %v362
      %v375 = vpack.i.b16 %v363, %v363
      %v376 = vpack.i.b16 %v364, %v364
      %v377 = vpack.i.b16 %v365, %v365
      %v378 = vpack.i.b16 %v366, %v366
      %v379 = vpack.i.b16 %v367, %v367
      %v380 = vpack.i.b16 %v368, %v368
      %v381 = vpack.i.b16 %v369, %v369
      %v382 = vpack.i.b16 %v370, %v370
      %v383 = vpack.i.b16 %v371, %v371
      %v384 = vpack.i.b16 %v372, %v372
      %vm397 = vsmask.f32 7938
      %vm398 = vmand %vm143, %vm397
      %v399 = vld [vmem:[%s114] sm:$0x1]
      %v400 = vsel %vm398, %v373, %v399
      %401 = vst [vmem:[%s114] sm:$0x1] %v400
      %v402 = vld [vmem:[%s114 + $0x1] sm:$0x1]
      %v403 = vsel %vm398, %v374, %v402
      %404 = vst [vmem:[%s114 + $0x1] sm:$0x1] %v403
      %v405 = vld [vmem:[%s114 + $0x2] sm:$0x1]
      %v406 = vsel %vm398, %v375, %v405
      %407 = vst [vmem:[%s114 + $0x2] sm:$0x1] %v406
      %v408 = vld [vmem:[%s114 + $0x8] sm:$0x1]
      %v409 = vsel %vm398, %v376, %v408
      %410 = vst [vmem:[%s114 + $0x8] sm:$0x1] %v409
      %v411 = vld [vmem:[%s114 + $0x9] sm:$0x1]
      %v412 = vsel %vm398, %v377, %v411
      %413 = vst [vmem:[%s114 + $0x9] sm:$0x1] %v412
      %v414 = vld [vmem:[%s114 + $0xa] sm:$0x1]
      %v415 = vsel %vm398, %v378, %v414
      %416 = vst [vmem:[%s114 + $0xa] sm:$0x1] %v415
      %v417 = vld [vmem:[%s114 + $0x10] sm:$0x1]
      %v418 = vsel %vm398, %v379, %v417
      %419 = vst [vmem:[%s114 + $0x10] sm:$0x1] %v418
      %v420 = vld [vmem:[%s114 + $0x11] sm:$0x1]
      %v421 = vsel %vm398, %v380, %v420
      %422 = vst [vmem:[%s114 + $0x11] sm:$0x1] %v421
      %v423 = vld [vmem:[%s114 + $0x12] sm:$0x1]
      %v424 = vsel %vm398, %v381, %v423
      %425 = vst [vmem:[%s114 + $0x12] sm:$0x1] %v424
      %v426 = vld [vmem:[%s114 + $0x18] sm:$0x1]
      %v427 = vsel %vm398, %v382, %v426
      %428 = vst [vmem:[%s114 + $0x18] sm:$0x1] %v427
      %v429 = vld [vmem:[%s114 + $0x19] sm:$0x1]
      %v430 = vsel %vm398, %v383, %v429
      %431 = vst [vmem:[%s114 + $0x19] sm:$0x1] %v430
      %v432 = vld [vmem:[%s114 + $0x1a] sm:$0x1]
      %v433 = vsel %vm398, %v384, %v432
      %434 = vst [vmem:[%s114 + $0x1a] sm:$0x1] %v433
      %436 = vst [vmem:[#allocation1] sm:$0xff] %v139
      %s437 = scalar_lea.vmem [#allocation1], 1
      %v438 = vld [vmem:[%s437] ss:$4 sm:$0xff]
      %440 = vst [vmem:[#allocation1 + $0x20] sm:$0xff] %v140
      %s441 = scalar_lea.vmem [#allocation1], 33
      %v442 = vld [vmem:[%s441] ss:$4 sm:$0xff]
      %444 = vst [vmem:[#allocation1] sm:$0xff] %v141
      %v445 = vld [vmem:[%s437] ss:$4 sm:$0xff]
      %447 = vst [vmem:[#allocation1 + $0x20] sm:$0xff] %v142
      %v448 = vld [vmem:[%s441] ss:$4 sm:$0xff]
      %s453 = scalar_lea.vmem %s114, 3
      %v454 = vld [vmem:[%s453] sm:$0x1]
      %v455 = vsel %vm398, %v438, %v454
      %456 = vst [vmem:[%s453] sm:$0x1] %v455
      %v457 = vld [vmem:[%s453 + $0x8] sm:$0x1]
      %v458 = vsel %vm398, %v442, %v457
      %459 = vst [vmem:[%s453 + $0x8] sm:$0x1] %v458
      %v460 = vld [vmem:[%s453 + $0x10] sm:$0x1]
      %v461 = vsel %vm398, %v445, %v460
      %462 = vst [vmem:[%s453 + $0x10] sm:$0x1] %v461
      %v463 = vld [vmem:[%s453 + $0x18] sm:$0x1]
      %v464 = vsel %vm398, %v448, %v463
      %465 = vst [vmem:[%s453 + $0x18] sm:$0x1] %v464
      %v466 = vpack.c.bf16 %v135, %v135
      %v467 = vpack.c.bf16 %v136, %v136
      %v468 = vpack.c.bf16 %v137, %v137
      %v469 = vpack.c.bf16 %v138, %v138
      %s470 = scalar_lea.vmem %s114, 4
      %v471 = vld [vmem:[%s470] sm:$0x1]
      %v472 = vsel %vm145, %v466, %v471
      %473 = vst [vmem:[%s470] sm:$0x1] %v472
      %v474 = vld [vmem:[%s470 + $0x8] sm:$0x1]
      %v475 = vsel %vm145, %v467, %v474
      %476 = vst [vmem:[%s470 + $0x8] sm:$0x1] %v475
      %v477 = vld [vmem:[%s470 + $0x10] sm:$0x1]
      %v478 = vsel %vm145, %v468, %v477
      %479 = vst [vmem:[%s470 + $0x10] sm:$0x1] %v478
      %v480 = vld [vmem:[%s470 + $0x18] sm:$0x1]
      %v481 = vsel %vm145, %v469, %v480
      %482 = vst [vmem:[%s470 + $0x18] sm:$0x1] %v481
      %v483 = vmul.f32 %v135, 0.25
      %v484 = vmul.f32 %v136, 0.25
      %v485 = vmul.f32 %v137, 0.25
      %v486 = vmul.f32 %v138, 0.25
      %v487 = vmul.f32 %v135, 0.75
      %v488 = vmul.f32 %v136, 0.75
      %v489 = vmul.f32 %v137, 0.75
      %v490 = vmul.f32 %v138, 0.75
      %v495 = vrot.slane %v487, 5
      %v496 = vrot.slane %v495, 4
      %v497 = vrot.slane %v488, 5
      %v498 = vrot.slane %v497, 4
      %v499 = vrot.slane %v489, 5
      %v500 = vrot.slane %v499, 4
      %v501 = vrot.slane %v490, 5
      %v502 = vrot.slane %v501, 4
      %v507 = vadd.f32 %v483, %v496
      %v508 = vadd.f32 %v484, %v498
      %v509 = vadd.f32 %v485, %v500
      %v510 = vadd.f32 %v486, %v502
      %v511 = vpack.c.bf16 %v507, %v507
      %v512 = vpack.c.bf16 %v508, %v508
      %v513 = vpack.c.bf16 %v509, %v509
      %v514 = vpack.c.bf16 %v510, %v510
      %v519 = vrot.slane %v511, 3
      %v520 = vrot.slane %v512, 3
      %v521 = vrot.slane %v513, 3
      %v522 = vrot.slane %v514, 3
      %v525 = vsel %vm198, %v511, %v519
      %v527 = vsel %vm203, %v511, %v519
      %v529 = vrot.slane %v527, 1
      %v532 = vsel %vm198, %v512, %v520
      %v534 = vsel %vm203, %v512, %v520
      %v536 = vrot.slane %v534, 1
      %v539 = vsel %vm198, %v513, %v521
      %v541 = vsel %vm203, %v513, %v521
      %v543 = vrot.slane %v541, 1
      %v546 = vsel %vm198, %v514, %v522
      %v548 = vsel %vm203, %v514, %v522
      %v550 = vrot.slane %v548, 1
      %v551 = vunpack.i.l.s16 %v525
      %v552 = vunpack.i.h.s16 %v525
      %v553 = vunpack.i.l.s16 %v529
      %v554 = vunpack.i.l.s16 %v532
      %v555 = vunpack.i.h.s16 %v532
      %v556 = vunpack.i.l.s16 %v536
      %v557 = vunpack.i.l.s16 %v539
      %v558 = vunpack.i.h.s16 %v539
      %v559 = vunpack.i.l.s16 %v543
      %v560 = vunpack.i.l.s16 %v546
      %v561 = vunpack.i.h.s16 %v546
      %v562 = vunpack.i.l.s16 %v550
      %v563 = vpack.i.b16 %v551, %v551
      %v564 = vpack.i.b16 %v552, %v552
      %v565 = vpack.i.b16 %v553, %v553
      %v566 = vpack.i.b16 %v554, %v554
      %v567 = vpack.i.b16 %v555, %v555
      %v568 = vpack.i.b16 %v556, %v556
      %v569 = vpack.i.b16 %v557, %v557
      %v570 = vpack.i.b16 %v558, %v558
      %v571 = vpack.i.b16 %v559, %v559
      %v572 = vpack.i.b16 %v560, %v560
      %v573 = vpack.i.b16 %v561, %v561
      %v574 = vpack.i.b16 %v562, %v562
      %s587 = scalar_lea.vmem %s114, 5
      %v588 = vld [vmem:[%s587] sm:$0x1]
      %v589 = vsel %vm145, %v563, %v588
      %590 = vst [vmem:[%s587] sm:$0x1] %v589
      %v591 = vld [vmem:[%s587 + $0x1] sm:$0x1]
      %v592 = vsel %vm145, %v564, %v591
      %593 = vst [vmem:[%s587 + $0x1] sm:$0x1] %v592
      %v594 = vld [vmem:[%s587 + $0x2] sm:$0x1]
      %v595 = vsel %vm145, %v565, %v594
      %596 = vst [vmem:[%s587 + $0x2] sm:$0x1] %v595
      %v597 = vld [vmem:[%s587 + $0x8] sm:$0x1]
      %v598 = vsel %vm145, %v566, %v597
      %599 = vst [vmem:[%s587 + $0x8] sm:$0x1] %v598
      %v600 = vld [vmem:[%s587 + $0x9] sm:$0x1]
      %v601 = vsel %vm145, %v567, %v600
      %602 = vst [vmem:[%s587 + $0x9] sm:$0x1] %v601
      %v603 = vld [vmem:[%s587 + $0xa] sm:$0x1]
      %v604 = vsel %vm145, %v568, %v603
      %605 = vst [vmem:[%s587 + $0xa] sm:$0x1] %v604
      %v606 = vld [vmem:[%s587 + $0x10] sm:$0x1]
      %v607 = vsel %vm145, %v569, %v606
      %608 = vst [vmem:[%s587 + $0x10] sm:$0x1] %v607
      %v609 = vld [vmem:[%s587 + $0x11] sm:$0x1]
      %v610 = vsel %vm145, %v570, %v609
      %611 = vst [vmem:[%s587 + $0x11] sm:$0x1] %v610
      %v612 = vld [vmem:[%s587 + $0x12] sm:$0x1]
      %v613 = vsel %vm145, %v571, %v612
      %614 = vst [vmem:[%s587 + $0x12] sm:$0x1] %v613
      %v615 = vld [vmem:[%s587 + $0x18] sm:$0x1]
      %v616 = vsel %vm145, %v572, %v615
      %617 = vst [vmem:[%s587 + $0x18] sm:$0x1] %v616
      %v618 = vld [vmem:[%s587 + $0x19] sm:$0x1]
      %v619 = vsel %vm145, %v573, %v618
      %620 = vst [vmem:[%s587 + $0x19] sm:$0x1] %v619
      %v621 = vld [vmem:[%s587 + $0x1a] sm:$0x1]
      %v622 = vsel %vm145, %v574, %v621
      %623 = vst [vmem:[%s587 + $0x1a] sm:$0x1] %v622
      %v628 = vrot.slane %v483, 5
      %v629 = vrot.slane %v628, 4
      %v630 = vrot.slane %v484, 5
      %v631 = vrot.slane %v630, 4
      %v632 = vrot.slane %v485, 5
      %v633 = vrot.slane %v632, 4
      %v634 = vrot.slane %v486, 5
      %v635 = vrot.slane %v634, 4
      %v640 = vadd.f32 %v487, %v629
      %v641 = vadd.f32 %v488, %v631
      %v642 = vadd.f32 %v489, %v633
      %v643 = vadd.f32 %v490, %v635
      %v644 = vpack.c.bf16 %v640, %v640
      %v645 = vpack.c.bf16 %v641, %v641
      %v646 = vpack.c.bf16 %v642, %v642
      %v647 = vpack.c.bf16 %v643, %v643
      %v652 = vrot.slane %v644, 3
      %v653 = vrot.slane %v645, 3
      %v654 = vrot.slane %v646, 3
      %v655 = vrot.slane %v647, 3
      %v658 = vsel %vm198, %v644, %v652
      %v660 = vsel %vm203, %v644, %v652
      %v662 = vrot.slane %v660, 1
      %v665 = vsel %vm198, %v645, %v653
      %v667 = vsel %vm203, %v645, %v653
      %v669 = vrot.slane %v667, 1
      %v672 = vsel %vm198, %v646, %v654
      %v674 = vsel %vm203, %v646, %v654
      %v676 = vrot.slane %v674, 1
      %v679 = vsel %vm198, %v647, %v655
      %v681 = vsel %vm203, %v647, %v655
      %v683 = vrot.slane %v681, 1
      %v684 = vunpack.i.l.s16 %v658
      %v685 = vunpack.i.h.s16 %v658
      %v686 = vunpack.i.l.s16 %v662
      %v687 = vunpack.i.l.s16 %v665
      %v688 = vunpack.i.h.s16 %v665
      %v689 = vunpack.i.l.s16 %v669
      %v690 = vunpack.i.l.s16 %v672
      %v691 = vunpack.i.h.s16 %v672
      %v692 = vunpack.i.l.s16 %v676
      %v693 = vunpack.i.l.s16 %v679
      %v694 = vunpack.i.h.s16 %v679
      %v695 = vunpack.i.l.s16 %v683
      %v696 = vpack.i.b16 %v684, %v684
      %v697 = vpack.i.b16 %v685, %v685
      %v698 = vpack.i.b16 %v686, %v686
      %v699 = vpack.i.b16 %v687, %v687
      %v700 = vpack.i.b16 %v688, %v688
      %v701 = vpack.i.b16 %v689, %v689
      %v702 = vpack.i.b16 %v690, %v690
      %v703 = vpack.i.b16 %v691, %v691
      %v704 = vpack.i.b16 %v692, %v692
      %v705 = vpack.i.b16 %v693, %v693
      %v706 = vpack.i.b16 %v694, %v694
      %v707 = vpack.i.b16 %v695, %v695
      %v720 = vld [vmem:[%s470] sm:$0x1]
      %v721 = vsel %vm398, %v696, %v720
      %722 = vst [vmem:[%s470] sm:$0x1] %v721
      %v723 = vld [vmem:[%s470 + $0x1] sm:$0x1]
      %v724 = vsel %vm398, %v697, %v723
      %725 = vst [vmem:[%s470 + $0x1] sm:$0x1] %v724
      %v726 = vld [vmem:[%s470 + $0x2] sm:$0x1]
      %v727 = vsel %vm398, %v698, %v726
      %728 = vst [vmem:[%s470 + $0x2] sm:$0x1] %v727
      %v729 = vld [vmem:[%s470 + $0x8] sm:$0x1]
      %v730 = vsel %vm398, %v699, %v729
      %731 = vst [vmem:[%s470 + $0x8] sm:$0x1] %v730
      %v732 = vld [vmem:[%s470 + $0x9] sm:$0x1]
      %v733 = vsel %vm398, %v700, %v732
      %734 = vst [vmem:[%s470 + $0x9] sm:$0x1] %v733
      %v735 = vld [vmem:[%s470 + $0xa] sm:$0x1]
      %v736 = vsel %vm398, %v701, %v735
      %737 = vst [vmem:[%s470 + $0xa] sm:$0x1] %v736
      %v738 = vld [vmem:[%s470 + $0x10] sm:$0x1]
      %v739 = vsel %vm398, %v702, %v738
      %740 = vst [vmem:[%s470 + $0x10] sm:$0x1] %v739
      %v741 = vld [vmem:[%s470 + $0x11] sm:$0x1]
      %v742 = vsel %vm398, %v703, %v741
      %743 = vst [vmem:[%s470 + $0x11] sm:$0x1] %v742
      %v744 = vld [vmem:[%s470 + $0x12] sm:$0x1]
      %v745 = vsel %vm398, %v704, %v744
      %746 = vst [vmem:[%s470 + $0x12] sm:$0x1] %v745
      %v747 = vld [vmem:[%s470 + $0x18] sm:$0x1]
      %v748 = vsel %vm398, %v705, %v747
      %749 = vst [vmem:[%s470 + $0x18] sm:$0x1] %v748
      %v750 = vld [vmem:[%s470 + $0x19] sm:$0x1]
      %v751 = vsel %vm398, %v706, %v750
      %752 = vst [vmem:[%s470 + $0x19] sm:$0x1] %v751
      %v753 = vld [vmem:[%s470 + $0x1a] sm:$0x1]
      %v754 = vsel %vm398, %v707, %v753
      %755 = vst [vmem:[%s470 + $0x1a] sm:$0x1] %v754
      %757 = vst [vmem:[#allocation1] sm:$0xff] %v466
      %s758 = scalar_lea.vmem [#allocation1], 1
      %v759 = vld [vmem:[%s758] ss:$4 sm:$0xff]
      %761 = vst [vmem:[#allocation1 + $0x20] sm:$0xff] %v467
      %s762 = scalar_lea.vmem [#allocation1], 33
      %v763 = vld [vmem:[%s762] ss:$4 sm:$0xff]
      %765 = vst [vmem:[#allocation1] sm:$0xff] %v468
      %v766 = vld [vmem:[%s758] ss:$4 sm:$0xff]
      %768 = vst [vmem:[#allocation1 + $0x20] sm:$0xff] %v469
      %v769 = vld [vmem:[%s762] ss:$4 sm:$0xff]
      %s774 = scalar_lea.vmem %s114, 7
      %v775 = vld [vmem:[%s774] sm:$0x1]
      %v776 = vsel %vm398, %v759, %v775
      %777 = vst [vmem:[%s774] sm:$0x1] %v776
      %v778 = vld [vmem:[%s774 + $0x8] sm:$0x1]
      %v779 = vsel %vm398, %v763, %v778
      %780 = vst [vmem:[%s774 + $0x8] sm:$0x1] %v779
      %v781 = vld [vmem:[%s774 + $0x10] sm:$0x1]
      %v782 = vsel %vm398, %v766, %v781
      %783 = vst [vmem:[%s774 + $0x10] sm:$0x1] %v782
      %v784 = vld [vmem:[%s774 + $0x18] sm:$0x1]
      %v785 = vsel %vm398, %v769, %v784
      %786 = vst [vmem:[%s774 + $0x18] sm:$0x1] %v785
      %p787 = scmp.lt.s32.totalorder %s12, 1
      %s788 = scalar_select %p787, %s12, 1
      %s789 = smul.addr %s788, 32
      %s790 = scalar_lea.vmem %s1, %s789
      // Predicated region
      $region25: #{_lambda_.25} parent=23 // pred_check
        %p791 = pneg %p56
      $region26: #{_lambda_.25} parent=23 // pred_check_branch
        %793 = sbr.rel (%p791) target = $region28
      $region27: #{_lambda_.25} parent=23 // pred_region
        _
      $region28: #{_lambda_.25} parent=23 // pred_fallthru
        _
    $region24: #{_lambda_.25} parent=5 // pred_fallthru
      _
    %p794 = scmp.le.s32.totalorder 2, %s7
    // Predicated region
    $region29: #{_lambda_.25} parent=5 // pred_check
      %p795 = pneg %p794
    $region30: #{_lambda_.25} parent=5 // pred_check_branch
      %797 = sbr.rel (%p795) target = $region32
    $region31: #{_lambda_.25} parent=5 // pred_region
      %s798 = ssub.s32 %s7, 2
      // Predicated region
      $region33: #{_lambda_.25} parent=31 // pred_check
        %p799 = pneg %p62
      $region34: #{_lambda_.25} parent=31 // pred_check_branch
        %801 = sbr.rel (%p799) target = $region36
      $region35: #{_lambda_.25} parent=31 // pred_region
        %p802 = scmp.lt.s32.totalorder %s13, 1
        %s803 = scalar_select %p802, %s13, 1
        %s804 = smul.addr %s803, 32
        %s805 = scalar_lea.vmem %s1, %s804
      $region36: #{_lambda_.25} parent=31 // pred_fallthru
        _
    $region32: #{_lambda_.25} parent=5 // pred_fallthru
      _
  $region6: #{_lambda_.25} parent=0 // loop_footer
    %s11 = sadd.s32 1, %s7
  $region7: #{_lambda_.25} parent=0 // loop_footer_branch
    %6 = sbr.rel target = $region3
  $region8: #{_lambda_.25} parent=0 // loop_exit
    _

// kernel: _lambda_.28
$region0: #{_lambda_.28}
  #allocation0 [shape = 'u32[]', space=smem, size = 0x4, offset = 0x4, fixed_abs, tag = 'smem constant byte address 0x4 - core index']
  #allocation1 [shape = 'u32[72,128]{1,0:T(1,128)}', space=vmem, size = 0x9000, scoped, tag = 'internal scratch']
  %s0 = inlined_call_operand.vmem [shape: bf16[2,8,8,16], index: 0, kind: input, shape index: {}]
  %s1 = inlined_call_operand.vmem [shape: bf16[2,8,2,8,2,16], index: 1, kind: output, shape index: {}]
  %s2 = sld [smem:[#allocation0]]
  $region37: #{_lambda_.28} parent=0
    _
  %s4 = ssub.s32 1, %s2
  %s5 = scalar_select 0, %s4, %s2
  loop: start=0, step=1, limit=4
  $region2: #{_lambda_.28} parent=0 // loop_pre_header
    _
  $region3: #{_lambda_.28} parent=0 // loop_header
    %s7 = sphi 0, %s11
    %p8 = scmp.ge.s32.totalorder %s7, 4
    %s17 = sphi 0, %s19
    %s20 = sphi 0, %s17
    %s21 = sphi 0, %s20
    %s37 = sphi 0, %s21
    %s43 = sphi 0, %s45
    %s46 = sphi 0, %s43
    %s47 = sphi 0, %s46
    %s63 = sphi 0, %s47
  $region4: #{_lambda_.28} parent=0 // loop_header_branch
    %10 = sbr.rel (%p8) target = $region8
  $region5: #{_lambda_.28} parent=0 // loop_body
    %s12 = ssub.s32 %s7, 1
    %s13 = ssub.s32 %s7, 2
    %s14 = sadd.s32 %s7, 1
    %s15 = ssub.s32 %s7, %s14
    %p16 = scmp.eq.s32.totalorder %s15, 0
    %s18 = sadd.s32 %s17, 1
    %s19 = scalar_select %p16, %s17, %s18
    %p22 = pneg %p16
    %p23 = scmp.eq.s32.totalorder %s7, 1
    %p24 = por %p22, %p23
    %p25 = scmp.ne.s32.totalorder %s17, %s20
    %p26 = scmp.eq.s32.totalorder %s7, 0
    %p27 = por %p25, %p26
    %p28 = scmp.ne.s32.totalorder %s17, %s20
    %p29 = scmp.eq.s32.totalorder %s12, 1
    %p30 = por %p28, %p29
    %p31 = scmp.ne.s32.totalorder %s20, %s21
    %p32 = scmp.eq.s32.totalorder %s12, 0
    %p33 = por %p31, %p32
    %p34 = scmp.ne.s32.totalorder %s20, %s21
    %p35 = scmp.eq.s32.totalorder %s13, 1
    %p36 = por %p34, %p35
    %p38 = scmp.ne.s32.totalorder %s21, %s37
    %p39 = scmp.eq.s32.totalorder %s13, 0
    %p40 = por %p38, %p39
    %s41 = ssub.s32 %s7, %s14
    %p42 = scmp.eq.s32.totalorder %s41, 0
    %s44 = sadd.s32 %s43, 1
    %s45 = scalar_select %p42, %s43, %s44
    %p48 = pneg %p42
    %p49 = scmp.eq.s32.totalorder %s7, 1
    %p50 = por %p48, %p49
    %p51 = scmp.ne.s32.totalorder %s43, %s46
    %p52 = scmp.eq.s32.totalorder %s7, 0
    %p53 = por %p51, %p52
    %p54 = scmp.ne.s32.totalorder %s43, %s46
    %p55 = scmp.eq.s32.totalorder %s12, 1
    %p56 = por %p54, %p55
    %p57 = scmp.ne.s32.totalorder %s46, %s47
    %p58 = scmp.eq.s32.totalorder %s12, 0
    %p59 = por %p57, %p58
    %p60 = scmp.ne.s32.totalorder %s46, %s47
    %p61 = scmp.eq.s32.totalorder %s13, 1
    %p62 = por %p60, %p61
    %p64 = scmp.ne.s32.totalorder %s47, %s63
    %p65 = scmp.eq.s32.totalorder %s13, 0
    %p66 = por %p64, %p65
    %p67 = scmp.le.s32.totalorder 1, %s7
    %p68 = scmp.lt.s32.totalorder %s7, 3
    %p69 = pnand %p67, %p68
    %p70 = pneg %p69
    // Predicated region
    $region9: #{_lambda_.28} parent=5 // pred_check
      _
    $region10: #{_lambda_.28} parent=5 // pred_check_branch
      %72 = sbr.rel (%p69) target = $region12
    $region11: #{_lambda_.28} parent=5 // pred_region
      %s73 = ssub.s32 %s7, 1
    $region12: #{_lambda_.28} parent=5 // pred_fallthru
      _
    %p74 = scmp.lt.s32.totalorder %s7, 2
    // Predicated region
    $region13: #{_lambda_.28} parent=5 // pred_check
      %p75 = pneg %p74
    $region14: #{_lambda_.28} parent=5 // pred_check_branch
      %77 = sbr.rel (%p75) target = $region16
    $region15: #{_lambda_.28} parent=5 // pred_region
      // Predicated region
      $region17: #{_lambda_.28} parent=15 // pred_check
        %p78 = pneg %p27
      $region18: #{_lambda_.28} parent=15 // pred_check_branch
        %80 = sbr.rel (%p78) target = $region20
      $region19: #{_lambda_.28} parent=15 // pred_region
        %p81 = scmp.lt.s32.totalorder %s7, 1
        %s82 = scalar_select %p81, %s7, 1
        %s83 = smul.addr %s82, 8
        %s84 = smul.addr %s83, 4
        %s85 = scalar_lea.vmem %s0, %s84
      $region20: #{_lambda_.28} parent=15 // pred_fallthru
        _
    $region16: #{_lambda_.28} parent=5 // pred_fallthru
      _
    %p86 = scmp.le.s32.totalorder 1, %s7
    %p87 = scmp.lt.s32.totalorder %s7, 3
    %p88 = pnand %p86, %p87
    %p89 = pneg %p88
    // Predicated region
    $region21: #{_lambda_.28} parent=5 // pred_check
      _
    $region22: #{_lambda_.28} parent=5 // pred_check_branch
      %91 = sbr.rel (%p88) target = $region24
    $region23: #{_lambda_.28} parent=5 // pred_region
      %s92 = ssub.s32 %s7, 1
      %p93 = scmp.lt.s32.totalorder %s12, 1
      %s94 = scalar_select %p93, %s12, 1
      %s95 = smul.addr %s94, 8
      %s96 = smul.addr %s95, 4
      %s97 = scalar_lea.vmem %s0, %s96
      %p98 = pneg %p33
      %p99 = pneg %p30
      %p100 = pneg %p59
      %p101 = pneg %p56
      %p102 = scmp.lt.s32.totalorder %s12, 1
      %s103 = scalar_select %p102, %s12, 1
      %s104 = smul.addr %s103, 128
      %s105 = scalar_lea.vmem %s1, %s104
      %p106 = scmp.lt.s32.totalorder %s12, 1
      %s107 = scalar_select %p106, %s12, 1
      %s108 = smul.addr %s107, 8
      %s109 = smul.addr %s108, 4
      %s110 = scalar_lea.vmem %s0, %s109
      %p111 = scmp.lt.s32.totalorder %s12, 1
      %s112 = scalar_select %p111, %s12, 1
      %s113 = smul.addr %s112, 128
      %s114 = scalar_lea.vmem %s1, %s113
      %v115 = vld [vmem:[%s110] sm:$0xf]
      %v116 = vld [vmem:[%s110 + $0x4] sm:$0xf]
      %v117 = vld [vmem:[%s110 + $0x8] sm:$0xf]
      %v118 = vld [vmem:[%s110 + $0xc] sm:$0xf]
      %v119 = vld [vmem:[%s110 + $0x10] sm:$0xf]
      %v120 = vld [vmem:[%s110 + $0x14] sm:$0xf]
      %v121 = vld [vmem:[%s110 + $0x18] sm:$0xf]
      %v122 = vld [vmem:[%s110 + $0x1c] sm:$0xf]
      %v123 = vunpack.c.l.bf16 %v115
      %v124 = vunpack.c.l.bf16 %v116
      %v125 = vunpack.c.l.bf16 %v117
      %v126 = vunpack.c.l.bf16 %v118
      %v127 = vunpack.c.l.bf16 %v119
      %v128 = vunpack.c.l.bf16 %v120
      %v129 = vunpack.c.l.bf16 %v121
      %v130 = vunpack.c.l.bf16 %v122
      %v131 = vmul.f32 %v123, 0.25
      %v132 = vmul.f32 %v124, 0.25
      %v133 = vmul.f32 %v125, 0.25
      %v134 = vmul.f32 %v126, 0.25
      %v135 = vmul.f32 %v127, 0.25
      %v136 = vmul.f32 %v128, 0.25
      %v137 = vmul.f32 %v129, 0.25
      %v138 = vmul.f32 %v123, 0.75
      %v139 = vmul.f32 %v124, 0.75
      %v140 = vmul.f32 %v125, 0.75
      %v141 = vmul.f32 %v126, 0.75
      %v142 = vmul.f32 %v127, 0.75
      %v143 = vmul.f32 %v128, 0.75
      %v144 = vmul.f32 %v129, 0.75
      %v145 = vmul.f32 %v130, 0.75
      %v146 = vadd.f32 %v131, %v138
      %v147 = vadd.f32 %v131, %v139
      %v148 = vadd.f32 %v132, %v140
      %v149 = vadd.f32 %v133, %v141
      %v150 = vadd.f32 %v134, %v142
      %v151 = vadd.f32 %v135, %v143
      %v152 = vadd.f32 %v136, %v144
      %v153 = vadd.f32 %v137, %v145
      %v154 = vmul.f32 %v130, 0.25
      %v155 = vadd.f32 %v138, %v132
      %v156 = vadd.f32 %v139, %v133
      %v157 = vadd.f32 %v140, %v134
      %v158 = vadd.f32 %v141, %v135
      %v159 = vadd.f32 %v142, %v136
      %v160 = vadd.f32 %v143, %v137
      %v161 = vadd.f32 %v144, %v154
      %v162 = vadd.f32 %v145, %v154
      %v163 = vpack.c.bf16 %v146, %v146
      %v164 = vpack.c.bf16 %v147, %v147
      %v165 = vpack.c.bf16 %v148, %v148
      %v166 = vpack.c.bf16 %v149, %v149
      %v167 = vpack.c.bf16 %v150, %v150
      %v168 = vpack.c.bf16 %v151, %v151
      %v169 = vpack.c.bf16 %v152, %v152
      %v170 = vpack.c.bf16 %v153, %v153
      %vm171 = vcmask 122880
      %vm172 = vsmask.f32 256
      %vm173 = vmand %vm171, %vm172
      %v174 = vld [vmem:[%s114] sm:$0x1]
      %v175 = vsel %vm173, %v163, %v174
      %176 = vst [vmem:[%s114] sm:$0x1] %v175
      %v177 = vld [vmem:[%s114 + $0x10] sm:$0x1]
      %v178 = vsel %vm173, %v164, %v177
      %179 = vst [vmem:[%s114 + $0x10] sm:$0x1] %v178
      %v180 = vld [vmem:[%s114 + $0x20] sm:$0x1]
      %v181 = vsel %vm173, %v165, %v180
      %182 = vst [vmem:[%s114 + $0x20] sm:$0x1] %v181
      %v183 = vld [vmem:[%s114 + $0x30] sm:$0x1]
      %v184 = vsel %vm173, %v166, %v183
      %185 = vst [vmem:[%s114 + $0x30] sm:$0x1] %v184
      %v186 = vld [vmem:[%s114 + $0x40] sm:$0x1]
      %v187 = vsel %vm173, %v167, %v186
      %188 = vst [vmem:[%s114 + $0x40] sm:$0x1] %v187
      %v189 = vld [vmem:[%s114 + $0x50] sm:$0x1]
      %v190 = vsel %vm173, %v168, %v189
      %191 = vst [vmem:[%s114 + $0x50] sm:$0x1] %v190
      %v192 = vld [vmem:[%s114 + $0x60] sm:$0x1]
      %v193 = vsel %vm173, %v169, %v192
      %194 = vst [vmem:[%s114 + $0x60] sm:$0x1] %v193
      %v195 = vld [vmem:[%s114 + $0x70] sm:$0x1]
      %v196 = vsel %vm173, %v170, %v195
      %197 = vst [vmem:[%s114 + $0x70] sm:$0x1] %v196
      %v198 = vmul.f32 %v146, 0.25
      %v199 = vmul.f32 %v147, 0.25
      %v200 = vmul.f32 %v148, 0.25
      %v201 = vmul.f32 %v149, 0.25
      %v202 = vmul.f32 %v150, 0.25
      %v203 = vmul.f32 %v151, 0.25
      %v204 = vmul.f32 %v152, 0.25
      %v205 = vmul.f32 %v153, 0.25
      %v206 = vmul.f32 %v146, 0.75
      %v207 = vmul.f32 %v147, 0.75
      %v208 = vmul.f32 %v148, 0.75
      %v209 = vmul.f32 %v149, 0.75
      %v210 = vmul.f32 %v150, 0.75
      %v211 = vmul.f32 %v151, 0.75
      %v212 = vmul.f32 %v152, 0.75
      %v213 = vmul.f32 %v153, 0.75
      %v222 = vrot.slane %v206, 1
      %v223 = vrot.slane %v207, 1
      %v224 = vrot.slane %v208, 1
      %v225 = vrot.slane %v209, 1
      %v226 = vrot.slane %v210, 1
      %v227 = vrot.slane %v211, 1
      %v228 = vrot.slane %v212, 1
      %v229 = vrot.slane %v213, 1
      %v238 = vadd.f32 %v198, %v222
      %v239 = vadd.f32 %v199, %v223
      %v240 = vadd.f32 %v200, %v224
      %v241 = vadd.f32 %v201, %v225
      %v242 = vadd.f32 %v202, %v226
      %v243 = vadd.f32 %v203, %v227
      %v244 = vadd.f32 %v204, %v228
      %v245 = vadd.f32 %v205, %v229
      %v246 = vpack.c.bf16 %v238, %v238
      %v247 = vpack.c.bf16 %v239, %v239
      %v248 = vpack.c.bf16 %v240, %v240
      %v249 = vpack.c.bf16 %v241, %v241
      %v250 = vpack.c.bf16 %v242, %v242
      %v251 = vpack.c.bf16 %v243, %v243
      %v252 = vpack.c.bf16 %v244, %v244
      %v253 = vpack.c.bf16 %v245, %v245
      %v262 = vrot.slane %v246, 3
      %v263 = vrot.slane %v247, 3
      %v264 = vrot.slane %v248, 3
      %v265 = vrot.slane %v249, 3
      %v266 = vrot.slane %v250, 3
      %v267 = vrot.slane %v251, 3
      %v268 = vrot.slane %v252, 3
      %v269 = vrot.slane %v253, 3
      %vm270 = vcmask 1040384
      %v273 = vsel %vm270, %v246, %v262
      %vm275 = vcmask 1041409
      %v276 = vsel %vm275, %v246, %v262
      %v278 = vrot.slane %v276, 1
      %vm279 = vcmask 1042434
      %v280 = vsel %vm279, %v246, %v262
      %v282 = vrot.slane %v280, 2
      %vm283 = vcmask 1043459
      %v284 = vsel %vm283, %v246, %v262
      %v286 = vrot.slane %v284, 3
      %v289 = vsel %vm270, %v247, %v263
      %v291 = vsel %vm275, %v247, %v263
      %v293 = vrot.slane %v291, 1
      %v294 = vsel %vm279, %v247, %v263
      %v296 = vrot.slane %v294, 2
      %v297 = vsel %vm283, %v247, %v263
      %v299 = vrot.slane %v297, 3
      %v302 = vsel %vm270, %v248, %v264
      %v304 = vsel %vm275, %v248, %v264
      %v306 = vrot.slane %v304, 1
      %v307 = vsel %vm279, %v248, %v264
      %v309 = vrot.slane %v307, 2
      %v310 = vsel %vm283, %v248, %v264
      %v312 = vrot.slane %v310, 3
      %v315 = vsel %vm270, %v249, %v265
      %v317 = vsel %vm275, %v249, %v265
      %v319 = vrot.slane %v317, 1
      %v320 = vsel %vm279, %v249, %v265
      %v322 = vrot.slane %v320, 2
      %v323 = vsel %vm283, %v249, %v265
      %v325 = vrot.slane %v323, 3
      %v328 = vsel %vm270, %v250, %v266
      %v330 = vsel %vm275, %v250, %v266
      %v332 = vrot.slane %v330, 1
      %v333 = vsel %vm279, %v250, %v266
      %v335 = vrot.slane %v333, 2
      %v336 = vsel %vm283, %v250, %v266
      %v338 = vrot.slane %v336, 3
      %v341 = vsel %vm270, %v251, %v267
      %v343 = vsel %vm275, %v251, %v267
      %v345 = vrot.slane %v343, 1
      %v346 = vsel %vm279, %v251, %v267
      %v348 = vrot.slane %v346, 2
      %v349 = vsel %vm283, %v251, %v267
      %v351 = vrot.slane %v349, 3
      %v354 = vsel %vm270, %v252, %v268
      %v356 = vsel %vm275, %v252, %v268
      %v358 = vrot.slane %v356, 1
      %v359 = vsel %vm279, %v252, %v268
      %v361 = vrot.slane %v359, 2
      %v362 = vsel %vm283, %v252, %v268
      %v364 = vrot.slane %v362, 3
      %v367 = vsel %vm270, %v253, %v269
      %v369 = vsel %vm275, %v253, %v269
      %v371 = vrot.slane %v369, 1
      %v372 = vsel %vm279, %v253, %v269
      %v374 = vrot.slane %v372, 2
      %v375 = vsel %vm283, %v253, %v269
      %v377 = vrot.slane %v375, 3
      %v378 = vunpack.i.l.s16 %v273
      %v379 = vunpack.i.h.s16 %v273
      %v380 = vunpack.i.l.s16 %v278
      %v381 = vunpack.i.h.s16 %v278
      %v382 = vunpack.i.l.s16 %v282
      %v383 = vunpack.i.h.s16 %v282
      %v384 = vunpack.i.l.s16 %v286
      %v385 = vunpack.i.l.s16 %v289
      %v386 = vunpack.i.h.s16 %v289
      %v387 = vunpack.i.l.s16 %v293
      %v388 = vunpack.i.h.s16 %v293
      %v389 = vunpack.i.l.s16 %v296
      %v390 = vunpack.i.h.s16 %v296
      %v391 = vunpack.i.l.s16 %v299
      %v392 = vunpack.i.l.s16 %v302
      %v393 = vunpack.i.h.s16 %v302
      %v394 = vunpack.i.l.s16 %v306
      %v395 = vunpack.i.h.s16 %v306
      %v396 = vunpack.i.l.s16 %v309
      %v397 = vunpack.i.h.s16 %v309
      %v398 = vunpack.i.l.s16 %v312
      %v399 = vunpack.i.l.s16 %v315
      %v400 = vunpack.i.h.s16 %v315
      %v401 = vunpack.i.l.s16 %v319
      %v402 = vunpack.i.h.s16 %v319
      %v403 = vunpack.i.l.s16 %v322
      %v404 = vunpack.i.h.s16 %v322
      %v405 = vunpack.i.l.s16 %v325
      %v406 = vunpack.i.l.s16 %v328
      %v407 = vunpack.i.h.s16 %v328
      %v408 = vunpack.i.l.s16 %v332
      %v409 = vunpack.i.h.s16 %v332
      %v410 = vunpack.i.l.s16 %v335
      %v411 = vunpack.i.h.s16 %v335
      %v412 = vunpack.i.l.s16 %v338
      %v413 = vunpack.i.l.s16 %v341
      %v414 = vunpack.i.h.s16 %v341
      %v415 = vunpack.i.l.s16 %v345
      %v416 = vunpack.i.h.s16 %v345
      %v417 = vunpack.i.l.s16 %v348
      %v418 = vunpack.i.h.s16 %v348
      %v419 = vunpack.i.l.s16 %v351
      %v420 = vunpack.i.l.s16 %v354
      %v421 = vunpack.i.h.s16 %v354
      %v422 = vunpack.i.l.s16 %v358
      %v423 = vunpack.i.h.s16 %v358
      %v424 = vunpack.i.l.s16 %v361
      %v425 = vunpack.i.h.s16 %v361
      %v426 = vunpack.i.l.s16 %v364
      %v427 = vunpack.i.l.s16 %v367
      %v428 = vunpack.i.h.s16 %v367
      %v429 = vunpack.i.l.s16 %v371
      %v430 = vunpack.i.h.s16 %v371
      %v431 = vunpack.i.l.s16 %v374
      %v432 = vunpack.i.h.s16 %v374
      %v433 = vunpack.i.l.s16 %v377
      %v434 = vpack.i.b16 %v378, %v378
      %v435 = vpack.i.b16 %v379, %v379
      %v436 = vpack.i.b16 %v380, %v380
      %v437 = vpack.i.b16 %v381, %v381
      %v438 = vpack.i.b16 %v382, %v382
      %v439 = vpack.i.b16 %v383, %v383
      %v440 = vpack.i.b16 %v384, %v384
      %v441 = vpack.i.b16 %v385, %v385
      %v442 = vpack.i.b16 %v386, %v386
      %v443 = vpack.i.b16 %v387, %v387
      %v444 = vpack.i.b16 %v388, %v388
      %v445 = vpack.i.b16 %v389, %v389
      %v446 = vpack.i.b16 %v390, %v390
      %v447 = vpack.i.b16 %v391, %v391
      %v448 = vpack.i.b16 %v392, %v392
      %v449 = vpack.i.b16 %v393, %v393
      %v450 = vpack.i.b16 %v394, %v394
      %v451 = vpack.i.b16 %v395, %v395
      %v452 = vpack.i.b16 %v396, %v396
      %v453 = vpack.i.b16 %v397, %v397
      %v454 = vpack.i.b16 %v398, %v398
      %v455 = vpack.i.b16 %v399, %v399
      %v456 = vpack.i.b16 %v400, %v400
      %v457 = vpack.i.b16 %v401, %v401
      %v458 = vpack.i.b16 %v402, %v402
      %v459 = vpack.i.b16 %v403, %v403
      %v460 = vpack.i.b16 %v404, %v404
      %v461 = vpack.i.b16 %v405, %v405
      %v462 = vpack.i.b16 %v406, %v406
      %v463 = vpack.i.b16 %v407, %v407
      %v464 = vpack.i.b16 %v408, %v408
      %v465 = vpack.i.b16 %v409, %v409
      %v466 = vpack.i.b16 %v410, %v410
      %v467 = vpack.i.b16 %v411, %v411
      %v468 = vpack.i.b16 %v412, %v412
      %v469 = vpack.i.b16 %v413, %v413
      %v470 = vpack.i.b16 %v414, %v414
      %v471 = vpack.i.b16 %v415, %v415
      %v472 = vpack.i.b16 %v416, %v416
      %v473 = vpack.i.b16 %v417, %v417
      %v474 = vpack.i.b16 %v418, %v418
      %v475 = vpack.i.b16 %v419, %v419
      %v476 = vpack.i.b16 %v420, %v420
      %v477 = vpack.i.b16 %v421, %v421
      %v478 = vpack.i.b16 %v422, %v422
      %v479 = vpack.i.b16 %v423, %v423
      %v480 = vpack.i.b16 %v424, %v424
      %v481 = vpack.i.b16 %v425, %v425
      %v482 = vpack.i.b16 %v426, %v426
      %v483 = vpack.i.b16 %v427, %v427
      %v484 = vpack.i.b16 %v428, %v428
      %v485 = vpack.i.b16 %v429, %v429
      %v486 = vpack.i.b16 %v430, %v430
      %v487 = vpack.i.b16 %v431, %v431
      %v488 = vpack.i.b16 %v432, %v432
      %v489 = vpack.i.b16 %v433, %v433
      %s546 = scalar_lea.vmem %s114, 1
      %v547 = vld [vmem:[%s546] sm:$0x1]
      %v548 = vsel %vm173, %v434, %v547
      %549 = vst [vmem:[%s546] sm:$0x1] %v548
      %v550 = vld [vmem:[%s546 + $0x1] sm:$0x1]
      %v551 = vsel %vm173, %v435, %v550
      %552 = vst [vmem:[%s546 + $0x1] sm:$0x1] %v551
      %v553 = vld [vmem:[%s546 + $0x2] sm:$0x1]
      %v554 = vsel %vm173, %v436, %v553
      %555 = vst [vmem:[%s546 + $0x2] sm:$0x1] %v554
      %v556 = vld [vmem:[%s546 + $0x3] sm:$0x1]
      %v557 = vsel %vm173, %v437, %v556
      %558 = vst [vmem:[%s546 + $0x3] sm:$0x1] %v557
      %v559 = vld [vmem:[%s546 + $0x4] sm:$0x1]
      %v560 = vsel %vm173, %v438, %v559
      %561 = vst [vmem:[%s546 + $0x4] sm:$0x1] %v560
      %v562 = vld [vmem:[%s546 + $0x5] sm:$0x1]
      %v563 = vsel %vm173, %v439, %v562
      %564 = vst [vmem:[%s546 + $0x5] sm:$0x1] %v563
      %v565 = vld [vmem:[%s546 + $0x6] sm:$0x1]
      %v566 = vsel %vm173, %v440, %v565
      %567 = vst [vmem:[%s546 + $0x6] sm:$0x1] %v566
      %v568 = vld [vmem:[%s546 + $0x10] sm:$0x1]
      %v569 = vsel %vm173, %v441, %v568
      %570 = vst [vmem:[%s546 + $0x10] sm:$0x1] %v569
      %v571 = vld [vmem:[%s546 + $0x11] sm:$0x1]
      %v572 = vsel %vm173, %v442, %v571
      %573 = vst [vmem:[%s546 + $0x11] sm:$0x1] %v572
      %v574 = vld [vmem:[%s546 + $0x12] sm:$0x1]
      %v575 = vsel %vm173, %v443, %v574
      %576 = vst [vmem:[%s546 + $0x12] sm:$0x1] %v575
      %v577 = vld [vmem:[%s546 + $0x13] sm:$0x1]
      %v578 = vsel %vm173, %v444, %v577
      %579 = vst [vmem:[%s546 + $0x13] sm:$0x1] %v578
      %v580 = vld [vmem:[%s546 + $0x14] sm:$0x1]
      %v581 = vsel %vm173, %v445, %v580
      %582 = vst [vmem:[%s546 + $0x14] sm:$0x1] %v581
      %v583 = vld [vmem:[%s546 + $0x15] sm:$0x1]
      %v584 = vsel %vm173, %v446, %v583
      %585 = vst [vmem:[%s546 + $0x15] sm:$0x1] %v584
      %v586 = vld [vmem:[%s546 + $0x16] sm:$0x1]
      %v587 = vsel %vm173, %v447, %v586
      %588 = vst [vmem:[%s546 + $0x16] sm:$0x1] %v587
      %v589 = vld [vmem:[%s546 + $0x20] sm:$0x1]
      %v590 = vsel %vm173, %v448, %v589
      %591 = vst [vmem:[%s546 + $0x20] sm:$0x1] %v590
      %v592 = vld [vmem:[%s546 + $0x21] sm:$0x1]
      %v593 = vsel %vm173, %v449, %v592
      %594 = vst [vmem:[%s546 + $0x21] sm:$0x1] %v593
      %v595 = vld [vmem:[%s546 + $0x22] sm:$0x1]
      %v596 = vsel %vm173, %v450, %v595
      %597 = vst [vmem:[%s546 + $0x22] sm:$0x1] %v596
      %v598 = vld [vmem:[%s546 + $0x23] sm:$0x1]
      %v599 = vsel %vm173, %v451, %v598
      %600 = vst [vmem:[%s546 + $0x23] sm:$0x1] %v599
      %v601 = vld [vmem:[%s546 + $0x24] sm:$0x1]
      %v602 = vsel %vm173, %v452, %v601
      %603 = vst [vmem:[%s546 + $0x24] sm:$0x1] %v602
      %v604 = vld [vmem:[%s546 + $0x25] sm:$0x1]
      %v605 = vsel %vm173, %v453, %v604
      %606 = vst [vmem:[%s546 + $0x25] sm:$0x1] %v605
      %v607 = vld [vmem:[%s546 + $0x26] sm:$0x1]
      %v608 = vsel %vm173, %v454, %v607
      %609 = vst [vmem:[%s546 + $0x26] sm:$0x1] %v608
      %v610 = vld [vmem:[%s546 + $0x30] sm:$0x1]
      %v611 = vsel %vm173, %v455, %v610
      %612 = vst [vmem:[%s546 + $0x30] sm:$0x1] %v611
      %v613 = vld [vmem:[%s546 + $0x31] sm:$0x1]
      %v614 = vsel %vm173, %v456, %v613
      %615 = vst [vmem:[%s546 + $0x31] sm:$0x1] %v614
      %v616 = vld [vmem:[%s546 + $0x32] sm:$0x1]
      %v617 = vsel %vm173, %v457, %v616
      %618 = vst [vmem:[%s546 + $0x32] sm:$0x1] %v617
      %v619 = vld [vmem:[%s546 + $0x33] sm:$0x1]
      %v620 = vsel %vm173, %v458, %v619
      %621 = vst [vmem:[%s546 + $0x33] sm:$0x1] %v620
      %v622 = vld [vmem:[%s546 + $0x34] sm:$0x1]
      %v623 = vsel %vm173, %v459, %v622
      %624 = vst [vmem:[%s546 + $0x34] sm:$0x1] %v623
      %v625 = vld [vmem:[%s546 + $0x35] sm:$0x1]
      %v626 = vsel %vm173, %v460, %v625
      %627 = vst [vmem:[%s546 + $0x35] sm:$0x1] %v626
      %v628 = vld [vmem:[%s546 + $0x36] sm:$0x1]
      %v629 = vsel %vm173, %v461, %v628
      %630 = vst [vmem:[%s546 + $0x36] sm:$0x1] %v629
      %v631 = vld [vmem:[%s546 + $0x40] sm:$0x1]
      %v632 = vsel %vm173, %v462, %v631
      %633 = vst [vmem:[%s546 + $0x40] sm:$0x1] %v632
      %v634 = vld [vmem:[%s546 + $0x41] sm:$0x1]
      %v635 = vsel %vm173, %v463, %v634
      %636 = vst [vmem:[%s546 + $0x41] sm:$0x1] %v635
      %v637 = vld [vmem:[%s546 + $0x42] sm:$0x1]
      %v638 = vsel %vm173, %v464, %v637
      %639 = vst [vmem:[%s546 + $0x42] sm:$0x1] %v638
      %v640 = vld [vmem:[%s546 + $0x43] sm:$0x1]
      %v641 = vsel %vm173, %v465, %v640
      %642 = vst [vmem:[%s546 + $0x43] sm:$0x1] %v641
      %v643 = vld [vmem:[%s546 + $0x44] sm:$0x1]
      %v644 = vsel %vm173, %v466, %v643
      %645 = vst [vmem:[%s546 + $0x44] sm:$0x1] %v644
      %v646 = vld [vmem:[%s546 + $0x45] sm:$0x1]
      %v647 = vsel %vm173, %v467, %v646
      %648 = vst [vmem:[%s546 + $0x45] sm:$0x1] %v647
      %v649 = vld [vmem:[%s546 + $0x46] sm:$0x1]
      %v650 = vsel %vm173, %v468, %v649
      %651 = vst [vmem:[%s546 + $0x46] sm:$0x1] %v650
      %v652 = vld [vmem:[%s546 + $0x50] sm:$0x1]
      %v653 = vsel %vm173, %v469, %v652
      %654 = vst [vmem:[%s546 + $0x50] sm:$0x1] %v653
      %v655 = vld [vmem:[%s546 + $0x51] sm:$0x1]
      %v656 = vsel %vm173, %v470, %v655
      %657 = vst [vmem:[%s546 + $0x51] sm:$0x1] %v656
      %v658 = vld [vmem:[%s546 + $0x52] sm:$0x1]
      %v659 = vsel %vm173, %v471, %v658
      %660 = vst [vmem:[%s546 + $0x52] sm:$0x1] %v659
      %v661 = vld [vmem:[%s546 + $0x53] sm:$0x1]
      %v662 = vsel %vm173, %v472, %v661
      %663 = vst [vmem:[%s546 + $0x53] sm:$0x1] %v662
      %v664 = vld [vmem:[%s546 + $0x54] sm:$0x1]
      %v665 = vsel %vm173, %v473, %v664
      %666 = vst [vmem:[%s546 + $0x54] sm:$0x1] %v665
      %v667 = vld [vmem:[%s546 + $0x55] sm:$0x1]
      %v668 = vsel %vm173, %v474, %v667
      %669 = vst [vmem:[%s546 + $0x55] sm:$0x1] %v668
      %v670 = vld [vmem:[%s546 + $0x56] sm:$0x1]
      %v671 = vsel %vm173, %v475, %v670
      %672 = vst [vmem:[%s546 + $0x56] sm:$0x1] %v671
      %v673 = vld [vmem:[%s546 + $0x60] sm:$0x1]
      %v674 = vsel %vm173, %v476, %v673
      %675 = vst [vmem:[%s546 + $0x60] sm:$0x1] %v674
      %v676 = vld [vmem:[%s546 + $0x61] sm:$0x1]
      %v677 = vsel %vm173, %v477, %v676
      %678 = vst [vmem:[%s546 + $0x61] sm:$0x1] %v677
      %v679 = vld [vmem:[%s546 + $0x62] sm:$0x1]
      %v680 = vsel %vm173, %v478, %v679
      %681 = vst [vmem:[%s546 + $0x62] sm:$0x1] %v680
      %v682 = vld [vmem:[%s546 + $0x63] sm:$0x1]
      %v683 = vsel %vm173, %v479, %v682
      %684 = vst [vmem:[%s546 + $0x63] sm:$0x1] %v683
      %v685 = vld [vmem:[%s546 + $0x64] sm:$0x1]
      %v686 = vsel %vm173, %v480, %v685
      %687 = vst [vmem:[%s546 + $0x64] sm:$0x1] %v686
      %v688 = vld [vmem:[%s546 + $0x65] sm:$0x1]
      %v689 = vsel %vm173, %v481, %v688
      %690 = vst [vmem:[%s546 + $0x65] sm:$0x1] %v689
      %v691 = vld [vmem:[%s546 + $0x66] sm:$0x1]
      %v692 = vsel %vm173, %v482, %v691
      %693 = vst [vmem:[%s546 + $0x66] sm:$0x1] %v692
      %v694 = vld [vmem:[%s546 + $0x70] sm:$0x1]
      %v695 = vsel %vm173, %v483, %v694
      %696 = vst [vmem:[%s546 + $0x70] sm:$0x1] %v695
      %v697 = vld [vmem:[%s546 + $0x71] sm:$0x1]
      %v698 = vsel %vm173, %v484, %v697
      %699 = vst [vmem:[%s546 + $0x71] sm:$0x1] %v698
      %v700 = vld [vmem:[%s546 + $0x72] sm:$0x1]
      %v701 = vsel %vm173, %v485, %v700
      %702 = vst [vmem:[%s546 + $0x72] sm:$0x1] %v701
      %v703 = vld [vmem:[%s546 + $0x73] sm:$0x1]
      %v704 = vsel %vm173, %v486, %v703
      %705 = vst [vmem:[%s546 + $0x73] sm:$0x1] %v704
      %v706 = vld [vmem:[%s546 + $0x74] sm:$0x1]
      %v707 = vsel %vm173, %v487, %v706
      %708 = vst [vmem:[%s546 + $0x74] sm:$0x1] %v707
      %v709 = vld [vmem:[%s546 + $0x75] sm:$0x1]
      %v710 = vsel %vm173, %v488, %v709
      %711 = vst [vmem:[%s546 + $0x75] sm:$0x1] %v710
      %v712 = vld [vmem:[%s546 + $0x76] sm:$0x1]
      %v713 = vsel %vm173, %v489, %v712
      %714 = vst [vmem:[%s546 + $0x76] sm:$0x1] %v713
      %v723 = vrot.slane %v198, 1
      %v724 = vrot.slane %v199, 1
      %v725 = vrot.slane %v200, 1
      %v726 = vrot.slane %v201, 1
      %v727 = vrot.slane %v202, 1
      %v728 = vrot.slane %v203, 1
      %v729 = vrot.slane %v204, 1
      %v730 = vrot.slane %v205, 1
      %v739 = vadd.f32 %v206, %v723
      %v740 = vadd.f32 %v207, %v724
      %v741 = vadd.f32 %v208, %v725
      %v742 = vadd.f32 %v209, %v726
      %v743 = vadd.f32 %v210, %v727
      %v744 = vadd.f32 %v211, %v728
      %v745 = vadd.f32 %v212, %v729
      %v746 = vadd.f32 %v213, %v730
      %v747 = vpack.c.bf16 %v739, %v739
      %v748 = vpack.c.bf16 %v740, %v740
      %v749 = vpack.c.bf16 %v741, %v741
      %v750 = vpack.c.bf16 %v742, %v742
      %v751 = vpack.c.bf16 %v743, %v743
      %v752 = vpack.c.bf16 %v744, %v744
      %v753 = vpack.c.bf16 %v745, %v745
      %v754 = vpack.c.bf16 %v746, %v746
      %v763 = vrot.slane %v747, 3
      %v764 = vrot.slane %v748, 3
      %v765 = vrot.slane %v749, 3
      %v766 = vrot.slane %v750, 3
      %v767 = vrot.slane %v751, 3
      %v768 = vrot.slane %v752, 3
      %v769 = vrot.slane %v753, 3
      %v770 = vrot.slane %v754, 3
      %v773 = vsel %vm270, %v747, %v763
      %v775 = vsel %vm275, %v747, %v763
      %v777 = vrot.slane %v775, 1
      %v778 = vsel %vm279, %v747, %v763
      %v780 = vrot.slane %v778, 2
      %v781 = vsel %vm283, %v747, %v763
      %v783 = vrot.slane %v781, 3
      %v786 = vsel %vm270, %v748, %v764
      %v788 = vsel %vm275, %v748, %v764
      %v790 = vrot.slane %v788, 1
      %v791 = vsel %vm279, %v748, %v764
      %v793 = vrot.slane %v791, 2
      %v794 = vsel %vm283, %v748, %v764
      %v796 = vrot.slane %v794, 3
      %v799 = vsel %vm270, %v749, %v765
      %v801 = vsel %vm275, %v749, %v765
      %v803 = vrot.slane %v801, 1
      %v804 = vsel %vm279, %v749, %v765
      %v806 = vrot.slane %v804, 2
      %v807 = vsel %vm283, %v749, %v765
      %v809 = vrot.slane %v807, 3
      %v812 = vsel %vm270, %v750, %v766
      %v814 = vsel %vm275, %v750, %v766
      %v816 = vrot.slane %v814, 1
      %v817 = vsel %vm279, %v750, %v766
      %v819 = vrot.slane %v817, 2
      %v820 = vsel %vm283, %v750, %v766
      %v822 = vrot.slane %v820, 3
      %v825 = vsel %vm270, %v751, %v767
      %v827 = vsel %vm275, %v751, %v767
      %v829 = vrot.slane %v827, 1
      %v830 = vsel %vm279, %v751, %v767
      %v832 = vrot.slane %v830, 2
      %v833 = vsel %vm283, %v751, %v767
      %v835 = vrot.slane %v833, 3
      %v838 = vsel %vm270, %v752, %v768
      %v840 = vsel %vm275, %v752, %v768
      %v842 = vrot.slane %v840, 1
      %v843 = vsel %vm279, %v752, %v768
      %v845 = vrot.slane %v843, 2
      %v846 = vsel %vm283, %v752, %v768
      %v848 = vrot.slane %v846, 3
      %v851 = vsel %vm270, %v753, %v769
      %v853 = vsel %vm275, %v753, %v769
      %v855 = vrot.slane %v853, 1
      %v856 = vsel %vm279, %v753, %v769
      %v858 = vrot.slane %v856, 2
      %v859 = vsel %vm283, %v753, %v769
      %v861 = vrot.slane %v859, 3
      %v864 = vsel %vm270, %v754, %v770
      %v866 = vsel %vm275, %v754, %v770
      %v868 = vrot.slane %v866, 1
      %v869 = vsel %vm279, %v754, %v770
      %v871 = vrot.slane %v869, 2
      %v872 = vsel %vm283, %v754, %v770
      %v874 = vrot.slane %v872, 3
      %v875 = vunpack.i.l.s16 %v773
      %v876 = vunpack.i.h.s16 %v773
      %v877 = vunpack.i.l.s16 %v777
      %v878 = vunpack.i.h.s16 %v777
      %v879 = vunpack.i.l.s16 %v780
      %v880 = vunpack.i.h.s16 %v780
      %v881 = vunpack.i.l.s16 %v783
      %v882 = vunpack.i.l.s16 %v786
      %v883 = vunpack.i.h.s16 %v786
      %v884 = vunpack.i.l.s16 %v790
      %v885 = vunpack.i.h.s16 %v790
      %v886 = vunpack.i.l.s16 %v793
      %v887 = vunpack.i.h.s16 %v793
      %v888 = vunpack.i.l.s16 %v796
      %v889 = vunpack.i.l.s16 %v799
      %v890 = vunpack.i.h.s16 %v799
      %v891 = vunpack.i.l.s16 %v803
      %v892 = vunpack.i.h.s16 %v803
      %v893 = vunpack.i.l.s16 %v806
      %v894 = vunpack.i.h.s16 %v806
      %v895 = vunpack.i.l.s16 %v809
      %v896 = vunpack.i.l.s16 %v812
      %v897 = vunpack.i.h.s16 %v812
      %v898 = vunpack.i.l.s16 %v816
      %v899 = vunpack.i.h.s16 %v816
      %v900 = vunpack.i.l.s16 %v819
      %v901 = vunpack.i.h.s16 %v819
      %v902 = vunpack.i.l.s16 %v822
      %v903 = vunpack.i.l.s16 %v825
      %v904 = vunpack.i.h.s16 %v825
      %v905 = vunpack.i.l.s16 %v829
      %v906 = vunpack.i.h.s16 %v829
      %v907 = vunpack.i.l.s16 %v832
      %v908 = vunpack.i.h.s16 %v832
      %v909 = vunpack.i.l.s16 %v835
      %v910 = vunpack.i.l.s16 %v838
      %v911 = vunpack.i.h.s16 %v838
      %v912 = vunpack.i.l.s16 %v842
      %v913 = vunpack.i.h.s16 %v842
      %v914 = vunpack.i.l.s16 %v845
      %v915 = vunpack.i.h.s16 %v845
      %v916 = vunpack.i.l.s16 %v848
      %v917 = vunpack.i.l.s16 %v851
      %v918 = vunpack.i.h.s16 %v851
      %v919 = vunpack.i.l.s16 %v855
      %v920 = vunpack.i.h.s16 %v855
      %v921 = vunpack.i.l.s16 %v858
      %v922 = vunpack.i.h.s16 %v858
      %v923 = vunpack.i.l.s16 %v861
      %v924 = vunpack.i.l.s16 %v864
      %v925 = vunpack.i.h.s16 %v864
      %v926 = vunpack.i.l.s16 %v868
      %v927 = vunpack.i.h.s16 %v868
      %v928 = vunpack.i.l.s16 %v871
      %v929 = vunpack.i.h.s16 %v871
      %v930 = vunpack.i.l.s16 %v874
      %v931 = vpack.i.b16 %v875, %v875
      %v932 = vpack.i.b16 %v876, %v876
      %v933 = vpack.i.b16 %v877, %v877
      %v934 = vpack.i.b16 %v878, %v878
      %v935 = vpack.i.b16 %v879, %v879
      %v936 = vpack.i.b16 %v880, %v880
      %v937 = vpack.i.b16 %v881, %v881
      %v938 = vpack.i.b16 %v882, %v882
      %v939 = vpack.i.b16 %v883, %v883
      %v940 = vpack.i.b16 %v884, %v884
      %v941 = vpack.i.b16 %v885, %v885
      %v942 = vpack.i.b16 %v886, %v886
      %v943 = vpack.i.b16 %v887, %v887
      %v944 = vpack.i.b16 %v888, %v888
      %v945 = vpack.i.b16 %v889, %v889
      %v946 = vpack.i.b16 %v890, %v890
      %v947 = vpack.i.b16 %v891, %v891
      %v948 = vpack.i.b16 %v892, %v892
      %v949 = vpack.i.b16 %v893, %v893
      %v950 = vpack.i.b16 %v894, %v894
      %v951 = vpack.i.b16 %v895, %v895
      %v952 = vpack.i.b16 %v896, %v896
      %v953 = vpack.i.b16 %v897, %v897
      %v954 = vpack.i.b16 %v898, %v898
      %v955 = vpack.i.b16 %v899, %v899
      %v956 = vpack.i.b16 %v900, %v900
      %v957 = vpack.i.b16 %v901, %v901
      %v958 = vpack.i.b16 %v902, %v902
      %v959 = vpack.i.b16 %v903, %v903
      %v960 = vpack.i.b16 %v904, %v904
      %v961 = vpack.i.b16 %v905, %v905
      %v962 = vpack.i.b16 %v906, %v906
      %v963 = vpack.i.b16 %v907, %v907
      %v964 = vpack.i.b16 %v908, %v908
      %v965 = vpack.i.b16 %v909, %v909
      %v966 = vpack.i.b16 %v910, %v910
      %v967 = vpack.i.b16 %v911, %v911
      %v968 = vpack.i.b16 %v912, %v912
      %v969 = vpack.i.b16 %v913, %v913
      %v970 = vpack.i.b16 %v914, %v914
      %v971 = vpack.i.b16 %v915, %v915
      %v972 = vpack.i.b16 %v916, %v916
      %v973 = vpack.i.b16 %v917, %v917
      %v974 = vpack.i.b16 %v918, %v918
      %v975 = vpack.i.b16 %v919, %v919
      %v976 = vpack.i.b16 %v920, %v920
      %v977 = vpack.i.b16 %v921, %v921
      %v978 = vpack.i.b16 %v922, %v922
      %v979 = vpack.i.b16 %v923, %v923
      %v980 = vpack.i.b16 %v924, %v924
      %v981 = vpack.i.b16 %v925, %v925
      %v982 = vpack.i.b16 %v926, %v926
      %v983 = vpack.i.b16 %v927, %v927
      %v984 = vpack.i.b16 %v928, %v928
      %v985 = vpack.i.b16 %v929, %v929
      %v986 = vpack.i.b16 %v930, %v930
      %vm1043 = vsmask.f32 7938
      %vm1044 = vmand %vm171, %vm1043
      %v1045 = vld [vmem:[%s114] sm:$0x1]
      %v1046 = vsel %vm1044, %v931, %v1045
      %1047 = vst [vmem:[%s114] sm:$0x1] %v1046
      %v1048 = vld [vmem:[%s114 + $0x1] sm:$0x1]
      %v1049 = vsel %vm1044, %v932, %v1048
      %1050 = vst [vmem:[%s114 + $0x1] sm:$0x1] %v1049
      %v1051 = vld [vmem:[%s114 + $0x2] sm:$0x1]
      %v1052 = vsel %vm1044, %v933, %v1051
      %1053 = vst [vmem:[%s114 + $0x2] sm:$0x1] %v1052
      %v1054 = vld [vmem:[%s114 + $0x3] sm:$0x1]
      %v1055 = vsel %vm1044, %v934, %v1054
      %1056 = vst [vmem:[%s114 + $0x3] sm:$0x1] %v1055
      %v1057 = vld [vmem:[%s114 + $0x4] sm:$0x1]
      %v1058 = vsel %vm1044, %v935, %v1057
      %1059 = vst [vmem:[%s114 + $0x4] sm:$0x1] %v1058
      %v1060 = vld [vmem:[%s114 + $0x5] sm:$0x1]
      %v1061 = vsel %vm1044, %v936, %v1060
      %1062 = vst [vmem:[%s114 + $0x5] sm:$0x1] %v1061
      %v1063 = vld [vmem:[%s114 + $0x6] sm:$0x1]
      %v1064 = vsel %vm1044, %v937, %v1063
      %1065 = vst [vmem:[%s114 + $0x6] sm:$0x1] %v1064
      %v1066 = vld [vmem:[%s114 + $0x10] sm:$0x1]
      %v1067 = vsel %vm1044, %v938, %v1066
      %1068 = vst [vmem:[%s114 + $0x10] sm:$0x1] %v1067
      %v1069 = vld [vmem:[%s114 + $0x11] sm:$0x1]
      %v1070 = vsel %vm1044, %v939, %v1069
      %1071 = vst [vmem:[%s114 + $0x11] sm:$0x1] %v1070
      %v1072 = vld [vmem:[%s114 + $0x12] sm:$0x1]
      %v1073 = vsel %vm1044, %v940, %v1072
      %1074 = vst [vmem:[%s114 + $0x12] sm:$0x1] %v1073
      %v1075 = vld [vmem:[%s114 + $0x13] sm:$0x1]
      %v1076 = vsel %vm1044, %v941, %v1075
      %1077 = vst [vmem:[%s114 + $0x13] sm:$0x1] %v1076
      %v1078 = vld [vmem:[%s114 + $0x14] sm:$0x1]
      %v1079 = vsel %vm1044, %v942, %v1078
      %1080 = vst [vmem:[%s114 + $0x14] sm:$0x1] %v1079
      %v1081 = vld [vmem:[%s114 + $0x15] sm:$0x1]
      %v1082 = vsel %vm1044, %v943, %v1081
      %1083 = vst [vmem:[%s114 + $0x15] sm:$0x1] %v1082
      %v1084 = vld [vmem:[%s114 + $0x16] sm:$0x1]
      %v1085 = vsel %vm1044, %v944, %v1084
      %1086 = vst [vmem:[%s114 + $0x16] sm:$0x1] %v1085
      %v1087 = vld [vmem:[%s114 + $0x20] sm:$0x1]
      %v1088 = vsel %vm1044, %v945, %v1087
      %1089 = vst [vmem:[%s114 + $0x20] sm:$0x1] %v1088
      %v1090 = vld [vmem:[%s114 + $0x21] sm:$0x1]
      %v1091 = vsel %vm1044, %v946, %v1090
      %1092 = vst [vmem:[%s114 + $0x21] sm:$0x1] %v1091
      %v1093 = vld [vmem:[%s114 + $0x22] sm:$0x1]
      %v1094 = vsel %vm1044, %v947, %v1093
      %1095 = vst [vmem:[%s114 + $0x22] sm:$0x1] %v1094
      %v1096 = vld [vmem:[%s114 + $0x23] sm:$0x1]
      %v1097 = vsel %vm1044, %v948, %v1096
      %1098 = vst [vmem:[%s114 + $0x23] sm:$0x1] %v1097
      %v1099 = vld [vmem:[%s114 + $0x24] sm:$0x1]
      %v1100 = vsel %vm1044, %v949, %v1099
      %1101 = vst [vmem:[%s114 + $0x24] sm:$0x1] %v1100
      %v1102 = vld [vmem:[%s114 + $0x25] sm:$0x1]
      %v1103 = vsel %vm1044, %v950, %v1102
      %1104 = vst [vmem:[%s114 + $0x25] sm:$0x1] %v1103
      %v1105 = vld [vmem:[%s114 + $0x26] sm:$0x1]
      %v1106 = vsel %vm1044, %v951, %v1105
      %1107 = vst [vmem:[%s114 + $0x26] sm:$0x1] %v1106
      %v1108 = vld [vmem:[%s114 + $0x30] sm:$0x1]
      %v1109 = vsel %vm1044, %v952, %v1108
      %1110 = vst [vmem:[%s114 + $0x30] sm:$0x1] %v1109
      %v1111 = vld [vmem:[%s114 + $0x31] sm:$0x1]
      %v1112 = vsel %vm1044, %v953, %v1111
      %1113 = vst [vmem:[%s114 + $0x31] sm:$0x1] %v1112
      %v1114 = vld [vmem:[%s114 + $0x32] sm:$0x1]
      %v1115 = vsel %vm1044, %v954, %v1114
      %1116 = vst [vmem:[%s114 + $0x32] sm:$0x1] %v1115
      %v1117 = vld [vmem:[%s114 + $0x33] sm:$0x1]
      %v1118 = vsel %vm1044, %v955, %v1117
      %1119 = vst [vmem:[%s114 + $0x33] sm:$0x1] %v1118
      %v1120 = vld [vmem:[%s114 + $0x34] sm:$0x1]
      %v1121 = vsel %vm1044, %v956, %v1120
      %1122 = vst [vmem:[%s114 + $0x34] sm:$0x1] %v1121
      %v1123 = vld [vmem:[%s114 + $0x35] sm:$0x1]
      %v1124 = vsel %vm1044, %v957, %v1123
      %1125 = vst [vmem:[%s114 + $0x35] sm:$0x1] %v1124
      %v1126 = vld [vmem:[%s114 + $0x36] sm:$0x1]
      %v1127 = vsel %vm1044, %v958, %v1126
      %1128 = vst [vmem:[%s114 + $0x36] sm:$0x1] %v1127
      %v1129 = vld [vmem:[%s114 + $0x40] sm:$0x1]
      %v1130 = vsel %vm1044, %v959, %v1129
      %1131 = vst [vmem:[%s114 + $0x40] sm:$0x1] %v1130
      %v1132 = vld [vmem:[%s114 + $0x41] sm:$0x1]
      %v1133 = vsel %vm1044, %v960, %v1132
      %1134 = vst [vmem:[%s114 + $0x41] sm:$0x1] %v1133
      %v1135 = vld [vmem:[%s114 + $0x42] sm:$0x1]
      %v1136 = vsel %vm1044, %v961, %v1135
      %1137 = vst [vmem:[%s114 + $0x42] sm:$0x1] %v1136
      %v1138 = vld [vmem:[%s114 + $0x43] sm:$0x1]
      %v1139 = vsel %vm1044, %v962, %v1138
      %1140 = vst [vmem:[%s114 + $0x43] sm:$0x1] %v1139
      %v1141 = vld [vmem:[%s114 + $0x44] sm:$0x1]
      %v1142 = vsel %vm1044, %v963, %v1141
      %1143 = vst [vmem:[%s114 + $0x44] sm:$0x1] %v1142
      %v1144 = vld [vmem:[%s114 + $0x45] sm:$0x1]
      %v1145 = vsel %vm1044, %v964, %v1144
      %1146 = vst [vmem:[%s114 + $0x45] sm:$0x1] %v1145
      %v1147 = vld [vmem:[%s114 + $0x46] sm:$0x1]
      %v1148 = vsel %vm1044, %v965, %v1147
      %1149 = vst [vmem:[%s114 + $0x46] sm:$0x1] %v1148
      %v1150 = vld [vmem:[%s114 + $0x50] sm:$0x1]
      %v1151 = vsel %vm1044, %v966, %v1150
      %1152 = vst [vmem:[%s114 + $0x50] sm:$0x1] %v1151
      %v1153 = vld [vmem:[%s114 + $0x51] sm:$0x1]
      %v1154 = vsel %vm1044, %v967, %v1153
      %1155 = vst [vmem:[%s114 + $0x51] sm:$0x1] %v1154
      %v1156 = vld [vmem:[%s114 + $0x52] sm:$0x1]
      %v1157 = vsel %vm1044, %v968, %v1156
      %1158 = vst [vmem:[%s114 + $0x52] sm:$0x1] %v1157
      %v1159 = vld [vmem:[%s114 + $0x53] sm:$0x1]
      %v1160 = vsel %vm1044, %v969, %v1159
      %1161 = vst [vmem:[%s114 + $0x53] sm:$0x1] %v1160
      %v1162 = vld [vmem:[%s114 + $0x54] sm:$0x1]
      %v1163 = vsel %vm1044, %v970, %v1162
      %1164 = vst [vmem:[%s114 + $0x54] sm:$0x1] %v1163
      %v1165 = vld [vmem:[%s114 + $0x55] sm:$0x1]
      %v1166 = vsel %vm1044, %v971, %v1165
      %1167 = vst [vmem:[%s114 + $0x55] sm:$0x1] %v1166
      %v1168 = vld [vmem:[%s114 + $0x56] sm:$0x1]
      %v1169 = vsel %vm1044, %v972, %v1168
      %1170 = vst [vmem:[%s114 + $0x56] sm:$0x1] %v1169
      %v1171 = vld [vmem:[%s114 + $0x60] sm:$0x1]
      %v1172 = vsel %vm1044, %v973, %v1171
      %1173 = vst [vmem:[%s114 + $0x60] sm:$0x1] %v1172
      %v1174 = vld [vmem:[%s114 + $0x61] sm:$0x1]
      %v1175 = vsel %vm1044, %v974, %v1174
      %1176 = vst [vmem:[%s114 + $0x61] sm:$0x1] %v1175
      %v1177 = vld [vmem:[%s114 + $0x62] sm:$0x1]
      %v1178 = vsel %vm1044, %v975, %v1177
      %1179 = vst [vmem:[%s114 + $0x62] sm:$0x1] %v1178
      %v1180 = vld [vmem:[%s114 + $0x63] sm:$0x1]
      %v1181 = vsel %vm1044, %v976, %v1180
      %1182 = vst [vmem:[%s114 + $0x63] sm:$0x1] %v1181
      %v1183 = vld [vmem:[%s114 + $0x64] sm:$0x1]
      %v1184 = vsel %vm1044, %v977, %v1183
      %1185 = vst [vmem:[%s114 + $0x64] sm:$0x1] %v1184
      %v1186 = vld [vmem:[%s114 + $0x65] sm:$0x1]
      %v1187 = vsel %vm1044, %v978, %v1186
      %1188 = vst [vmem:[%s114 + $0x65] sm:$0x1] %v1187
      %v1189 = vld [vmem:[%s114 + $0x66] sm:$0x1]
      %v1190 = vsel %vm1044, %v979, %v1189
      %1191 = vst [vmem:[%s114 + $0x66] sm:$0x1] %v1190
      %v1192 = vld [vmem:[%s114 + $0x70] sm:$0x1]
      %v1193 = vsel %vm1044, %v980, %v1192
      %1194 = vst [vmem:[%s114 + $0x70] sm:$0x1] %v1193
      %v1195 = vld [vmem:[%s114 + $0x71] sm:$0x1]
      %v1196 = vsel %vm1044, %v981, %v1195
      %1197 = vst [vmem:[%s114 + $0x71] sm:$0x1] %v1196
      %v1198 = vld [vmem:[%s114 + $0x72] sm:$0x1]
      %v1199 = vsel %vm1044, %v982, %v1198
      %1200 = vst [vmem:[%s114 + $0x72] sm:$0x1] %v1199
      %v1201 = vld [vmem:[%s114 + $0x73] sm:$0x1]
      %v1202 = vsel %vm1044, %v983, %v1201
      %1203 = vst [vmem:[%s114 + $0x73] sm:$0x1] %v1202
      %v1204 = vld [vmem:[%s114 + $0x74] sm:$0x1]
      %v1205 = vsel %vm1044, %v984, %v1204
      %1206 = vst [vmem:[%s114 + $0x74] sm:$0x1] %v1205
      %v1207 = vld [vmem:[%s114 + $0x75] sm:$0x1]
      %v1208 = vsel %vm1044, %v985, %v1207
      %1209 = vst [vmem:[%s114 + $0x75] sm:$0x1] %v1208
      %v1210 = vld [vmem:[%s114 + $0x76] sm:$0x1]
      %v1211 = vsel %vm1044, %v986, %v1210
      %1212 = vst [vmem:[%s114 + $0x76] sm:$0x1] %v1211
      %1214 = vst [vmem:[#allocation1] sm:$0xff] %v163
      %s1215 = scalar_lea.vmem [#allocation1], 3
      %v1216 = vld [vmem:[%s1215] ss:$4 sm:$0xff]
      %1218 = vst [vmem:[#allocation1 + $0x20] sm:$0xff] %v164
      %s1219 = scalar_lea.vmem [#allocation1], 35
      %v1220 = vld [vmem:[%s1219] ss:$4 sm:$0xff]
      %1222 = vst [vmem:[#allocation1] sm:$0xff] %v165
      %v1223 = vld [vmem:[%s1215] ss:$4 sm:$0xff]
      %1225 = vst [vmem:[#allocation1 + $0x20] sm:$0xff] %v166
      %v1226 = vld [vmem:[%s1219] ss:$4 sm:$0xff]
      %1228 = vst [vmem:[#allocation1] sm:$0xff] %v167
      %v1229 = vld [vmem:[%s1215] ss:$4 sm:$0xff]
      %1231 = vst [vmem:[#allocation1 + $0x20] sm:$0xff] %v168
      %v1232 = vld [vmem:[%s1219] ss:$4 sm:$0xff]
      %1234 = vst [vmem:[#allocation1] sm:$0xff] %v169
      %v1235 = vld [vmem:[%s1215] ss:$4 sm:$0xff]
      %1237 = vst [vmem:[#allocation1 + $0x20] sm:$0xff] %v170
      %v1238 = vld [vmem:[%s1219] ss:$4 sm:$0xff]
      %s1247 = scalar_lea.vmem %s114, 7
      %v1248 = vld [vmem:[%s1247] sm:$0x1]
      %v1249 = vsel %vm1044, %v1216, %v1248
      %1250 = vst [vmem:[%s1247] sm:$0x1] %v1249
      %v1251 = vld [vmem:[%s1247 + $0x10] sm:$0x1]
      %v1252 = vsel %vm1044, %v1220, %v1251
      %1253 = vst [vmem:[%s1247 + $0x10] sm:$0x1] %v1252
      %v1254 = vld [vmem:[%s1247 + $0x20] sm:$0x1]
      %v1255 = vsel %vm1044, %v1223, %v1254
      %1256 = vst [vmem:[%s1247 + $0x20] sm:$0x1] %v1255
      %v1257 = vld [vmem:[%s1247 + $0x30] sm:$0x1]
      %v1258 = vsel %vm1044, %v1226, %v1257
      %1259 = vst [vmem:[%s1247 + $0x30] sm:$0x1] %v1258
      %v1260 = vld [vmem:[%s1247 + $0x40] sm:$0x1]
      %v1261 = vsel %vm1044, %v1229, %v1260
      %1262 = vst [vmem:[%s1247 + $0x40] sm:$0x1] %v1261
      %v1263 = vld [vmem:[%s1247 + $0x50] sm:$0x1]
      %v1264 = vsel %vm1044, %v1232, %v1263
      %1265 = vst [vmem:[%s1247 + $0x50] sm:$0x1] %v1264
      %v1266 = vld [vmem:[%s1247 + $0x60] sm:$0x1]
      %v1267 = vsel %vm1044, %v1235, %v1266
      %1268 = vst [vmem:[%s1247 + $0x60] sm:$0x1] %v1267
      %v1269 = vld [vmem:[%s1247 + $0x70] sm:$0x1]
      %v1270 = vsel %vm1044, %v1238, %v1269
      %1271 = vst [vmem:[%s1247 + $0x70] sm:$0x1] %v1270
      %v1272 = vpack.c.bf16 %v155, %v155
      %v1273 = vpack.c.bf16 %v156, %v156
      %v1274 = vpack.c.bf16 %v157, %v157
      %v1275 = vpack.c.bf16 %v158, %v158
      %v1276 = vpack.c.bf16 %v159, %v159
      %v1277 = vpack.c.bf16 %v160, %v160
      %v1278 = vpack.c.bf16 %v161, %v161
      %v1279 = vpack.c.bf16 %v162, %v162
      %s1280 = scalar_lea.vmem %s114, 8
      %v1281 = vld [vmem:[%s1280] sm:$0x1]
      %v1282 = vsel %vm173, %v1272, %v1281
      %1283 = vst [vmem:[%s1280] sm:$0x1] %v1282
      %v1284 = vld [vmem:[%s1280 + $0x10] sm:$0x1]
      %v1285 = vsel %vm173, %v1273, %v1284
      %1286 = vst [vmem:[%s1280 + $0x10] sm:$0x1] %v1285
      %v1287 = vld [vmem:[%s1280 + $0x20] sm:$0x1]
      %v1288 = vsel %vm173, %v1274, %v1287
      %1289 = vst [vmem:[%s1280 + $0x20] sm:$0x1] %v1288
      %v1290 = vld [vmem:[%s1280 + $0x30] sm:$0x1]
      %v1291 = vsel %vm173, %v1275, %v1290
      %1292 = vst [vmem:[%s1280 + $0x30] sm:$0x1] %v1291
      %v1293 = vld [vmem:[%s1280 + $0x40] sm:$0x1]
      %v1294 = vsel %vm173, %v1276, %v1293
      %1295 = vst [vmem:[%s1280 + $0x40] sm:$0x1] %v1294
      %v1296 = vld [vmem:[%s1280 + $0x50] sm:$0x1]
      %v1297 = vsel %vm173, %v1277, %v1296
      %1298 = vst [vmem:[%s1280 + $0x50] sm:$0x1] %v1297
      %v1299 = vld [vmem:[%s1280 + $0x60] sm:$0x1]
      %v1300 = vsel %vm173, %v1278, %v1299
      %1301 = vst [vmem:[%s1280 + $0x60] sm:$0x1] %v1300
      %v1302 = vld [vmem:[%s1280 + $0x70] sm:$0x1]
      %v1303 = vsel %vm173, %v1279, %v1302
      %1304 = vst [vmem:[%s1280 + $0x70] sm:$0x1] %v1303
      %v1305 = vmul.f32 %v155, 0.25
      %v1306 = vmul.f32 %v156, 0.25
      %v1307 = vmul.f32 %v157, 0.25
      %v1308 = vmul.f32 %v158, 0.25
      %v1309 = vmul.f32 %v159, 0.25
      %v1310 = vmul.f32 %v160, 0.25
      %v1311 = vmul.f32 %v161, 0.25
      %v1312 = vmul.f32 %v162, 0.25
      %v1313 = vmul.f32 %v155, 0.75
      %v1314 = vmul.f32 %v156, 0.75
      %v1315 = vmul.f32 %v157, 0.75
      %v1316 = vmul.f32 %v158, 0.75
      %v1317 = vmul.f32 %v159, 0.75
      %v1318 = vmul.f32 %v160, 0.75
      %v1319 = vmul.f32 %v161, 0.75
      %v1320 = vmul.f32 %v162, 0.75
      %v1329 = vrot.slane %v1313, 1
      %v1330 = vrot.slane %v1314, 1
      %v1331 = vrot.slane %v1315, 1
      %v1332 = vrot.slane %v1316, 1
      %v1333 = vrot.slane %v1317, 1
      %v1334 = vrot.slane %v1318, 1
      %v1335 = vrot.slane %v1319, 1
      %v1336 = vrot.slane %v1320, 1
      %v1345 = vadd.f32 %v1305, %v1329
      %v1346 = vadd.f32 %v1306, %v1330
      %v1347 = vadd.f32 %v1307, %v1331
      %v1348 = vadd.f32 %v1308, %v1332
      %v1349 = vadd.f32 %v1309, %v1333
      %v1350 = vadd.f32 %v1310, %v1334
      %v1351 = vadd.f32 %v1311, %v1335
      %v1352 = vadd.f32 %v1312, %v1336
      %v1353 = vpack.c.bf16 %v1345, %v1345
      %v1354 = vpack.c.bf16 %v1346, %v1346
      %v1355 = vpack.c.bf16 %v1347, %v1347
      %v1356 = vpack.c.bf16 %v1348, %v1348
      %v1357 = vpack.c.bf16 %v1349, %v1349
      %v1358 = vpack.c.bf16 %v1350, %v1350
      %v1359 = vpack.c.bf16 %v1351, %v1351
      %v1360 = vpack.c.bf16 %v1352, %v1352
      %v1369 = vrot.slane %v1353, 3
      %v1370 = vrot.slane %v1354, 3
      %v1371 = vrot.slane %v1355, 3
      %v1372 = vrot.slane %v1356, 3
      %v1373 = vrot.slane %v1357, 3
      %v1374 = vrot.slane %v1358, 3
      %v1375 = vrot.slane %v1359, 3
      %v1376 = vrot.slane %v1360, 3
      %v1379 = vsel %vm270, %v1353, %v1369
      %v1381 = vsel %vm275, %v1353, %v1369
      %v1383 = vrot.slane %v1381, 1
      %v1384 = vsel %vm279, %v1353, %v1369
      %v1386 = vrot.slane %v1384, 2
      %v1387 = vsel %vm283, %v1353, %v1369
      %v1389 = vrot.slane %v1387, 3
      %v1392 = vsel %vm270, %v1354, %v1370
      %v1394 = vsel %vm275, %v1354, %v1370
      %v1396 = vrot.slane %v1394, 1
      %v1397 = vsel %vm279, %v1354, %v1370
      %v1399 = vrot.slane %v1397, 2
      %v1400 = vsel %vm283, %v1354, %v1370
      %v1402 = vrot.slane %v1400, 3
      %v1405 = vsel %vm270, %v1355, %v1371
      %v1407 = vsel %vm275, %v1355, %v1371
      %v1409 = vrot.slane %v1407, 1
      %v1410 = vsel %vm279, %v1355, %v1371
      %v1412 = vrot.slane %v1410, 2
      %v1413 = vsel %vm283, %v1355, %v1371
      %v1415 = vrot.slane %v1413, 3
      %v1418 = vsel %vm270, %v1356, %v1372
      %v1420 = vsel %vm275, %v1356, %v1372
      %v1422 = vrot.slane %v1420, 1
      %v1423 = vsel %vm279, %v1356, %v1372
      %v1425 = vrot.slane %v1423, 2
      %v1426 = vsel %vm283, %v1356, %v1372
      %v1428 = vrot.slane %v1426, 3
      %v1431 = vsel %vm270, %v1357, %v1373
      %v1433 = vsel %vm275, %v1357, %v1373
      %v1435 = vrot.slane %v1433, 1
      %v1436 = vsel %vm279, %v1357, %v1373
      %v1438 = vrot.slane %v1436, 2
      %v1439 = vsel %vm283, %v1357, %v1373
      %v1441 = vrot.slane %v1439, 3
      %v1444 = vsel %vm270, %v1358, %v1374
      %v1446 = vsel %vm275, %v1358, %v1374
      %v1448 = vrot.slane %v1446, 1
      %v1449 = vsel %vm279, %v1358, %v1374
      %v1451 = vrot.slane %v1449, 2
      %v1452 = vsel %vm283, %v1358, %v1374
      %v1454 = vrot.slane %v1452, 3
      %v1457 = vsel %vm270, %v1359, %v1375
      %v1459 = vsel %vm275, %v1359, %v1375
      %v1461 = vrot.slane %v1459, 1
      %v1462 = vsel %vm279, %v1359, %v1375
      %v1464 = vrot.slane %v1462, 2
      %v1465 = vsel %vm283, %v1359, %v1375
      %v1467 = vrot.slane %v1465, 3
      %v1470 = vsel %vm270, %v1360, %v1376
      %v1472 = vsel %vm275, %v1360, %v1376
      %v1474 = vrot.slane %v1472, 1
      %v1475 = vsel %vm279, %v1360, %v1376
      %v1477 = vrot.slane %v1475, 2
      %v1478 = vsel %vm283, %v1360, %v1376
      %v1480 = vrot.slane %v1478, 3
      %v1481 = vunpack.i.l.s16 %v1379
      %v1482 = vunpack.i.h.s16 %v1379
      %v1483 = vunpack.i.l.s16 %v1383
      %v1484 = vunpack.i.h.s16 %v1383
      %v1485 = vunpack.i.l.s16 %v1386
      %v1486 = vunpack.i.h.s16 %v1386
      %v1487 = vunpack.i.l.s16 %v1389
      %v1488 = vunpack.i.l.s16 %v1392
      %v1489 = vunpack.i.h.s16 %v1392
      %v1490 = vunpack.i.l.s16 %v1396
      %v1491 = vunpack.i.h.s16 %v1396
      %v1492 = vunpack.i.l.s16 %v1399
      %v1493 = vunpack.i.h.s16 %v1399
      %v1494 = vunpack.i.l.s16 %v1402
      %v1495 = vunpack.i.l.s16 %v1405
      %v1496 = vunpack.i.h.s16 %v1405
      %v1497 = vunpack.i.l.s16 %v1409
      %v1498 = vunpack.i.h.s16 %v1409
      %v1499 = vunpack.i.l.s16 %v1412
      %v1500 = vunpack.i.h.s16 %v1412
      %v1501 = vunpack.i.l.s16 %v1415
      %v1502 = vunpack.i.l.s16 %v1418
      %v1503 = vunpack.i.h.s16 %v1418
      %v1504 = vunpack.i.l.s16 %v1422
      %v1505 = vunpack.i.h.s16 %v1422
      %v1506 = vunpack.i.l.s16 %v1425
      %v1507 = vunpack.i.h.s16 %v1425
      %v1508 = vunpack.i.l.s16 %v1428
      %v1509 = vunpack.i.l.s16 %v1431
      %v1510 = vunpack.i.h.s16 %v1431
      %v1511 = vunpack.i.l.s16 %v1435
      %v1512 = vunpack.i.h.s16 %v1435
      %v1513 = vunpack.i.l.s16 %v1438
      %v1514 = vunpack.i.h.s16 %v1438
      %v1515 = vunpack.i.l.s16 %v1441
      %v1516 = vunpack.i.l.s16 %v1444
      %v1517 = vunpack.i.h.s16 %v1444
      %v1518 = vunpack.i.l.s16 %v1448
      %v1519 = vunpack.i.h.s16 %v1448
      %v1520 = vunpack.i.l.s16 %v1451
      %v1521 = vunpack.i.h.s16 %v1451
      %v1522 = vunpack.i.l.s16 %v1454
      %v1523 = vunpack.i.l.s16 %v1457
      %v1524 = vunpack.i.h.s16 %v1457
      %v1525 = vunpack.i.l.s16 %v1461
      %v1526 = vunpack.i.h.s16 %v1461
      %v1527 = vunpack.i.l.s16 %v1464
      %v1528 = vunpack.i.h.s16 %v1464
      %v1529 = vunpack.i.l.s16 %v1467
      %v1530 = vunpack.i.l.s16 %v1470
      %v1531 = vunpack.i.h.s16 %v1470
      %v1532 = vunpack.i.l.s16 %v1474
      %v1533 = vunpack.i.h.s16 %v1474
      %v1534 = vunpack.i.l.s16 %v1477
      %v1535 = vunpack.i.h.s16 %v1477
      %v1536 = vunpack.i.l.s16 %v1480
      %v1537 = vpack.i.b16 %v1481, %v1481
      %v1538 = vpack.i.b16 %v1482, %v1482
      %v1539 = vpack.i.b16 %v1483, %v1483
      %v1540 = vpack.i.b16 %v1484, %v1484
      %v1541 = vpack.i.b16 %v1485, %v1485
      %v1542 = vpack.i.b16 %v1486, %v1486
      %v1543 = vpack.i.b16 %v1487, %v1487
      %v1544 = vpack.i.b16 %v1488, %v1488
      %v1545 = vpack.i.b16 %v1489, %v1489
      %v1546 = vpack.i.b16 %v1490, %v1490
      %v1547 = vpack.i.b16 %v1491, %v1491
      %v1548 = vpack.i.b16 %v1492, %v1492
      %v1549 = vpack.i.b16 %v1493, %v1493
      %v1550 = vpack.i.b16 %v1494, %v1494
      %v1551 = vpack.i.b16 %v1495, %v1495
      %v1552 = vpack.i.b16 %v1496, %v1496
      %v1553 = vpack.i.b16 %v1497, %v1497
      %v1554 = vpack.i.b16 %v1498, %v1498
      %v1555 = vpack.i.b16 %v1499, %v1499
      %v1556 = vpack.i.b16 %v1500, %v1500
      %v1557 = vpack.i.b16 %v1501, %v1501
      %v1558 = vpack.i.b16 %v1502, %v1502
      %v1559 = vpack.i.b16 %v1503, %v1503
      %v1560 = vpack.i.b16 %v1504, %v1504
      %v1561 = vpack.i.b16 %v1505, %v1505
      %v1562 = vpack.i.b16 %v1506, %v1506
      %v1563 = vpack.i.b16 %v1507, %v1507
      %v1564 = vpack.i.b16 %v1508, %v1508
      %v1565 = vpack.i.b16 %v1509, %v1509
      %v1566 = vpack.i.b16 %v1510, %v1510
      %v1567 = vpack.i.b16 %v1511, %v1511
      %v1568 = vpack.i.b16 %v1512, %v1512
      %v1569 = vpack.i.b16 %v1513, %v1513
      %v1570 = vpack.i.b16 %v1514, %v1514
      %v1571 = vpack.i.b16 %v1515, %v1515
      %v1572 = vpack.i.b16 %v1516, %v1516
      %v1573 = vpack.i.b16 %v1517, %v1517
      %v1574 = vpack.i.b16 %v1518, %v1518
      %v1575 = vpack.i.b16 %v1519, %v1519
      %v1576 = vpack.i.b16 %v1520, %v1520
      %v1577 = vpack.i.b16 %v1521, %v1521
      %v1578 = vpack.i.b16 %v1522, %v1522
      %v1579 = vpack.i.b16 %v1523, %v1523
      %v1580 = vpack.i.b16 %v1524, %v1524
      %v1581 = vpack.i.b16 %v1525, %v1525
      %v1582 = vpack.i.b16 %v1526, %v1526
      %v1583 = vpack.i.b16 %v1527, %v1527
      %v1584 = vpack.i.b16 %v1528, %v1528
      %v1585 = vpack.i.b16 %v1529, %v1529
      %v1586 = vpack.i.b16 %v1530, %v1530
      %v1587 = vpack.i.b16 %v1531, %v1531
      %v1588 = vpack.i.b16 %v1532, %v1532
      %v1589 = vpack.i.b16 %v1533, %v1533
      %v1590 = vpack.i.b16 %v1534, %v1534
      %v1591 = vpack.i.b16 %v1535, %v1535
      %v1592 = vpack.i.b16 %v1536, %v1536
      %s1649 = scalar_lea.vmem %s114, 9
      %v1650 = vld [vmem:[%s1649] sm:$0x1]
      %v1651 = vsel %vm173, %v1537, %v1650
      %1652 = vst [vmem:[%s1649] sm:$0x1] %v1651
      %v1653 = vld [vmem:[%s1649 + $0x1] sm:$0x1]
      %v1654 = vsel %vm173, %v1538, %v1653
      %1655 = vst [vmem:[%s1649 + $0x1] sm:$0x1] %v1654
      %v1656 = vld [vmem:[%s1649 + $0x2] sm:$0x1]
      %v1657 = vsel %vm173, %v1539, %v1656
      %1658 = vst [vmem:[%s1649 + $0x2] sm:$0x1] %v1657
      %v1659 = vld [vmem:[%s1649 + $0x3] sm:$0x1]
      %v1660 = vsel %vm173, %v1540, %v1659
      %1661 = vst [vmem:[%s1649 + $0x3] sm:$0x1] %v1660
      %v1662 = vld [vmem:[%s1649 + $0x4] sm:$0x1]
      %v1663 = vsel %vm173, %v1541, %v1662
      %1664 = vst [vmem:[%s1649 + $0x4] sm:$0x1] %v1663
      %v1665 = vld [vmem:[%s1649 + $0x5] sm:$0x1]
      %v1666 = vsel %vm173, %v1542, %v1665
      %1667 = vst [vmem:[%s1649 + $0x5] sm:$0x1] %v1666
      %v1668 = vld [vmem:[%s1649 + $0x6] sm:$0x1]
      %v1669 = vsel %vm173, %v1543, %v1668
      %1670 = vst [vmem:[%s1649 + $0x6] sm:$0x1] %v1669
      %v1671 = vld [vmem:[%s1649 + $0x10] sm:$0x1]
      %v1672 = vsel %vm173, %v1544, %v1671
      %1673 = vst [vmem:[%s1649 + $0x10] sm:$0x1] %v1672
      %v1674 = vld [vmem:[%s1649 + $0x11] sm:$0x1]
      %v1675 = vsel %vm173, %v1545, %v1674
      %1676 = vst [vmem:[%s1649 + $0x11] sm:$0x1] %v1675
      %v1677 = vld [vmem:[%s1649 + $0x12] sm:$0x1]
      %v1678 = vsel %vm173, %v1546, %v1677
      %1679 = vst [vmem:[%s1649 + $0x12] sm:$0x1] %v1678
      %v1680 = vld [vmem:[%s1649 + $0x13] sm:$0x1]
      %v1681 = vsel %vm173, %v1547, %v1680
      %1682 = vst [vmem:[%s1649 + $0x13] sm:$0x1] %v1681
      %v1683 = vld [vmem:[%s1649 + $0x14] sm:$0x1]
      %v1684 = vsel %vm173, %v1548, %v1683
      %1685 = vst [vmem:[%s1649 + $0x14] sm:$0x1] %v1684
      %v1686 = vld [vmem:[%s1649 + $0x15] sm:$0x1]
      %v1687 = vsel %vm173, %v1549, %v1686
      %1688 = vst [vmem:[%s1649 + $0x15] sm:$0x1] %v1687
      %v1689 = vld [vmem:[%s1649 + $0x16] sm:$0x1]
      %v1690 = vsel %vm173, %v1550, %v1689
      %1691 = vst [vmem:[%s1649 + $0x16] sm:$0x1] %v1690
      %v1692 = vld [vmem:[%s1649 + $0x20] sm:$0x1]
      %v1693 = vsel %vm173, %v1551, %v1692
      %1694 = vst [vmem:[%s1649 + $0x20] sm:$0x1] %v1693
      %v1695 = vld [vmem:[%s1649 + $0x21] sm:$0x1]
      %v1696 = vsel %vm173, %v1552, %v1695
      %1697 = vst [vmem:[%s1649 + $0x21] sm:$0x1] %v1696
      %v1698 = vld [vmem:[%s1649 + $0x22] sm:$0x1]
      %v1699 = vsel %vm173, %v1553, %v1698
      %1700 = vst [vmem:[%s1649 + $0x22] sm:$0x1] %v1699
      %v1701 = vld [vmem:[%s1649 + $0x23] sm:$0x1]
      %v1702 = vsel %vm173, %v1554, %v1701
      %1703 = vst [vmem:[%s1649 + $0x23] sm:$0x1] %v1702
      %v1704 = vld [vmem:[%s1649 + $0x24] sm:$0x1]
      %v1705 = vsel %vm173, %v1555, %v1704
      %1706 = vst [vmem:[%s1649 + $0x24] sm:$0x1] %v1705
      %v1707 = vld [vmem:[%s1649 + $0x25] sm:$0x1]
      %v1708 = vsel %vm173, %v1556, %v1707
      %1709 = vst [vmem:[%s1649 + $0x25] sm:$0x1] %v1708
      %v1710 = vld [vmem:[%s1649 + $0x26] sm:$0x1]
      %v1711 = vsel %vm173, %v1557, %v1710
      %1712 = vst [vmem:[%s1649 + $0x26] sm:$0x1] %v1711
      %v1713 = vld [vmem:[%s1649 + $0x30] sm:$0x1]
      %v1714 = vsel %vm173, %v1558, %v1713
      %1715 = vst [vmem:[%s1649 + $0x30] sm:$0x1] %v1714
      %v1716 = vld [vmem:[%s1649 + $0x31] sm:$0x1]
      %v1717 = vsel %vm173, %v1559, %v1716
      %1718 = vst [vmem:[%s1649 + $0x31] sm:$0x1] %v1717
      %v1719 = vld [vmem:[%s1649 + $0x32] sm:$0x1]
      %v1720 = vsel %vm173, %v1560, %v1719
      %1721 = vst [vmem:[%s1649 + $0x32] sm:$0x1] %v1720
      %v1722 = vld [vmem:[%s1649 + $0x33] sm:$0x1]
      %v1723 = vsel %vm173, %v1561, %v1722
      %1724 = vst [vmem:[%s1649 + $0x33] sm:$0x1] %v1723
      %v1725 = vld [vmem:[%s1649 + $0x34] sm:$0x1]
      %v1726 = vsel %vm173, %v1562, %v1725
      %1727 = vst [vmem:[%s1649 + $0x34] sm:$0x1] %v1726
      %v1728 = vld [vmem:[%s1649 + $0x35] sm:$0x1]
      %v1729 = vsel %vm173, %v1563, %v1728
      %1730 = vst [vmem:[%s1649 + $0x35] sm:$0x1] %v1729
      %v1731 = vld [vmem:[%s1649 + $0x36] sm:$0x1]
      %v1732 = vsel %vm173, %v1564, %v1731
      %1733 = vst [vmem:[%s1649 + $0x36] sm:$0x1] %v1732
      %v1734 = vld [vmem:[%s1649 + $0x40] sm:$0x1]
      %v1735 = vsel %vm173, %v1565, %v1734
      %1736 = vst [vmem:[%s1649 + $0x40] sm:$0x1] %v1735
      %v1737 = vld [vmem:[%s1649 + $0x41] sm:$0x1]
      %v1738 = vsel %vm173, %v1566, %v1737
      %1739 = vst [vmem:[%s1649 + $0x41] sm:$0x1] %v1738
      %v1740 = vld [vmem:[%s1649 + $0x42] sm:$0x1]
      %v1741 = vsel %vm173, %v1567, %v1740
      %1742 = vst [vmem:[%s1649 + $0x42] sm:$0x1] %v1741
      %v1743 = vld [vmem:[%s1649 + $0x43] sm:$0x1]
      %v1744 = vsel %vm173, %v1568, %v1743
      %1745 = vst [vmem:[%s1649 + $0x43] sm:$0x1] %v1744
      %v1746 = vld [vmem:[%s1649 + $0x44] sm:$0x1]
      %v1747 = vsel %vm173, %v1569, %v1746
      %1748 = vst [vmem:[%s1649 + $0x44] sm:$0x1] %v1747
      %v1749 = vld [vmem:[%s1649 + $0x45] sm:$0x1]
      %v1750 = vsel %vm173, %v1570, %v1749
      %1751 = vst [vmem:[%s1649 + $0x45] sm:$0x1] %v1750
      %v1752 = vld [vmem:[%s1649 + $0x46] sm:$0x1]
      %v1753 = vsel %vm173, %v1571, %v1752
      %1754 = vst [vmem:[%s1649 + $0x46] sm:$0x1] %v1753
      %v1755 = vld [vmem:[%s1649 + $0x50] sm:$0x1]
      %v1756 = vsel %vm173, %v1572, %v1755
      %1757 = vst [vmem:[%s1649 + $0x50] sm:$0x1] %v1756
      %v1758 = vld [vmem:[%s1649 + $0x51] sm:$0x1]
      %v1759 = vsel %vm173, %v1573, %v1758
      %1760 = vst [vmem:[%s1649 + $0x51] sm:$0x1] %v1759
      %v1761 = vld [vmem:[%s1649 + $0x52] sm:$0x1]
      %v1762 = vsel %vm173, %v1574, %v1761
      %1763 = vst [vmem:[%s1649 + $0x52] sm:$0x1] %v1762
      %v1764 = vld [vmem:[%s1649 + $0x53] sm:$0x1]
      %v1765 = vsel %vm173, %v1575, %v1764
      %1766 = vst [vmem:[%s1649 + $0x53] sm:$0x1] %v1765
      %v1767 = vld [vmem:[%s1649 + $0x54] sm:$0x1]
      %v1768 = vsel %vm173, %v1576, %v1767
      %1769 = vst [vmem:[%s1649 + $0x54] sm:$0x1] %v1768
      %v1770 = vld [vmem:[%s1649 + $0x55] sm:$0x1]
      %v1771 = vsel %vm173, %v1577, %v1770
      %1772 = vst [vmem:[%s1649 + $0x55] sm:$0x1] %v1771
      %v1773 = vld [vmem:[%s1649 + $0x56] sm:$0x1]
      %v1774 = vsel %vm173, %v1578, %v1773
      %1775 = vst [vmem:[%s1649 + $0x56] sm:$0x1] %v1774
      %v1776 = vld [vmem:[%s1649 + $0x60] sm:$0x1]
      %v1777 = vsel %vm173, %v1579, %v1776
      %1778 = vst [vmem:[%s1649 + $0x60] sm:$0x1] %v1777
      %v1779 = vld [vmem:[%s1649 + $0x61] sm:$0x1]
      %v1780 = vsel %vm173, %v1580, %v1779
      %1781 = vst [vmem:[%s1649 + $0x61] sm:$0x1] %v1780
      %v1782 = vld [vmem:[%s1649 + $0x62] sm:$0x1]
      %v1783 = vsel %vm173, %v1581, %v1782
      %1784 = vst [vmem:[%s1649 + $0x62] sm:$0x1] %v1783
      %v1785 = vld [vmem:[%s1649 + $0x63] sm:$0x1]
      %v1786 = vsel %vm173, %v1582, %v1785
      %1787 = vst [vmem:[%s1649 + $0x63] sm:$0x1] %v1786
      %v1788 = vld [vmem:[%s1649 + $0x64] sm:$0x1]
      %v1789 = vsel %vm173, %v1583, %v1788
      %1790 = vst [vmem:[%s1649 + $0x64] sm:$0x1] %v1789
      %v1791 = vld [vmem:[%s1649 + $0x65] sm:$0x1]
      %v1792 = vsel %vm173, %v1584, %v1791
      %1793 = vst [vmem:[%s1649 + $0x65] sm:$0x1] %v1792
      %v1794 = vld [vmem:[%s1649 + $0x66] sm:$0x1]
      %v1795 = vsel %vm173, %v1585, %v1794
      %1796 = vst [vmem:[%s1649 + $0x66] sm:$0x1] %v1795
      %v1797 = vld [vmem:[%s1649 + $0x70] sm:$0x1]
      %v1798 = vsel %vm173, %v1586, %v1797
      %1799 = vst [vmem:[%s1649 + $0x70] sm:$0x1] %v1798
      %v1800 = vld [vmem:[%s1649 + $0x71] sm:$0x1]
      %v1801 = vsel %vm173, %v1587, %v1800
      %1802 = vst [vmem:[%s1649 + $0x71] sm:$0x1] %v1801
      %v1803 = vld [vmem:[%s1649 + $0x72] sm:$0x1]
      %v1804 = vsel %vm173, %v1588, %v1803
      %1805 = vst [vmem:[%s1649 + $0x72] sm:$0x1] %v1804
      %v1806 = vld [vmem:[%s1649 + $0x73] sm:$0x1]
      %v1807 = vsel %vm173, %v1589, %v1806
      %1808 = vst [vmem:[%s1649 + $0x73] sm:$0x1] %v1807
      %v1809 = vld [vmem:[%s1649 + $0x74] sm:$0x1]
      %v1810 = vsel %vm173, %v1590, %v1809
      %1811 = vst [vmem:[%s1649 + $0x74] sm:$0x1] %v1810
      %v1812 = vld [vmem:[%s1649 + $0x75] sm:$0x1]
      %v1813 = vsel %vm173, %v1591, %v1812
      %1814 = vst [vmem:[%s1649 + $0x75] sm:$0x1] %v1813
      %v1815 = vld [vmem:[%s1649 + $0x76] sm:$0x1]
      %v1816 = vsel %vm173, %v1592, %v1815
      %1817 = vst [vmem:[%s1649 + $0x76] sm:$0x1] %v1816
      %v1826 = vrot.slane %v1305, 1
      %v1827 = vrot.slane %v1306, 1
      %v1828 = vrot.slane %v1307, 1
      %v1829 = vrot.slane %v1308, 1
      %v1830 = vrot.slane %v1309, 1
      %v1831 = vrot.slane %v1310, 1
      %v1832 = vrot.slane %v1311, 1
      %v1833 = vrot.slane %v1312, 1
      %v1842 = vadd.f32 %v1313, %v1826
      %v1843 = vadd.f32 %v1314, %v1827
      %v1844 = vadd.f32 %v1315, %v1828
      %v1845 = vadd.f32 %v1316, %v1829
      %v1846 = vadd.f32 %v1317, %v1830
      %v1847 = vadd.f32 %v1318, %v1831
      %v1848 = vadd.f32 %v1319, %v1832
      %v1849 = vadd.f32 %v1320, %v1833
      %v1850 = vpack.c.bf16 %v1842, %v1842
      %v1851 = vpack.c.bf16 %v1843, %v1843
      %v1852 = vpack.c.bf16 %v1844, %v1844
      %v1853 = vpack.c.bf16 %v1845, %v1845
      %v1854 = vpack.c.bf16 %v1846, %v1846
      %v1855 = vpack.c.bf16 %v1847, %v1847
      %v1856 = vpack.c.bf16 %v1848, %v1848
      %v1857 = vpack.c.bf16 %v1849, %v1849
      %v1866 = vrot.slane %v1850, 3
      %v1867 = vrot.slane %v1851, 3
      %v1868 = vrot.slane %v1852, 3
      %v1869 = vrot.slane %v1853, 3
      %v1870 = vrot.slane %v1854, 3
      %v1871 = vrot.slane %v1855, 3
      %v1872 = vrot.slane %v1856, 3
      %v1873 = vrot.slane %v1857, 3
      %v1876 = vsel %vm270, %v1850, %v1866
      %v1878 = vsel %vm275, %v1850, %v1866
      %v1880 = vrot.slane %v1878, 1
      %v1881 = vsel %vm279, %v1850, %v1866
      %v1883 = vrot.slane %v1881, 2
      %v1884 = vsel %vm283, %v1850, %v1866
      %v1886 = vrot.slane %v1884, 3
      %v1889 = vsel %vm270, %v1851, %v1867
      %v1891 = vsel %vm275, %v1851, %v1867
      %v1893 = vrot.slane %v1891, 1
      %v1894 = vsel %vm279, %v1851, %v1867
      %v1896 = vrot.slane %v1894, 2
      %v1897 = vsel %vm283, %v1851, %v1867
      %v1899 = vrot.slane %v1897, 3
      %v1902 = vsel %vm270, %v1852, %v1868
      %v1904 = vsel %vm275, %v1852, %v1868
      %v1906 = vrot.slane %v1904, 1
      %v1907 = vsel %vm279, %v1852, %v1868
      %v1909 = vrot.slane %v1907, 2
      %v1910 = vsel %vm283, %v1852, %v1868
      %v1912 = vrot.slane %v1910, 3
      %v1915 = vsel %vm270, %v1853, %v1869
      %v1917 = vsel %vm275, %v1853, %v1869
      %v1919 = vrot.slane %v1917, 1
      %v1920 = vsel %vm279, %v1853, %v1869
      %v1922 = vrot.slane %v1920, 2
      %v1923 = vsel %vm283, %v1853, %v1869
      %v1925 = vrot.slane %v1923, 3
      %v1928 = vsel %vm270, %v1854, %v1870
      %v1930 = vsel %vm275, %v1854, %v1870
      %v1932 = vrot.slane %v1930, 1
      %v1933 = vsel %vm279, %v1854, %v1870
      %v1935 = vrot.slane %v1933, 2
      %v1936 = vsel %vm283, %v1854, %v1870
      %v1938 = vrot.slane %v1936, 3
      %v1941 = vsel %vm270, %v1855, %v1871
      %v1943 = vsel %vm275, %v1855, %v1871
      %v1945 = vrot.slane %v1943, 1
      %v1946 = vsel %vm279, %v1855, %v1871
      %v1948 = vrot.slane %v1946, 2
      %v1949 = vsel %vm283, %v1855, %v1871
      %v1951 = vrot.slane %v1949, 3
      %v1954 = vsel %vm270, %v1856, %v1872
      %v1956 = vsel %vm275, %v1856, %v1872
      %v1958 = vrot.slane %v1956, 1
      %v1959 = vsel %vm279, %v1856, %v1872
      %v1961 = vrot.slane %v1959, 2
      %v1962 = vsel %vm283, %v1856, %v1872
      %v1964 = vrot.slane %v1962, 3
      %v1967 = vsel %vm270, %v1857, %v1873
      %v1969 = vsel %vm275, %v1857, %v1873
      %v1971 = vrot.slane %v1969, 1
      %v1972 = vsel %vm279, %v1857, %v1873
      %v1974 = vrot.slane %v1972, 2
      %v1975 = vsel %vm283, %v1857, %v1873
      %v1977 = vrot.slane %v1975, 3
      %v1978 = vunpack.i.l.s16 %v1876
      %v1979 = vunpack.i.h.s16 %v1876
      %v1980 = vunpack.i.l.s16 %v1880
      %v1981 = vunpack.i.h.s16 %v1880
      %v1982 = vunpack.i.l.s16 %v1883
      %v1983 = vunpack.i.h.s16 %v1883
      %v1984 = vunpack.i.l.s16 %v1886
      %v1985 = vunpack.i.l.s16 %v1889
      %v1986 = vunpack.i.h.s16 %v1889
      %v1987 = vunpack.i.l.s16 %v1893
      %v1988 = vunpack.i.h.s16 %v1893
      %v1989 = vunpack.i.l.s16 %v1896
      %v1990 = vunpack.i.h.s16 %v1896
      %v1991 = vunpack.i.l.s16 %v1899
      %v1992 = vunpack.i.l.s16 %v1902
      %v1993 = vunpack.i.h.s16 %v1902
      %v1994 = vunpack.i.l.s16 %v1906
      %v1995 = vunpack.i.h.s16 %v1906
      %v1996 = vunpack.i.l.s16 %v1909
      %v1997 = vunpack.i.h.s16 %v1909
      %v1998 = vunpack.i.l.s16 %v1912
      %v1999 = vunpack.i.l.s16 %v1915
      %v2000 = vunpack.i.h.s16 %v1915
      %v2001 = vunpack.i.l.s16 %v1919
      %v2002 = vunpack.i.h.s16 %v1919
      %v2003 = vunpack.i.l.s16 %v1922
      %v2004 = vunpack.i.h.s16 %v1922
      %v2005 = vunpack.i.l.s16 %v1925
      %v2006 = vunpack.i.l.s16 %v1928
      %v2007 = vunpack.i.h.s16 %v1928
      %v2008 = vunpack.i.l.s16 %v1932
      %v2009 = vunpack.i.h.s16 %v1932
      %v2010 = vunpack.i.l.s16 %v1935
      %v2011 = vunpack.i.h.s16 %v1935
      %v2012 = vunpack.i.l.s16 %v1938
      %v2013 = vunpack.i.l.s16 %v1941
      %v2014 = vunpack.i.h.s16 %v1941
      %v2015 = vunpack.i.l.s16 %v1945
      %v2016 = vunpack.i.h.s16 %v1945
      %v2017 = vunpack.i.l.s16 %v1948
      %v2018 = vunpack.i.h.s16 %v1948
      %v2019 = vunpack.i.l.s16 %v1951
      %v2020 = vunpack.i.l.s16 %v1954
      %v2021 = vunpack.i.h.s16 %v1954
      %v2022 = vunpack.i.l.s16 %v1958
      %v2023 = vunpack.i.h.s16 %v1958
      %v2024 = vunpack.i.l.s16 %v1961
      %v2025 = vunpack.i.h.s16 %v1961
      %v2026 = vunpack.i.l.s16 %v1964
      %v2027 = vunpack.i.l.s16 %v1967
      %v2028 = vunpack.i.h.s16 %v1967
      %v2029 = vunpack.i.l.s16 %v1971
      %v2030 = vunpack.i.h.s16 %v1971
      %v2031 = vunpack.i.l.s16 %v1974
      %v2032 = vunpack.i.h.s16 %v1974
      %v2033 = vunpack.i.l.s16 %v1977
      %v2034 = vpack.i.b16 %v1978, %v1978
      %v2035 = vpack.i.b16 %v1979, %v1979
      %v2036 = vpack.i.b16 %v1980, %v1980
      %v2037 = vpack.i.b16 %v1981, %v1981
      %v2038 = vpack.i.b16 %v1982, %v1982
      %v2039 = vpack.i.b16 %v1983, %v1983
      %v2040 = vpack.i.b16 %v1984, %v1984
      %v2041 = vpack.i.b16 %v1985, %v1985
      %v2042 = vpack.i.b16 %v1986, %v1986
      %v2043 = vpack.i.b16 %v1987, %v1987
      %v2044 = vpack.i.b16 %v1988, %v1988
      %v2045 = vpack.i.b16 %v1989, %v1989
      %v2046 = vpack.i.b16 %v1990, %v1990
      %v2047 = vpack.i.b16 %v1991, %v1991
      %v2048 = vpack.i.b16 %v1992, %v1992
      %v2049 = vpack.i.b16 %v1993, %v1993
      %v2050 = vpack.i.b16 %v1994, %v1994
      %v2051 = vpack.i.b16 %v1995, %v1995
      %v2052 = vpack.i.b16 %v1996, %v1996
      %v2053 = vpack.i.b16 %v1997, %v1997
      %v2054 = vpack.i.b16 %v1998, %v1998
      %v2055 = vpack.i.b16 %v1999, %v1999
      %v2056 = vpack.i.b16 %v2000, %v2000
      %v2057 = vpack.i.b16 %v2001, %v2001
      %v2058 = vpack.i.b16 %v2002, %v2002
      %v2059 = vpack.i.b16 %v2003, %v2003
      %v2060 = vpack.i.b16 %v2004, %v2004
      %v2061 = vpack.i.b16 %v2005, %v2005
      %v2062 = vpack.i.b16 %v2006, %v2006
      %v2063 = vpack.i.b16 %v2007, %v2007
      %v2064 = vpack.i.b16 %v2008, %v2008
      %v2065 = vpack.i.b16 %v2009, %v2009
      %v2066 = vpack.i.b16 %v2010, %v2010
      %v2067 = vpack.i.b16 %v2011, %v2011
      %v2068 = vpack.i.b16 %v2012, %v2012
      %v2069 = vpack.i.b16 %v2013, %v2013
      %v2070 = vpack.i.b16 %v2014, %v2014
      %v2071 = vpack.i.b16 %v2015, %v2015
      %v2072 = vpack.i.b16 %v2016, %v2016
      %v2073 = vpack.i.b16 %v2017, %v2017
      %v2074 = vpack.i.b16 %v2018, %v2018
      %v2075 = vpack.i.b16 %v2019, %v2019
      %v2076 = vpack.i.b16 %v2020, %v2020
      %v2077 = vpack.i.b16 %v2021, %v2021
      %v2078 = vpack.i.b16 %v2022, %v2022
      %v2079 = vpack.i.b16 %v2023, %v2023
      %v2080 = vpack.i.b16 %v2024, %v2024
      %v2081 = vpack.i.b16 %v2025, %v2025
      %v2082 = vpack.i.b16 %v2026, %v2026
      %v2083 = vpack.i.b16 %v2027, %v2027
      %v2084 = vpack.i.b16 %v2028, %v2028
      %v2085 = vpack.i.b16 %v2029, %v2029
      %v2086 = vpack.i.b16 %v2030, %v2030
      %v2087 = vpack.i.b16 %v2031, %v2031
      %v2088 = vpack.i.b16 %v2032, %v2032
      %v2089 = vpack.i.b16 %v2033, %v2033
      %v2146 = vld [vmem:[%s1280] sm:$0x1]
      %v2147 = vsel %vm1044, %v2034, %v2146
      %2148 = vst [vmem:[%s1280] sm:$0x1] %v2147
      %v2149 = vld [vmem:[%s1280 + $0x1] sm:$0x1]
      %v2150 = vsel %vm1044, %v2035, %v2149
      %2151 = vst [vmem:[%s1280 + $0x1] sm:$0x1] %v2150
      %v2152 = vld [vmem:[%s1280 + $0x2] sm:$0x1]
      %v2153 = vsel %vm1044, %v2036, %v2152
      %2154 = vst [vmem:[%s1280 + $0x2] sm:$0x1] %v2153
      %v2155 = vld [vmem:[%s1280 + $0x3] sm:$0x1]
      %v2156 = vsel %vm1044, %v2037, %v2155
      %2157 = vst [vmem:[%s1280 + $0x3] sm:$0x1] %v2156
      %v2158 = vld [vmem:[%s1280 + $0x4] sm:$0x1]
      %v2159 = vsel %vm1044, %v2038, %v2158
      %2160 = vst [vmem:[%s1280 + $0x4] sm:$0x1] %v2159
      %v2161 = vld [vmem:[%s1280 + $0x5] sm:$0x1]
      %v2162 = vsel %vm1044, %v2039, %v2161
      %2163 = vst [vmem:[%s1280 + $0x5] sm:$0x1] %v2162
      %v2164 = vld [vmem:[%s1280 + $0x6] sm:$0x1]
      %v2165 = vsel %vm1044, %v2040, %v2164
      %2166 = vst [vmem:[%s1280 + $0x6] sm:$0x1] %v2165
      %v2167 = vld [vmem:[%s1280 + $0x10] sm:$0x1]
      %v2168 = vsel %vm1044, %v2041, %v2167
      %2169 = vst [vmem:[%s1280 + $0x10] sm:$0x1] %v2168
      %v2170 = vld [vmem:[%s1280 + $0x11] sm:$0x1]
      %v2171 = vsel %vm1044, %v2042, %v2170
      %2172 = vst [vmem:[%s1280 + $0x11] sm:$0x1] %v2171
      %v2173 = vld [vmem:[%s1280 + $0x12] sm:$0x1]
      %v2174 = vsel %vm1044, %v2043, %v2173
      %2175 = vst [vmem:[%s1280 + $0x12] sm:$0x1] %v2174
      %v2176 = vld [vmem:[%s1280 + $0x13] sm:$0x1]
      %v2177 = vsel %vm1044, %v2044, %v2176
      %2178 = vst [vmem:[%s1280 + $0x13] sm:$0x1] %v2177
      %v2179 = vld [vmem:[%s1280 + $0x14] sm:$0x1]
      %v2180 = vsel %vm1044, %v2045, %v2179
      %2181 = vst [vmem:[%s1280 + $0x14] sm:$0x1] %v2180
      %v2182 = vld [vmem:[%s1280 + $0x15] sm:$0x1]
      %v2183 = vsel %vm1044, %v2046, %v2182
      %2184 = vst [vmem:[%s1280 + $0x15] sm:$0x1] %v2183
      %v2185 = vld [vmem:[%s1280 + $0x16] sm:$0x1]
      %v2186 = vsel %vm1044, %v2047, %v2185
      %2187 = vst [vmem:[%s1280 + $0x16] sm:$0x1] %v2186
      %v2188 = vld [vmem:[%s1280 + $0x20] sm:$0x1]
      %v2189 = vsel %vm1044, %v2048, %v2188
      %2190 = vst [vmem:[%s1280 + $0x20] sm:$0x1] %v2189
      %v2191 = vld [vmem:[%s1280 + $0x21] sm:$0x1]
      %v2192 = vsel %vm1044, %v2049, %v2191
      %2193 = vst [vmem:[%s1280 + $0x21] sm:$0x1] %v2192
      %v2194 = vld [vmem:[%s1280 + $0x22] sm:$0x1]
      %v2195 = vsel %vm1044, %v2050, %v2194
      %2196 = vst [vmem:[%s1280 + $0x22] sm:$0x1] %v2195
      %v2197 = vld [vmem:[%s1280 + $0x23] sm:$0x1]
      %v2198 = vsel %vm1044, %v2051, %v2197
      %2199 = vst [vmem:[%s1280 + $0x23] sm:$0x1] %v2198
      %v2200 = vld [vmem:[%s1280 + $0x24] sm:$0x1]
      %v2201 = vsel %vm1044, %v2052, %v2200
      %2202 = vst [vmem:[%s1280 + $0x24] sm:$0x1] %v2201
      %v2203 = vld [vmem:[%s1280 + $0x25] sm:$0x1]
      %v2204 = vsel %vm1044, %v2053, %v2203
      %2205 = vst [vmem:[%s1280 + $0x25] sm:$0x1] %v2204
      %v2206 = vld [vmem:[%s1280 + $0x26] sm:$0x1]
      %v2207 = vsel %vm1044, %v2054, %v2206
      %2208 = vst [vmem:[%s1280 + $0x26] sm:$0x1] %v2207
      %v2209 = vld [vmem:[%s1280 + $0x30] sm:$0x1]
      %v2210 = vsel %vm1044, %v2055, %v2209
      %2211 = vst [vmem:[%s1280 + $0x30] sm:$0x1] %v2210
      %v2212 = vld [vmem:[%s1280 + $0x31] sm:$0x1]
      %v2213 = vsel %vm1044, %v2056, %v2212
      %2214 = vst [vmem:[%s1280 + $0x31] sm:$0x1] %v2213
      %v2215 = vld [vmem:[%s1280 + $0x32] sm:$0x1]
      %v2216 = vsel %vm1044, %v2057, %v2215
      %2217 = vst [vmem:[%s1280 + $0x32] sm:$0x1] %v2216
      %v2218 = vld [vmem:[%s1280 + $0x33] sm:$0x1]
      %v2219 = vsel %vm1044, %v2058, %v2218
      %2220 = vst [vmem:[%s1280 + $0x33] sm:$0x1] %v2219
      %v2221 = vld [vmem:[%s1280 + $0x34] sm:$0x1]
      %v2222 = vsel %vm1044, %v2059, %v2221
      %2223 = vst [vmem:[%s1280 + $0x34] sm:$0x1] %v2222
      %v2224 = vld [vmem:[%s1280 + $0x35] sm:$0x1]
      %v2225 = vsel %vm1044, %v2060, %v2224
      %2226 = vst [vmem:[%s1280 + $0x35] sm:$0x1] %v2225
      %v2227 = vld [vmem:[%s1280 + $0x36] sm:$0x1]
      %v2228 = vsel %vm1044, %v2061, %v2227
      %2229 = vst [vmem:[%s1280 + $0x36] sm:$0x1] %v2228
      %v2230 = vld [vmem:[%s1280 + $0x40] sm:$0x1]
      %v2231 = vsel %vm1044, %v2062, %v2230
      %2232 = vst [vmem:[%s1280 + $0x40] sm:$0x1] %v2231
      %v2233 = vld [vmem:[%s1280 + $0x41] sm:$0x1]
      %v2234 = vsel %vm1044, %v2063, %v2233
      %2235 = vst [vmem:[%s1280 + $0x41] sm:$0x1] %v2234
      %v2236 = vld [vmem:[%s1280 + $0x42] sm:$0x1]
      %v2237 = vsel %vm1044, %v2064, %v2236
      %2238 = vst [vmem:[%s1280 + $0x42] sm:$0x1] %v2237
      %v2239 = vld [vmem:[%s1280 + $0x43] sm:$0x1]
      %v2240 = vsel %vm1044, %v2065, %v2239
      %2241 = vst [vmem:[%s1280 + $0x43] sm:$0x1] %v2240
      %v2242 = vld [vmem:[%s1280 + $0x44] sm:$0x1]
      %v2243 = vsel %vm1044, %v2066, %v2242
      %2244 = vst [vmem:[%s1280 + $0x44] sm:$0x1] %v2243
      %v2245 = vld [vmem:[%s1280 + $0x45] sm:$0x1]
      %v2246 = vsel %vm1044, %v2067, %v2245
      %2247 = vst [vmem:[%s1280 + $0x45] sm:$0x1] %v2246
      %v2248 = vld [vmem:[%s1280 + $0x46] sm:$0x1]
      %v2249 = vsel %vm1044, %v2068, %v2248
      %2250 = vst [vmem:[%s1280 + $0x46] sm:$0x1] %v2249
      %v2251 = vld [vmem:[%s1280 + $0x50] sm:$0x1]
      %v2252 = vsel %vm1044, %v2069, %v2251
      %2253 = vst [vmem:[%s1280 + $0x50] sm:$0x1] %v2252
      %v2254 = vld [vmem:[%s1280 + $0x51] sm:$0x1]
      %v2255 = vsel %vm1044, %v2070, %v2254
      %2256 = vst [vmem:[%s1280 + $0x51] sm:$0x1] %v2255
      %v2257 = vld [vmem:[%s1280 + $0x52] sm:$0x1]
      %v2258 = vsel %vm1044, %v2071, %v2257
      %2259 = vst [vmem:[%s1280 + $0x52] sm:$0x1] %v2258
      %v2260 = vld [vmem:[%s1280 + $0x53] sm:$0x1]
      %v2261 = vsel %vm1044, %v2072, %v2260
      %2262 = vst [vmem:[%s1280 + $0x53] sm:$0x1] %v2261
      %v2263 = vld [vmem:[%s1280 + $0x54] sm:$0x1]
      %v2264 = vsel %vm1044, %v2073, %v2263
      %2265 = vst [vmem:[%s1280 + $0x54] sm:$0x1] %v2264
      %v2266 = vld [vmem:[%s1280 + $0x55] sm:$0x1]
      %v2267 = vsel %vm1044, %v2074, %v2266
      %2268 = vst [vmem:[%s1280 + $0x55] sm:$0x1] %v2267
      %v2269 = vld [vmem:[%s1280 + $0x56] sm:$0x1]
      %v2270 = vsel %vm1044, %v2075, %v2269
      %2271 = vst [vmem:[%s1280 + $0x56] sm:$0x1] %v2270
      %v2272 = vld [vmem:[%s1280 + $0x60] sm:$0x1]
      %v2273 = vsel %vm1044, %v2076, %v2272
      %2274 = vst [vmem:[%s1280 + $0x60] sm:$0x1] %v2273
      %v2275 = vld [vmem:[%s1280 + $0x61] sm:$0x1]
      %v2276 = vsel %vm1044, %v2077, %v2275
      %2277 = vst [vmem:[%s1280 + $0x61] sm:$0x1] %v2276
      %v2278 = vld [vmem:[%s1280 + $0x62] sm:$0x1]
      %v2279 = vsel %vm1044, %v2078, %v2278
      %2280 = vst [vmem:[%s1280 + $0x62] sm:$0x1] %v2279
      %v2281 = vld [vmem:[%s1280 + $0x63] sm:$0x1]
      %v2282 = vsel %vm1044, %v2079, %v2281
      %2283 = vst [vmem:[%s1280 + $0x63] sm:$0x1] %v2282
      %v2284 = vld [vmem:[%s1280 + $0x64] sm:$0x1]
      %v2285 = vsel %vm1044, %v2080, %v2284
      %2286 = vst [vmem:[%s1280 + $0x64] sm:$0x1] %v2285
      %v2287 = vld [vmem:[%s1280 + $0x65] sm:$0x1]
      %v2288 = vsel %vm1044, %v2081, %v2287
      %2289 = vst [vmem:[%s1280 + $0x65] sm:$0x1] %v2288
      %v2290 = vld [vmem:[%s1280 + $0x66] sm:$0x1]
      %v2291 = vsel %vm1044, %v2082, %v2290
      %2292 = vst [vmem:[%s1280 + $0x66] sm:$0x1] %v2291
      %v2293 = vld [vmem:[%s1280 + $0x70] sm:$0x1]
      %v2294 = vsel %vm1044, %v2083, %v2293
      %2295 = vst [vmem:[%s1280 + $0x70] sm:$0x1] %v2294
      %v2296 = vld [vmem:[%s1280 + $0x71] sm:$0x1]
      %v2297 = vsel %vm1044, %v2084, %v2296
      %2298 = vst [vmem:[%s1280 + $0x71] sm:$0x1] %v2297
      %v2299 = vld [vmem:[%s1280 + $0x72] sm:$0x1]
      %v2300 = vsel %vm1044, %v2085, %v2299
      %2301 = vst [vmem:[%s1280 + $0x72] sm:$0x1] %v2300
      %v2302 = vld [vmem:[%s1280 + $0x73] sm:$0x1]
      %v2303 = vsel %vm1044, %v2086, %v2302
      %2304 = vst [vmem:[%s1280 + $0x73] sm:$0x1] %v2303
      %v2305 = vld [vmem:[%s1280 + $0x74] sm:$0x1]
      %v2306 = vsel %vm1044, %v2087, %v2305
      %2307 = vst [vmem:[%s1280 + $0x74] sm:$0x1] %v2306
      %v2308 = vld [vmem:[%s1280 + $0x75] sm:$0x1]
      %v2309 = vsel %vm1044, %v2088, %v2308
      %2310 = vst [vmem:[%s1280 + $0x75] sm:$0x1] %v2309
      %v2311 = vld [vmem:[%s1280 + $0x76] sm:$0x1]
      %v2312 = vsel %vm1044, %v2089, %v2311
      %2313 = vst [vmem:[%s1280 + $0x76] sm:$0x1] %v2312
      %2315 = vst [vmem:[#allocation1] sm:$0xff] %v1272
      %s2316 = scalar_lea.vmem [#allocation1], 3
      %v2317 = vld [vmem:[%s2316] ss:$4 sm:$0xff]
      %2319 = vst [vmem:[#allocation1 + $0x20] sm:$0xff] %v1273
      %s2320 = scalar_lea.vmem [#allocation1], 35
      %v2321 = vld [vmem:[%s2320] ss:$4 sm:$0xff]
      %2323 = vst [vmem:[#allocation1] sm:$0xff] %v1274
      %v2324 = vld [vmem:[%s2316] ss:$4 sm:$0xff]
      %2326 = vst [vmem:[#allocation1 + $0x20] sm:$0xff] %v1275
      %v2327 = vld [vmem:[%s2320] ss:$4 sm:$0xff]
      %2329 = vst [vmem:[#allocation1] sm:$0xff] %v1276
      %v2330 = vld [vmem:[%s2316] ss:$4 sm:$0xff]
      %2332 = vst [vmem:[#allocation1 + $0x20] sm:$0xff] %v1277
      %v2333 = vld [vmem:[%s2320] ss:$4 sm:$0xff]
      %2335 = vst [vmem:[#allocation1] sm:$0xff] %v1278
      %v2336 = vld [vmem:[%s2316] ss:$4 sm:$0xff]
      %2338 = vst [vmem:[#allocation1 + $0x20] sm:$0xff] %v1279
      %v2339 = vld [vmem:[%s2320] ss:$4 sm:$0xff]
      %s2348 = scalar_lea.vmem %s114, 15
      %v2349 = vld [vmem:[%s2348] sm:$0x1]
      %v2350 = vsel %vm1044, %v2317, %v2349
      %2351 = vst [vmem:[%s2348] sm:$0x1] %v2350
      %v2352 = vld [vmem:[%s2348 + $0x10] sm:$0x1]
      %v2353 = vsel %vm1044, %v2321, %v2352
      %2354 = vst [vmem:[%s2348 + $0x10] sm:$0x1] %v2353
      %v2355 = vld [vmem:[%s2348 + $0x20] sm:$0x1]
      %v2356 = vsel %vm1044, %v2324, %v2355
      %2357 = vst [vmem:[%s2348 + $0x20] sm:$0x1] %v2356
      %v2358 = vld [vmem:[%s2348 + $0x30] sm:$0x1]
      %v2359 = vsel %vm1044, %v2327, %v2358
      %2360 = vst [vmem:[%s2348 + $0x30] sm:$0x1] %v2359
      %v2361 = vld [vmem:[%s2348 + $0x40] sm:$0x1]
      %v2362 = vsel %vm1044, %v2330, %v2361
      %2363 = vst [vmem:[%s2348 + $0x40] sm:$0x1] %v2362
      %v2364 = vld [vmem:[%s2348 + $0x50] sm:$0x1]
      %v2365 = vsel %vm1044, %v2333, %v2364
      %2366 = vst [vmem:[%s2348 + $0x50] sm:$0x1] %v2365
      %v2367 = vld [vmem:[%s2348 + $0x60] sm:$0x1]
      %v2368 = vsel %vm1044, %v2336, %v2367
      %2369 = vst [vmem:[%s2348 + $0x60] sm:$0x1] %v2368
      %v2370 = vld [vmem:[%s2348 + $0x70] sm:$0x1]
      %v2371 = vsel %vm1044, %v2339, %v2370
      %2372 = vst [vmem:[%s2348 + $0x70] sm:$0x1] %v2371
      %p2373 = scmp.lt.s32.totalorder %s12, 1
      %s2374 = scalar_select %p2373, %s12, 1
      %s2375 = smul.addr %s2374, 128
      %s2376 = scalar_lea.vmem %s1, %s2375
      // Predicated region
      $region25: #{_lambda_.28} parent=23 // pred_check
        %p2377 = pneg %p56
      $region26: #{_lambda_.28} parent=23 // pred_check_branch
        %2379 = sbr.rel (%p2377) target = $region28
      $region27: #{_lambda_.28} parent=23 // pred_region
        _
      $region28: #{_lambda_.28} parent=23 // pred_fallthru
        _
    $region24: #{_lambda_.28} parent=5 // pred_fallthru
      _
    %p2380 = scmp.le.s32.totalorder 2, %s7
    // Predicated region
    $region29: #{_lambda_.28} parent=5 // pred_check
      %p2381 = pneg %p2380
    $region30: #{_lambda_.28} parent=5 // pred_check_branch
      %2383 = sbr.rel (%p2381) target = $region32
    $region31: #{_lambda_.28} parent=5 // pred_region
      %s2384 = ssub.s32 %s7, 2
      // Predicated region
      $region33: #{_lambda_.28} parent=31 // pred_check
        %p2385 = pneg %p62
      $region34: #{_lambda_.28} parent=31 // pred_check_branch
        %2387 = sbr.rel (%p2385) target = $region36
      $region35: #{_lambda_.28} parent=31 // pred_region
        %p2388 = scmp.lt.s32.totalorder %s13, 1
        %s2389 = scalar_select %p2388, %s13, 1
        %s2390 = smul.addr %s2389, 128
        %s2391 = scalar_lea.vmem %s1, %s2390
      $region36: #{_lambda_.28} parent=31 // pred_fallthru
        _
    $region32: #{_lambda_.28} parent=5 // pred_fallthru
      _
  $region6: #{_lambda_.28} parent=0 // loop_footer
    %s11 = sadd.s32 1, %s7
  $region7: #{_lambda_.28} parent=0 // loop_footer_branch
    %6 = sbr.rel target = $region3
  $region8: #{_lambda_.28} parent=0 // loop_exit
    _

// kernel: _lambda_.29
$region0: #{_lambda_.29}
  #allocation0 [shape = 'u32[]', space=smem, size = 0x4, offset = 0x4, fixed_abs, tag = 'smem constant byte address 0x4 - core index']
  #allocation1 [shape = 'u32[72,128]{1,0:T(1,128)}', space=vmem, size = 0x9000, scoped, tag = 'internal scratch']
  #allocation2 [shape = 'f32[16,128]{1,0:T(8,128)}', space=vmem, size = 0x2000, scoped, tag = 'scratch operand']
  %s0 = inlined_call_operand.vmem [shape: bf16[2,16,256], index: 0, kind: input, shape index: {}]
  %s1 = inlined_call_operand.vmem [shape: bf16[3,256,128], index: 1, kind: input, shape index: {}]
  %s2 = inlined_call_operand.vmem [shape: f32[1,128], index: 2, kind: input, shape index: {}]
  %s3 = inlined_call_operand.vmem [shape: f32[1,128], index: 3, kind: input, shape index: {}]
  %s4 = inlined_call_operand.vmem [shape: bf16[2,16,128], index: 4, kind: output, shape index: {}]
  %s5 = sld [smem:[#allocation0]]
  $region49: #{_lambda_.29} parent=0
    _
  %s7 = ssub.s32 1, %s5
  %s8 = scalar_select 0, %s7, %s5
  loop: start=0, step=1, limit=4
  $region2: #{_lambda_.29} parent=0 // loop_pre_header
    _
  $region3: #{_lambda_.29} parent=0 // loop_header
    %s10 = sphi 0, %s14
    %p11 = scmp.ge.s32.totalorder %s10, 4
    %s20 = sphi 0, %s22
    %s23 = sphi 0, %s20
    %s24 = sphi 0, %s23
    %s40 = sphi 0, %s24
    %s44 = sphi 0, %s44
    %s46 = sphi 0, %s44
    %s47 = sphi 0, %s46
    %s61 = sphi 0, %s47
    %s65 = sphi 0, %s65
    %s67 = sphi 0, %s65
    %s68 = sphi 0, %s67
    %s82 = sphi 0, %s68
    %s86 = sphi 0, %s86
    %s88 = sphi 0, %s86
    %s89 = sphi 0, %s88
    %s103 = sphi 0, %s89
    %s109 = sphi 0, %s111
    %s112 = sphi 0, %s109
    %s113 = sphi 0, %s112
    %s129 = sphi 0, %s113
  $region4: #{_lambda_.29} parent=0 // loop_header_branch
    %13 = sbr.rel (%p11) target = $region8
  $region5: #{_lambda_.29} parent=0 // loop_body
    %s15 = ssub.s32 %s10, 1
    %s16 = ssub.s32 %s10, 2
    %s17 = sadd.s32 %s10, 1
    %s18 = ssub.s32 %s10, %s17
    %p19 = scmp.eq.s32.totalorder %s18, 0
    %s21 = sadd.s32 %s20, 1
    %s22 = scalar_select %p19, %s20, %s21
    %p25 = pneg %p19
    %p26 = scmp.eq.s32.totalorder %s10, 1
    %p27 = por %p25, %p26
    %p28 = scmp.ne.s32.totalorder %s20, %s23
    %p29 = scmp.eq.s32.totalorder %s10, 0
    %p30 = por %p28, %p29
    %p31 = scmp.ne.s32.totalorder %s20, %s23
    %p32 = scmp.eq.s32.totalorder %s15, 1
    %p33 = por %p31, %p32
    %p34 = scmp.ne.s32.totalorder %s23, %s24
    %p35 = scmp.eq.s32.totalorder %s15, 0
    %p36 = por %p34, %p35
    %p37 = scmp.ne.s32.totalorder %s23, %s24
    %p38 = scmp.eq.s32.totalorder %s16, 1
    %p39 = por %p37, %p38
    %p41 = scmp.ne.s32.totalorder %s24, %s40
    %p42 = scmp.eq.s32.totalorder %s16, 0
    %p43 = por %p41, %p42
    %s45 = sadd.s32 %s44, 1
    %p48 = scmp.eq.s32.totalorder %s10, 1
    %p49 = scmp.ne.s32.totalorder %s44, %s46
    %p50 = scmp.eq.s32.totalorder %s10, 0
    %p51 = por %p49, %p50
    %p52 = scmp.ne.s32.totalorder %s44, %s46
    %p53 = scmp.eq.s32.totalorder %s15, 1
    %p54 = por %p52, %p53
    %p55 = scmp.ne.s32.totalorder %s46, %s47
    %p56 = scmp.eq.s32.totalorder %s15, 0
    %p57 = por %p55, %p56
    %p58 = scmp.ne.s32.totalorder %s46, %s47
    %p59 = scmp.eq.s32.totalorder %s16, 1
    %p60 = por %p58, %p59
    %p62 = scmp.ne.s32.totalorder %s47, %s61
    %p63 = scmp.eq.s32.totalorder %s16, 0
    %p64 = por %p62, %p63
    %s66 = sadd.s32 %s65, 1
    %p69 = scmp.eq.s32.totalorder %s10, 1
    %p70 = scmp.ne.s32.totalorder %s65, %s67
    %p71 = scmp.eq.s32.totalorder %s10, 0
    %p72 = por %p70, %p71
    %p73 = scmp.ne.s32.totalorder %s65, %s67
    %p74 = scmp.eq.s32.totalorder %s15, 1
    %p75 = por %p73, %p74
    %p76 = scmp.ne.s32.totalorder %s67, %s68
    %p77 = scmp.eq.s32.totalorder %s15, 0
    %p78 = por %p76, %p77
    %p79 = scmp.ne.s32.totalorder %s67, %s68
    %p80 = scmp.eq.s32.totalorder %s16, 1
    %p81 = por %p79, %p80
    %p83 = scmp.ne.s32.totalorder %s68, %s82
    %p84 = scmp.eq.s32.totalorder %s16, 0
    %p85 = por %p83, %p84
    %s87 = sadd.s32 %s86, 1
    %p90 = scmp.eq.s32.totalorder %s10, 1
    %p91 = scmp.ne.s32.totalorder %s86, %s88
    %p92 = scmp.eq.s32.totalorder %s10, 0
    %p93 = por %p91, %p92
    %p94 = scmp.ne.s32.totalorder %s86, %s88
    %p95 = scmp.eq.s32.totalorder %s15, 1
    %p96 = por %p94, %p95
    %p97 = scmp.ne.s32.totalorder %s88, %s89
    %p98 = scmp.eq.s32.totalorder %s15, 0
    %p99 = por %p97, %p98
    %p100 = scmp.ne.s32.totalorder %s88, %s89
    %p101 = scmp.eq.s32.totalorder %s16, 1
    %p102 = por %p100, %p101
    %p104 = scmp.ne.s32.totalorder %s89, %s103
    %p105 = scmp.eq.s32.totalorder %s16, 0
    %p106 = por %p104, %p105
    %s107 = ssub.s32 %s10, %s17
    %p108 = scmp.eq.s32.totalorder %s107, 0
    %s110 = sadd.s32 %s109, 1
    %s111 = scalar_select %p108, %s109, %s110
    %p114 = pneg %p108
    %p115 = scmp.eq.s32.totalorder %s10, 1
    %p116 = por %p114, %p115
    %p117 = scmp.ne.s32.totalorder %s109, %s112
    %p118 = scmp.eq.s32.totalorder %s10, 0
    %p119 = por %p117, %p118
    %p120 = scmp.ne.s32.totalorder %s109, %s112
    %p121 = scmp.eq.s32.totalorder %s15, 1
    %p122 = por %p120, %p121
    %p123 = scmp.ne.s32.totalorder %s112, %s113
    %p124 = scmp.eq.s32.totalorder %s15, 0
    %p125 = por %p123, %p124
    %p126 = scmp.ne.s32.totalorder %s112, %s113
    %p127 = scmp.eq.s32.totalorder %s16, 1
    %p128 = por %p126, %p127
    %p130 = scmp.ne.s32.totalorder %s113, %s129
    %p131 = scmp.eq.s32.totalorder %s16, 0
    %p132 = por %p130, %p131
    %p133 = scmp.le.s32.totalorder 1, %s10
    %p134 = scmp.lt.s32.totalorder %s10, 3
    %p135 = pnand %p133, %p134
    %p136 = pneg %p135
    // Predicated region
    $region9: #{_lambda_.29} parent=5 // pred_check
      _
    $region10: #{_lambda_.29} parent=5 // pred_check_branch
      %138 = sbr.rel (%p135) target = $region12
    $region11: #{_lambda_.29} parent=5 // pred_region
      %s139 = ssub.s32 %s10, 1
      // Predicated region
      $region13: #{_lambda_.29} parent=11 // pred_check
        %p140 = pneg %p57
      $region14: #{_lambda_.29} parent=11 // pred_check_branch
        %142 = sbr.rel (%p140) target = $region16
      $region15: #{_lambda_.29} parent=11 // pred_region
        _
      $region16: #{_lambda_.29} parent=11 // pred_fallthru
        _
      // Predicated region
      $region17: #{_lambda_.29} parent=11 // pred_check
        %p143 = pneg %p78
      $region18: #{_lambda_.29} parent=11 // pred_check_branch
        %145 = sbr.rel (%p143) target = $region20
      $region19: #{_lambda_.29} parent=11 // pred_region
        _
      $region20: #{_lambda_.29} parent=11 // pred_fallthru
        _
      // Predicated region
      $region21: #{_lambda_.29} parent=11 // pred_check
        %p146 = pneg %p99
      $region22: #{_lambda_.29} parent=11 // pred_check_branch
        %148 = sbr.rel (%p146) target = $region24
      $region23: #{_lambda_.29} parent=11 // pred_region
        _
      $region24: #{_lambda_.29} parent=11 // pred_fallthru
        _
    $region12: #{_lambda_.29} parent=5 // pred_fallthru
      _
    %p149 = scmp.lt.s32.totalorder %s10, 2
    // Predicated region
    $region25: #{_lambda_.29} parent=5 // pred_check
      %p150 = pneg %p149
    $region26: #{_lambda_.29} parent=5 // pred_check_branch
      %152 = sbr.rel (%p150) target = $region28
    $region27: #{_lambda_.29} parent=5 // pred_region
      // Predicated region
      $region29: #{_lambda_.29} parent=27 // pred_check
        %p153 = pneg %p30
      $region30: #{_lambda_.29} parent=27 // pred_check_branch
        %155 = sbr.rel (%p153) target = $region32
      $region31: #{_lambda_.29} parent=27 // pred_region
        %p156 = scmp.lt.s32.totalorder %s10, 1
        %s157 = scalar_select %p156, %s10, 1
        %s158 = smul.addr %s157, 4
        %s159 = smul.addr %s158, 4
        %s160 = scalar_lea.vmem %s0, %s159
      $region32: #{_lambda_.29} parent=27 // pred_fallthru
        _
    $region28: #{_lambda_.29} parent=5 // pred_fallthru
      _
    %p161 = scmp.le.s32.totalorder 1, %s10
    %p162 = scmp.lt.s32.totalorder %s10, 3
    %p163 = pnand %p161, %p162
    %p164 = pneg %p163
    // Predicated region
    $region33: #{_lambda_.29} parent=5 // pred_check
      _
    $region34: #{_lambda_.29} parent=5 // pred_check_branch
      %166 = sbr.rel (%p163) target = $region36
    $region35: #{_lambda_.29} parent=5 // pred_region
      %s167 = ssub.s32 %s10, 1
      %p168 = scmp.lt.s32.totalorder %s15, 1
      %s169 = scalar_select %p168, %s15, 1
      %s170 = smul.addr %s169, 4
      %s171 = smul.addr %s170, 4
      %s172 = scalar_lea.vmem %s0, %s171
      %p173 = pneg %p36
      %p174 = pneg %p33
      %p175 = pneg %p57
      %p176 = pneg %p54
      %p177 = pneg %p78
      %p178 = pneg %p75
      %p179 = pneg %p99
      %p180 = pneg %p96
      %p181 = pneg %p125
      %p182 = pneg %p122
      %p183 = scmp.lt.s32.totalorder %s15, 1
      %s184 = scalar_select %p183, %s15, 1
      %s185 = smul.addr %s184, 2
      %s186 = smul.addr %s185, 4
      %s187 = scalar_lea.vmem %s4, %s186
      %p188 = scmp.lt.s32.totalorder %s15, 1
      %s189 = scalar_select %p188, %s15, 1
      %s190 = smul.addr %s189, 4
      %s191 = smul.addr %s190, 4
      %s192 = scalar_lea.vmem %s0, %s191
      %p193 = scmp.lt.s32.totalorder %s15, 1
      %s194 = scalar_select %p193, %s15, 1
      %s195 = smul.addr %s194, 2
      %s196 = smul.addr %s195, 4
      %s197 = scalar_lea.vmem %s4, %s196
      %v198 = vld [vmem:[%s192] sm:$0xff]
      %v199 = vld [vmem:[%s192 + $0x8] sm:$0xff]
      %s200 = scalar_lea.vmem %s1, 128
      %v201 = vld [vmem:[%s200] sm:$0xf]
      %v202 = vld [vmem:[%s200 + $0x4] sm:$0xf]
      %v203 = vld [vmem:[%s200 + $0x8] sm:$0xf]
      %v204 = vld [vmem:[%s200 + $0xc] sm:$0xf]
      %v205 = vld [vmem:[%s200 + $0x10] sm:$0xf]
      %v206 = vld [vmem:[%s200 + $0x14] sm:$0xf]
      %v207 = vld [vmem:[%s200 + $0x18] sm:$0xf]
      %v208 = vld [vmem:[%s200 + $0x1c] sm:$0xf]
      %v209 = vld [vmem:[%s200 + $0x20] sm:$0xf]
      %v210 = vld [vmem:[%s200 + $0x24] sm:$0xf]
      %v211 = vld [vmem:[%s200 + $0x28] sm:$0xf]
      %v212 = vld [vmem:[%s200 + $0x2c] sm:$0xf]
      %v213 = vld [vmem:[%s200 + $0x30] sm:$0xf]
      %v214 = vld [vmem:[%s200 + $0x34] sm:$0xf]
      %v215 = vld [vmem:[%s200 + $0x38] sm:$0xf]
      %v216 = vld [vmem:[%s200 + $0x3c] sm:$0xf]
      %v217 = vld [vmem:[%s200 + $0x40] sm:$0xf]
      %v218 = vld [vmem:[%s200 + $0x44] sm:$0xf]
      %v219 = vld [vmem:[%s200 + $0x48] sm:$0xf]
      %v220 = vld [vmem:[%s200 + $0x4c] sm:$0xf]
      %v221 = vld [vmem:[%s200 + $0x50] sm:$0xf]
      %v222 = vld [vmem:[%s200 + $0x54] sm:$0xf]
      %v223 = vld [vmem:[%s200 + $0x58] sm:$0xf]
      %v224 = vld [vmem:[%s200 + $0x5c] sm:$0xf]
      %v225 = vld [vmem:[%s200 + $0x60] sm:$0xf]
      %v226 = vld [vmem:[%s200 + $0x64] sm:$0xf]
      %v227 = vld [vmem:[%s200 + $0x68] sm:$0xf]
      %v228 = vld [vmem:[%s200 + $0x6c] sm:$0xf]
      %v229 = vld [vmem:[%s200 + $0x70] sm:$0xf]
      %v230 = vld [vmem:[%s200 + $0x74] sm:$0xf]
      %v231 = vld [vmem:[%s200 + $0x78] sm:$0xf]
      %v232 = vld [vmem:[%s200 + $0x7c] sm:$0xf]
      %v235 = vunpack.c.l.b16 %v198
      %v236 = vunpack.c.h.b16 %v198
      %v237 = vunpack.c.l.b16 %v199
      %v238 = vunpack.c.h.b16 %v199
      %v239 = vpack.c.b16 %v237, %v235
      %v240 = vpack.c.b16 %v238, %v236
      %v275 = vunpack.c.l.b16 %v201
      %v276 = vunpack.c.l.b16 %v202
      %v277 = vunpack.c.l.b16 %v203
      %v278 = vunpack.c.l.b16 %v204
      %v279 = vunpack.c.l.b16 %v205
      %v280 = vunpack.c.l.b16 %v206
      %v281 = vunpack.c.l.b16 %v207
      %v282 = vunpack.c.l.b16 %v208
      %v283 = vunpack.c.l.b16 %v209
      %v284 = vunpack.c.l.b16 %v210
      %v285 = vunpack.c.l.b16 %v211
      %v286 = vunpack.c.l.b16 %v212
      %v287 = vunpack.c.l.b16 %v213
      %v288 = vunpack.c.l.b16 %v214
      %v289 = vunpack.c.l.b16 %v215
      %v290 = vunpack.c.l.b16 %v216
      %v291 = vunpack.c.l.b16 %v217
      %v292 = vunpack.c.l.b16 %v218
      %v293 = vunpack.c.l.b16 %v219
      %v294 = vunpack.c.l.b16 %v220
      %v295 = vunpack.c.l.b16 %v221
      %v296 = vunpack.c.l.b16 %v222
      %v297 = vunpack.c.l.b16 %v223
      %v298 = vunpack.c.l.b16 %v224
      %v299 = vunpack.c.l.b16 %v225
      %v300 = vunpack.c.l.b16 %v226
      %v301 = vunpack.c.l.b16 %v227
      %v302 = vunpack.c.l.b16 %v228
      %v303 = vunpack.c.l.b16 %v229
      %v304 = vunpack.c.l.b16 %v230
      %v305 = vunpack.c.l.b16 %v231
      %v306 = vunpack.c.l.b16 %v232
      %v307 = vpack.c.b16 %v276, %v275
      %v308 = vpack.c.b16 %v278, %v277
      %v309 = vpack.c.b16 %v280, %v279
      %v310 = vpack.c.b16 %v282, %v281
      %v311 = vpack.c.b16 %v284, %v283
      %v312 = vpack.c.b16 %v286, %v285
      %v313 = vpack.c.b16 %v288, %v287
      %v314 = vpack.c.b16 %v290, %v289
      %v315 = vpack.c.b16 %v292, %v291
      %v316 = vpack.c.b16 %v294, %v293
      %v317 = vpack.c.b16 %v296, %v295
      %v318 = vpack.c.b16 %v298, %v297
      %v319 = vpack.c.b16 %v300, %v299
      %v320 = vpack.c.b16 %v302, %v301
      %v321 = vpack.c.b16 %v304, %v303
      %v322 = vpack.c.b16 %v306, %v305
      %339 = vmatpush.bf16.msra.mxu0 %v314
      %340 = vmatpush.bf16.msra.mxu0 %v313
      %341 = vmatpush.bf16.msra.mxu0 %v312
      %342 = vmatpush.bf16.msra.mxu0 %v311
      %343 = vmatpush.bf16.msra.mxu0 %v310
      %344 = vmatpush.bf16.msra.mxu0 %v309
      %345 = vmatpush.bf16.msra.mxu0 %v308
      %346 = vmatpush.bf16.msra.mxu0 %v307
      %347 = vmatmul.bf16.gmra.mxu0 %v239
      %v348 = vpop.f32.mrf.mxu0
      %v349 = vadd.f32 0.0, %v348
      %v350 = vpop.f32.mrf.mxu0
      %v351 = vadd.f32 0.0, %v350
      %352 = vdwg.mxu0
      %353 = vmatpush.bf16.msra.mxu0 %v322
      %354 = vmatpush.bf16.msra.mxu0 %v321
      %355 = vmatpush.bf16.msra.mxu0 %v320
      %356 = vmatpush.bf16.msra.mxu0 %v319
      %357 = vmatpush.bf16.msra.mxu0 %v318
      %358 = vmatpush.bf16.msra.mxu0 %v317
      %359 = vmatpush.bf16.msra.mxu0 %v316
      %360 = vmatpush.bf16.msra.mxu0 %v315
      %361 = vmatmul.bf16.gmra.mxu0 %v240
      %v362 = vpop.f32.mrf.mxu0
      %v363 = vadd.f32 %v349, %v362
      %v364 = vpop.f32.mrf.mxu0
      %v365 = vadd.f32 %v351, %v364
      %366 = vdwg.mxu0
      %367 = vst [vmem:[#allocation2] sm:$0xff] %v363
      %368 = vst [vmem:[#allocation2 + $0x8] sm:$0xff] %v365
      %v369 = vld [vmem:[#allocation2 + $0x1] sm:$0xff]
      %v370 = vld [vmem:[#allocation2 + $0x9] sm:$0x7f]
      %v371 = vld [vmem:[%s192] sm:$0xff]
      %v372 = vld [vmem:[%s192 + $0x8] sm:$0xff]
      %v373 = vld [vmem:[%s1] sm:$0xf]
      %v374 = vld [vmem:[%s1 + $0x4] sm:$0xf]
      %v375 = vld [vmem:[%s1 + $0x8] sm:$0xf]
      %v376 = vld [vmem:[%s1 + $0xc] sm:$0xf]
      %v377 = vld [vmem:[%s1 + $0x10] sm:$0xf]
      %v378 = vld [vmem:[%s1 + $0x14] sm:$0xf]
      %v379 = vld [vmem:[%s1 + $0x18] sm:$0xf]
      %v380 = vld [vmem:[%s1 + $0x1c] sm:$0xf]
      %v381 = vld [vmem:[%s1 + $0x20] sm:$0xf]
      %v382 = vld [vmem:[%s1 + $0x24] sm:$0xf]
      %v383 = vld [vmem:[%s1 + $0x28] sm:$0xf]
      %v384 = vld [vmem:[%s1 + $0x2c] sm:$0xf]
      %v385 = vld [vmem:[%s1 + $0x30] sm:$0xf]
      %v386 = vld [vmem:[%s1 + $0x34] sm:$0xf]
      %v387 = vld [vmem:[%s1 + $0x38] sm:$0xf]
      %v388 = vld [vmem:[%s1 + $0x3c] sm:$0xf]
      %v389 = vld [vmem:[%s1 + $0x40] sm:$0xf]
      %v390 = vld [vmem:[%s1 + $0x44] sm:$0xf]
      %v391 = vld [vmem:[%s1 + $0x48] sm:$0xf]
      %v392 = vld [vmem:[%s1 + $0x4c] sm:$0xf]
      %v393 = vld [vmem:[%s1 + $0x50] sm:$0xf]
      %v394 = vld [vmem:[%s1 + $0x54] sm:$0xf]
      %v395 = vld [vmem:[%s1 + $0x58] sm:$0xf]
      %v396 = vld [vmem:[%s1 + $0x5c] sm:$0xf]
      %v397 = vld [vmem:[%s1 + $0x60] sm:$0xf]
      %v398 = vld [vmem:[%s1 + $0x64] sm:$0xf]
      %v399 = vld [vmem:[%s1 + $0x68] sm:$0xf]
      %v400 = vld [vmem:[%s1 + $0x6c] sm:$0xf]
      %v401 = vld [vmem:[%s1 + $0x70] sm:$0xf]
      %v402 = vld [vmem:[%s1 + $0x74] sm:$0xf]
      %v403 = vld [vmem:[%s1 + $0x78] sm:$0xf]
      %v404 = vld [vmem:[%s1 + $0x7c] sm:$0xf]
      %v407 = vunpack.c.l.b16 %v371
      %v408 = vunpack.c.h.b16 %v371
      %v409 = vunpack.c.l.b16 %v372
      %v410 = vunpack.c.h.b16 %v372
      %v411 = vpack.c.b16 %v409, %v407
      %v412 = vpack.c.b16 %v410, %v408
      %v447 = vunpack.c.l.b16 %v373
      %v448 = vunpack.c.l.b16 %v374
      %v449 = vunpack.c.l.b16 %v375
      %v450 = vunpack.c.l.b16 %v376
      %v451 = vunpack.c.l.b16 %v377
      %v452 = vunpack.c.l.b16 %v378
      %v453 = vunpack.c.l.b16 %v379
      %v454 = vunpack.c.l.b16 %v380
      %v455 = vunpack.c.l.b16 %v381
      %v456 = vunpack.c.l.b16 %v382
      %v457 = vunpack.c.l.b16 %v383
      %v458 = vunpack.c.l.b16 %v384
      %v459 = vunpack.c.l.b16 %v385
      %v460 = vunpack.c.l.b16 %v386
      %v461 = vunpack.c.l.b16 %v387
      %v462 = vunpack.c.l.b16 %v388
      %v463 = vunpack.c.l.b16 %v389
      %v464 = vunpack.c.l.b16 %v390
      %v465 = vunpack.c.l.b16 %v391
      %v466 = vunpack.c.l.b16 %v392
      %v467 = vunpack.c.l.b16 %v393
      %v468 = vunpack.c.l.b16 %v394
      %v469 = vunpack.c.l.b16 %v395
      %v470 = vunpack.c.l.b16 %v396
      %v471 = vunpack.c.l.b16 %v397
      %v472 = vunpack.c.l.b16 %v398
      %v473 = vunpack.c.l.b16 %v399
      %v474 = vunpack.c.l.b16 %v400
      %v475 = vunpack.c.l.b16 %v401
      %v476 = vunpack.c.l.b16 %v402
      %v477 = vunpack.c.l.b16 %v403
      %v478 = vunpack.c.l.b16 %v404
      %v479 = vpack.c.b16 %v448, %v447
      %v480 = vpack.c.b16 %v450, %v449
      %v481 = vpack.c.b16 %v452, %v451
      %v482 = vpack.c.b16 %v454, %v453
      %v483 = vpack.c.b16 %v456, %v455
      %v484 = vpack.c.b16 %v458, %v457
      %v485 = vpack.c.b16 %v460, %v459
      %v486 = vpack.c.b16 %v462, %v461
      %v487 = vpack.c.b16 %v464, %v463
      %v488 = vpack.c.b16 %v466, %v465
      %v489 = vpack.c.b16 %v468, %v467
      %v490 = vpack.c.b16 %v470, %v469
      %v491 = vpack.c.b16 %v472, %v471
      %v492 = vpack.c.b16 %v474, %v473
      %v493 = vpack.c.b16 %v476, %v475
      %v494 = vpack.c.b16 %v478, %v477
      %511 = vmatpush.bf16.msra.mxu0 %v486
      %512 = vmatpush.bf16.msra.mxu0 %v485
      %513 = vmatpush.bf16.msra.mxu0 %v484
      %514 = vmatpush.bf16.msra.mxu0 %v483
      %515 = vmatpush.bf16.msra.mxu0 %v482
      %516 = vmatpush.bf16.msra.mxu0 %v481
      %517 = vmatpush.bf16.msra.mxu0 %v480
      %518 = vmatpush.bf16.msra.mxu0 %v479
      %519 = vmatmul.bf16.gmra.mxu0 %v411
      %v520 = vpop.f32.mrf.mxu0
      %v521 = vadd.f32 0.0, %v520
      %v522 = vpop.f32.mrf.mxu0
      %v523 = vadd.f32 0.0, %v522
      %524 = vdwg.mxu0
      %525 = vmatpush.bf16.msra.mxu0 %v494
      %526 = vmatpush.bf16.msra.mxu0 %v493
      %527 = vmatpush.bf16.msra.mxu0 %v492
      %528 = vmatpush.bf16.msra.mxu0 %v491
      %529 = vmatpush.bf16.msra.mxu0 %v490
      %530 = vmatpush.bf16.msra.mxu0 %v489
      %531 = vmatpush.bf16.msra.mxu0 %v488
      %532 = vmatpush.bf16.msra.mxu0 %v487
      %533 = vmatmul.bf16.gmra.mxu0 %v412
      %v534 = vpop.f32.mrf.mxu0
      %v535 = vadd.f32 %v521, %v534
      %v536 = vpop.f32.mrf.mxu0
      %v537 = vadd.f32 %v523, %v536
      %538 = vdwg.mxu0
      %v539 = vadd.f32 %v369, %v535
      %v540 = vadd.f32 %v370, %v537
      %541 = vst [vmem:[#allocation2 + $0x1] sm:$0xff] %v539
      %542 = vst [vmem:[#allocation2 + $0x9] sm:$0x7f] %v540
      %v543 = vld [vmem:[#allocation2] sm:$0xff]
      %v544 = vld [vmem:[#allocation2 + $0x8] sm:$0x7f]
      %v545 = vld [vmem:[%s192] sm:$0xff]
      %v546 = vld [vmem:[%s192 + $0x8] sm:$0xff]
      %s547 = scalar_lea.vmem %s1, 256
      %v548 = vld [vmem:[%s547] sm:$0xf]
      %v549 = vld [vmem:[%s547 + $0x4] sm:$0xf]
      %v550 = vld [vmem:[%s547 + $0x8] sm:$0xf]
      %v551 = vld [vmem:[%s547 + $0xc] sm:$0xf]
      %v552 = vld [vmem:[%s547 + $0x10] sm:$0xf]
      %v553 = vld [vmem:[%s547 + $0x14] sm:$0xf]
      %v554 = vld [vmem:[%s547 + $0x18] sm:$0xf]
      %v555 = vld [vmem:[%s547 + $0x1c] sm:$0xf]
      %v556 = vld [vmem:[%s547 + $0x20] sm:$0xf]
      %v557 = vld [vmem:[%s547 + $0x24] sm:$0xf]
      %v558 = vld [vmem:[%s547 + $0x28] sm:$0xf]
      %v559 = vld [vmem:[%s547 + $0x2c] sm:$0xf]
      %v560 = vld [vmem:[%s547 + $0x30] sm:$0xf]
      %v561 = vld [vmem:[%s547 + $0x34] sm:$0xf]
      %v562 = vld [vmem:[%s547 + $0x38] sm:$0xf]
      %v563 = vld [vmem:[%s547 + $0x3c] sm:$0xf]
      %v564 = vld [vmem:[%s547 + $0x40] sm:$0xf]
      %v565 = vld [vmem:[%s547 + $0x44] sm:$0xf]
      %v566 = vld [vmem:[%s547 + $0x48] sm:$0xf]
      %v567 = vld [vmem:[%s547 + $0x4c] sm:$0xf]
      %v568 = vld [vmem:[%s547 + $0x50] sm:$0xf]
      %v569 = vld [vmem:[%s547 + $0x54] sm:$0xf]
      %v570 = vld [vmem:[%s547 + $0x58] sm:$0xf]
      %v571 = vld [vmem:[%s547 + $0x5c] sm:$0xf]
      %v572 = vld [vmem:[%s547 + $0x60] sm:$0xf]
      %v573 = vld [vmem:[%s547 + $0x64] sm:$0xf]
      %v574 = vld [vmem:[%s547 + $0x68] sm:$0xf]
      %v575 = vld [vmem:[%s547 + $0x6c] sm:$0xf]
      %v576 = vld [vmem:[%s547 + $0x70] sm:$0xf]
      %v577 = vld [vmem:[%s547 + $0x74] sm:$0xf]
      %v578 = vld [vmem:[%s547 + $0x78] sm:$0xf]
      %v579 = vld [vmem:[%s547 + $0x7c] sm:$0xf]
      %v582 = vunpack.c.l.b16 %v545
      %v583 = vunpack.c.h.b16 %v545
      %v584 = vunpack.c.l.b16 %v546
      %v585 = vunpack.c.h.b16 %v546
      %v586 = vpack.c.b16 %v584, %v582
      %v587 = vpack.c.b16 %v585, %v583
      %v589 = vshrl.u32 %v586, 16
      %v591 = vshll.u32 %v586, 16
      %v593 = vrot.slane %v591, 1
      %v594 = vor.u32 %v589, %v593
      %v596 = vshrl.u32 %v587, 16
      %v598 = vshll.u32 %v587, 16
      %v600 = vrot.slane %v598, 1
      %v601 = vor.u32 %v596, %v600
      %v636 = vunpack.c.l.b16 %v548
      %v637 = vunpack.c.l.b16 %v549
      %v638 = vunpack.c.l.b16 %v550
      %v639 = vunpack.c.l.b16 %v551
      %v640 = vunpack.c.l.b16 %v552
      %v641 = vunpack.c.l.b16 %v553
      %v642 = vunpack.c.l.b16 %v554
      %v643 = vunpack.c.l.b16 %v555
      %v644 = vunpack.c.l.b16 %v556
      %v645 = vunpack.c.l.b16 %v557
      %v646 = vunpack.c.l.b16 %v558
      %v647 = vunpack.c.l.b16 %v559
      %v648 = vunpack.c.l.b16 %v560
      %v649 = vunpack.c.l.b16 %v561
      %v650 = vunpack.c.l.b16 %v562
      %v651 = vunpack.c.l.b16 %v563
      %v652 = vunpack.c.l.b16 %v564
      %v653 = vunpack.c.l.b16 %v565
      %v654 = vunpack.c.l.b16 %v566
      %v655 = vunpack.c.l.b16 %v567
      %v656 = vunpack.c.l.b16 %v568
      %v657 = vunpack.c.l.b16 %v569
      %v658 = vunpack.c.l.b16 %v570
      %v659 = vunpack.c.l.b16 %v571
      %v660 = vunpack.c.l.b16 %v572
      %v661 = vunpack.c.l.b16 %v573
      %v662 = vunpack.c.l.b16 %v574
      %v663 = vunpack.c.l.b16 %v575
      %v664 = vunpack.c.l.b16 %v576
      %v665 = vunpack.c.l.b16 %v577
      %v666 = vunpack.c.l.b16 %v578
      %v667 = vunpack.c.l.b16 %v579
      %v668 = vpack.c.b16 %v637, %v636
      %v669 = vpack.c.b16 %v639, %v638
      %v670 = vpack.c.b16 %v641, %v640
      %v671 = vpack.c.b16 %v643, %v642
      %v672 = vpack.c.b16 %v645, %v644
      %v673 = vpack.c.b16 %v647, %v646
      %v674 = vpack.c.b16 %v649, %v648
      %v675 = vpack.c.b16 %v651, %v650
      %v676 = vpack.c.b16 %v653, %v652
      %v677 = vpack.c.b16 %v655, %v654
      %v678 = vpack.c.b16 %v657, %v656
      %v679 = vpack.c.b16 %v659, %v658
      %v680 = vpack.c.b16 %v661, %v660
      %v681 = vpack.c.b16 %v663, %v662
      %v682 = vpack.c.b16 %v665, %v664
      %v683 = vpack.c.b16 %v667, %v666
      %700 = vmatpush.bf16.msra.mxu0 %v675
      %701 = vmatpush.bf16.msra.mxu0 %v674
      %702 = vmatpush.bf16.msra.mxu0 %v673
      %703 = vmatpush.bf16.msra.mxu0 %v672
      %704 = vmatpush.bf16.msra.mxu0 %v671
      %705 = vmatpush.bf16.msra.mxu0 %v670
      %706 = vmatpush.bf16.msra.mxu0 %v669
      %707 = vmatpush.bf16.msra.mxu0 %v668
      %708 = vmatmul.bf16.gmra.mxu0 %v594
      %v709 = vpop.f32.mrf.mxu0
      %v710 = vadd.f32 0.0, %v709
      %v711 = vpop.f32.mrf.mxu0
      %v712 = vadd.f32 0.0, %v711
      %713 = vdwg.mxu0
      %714 = vmatpush.bf16.msra.mxu0 %v683
      %715 = vmatpush.bf16.msra.mxu0 %v682
      %716 = vmatpush.bf16.msra.mxu0 %v681
      %717 = vmatpush.bf16.msra.mxu0 %v680
      %718 = vmatpush.bf16.msra.mxu0 %v679
      %719 = vmatpush.bf16.msra.mxu0 %v678
      %720 = vmatpush.bf16.msra.mxu0 %v677
      %721 = vmatpush.bf16.msra.mxu0 %v676
      %722 = vmatmul.bf16.gmra.mxu0 %v601
      %v723 = vpop.f32.mrf.mxu0
      %v724 = vadd.f32 %v710, %v723
      %v725 = vpop.f32.mrf.mxu0
      %v726 = vadd.f32 %v712, %v725
      %727 = vdwg.mxu0
      %v728 = vadd.f32 %v543, %v724
      %v729 = vadd.f32 %v544, %v726
      %730 = vst [vmem:[#allocation2] sm:$0xff] %v728
      %731 = vst [vmem:[#allocation2 + $0x8] sm:$0x7f] %v729
      %v732 = vld [vmem:[#allocation2] sm:$0xff]
      %v733 = vld [vmem:[#allocation2 + $0x8] sm:$0xff]
      %v734 = vld [vmem:[%s2] sm:$0x1]
      %v736 = vperm.slane %v734, 0
      %v738 = vmul.f32 %v732, %v736
      %v739 = vmul.f32 %v733, %v736
      %v740 = vld [vmem:[%s3] sm:$0x1]
      %v742 = vperm.slane %v740, 0
      %v744 = vadd.f32 %v738, %v742
      %v745 = vadd.f32 %v739, %v742
      %v746 = vmax.f32 %v744, 0.0
      %v747 = vmax.f32 %v745, 0.0
      %v748 = vpack.c.bf16 %v746, %v746
      %v749 = vpack.c.bf16 %v747, %v747
      %750 = vst [vmem:[%s197] sm:$0xf] %v748
      %751 = vst [vmem:[%s197 + $0x4] sm:$0xf] %v749
      %p752 = scmp.lt.s32.totalorder %s15, 1
      %s753 = scalar_select %p752, %s15, 1
      %s754 = smul.addr %s753, 2
      %s755 = smul.addr %s754, 4
      %s756 = scalar_lea.vmem %s4, %s755
      // Predicated region
      $region37: #{_lambda_.29} parent=35 // pred_check
        %p757 = pneg %p122
      $region38: #{_lambda_.29} parent=35 // pred_check_branch
        %759 = sbr.rel (%p757) target = $region40
      $region39: #{_lambda_.29} parent=35 // pred_region
        _
      $region40: #{_lambda_.29} parent=35 // pred_fallthru
        _
    $region36: #{_lambda_.29} parent=5 // pred_fallthru
      _
    %p760 = scmp.le.s32.totalorder 2, %s10
    // Predicated region
    $region41: #{_lambda_.29} parent=5 // pred_check
      %p761 = pneg %p760
    $region42: #{_lambda_.29} parent=5 // pred_check_branch
      %763 = sbr.rel (%p761) target = $region44
    $region43: #{_lambda_.29} parent=5 // pred_region
      %s764 = ssub.s32 %s10, 2
      // Predicated region
      $region45: #{_lambda_.29} parent=43 // pred_check
        %p765 = pneg %p128
      $region46: #{_lambda_.29} parent=43 // pred_check_branch
        %767 = sbr.rel (%p765) target = $region48
      $region47: #{_lambda_.29} parent=43 // pred_region
        %p768 = scmp.lt.s32.totalorder %s16, 1
        %s769 = scalar_select %p768, %s16, 1
        %s770 = smul.addr %s769, 2
        %s771 = smul.addr %s770, 4
        %s772 = scalar_lea.vmem %s4, %s771
      $region48: #{_lambda_.29} parent=43 // pred_fallthru
        _
    $region44: #{_lambda_.29} parent=5 // pred_fallthru
      _
  $region6: #{_lambda_.29} parent=0 // loop_footer
    %s14 = sadd.s32 1, %s10
  $region7: #{_lambda_.29} parent=0 // loop_footer_branch
    %9 = sbr.rel target = $region3
  $region8: #{_lambda_.29} parent=0 // loop_exit
    _

// kernel: _lambda_.31
$region0: #{_lambda_.31}
  #allocation0 [shape = 'u32[]', space=smem, size = 0x4, offset = 0x4, fixed_abs, tag = 'smem constant byte address 0x4 - core index']
  #allocation1 [shape = 'u32[72,128]{1,0:T(1,128)}', space=vmem, size = 0x9000, scoped, tag = 'internal scratch']
  #allocation2 [shape = 'f32[16,16]{1,0:T(8,128)}', space=vmem, size = 0x2000, scoped, tag = 'scratch operand']
  %s0 = inlined_call_operand.vmem [shape: bf16[2,16,128], index: 0, kind: input, shape index: {}]
  %s1 = inlined_call_operand.vmem [shape: bf16[3,128,16], index: 1, kind: input, shape index: {}]
  %s2 = inlined_call_operand.vmem [shape: f32[1,16], index: 2, kind: input, shape index: {}]
  %s3 = inlined_call_operand.vmem [shape: f32[1,16], index: 3, kind: input, shape index: {}]
  %s4 = inlined_call_operand.hbm [shape: f32[2,16,16], index: 4, kind: output, shape index: {}]
  %s5 = sld [smem:[#allocation0]]
  $region49: #{_lambda_.31} parent=0
    _
  %s7 = ssub.s32 1, %s5
  %s8 = scalar_select 0, %s7, %s5
  $region1: #{_lambda_.31} parent=0
    #allocation3 [shape = 'u8[16384]{0}', space=vmem, size = 0x4000, scoped, tag = 'output window, operand 0']
    #allocation4 [shape = 's32[2]{0}', space=sflag, size = 0x8, scoped, tag = 'scoped memory for _lambda_.31']
    %9 = vsyncpa [#allocation4], 0
    %s10 = scalar_lea.sflag [#allocation4], 1
    %11 = vsyncpa %s10, 0
    loop: start=0, step=1, limit=4
    $region2: #{_lambda_.31} parent=1 // loop_pre_header
      _
    $region3: #{_lambda_.31} parent=1 // loop_header
      %s13 = sphi 0, %s17
      %p14 = scmp.ge.s32.totalorder %s13, 4
      %s23 = sphi 0, %s25
      %s26 = sphi 0, %s23
      %s27 = sphi 0, %s26
      %s43 = sphi 0, %s27
      %s47 = sphi 0, %s47
      %s49 = sphi 0, %s47
      %s50 = sphi 0, %s49
      %s64 = sphi 0, %s50
      %s68 = sphi 0, %s68
      %s70 = sphi 0, %s68
      %s71 = sphi 0, %s70
      %s85 = sphi 0, %s71
      %s89 = sphi 0, %s89
      %s91 = sphi 0, %s89
      %s92 = sphi 0, %s91
      %s106 = sphi 0, %s92
      %s112 = sphi 0, %s114
      %s115 = sphi 0, %s112
      %s116 = sphi 0, %s115
      %s132 = sphi 0, %s116
    $region4: #{_lambda_.31} parent=1 // loop_header_branch
      %16 = sbr.rel (%p14) target = $region8
    $region5: #{_lambda_.31} parent=1 // loop_body
      %s18 = ssub.s32 %s13, 1
      %s19 = ssub.s32 %s13, 2
      %s20 = sadd.s32 %s13, 1
      %s21 = ssub.s32 %s13, %s20
      %p22 = scmp.eq.s32.totalorder %s21, 0
      %s24 = sadd.s32 %s23, 1
      %s25 = scalar_select %p22, %s23, %s24
      %p28 = pneg %p22
      %p29 = scmp.eq.s32.totalorder %s13, 1
      %p30 = por %p28, %p29
      %p31 = scmp.ne.s32.totalorder %s23, %s26
      %p32 = scmp.eq.s32.totalorder %s13, 0
      %p33 = por %p31, %p32
      %p34 = scmp.ne.s32.totalorder %s23, %s26
      %p35 = scmp.eq.s32.totalorder %s18, 1
      %p36 = por %p34, %p35
      %p37 = scmp.ne.s32.totalorder %s26, %s27
      %p38 = scmp.eq.s32.totalorder %s18, 0
      %p39 = por %p37, %p38
      %p40 = scmp.ne.s32.totalorder %s26, %s27
      %p41 = scmp.eq.s32.totalorder %s19, 1
      %p42 = por %p40, %p41
      %p44 = scmp.ne.s32.totalorder %s27, %s43
      %p45 = scmp.eq.s32.totalorder %s19, 0
      %p46 = por %p44, %p45
      %s48 = sadd.s32 %s47, 1
      %p51 = scmp.eq.s32.totalorder %s13, 1
      %p52 = scmp.ne.s32.totalorder %s47, %s49
      %p53 = scmp.eq.s32.totalorder %s13, 0
      %p54 = por %p52, %p53
      %p55 = scmp.ne.s32.totalorder %s47, %s49
      %p56 = scmp.eq.s32.totalorder %s18, 1
      %p57 = por %p55, %p56
      %p58 = scmp.ne.s32.totalorder %s49, %s50
      %p59 = scmp.eq.s32.totalorder %s18, 0
      %p60 = por %p58, %p59
      %p61 = scmp.ne.s32.totalorder %s49, %s50
      %p62 = scmp.eq.s32.totalorder %s19, 1
      %p63 = por %p61, %p62
      %p65 = scmp.ne.s32.totalorder %s50, %s64
      %p66 = scmp.eq.s32.totalorder %s19, 0
      %p67 = por %p65, %p66
      %s69 = sadd.s32 %s68, 1
      %p72 = scmp.eq.s32.totalorder %s13, 1
      %p73 = scmp.ne.s32.totalorder %s68, %s70
      %p74 = scmp.eq.s32.totalorder %s13, 0
      %p75 = por %p73, %p74
      %p76 = scmp.ne.s32.totalorder %s68, %s70
      %p77 = scmp.eq.s32.totalorder %s18, 1
      %p78 = por %p76, %p77
      %p79 = scmp.ne.s32.totalorder %s70, %s71
      %p80 = scmp.eq.s32.totalorder %s18, 0
      %p81 = por %p79, %p80
      %p82 = scmp.ne.s32.totalorder %s70, %s71
      %p83 = scmp.eq.s32.totalorder %s19, 1
      %p84 = por %p82, %p83
      %p86 = scmp.ne.s32.totalorder %s71, %s85
      %p87 = scmp.eq.s32.totalorder %s19, 0
      %p88 = por %p86, %p87
      %s90 = sadd.s32 %s89, 1
      %p93 = scmp.eq.s32.totalorder %s13, 1
      %p94 = scmp.ne.s32.totalorder %s89, %s91
      %p95 = scmp.eq.s32.totalorder %s13, 0
      %p96 = por %p94, %p95
      %p97 = scmp.ne.s32.totalorder %s89, %s91
      %p98 = scmp.eq.s32.totalorder %s18, 1
      %p99 = por %p97, %p98
      %p100 = scmp.ne.s32.totalorder %s91, %s92
      %p101 = scmp.eq.s32.totalorder %s18, 0
      %p102 = por %p100, %p101
      %p103 = scmp.ne.s32.totalorder %s91, %s92
      %p104 = scmp.eq.s32.totalorder %s19, 1
      %p105 = por %p103, %p104
      %p107 = scmp.ne.s32.totalorder %s92, %s106
      %p108 = scmp.eq.s32.totalorder %s19, 0
      %p109 = por %p107, %p108
      %s110 = ssub.s32 %s13, %s20
      %p111 = scmp.eq.s32.totalorder %s110, 0
      %s113 = sadd.s32 %s112, 1
      %s114 = scalar_select %p111, %s112, %s113
      %p117 = pneg %p111
      %p118 = scmp.eq.s32.totalorder %s13, 1
      %p119 = por %p117, %p118
      %p120 = scmp.ne.s32.totalorder %s112, %s115
      %p121 = scmp.eq.s32.totalorder %s13, 0
      %p122 = por %p120, %p121
      %p123 = scmp.ne.s32.totalorder %s112, %s115
      %p124 = scmp.eq.s32.totalorder %s18, 1
      %p125 = por %p123, %p124
      %p126 = scmp.ne.s32.totalorder %s115, %s116
      %p127 = scmp.eq.s32.totalorder %s18, 0
      %p128 = por %p126, %p127
      %p129 = scmp.ne.s32.totalorder %s115, %s116
      %p130 = scmp.eq.s32.totalorder %s19, 1
      %p131 = por %p129, %p130
      %p133 = scmp.ne.s32.totalorder %s116, %s132
      %p134 = scmp.eq.s32.totalorder %s19, 0
      %p135 = por %p133, %p134
      %p136 = scmp.le.s32.totalorder 1, %s13
      %p137 = scmp.lt.s32.totalorder %s13, 3
      %p138 = pnand %p136, %p137
      %p139 = pneg %p138
      // Predicated region
      $region9: #{_lambda_.31} parent=5 // pred_check
        _
      $region10: #{_lambda_.31} parent=5 // pred_check_branch
        %141 = sbr.rel (%p138) target = $region12
      $region11: #{_lambda_.31} parent=5 // pred_region
        %s142 = ssub.s32 %s13, 1
        // Predicated region
        $region13: #{_lambda_.31} parent=11 // pred_check
          %p143 = pneg %p60
        $region14: #{_lambda_.31} parent=11 // pred_check_branch
          %145 = sbr.rel (%p143) target = $region16
        $region15: #{_lambda_.31} parent=11 // pred_region
          _
        $region16: #{_lambda_.31} parent=11 // pred_fallthru
          _
        // Predicated region
        $region17: #{_lambda_.31} parent=11 // pred_check
          %p146 = pneg %p81
        $region18: #{_lambda_.31} parent=11 // pred_check_branch
          %148 = sbr.rel (%p146) target = $region20
        $region19: #{_lambda_.31} parent=11 // pred_region
          _
        $region20: #{_lambda_.31} parent=11 // pred_fallthru
          _
        // Predicated region
        $region21: #{_lambda_.31} parent=11 // pred_check
          %p149 = pneg %p102
        $region22: #{_lambda_.31} parent=11 // pred_check_branch
          %151 = sbr.rel (%p149) target = $region24
        $region23: #{_lambda_.31} parent=11 // pred_region
          _
        $region24: #{_lambda_.31} parent=11 // pred_fallthru
          _
      $region12: #{_lambda_.31} parent=5 // pred_fallthru
        _
      %p152 = scmp.lt.s32.totalorder %s13, 2
      // Predicated region
      $region25: #{_lambda_.31} parent=5 // pred_check
        %p153 = pneg %p152
      $region26: #{_lambda_.31} parent=5 // pred_check_branch
        %155 = sbr.rel (%p153) target = $region28
      $region27: #{_lambda_.31} parent=5 // pred_region
        // Predicated region
        $region29: #{_lambda_.31} parent=27 // pred_check
          %p156 = pneg %p33
        $region30: #{_lambda_.31} parent=27 // pred_check_branch
          %158 = sbr.rel (%p156) target = $region32
        $region31: #{_lambda_.31} parent=27 // pred_region
          %p159 = scmp.lt.s32.totalorder %s13, 1
          %s160 = scalar_select %p159, %s13, 1
          %s161 = smul.addr %s160, 2
          %s162 = smul.addr %s161, 4
          %s163 = scalar_lea.vmem %s0, %s162
        $region32: #{_lambda_.31} parent=27 // pred_fallthru
          _
      $region28: #{_lambda_.31} parent=5 // pred_fallthru
        _
      %p164 = scmp.le.s32.totalorder 1, %s13
      %p165 = scmp.lt.s32.totalorder %s13, 3
      %p166 = pnand %p164, %p165
      %p167 = pneg %p166
      // Predicated region
      $region33: #{_lambda_.31} parent=5 // pred_check
        _
      $region34: #{_lambda_.31} parent=5 // pred_check_branch
        %169 = sbr.rel (%p166) target = $region36
      $region35: #{_lambda_.31} parent=5 // pred_region
        %s170 = ssub.s32 %s13, 1
        %p171 = scmp.lt.s32.totalorder %s18, 1
        %s172 = scalar_select %p171, %s18, 1
        %s173 = smul.addr %s172, 2
        %s174 = smul.addr %s173, 4
        %s175 = scalar_lea.vmem %s0, %s174
        %p176 = pneg %p39
        %p177 = pneg %p36
        %p178 = pneg %p60
        %p179 = pneg %p57
        %p180 = pneg %p81
        %p181 = pneg %p78
        %p182 = pneg %p102
        %p183 = pneg %p99
        %p184 = pneg %p128
        %p185 = pneg %p125
        %s186 = sand.u32 %s115, 1
        %s187 = scalar_lea.sflag [#allocation4], %s186
        %s188 = sand.u32 %s115, 1
        %s189 = smul.addr %s188, 16
        %s190 = scalar_lea.vmem [#allocation3], %s189
        %p191 = scmp.lt.s32.totalorder %s18, 1
        %s192 = scalar_select %p191, %s18, 1
        %s193 = smul.addr %s192, 2
        %s194 = smul.addr %s193, 4
        %s195 = scalar_lea.vmem %s0, %s194
        %v196 = vld [vmem:[%s195] sm:$0xf]
        %v197 = vld [vmem:[%s195 + $0x4] sm:$0xf]
        %s198 = scalar_lea.vmem %s1, 64
        %v199 = vld [vmem:[%s198] sm:$0xf]
        %v200 = vld [vmem:[%s198 + $0x4] sm:$0xf]
        %v201 = vld [vmem:[%s198 + $0x8] sm:$0xf]
        %v202 = vld [vmem:[%s198 + $0xc] sm:$0xf]
        %v203 = vld [vmem:[%s198 + $0x10] sm:$0xf]
        %v204 = vld [vmem:[%s198 + $0x14] sm:$0xf]
        %v205 = vld [vmem:[%s198 + $0x18] sm:$0xf]
        %v206 = vld [vmem:[%s198 + $0x1c] sm:$0xf]
        %v207 = vld [vmem:[%s198 + $0x20] sm:$0xf]
        %v208 = vld [vmem:[%s198 + $0x24] sm:$0xf]
        %v209 = vld [vmem:[%s198 + $0x28] sm:$0xf]
        %v210 = vld [vmem:[%s198 + $0x2c] sm:$0xf]
        %v211 = vld [vmem:[%s198 + $0x30] sm:$0xf]
        %v212 = vld [vmem:[%s198 + $0x34] sm:$0xf]
        %v213 = vld [vmem:[%s198 + $0x38] sm:$0xf]
        %v214 = vld [vmem:[%s198 + $0x3c] sm:$0xf]
        %v217 = vunpack.c.l.b16 %v196
        %v218 = vunpack.c.l.b16 %v197
        %v219 = vpack.c.b16 %v218, %v217
        %v237 = vunpack.c.l.b16 %v199
        %v238 = vunpack.c.l.b16 %v200
        %v239 = vunpack.c.l.b16 %v201
        %v240 = vunpack.c.l.b16 %v202
        %v241 = vunpack.c.l.b16 %v203
        %v242 = vunpack.c.l.b16 %v204
        %v243 = vunpack.c.l.b16 %v205
        %v244 = vunpack.c.l.b16 %v206
        %v245 = vunpack.c.l.b16 %v207
        %v246 = vunpack.c.l.b16 %v208
        %v247 = vunpack.c.l.b16 %v209
        %v248 = vunpack.c.l.b16 %v210
        %v249 = vunpack.c.l.b16 %v211
        %v250 = vunpack.c.l.b16 %v212
        %v251 = vunpack.c.l.b16 %v213
        %v252 = vunpack.c.l.b16 %v214
        %v253 = vpack.c.b16 %v238, %v237
        %v254 = vpack.c.b16 %v240, %v239
        %v255 = vpack.c.b16 %v242, %v241
        %v256 = vpack.c.b16 %v244, %v243
        %v257 = vpack.c.b16 %v246, %v245
        %v258 = vpack.c.b16 %v248, %v247
        %v259 = vpack.c.b16 %v250, %v249
        %v260 = vpack.c.b16 %v252, %v251
        %269 = vmatpush.bf16.msra.mxu0 %v260
        %270 = vmatpush.bf16.msra.mxu0 %v259
        %271 = vmatpush.bf16.msra.mxu0 %v258
        %272 = vmatpush.bf16.msra.mxu0 %v257
        %273 = vmatpush.bf16.msra.mxu0 %v256
        %274 = vmatpush.bf16.msra.mxu0 %v255
        %275 = vmatpush.bf16.msra.mxu0 %v254
        %276 = vmatpush.bf16.msra.mxu0 %v253
        %277 = vmatmul.bf16.gmra.mxu0 %v219
        %v278 = vpop.f32.mrf.mxu0
        %v279 = vadd.f32 0.0, %v278
        %v280 = vpop.f32.mrf.mxu0
        %v281 = vadd.f32 0.0, %v280
        %282 = vdwg.mxu0
        %vm283 = vcmask 130048
        %284 = vst.msk [vmem:[#allocation2] sm:$0xff] %vm283, %v279
        %285 = vst.msk [vmem:[#allocation2 + $0x8] sm:$0xff] %vm283, %v281
        %v286 = vld [vmem:[#allocation2 + $0x1] sm:$0xff]
        %v287 = vld [vmem:[#allocation2 + $0x9] sm:$0x7f]
        %v288 = vld [vmem:[%s195] sm:$0xf]
        %v289 = vld [vmem:[%s195 + $0x4] sm:$0xf]
        %v290 = vld [vmem:[%s1] sm:$0xf]
        %v291 = vld [vmem:[%s1 + $0x4] sm:$0xf]
        %v292 = vld [vmem:[%s1 + $0x8] sm:$0xf]
        %v293 = vld [vmem:[%s1 + $0xc] sm:$0xf]
        %v294 = vld [vmem:[%s1 + $0x10] sm:$0xf]
        %v295 = vld [vmem:[%s1 + $0x14] sm:$0xf]
        %v296 = vld [vmem:[%s1 + $0x18] sm:$0xf]
        %v297 = vld [vmem:[%s1 + $0x1c] sm:$0xf]
        %v298 = vld [vmem:[%s1 + $0x20] sm:$0xf]
        %v299 = vld [vmem:[%s1 + $0x24] sm:$0xf]
        %v300 = vld [vmem:[%s1 + $0x28] sm:$0xf]
        %v301 = vld [vmem:[%s1 + $0x2c] sm:$0xf]
        %v302 = vld [vmem:[%s1 + $0x30] sm:$0xf]
        %v303 = vld [vmem:[%s1 + $0x34] sm:$0xf]
        %v304 = vld [vmem:[%s1 + $0x38] sm:$0xf]
        %v305 = vld [vmem:[%s1 + $0x3c] sm:$0xf]
        %v308 = vunpack.c.l.b16 %v288
        %v309 = vunpack.c.l.b16 %v289
        %v310 = vpack.c.b16 %v309, %v308
        %v328 = vunpack.c.l.b16 %v290
        %v329 = vunpack.c.l.b16 %v291
        %v330 = vunpack.c.l.b16 %v292
        %v331 = vunpack.c.l.b16 %v293
        %v332 = vunpack.c.l.b16 %v294
        %v333 = vunpack.c.l.b16 %v295
        %v334 = vunpack.c.l.b16 %v296
        %v335 = vunpack.c.l.b16 %v297
        %v336 = vunpack.c.l.b16 %v298
        %v337 = vunpack.c.l.b16 %v299
        %v338 = vunpack.c.l.b16 %v300
        %v339 = vunpack.c.l.b16 %v301
        %v340 = vunpack.c.l.b16 %v302
        %v341 = vunpack.c.l.b16 %v303
        %v342 = vunpack.c.l.b16 %v304
        %v343 = vunpack.c.l.b16 %v305
        %v344 = vpack.c.b16 %v329, %v328
        %v345 = vpack.c.b16 %v331, %v330
        %v346 = vpack.c.b16 %v333, %v332
        %v347 = vpack.c.b16 %v335, %v334
        %v348 = vpack.c.b16 %v337, %v336
        %v349 = vpack.c.b16 %v339, %v338
        %v350 = vpack.c.b16 %v341, %v340
        %v351 = vpack.c.b16 %v343, %v342
        %360 = vmatpush.bf16.msra.mxu0 %v351
        %361 = vmatpush.bf16.msra.mxu0 %v350
        %362 = vmatpush.bf16.msra.mxu0 %v349
        %363 = vmatpush.bf16.msra.mxu0 %v348
        %364 = vmatpush.bf16.msra.mxu0 %v347
        %365 = vmatpush.bf16.msra.mxu0 %v346
        %366 = vmatpush.bf16.msra.mxu0 %v345
        %367 = vmatpush.bf16.msra.mxu0 %v344
        %368 = vmatmul.bf16.gmra.mxu0 %v310
        %v369 = vpop.f32.mrf.mxu0
        %v370 = vadd.f32 0.0, %v369
        %v371 = vpop.f32.mrf.mxu0
        %v372 = vadd.f32 0.0, %v371
        %373 = vdwg.mxu0
        %v374 = vadd.f32 %v286, %v370
        %v375 = vadd.f32 %v287, %v372
        %376 = vst.msk [vmem:[#allocation2 + $0x1] sm:$0xff] %vm283, %v374
        %vm377 = vcmask 129024
        %378 = vst.msk [vmem:[#allocation2 + $0x9] sm:$0x7f] %vm377, %v375
        %v379 = vld [vmem:[#allocation2] sm:$0xff]
        %v380 = vld [vmem:[#allocation2 + $0x8] sm:$0x7f]
        %v381 = vld [vmem:[%s195] sm:$0xf]
        %v382 = vld [vmem:[%s195 + $0x4] sm:$0xf]
        %s383 = scalar_lea.vmem %s1, 128
        %v384 = vld [vmem:[%s383] sm:$0xf]
        %v385 = vld [vmem:[%s383 + $0x4] sm:$0xf]
        %v386 = vld [vmem:[%s383 + $0x8] sm:$0xf]
        %v387 = vld [vmem:[%s383 + $0xc] sm:$0xf]
        %v388 = vld [vmem:[%s383 + $0x10] sm:$0xf]
        %v389 = vld [vmem:[%s383 + $0x14] sm:$0xf]
        %v390 = vld [vmem:[%s383 + $0x18] sm:$0xf]
        %v391 = vld [vmem:[%s383 + $0x1c] sm:$0xf]
        %v392 = vld [vmem:[%s383 + $0x20] sm:$0xf]
        %v393 = vld [vmem:[%s383 + $0x24] sm:$0xf]
        %v394 = vld [vmem:[%s383 + $0x28] sm:$0xf]
        %v395 = vld [vmem:[%s383 + $0x2c] sm:$0xf]
        %v396 = vld [vmem:[%s383 + $0x30] sm:$0xf]
        %v397 = vld [vmem:[%s383 + $0x34] sm:$0xf]
        %v398 = vld [vmem:[%s383 + $0x38] sm:$0xf]
        %v399 = vld [vmem:[%s383 + $0x3c] sm:$0xf]
        %v402 = vunpack.c.l.b16 %v381
        %v403 = vunpack.c.l.b16 %v382
        %v404 = vpack.c.b16 %v403, %v402
        %v406 = vshrl.u32 %v404, 16
        %v408 = vshll.u32 %v404, 16
        %v410 = vrot.slane %v408, 1
        %v411 = vor.u32 %v406, %v410
        %v429 = vunpack.c.l.b16 %v384
        %v430 = vunpack.c.l.b16 %v385
        %v431 = vunpack.c.l.b16 %v386
        %v432 = vunpack.c.l.b16 %v387
        %v433 = vunpack.c.l.b16 %v388
        %v434 = vunpack.c.l.b16 %v389
        %v435 = vunpack.c.l.b16 %v390
        %v436 = vunpack.c.l.b16 %v391
        %v437 = vunpack.c.l.b16 %v392
        %v438 = vunpack.c.l.b16 %v393
        %v439 = vunpack.c.l.b16 %v394
        %v440 = vunpack.c.l.b16 %v395
        %v441 = vunpack.c.l.b16 %v396
        %v442 = vunpack.c.l.b16 %v397
        %v443 = vunpack.c.l.b16 %v398
        %v444 = vunpack.c.l.b16 %v399
        %v445 = vpack.c.b16 %v430, %v429
        %v446 = vpack.c.b16 %v432, %v431
        %v447 = vpack.c.b16 %v434, %v433
        %v448 = vpack.c.b16 %v436, %v435
        %v449 = vpack.c.b16 %v438, %v437
        %v450 = vpack.c.b16 %v440, %v439
        %v451 = vpack.c.b16 %v442, %v441
        %v452 = vpack.c.b16 %v444, %v443
        %461 = vmatpush.bf16.msra.mxu0 %v452
        %462 = vmatpush.bf16.msra.mxu0 %v451
        %463 = vmatpush.bf16.msra.mxu0 %v450
        %464 = vmatpush.bf16.msra.mxu0 %v449
        %465 = vmatpush.bf16.msra.mxu0 %v448
        %466 = vmatpush.bf16.msra.mxu0 %v447
        %467 = vmatpush.bf16.msra.mxu0 %v446
        %468 = vmatpush.bf16.msra.mxu0 %v445
        %469 = vmatmul.bf16.gmra.mxu0 %v411
        %v470 = vpop.f32.mrf.mxu0
        %v471 = vadd.f32 0.0, %v470
        %v472 = vpop.f32.mrf.mxu0
        %v473 = vadd.f32 0.0, %v472
        %474 = vdwg.mxu0
        %v475 = vadd.f32 %v379, %v471
        %v476 = vadd.f32 %v380, %v473
        %477 = vst.msk [vmem:[#allocation2] sm:$0xff] %vm283, %v475
        %478 = vst.msk [vmem:[#allocation2 + $0x8] sm:$0x7f] %vm377, %v476
        %v479 = vld [vmem:[#allocation2] sm:$0xff]
        %v480 = vld [vmem:[#allocation2 + $0x8] sm:$0xff]
        %v481 = vld [vmem:[%s2] sm:$0x1]
        %v483 = vperm.slane %v481, 0
        %v485 = vmul.f32 %v479, %v483
        %v486 = vmul.f32 %v480, %v483
        %v487 = vld [vmem:[%s3] sm:$0x1]
        %v489 = vperm.slane %v487, 0
        %v491 = vadd.f32 %v485, %v489
        %v492 = vadd.f32 %v486, %v489
        %493 = vst.msk [vmem:[%s190] sm:$0xff] %vm283, %v491
        %494 = vst.msk [vmem:[%s190 + $0x8] sm:$0xff] %vm283, %v492
        %s495 = sand.u32 %s115, 1
        %s496 = scalar_lea.sflag [#allocation4], %s495
        %s497 = sand.u32 %s115, 1
        %s498 = smul.addr %s497, 16
        %s499 = scalar_lea.vmem [#allocation3], %s498
        // Predicated region
        $region37: #{_lambda_.31} parent=35 // pred_check
          %p500 = pneg %p125
        $region38: #{_lambda_.31} parent=35 // pred_check_branch
          %502 = sbr.rel (%p500) target = $region40
        $region39: #{_lambda_.31} parent=35 // pred_region
          %504 = vsyncadd %s496, 0
          %s505 = smul.addr %s18, 2
          %s506 = smul.addr %s505, 8
          %s507 = scalar_lea.hbm %s4, %s506
          %s508 = sshll.u32 %s499, 4
          %s509 = int_to_ptr.vmem [resolvable:$true] %s508
          %s510 = sshll.u32 %s507, 4
          %s511 = int_to_ptr.hbm [resolvable:$true] %s510
          %516 = dma.vmem_to_hbm [thread:$0]  %s509, 256, %s511, %s496, 128, 128, 8
        $region40: #{_lambda_.31} parent=35 // pred_fallthru
          _
      $region36: #{_lambda_.31} parent=5 // pred_fallthru
        _
      %p517 = scmp.le.s32.totalorder 2, %s13
      // Predicated region
      $region41: #{_lambda_.31} parent=5 // pred_check
        %p518 = pneg %p517
      $region42: #{_lambda_.31} parent=5 // pred_check_branch
        %520 = sbr.rel (%p518) target = $region44
      $region43: #{_lambda_.31} parent=5 // pred_region
        %s521 = ssub.s32 %s13, 2
        // Predicated region
        $region45: #{_lambda_.31} parent=43 // pred_check
          %p522 = pneg %p131
        $region46: #{_lambda_.31} parent=43 // pred_check_branch
          %524 = sbr.rel (%p522) target = $region48
        $region47: #{_lambda_.31} parent=43 // pred_region
          %s525 = sand.u32 %s116, 1
          %s526 = scalar_lea.sflag [#allocation4], %s525
          %s527 = sand.u32 %s116, 1
          %s528 = smul.addr %s527, 16
          %s529 = scalar_lea.vmem [#allocation3], %s528
          %531 = dma.done %s526, 256
        $region48: #{_lambda_.31} parent=43 // pred_fallthru
          _
      $region44: #{_lambda_.31} parent=5 // pred_fallthru
        _
    $region6: #{_lambda_.31} parent=1 // loop_footer
      %s17 = sadd.s32 1, %s13
    $region7: #{_lambda_.31} parent=1 // loop_footer_branch
      %12 = sbr.rel target = $region3
    $region8: #{_lambda_.31} parent=1 // loop_exit
      _
    %532 = vsyncpa [#allocation4], 1
    %s533 = scalar_lea.sflag [#allocation4], 1
    %534 = vsyncpa %s533, 1

</llo_original>
